<compile_context>
chip_gen: v7x
topology: tpu7x:2x2x1
jax: 0.10.0
libtpu: 0.0.40
codegen_flags: <defaults>
</compile_context>

<pallas_src>
import functools
import math

import jax
import jax.numpy as jnp
from jax import lax
from jax.experimental import pallas as pl
from jax.experimental.pallas import tpu as pltpu

# ----------------------------- configuration -------------------------------
CONFIG = dict(
    n_fft=15,            # -> F = n_fft // 2 + 1 = 8 freq bins
    hop_length=1,
    use_decoder=False,   # decoder branch -> zeros (reference default)
    gru_params=dict(hidden_size=32, n_layers=2),
)
SPEC_IDX = (0, 1)        # spec_features_indices
IN_CH = 4                # in_channels
OUT_CH = 3               # out_channels


# ----------------------------- Pallas kernels ------------------------------

def _stem_kernel(x_ref, cos_ref, sin_ref, encw_ref, encb_ref, aT_ref, wselT_ref,
                 bcol_ref, g_ref, be_ref, o_ref, *, S, n_fft, F, T, hop, pad):
    """Fused spectrogram + dB + SpecNormalize + encoder + liner + residual add
    + fc_in + LayerNorm + ReLU for one batch element.

    x_ref:   (S, Lpad)  reflect-padded selected channels
    cos/sin: (F, n_fft) windowed DFT basis (transposed -> T stays on lanes)
    encw:    (1, S)   encb: (1, 1)           # TODO(synk): Unet(resnet34) placeholder (1x1 conv)
    aT:      (H, F)   = (liner_w @ fc_in_w)^T  (liner folded into fc_in)
    wselT:   (H, S)   = fc_in_w[spec_idx]^T    (strided residual add folded in)
    bcol/g/be: (H, 1) combined bias / LN gamma / LN beta
    o_ref:   (H, T)   channel-major output (lane-dense over T)
    """
    xr = x_ref[...]                       # (S, Lpad)
    cw = cos_ref[...]
    sw = sin_ref[...]
    ew = encw_ref[...]                    # (1, S)
    db_scale = 10.0 / math.log(10.0)

    x_enc = jnp.zeros((F, T), jnp.float32) + encb_ref[...]
    for s in range(S):
        re = jnp.zeros((F, T), jnp.float32)
        im = jnp.zeros((F, T), jnp.float32)
        for k in range(n_fft):
            # frame t covers samples [t*hop, t*hop + n_fft); tap k is a shifted
            # copy of the signal -> static slice, no gather.
            if hop == 1:
                seg = xr[s:s + 1, k:k + T]                       # (1, T)
            else:
                # TODO(synk): hop>1 path uses a strided static slice; config hop=1.
                seg = lax.slice(xr, (s, k), (s + 1, k + (T - 1) * hop + 1), (1, hop))
            re = re + cw[:, k:k + 1] * seg
            im = im + sw[:, k:k + 1] * seg
        power = re * re + im * im                                # |STFT|^2
        xdb = db_scale * jnp.log(jnp.maximum(power, 1e-10))      # AmplitudeToDB
        mx = jnp.max(xdb)
        xdb = jnp.maximum(xdb, mx - 80.0)                        # top_db = 80
        mn = jnp.min(xdb)
        spec = (xdb - mn) / (mx - mn + 1e-8)                     # SpecNormalize
        x_enc = x_enc + ew[:, s:s + 1] * spec                    # 1x1-conv encoder

    # raw selected channels at frame times (channel-major)
    if hop == 1:
        raw = xr[:, pad:pad + T]                                 # (S, T)
    else:
        raw = lax.slice(xr, (0, pad), (S, pad + (T - 1) * hop + 1), (1, hop))

    # fc_in(liner(x_enc) + residual) + bias, all folded into two matmuls
    h = jnp.dot(aT_ref[...], x_enc, preferred_element_type=jnp.float32) + bcol_ref[...]
    wsel = wselT_ref[...]
    for j in range(S):
        h = h + wsel[:, j:j + 1] * raw[j:j + 1, :]               # (H, T)

    # LayerNorm over H (sublane axis) via ones-row matmuls (safe lowering)
    H = h.shape[0]
    ones_row = jnp.ones((1, H), jnp.float32)
    mu = jnp.dot(ones_row, h, preferred_element_type=jnp.float32) / H
    hc = h - mu
    var = jnp.dot(ones_row, hc * hc, preferred_element_type=jnp.float32) / H
    h = hc * lax.rsqrt(var + 1e-5) * g_ref[...] + be_ref[...]
    o_ref[...] = jnp.maximum(h, 0.0)                             # ReLU


def stem_forward(xpad, cosw_T, sinw_T, enc_w, enc_b, a_T, wsel_T, b_col, g_col,
                 be_col, *, T, hop, pad):
    B, S, Lpad = xpad.shape
    F, n_fft = cosw_T.shape
    H = a_T.shape[0]
    full2 = lambda i: (0, 0)
    return pl.pallas_call(
        functools.partial(_stem_kernel, S=S, n_fft=n_fft, F=F, T=T, hop=hop, pad=pad),
        out_shape=jax.ShapeDtypeStruct((B, H, T), jnp.float32),
        grid=(B,),
        in_specs=[
            pl.BlockSpec((None, S, Lpad), lambda i: (i, 0, 0)),
            pl.BlockSpec((F, n_fft), full2),
            pl.BlockSpec((F, n_fft), full2),
            pl.BlockSpec((1, S), full2),
            pl.BlockSpec((1, 1), full2),
            pl.BlockSpec((H, F), full2),
            pl.BlockSpec((H, S), full2),
            pl.BlockSpec((H, 1), full2),
            pl.BlockSpec((H, 1), full2),
            pl.BlockSpec((H, 1), full2),
        ],
        out_specs=pl.BlockSpec((None, H, T), lambda i: (i, 0, 0)),
        compiler_params=pltpu.CompilerParams(dimension_semantics=("parallel",)),
    )(xpad, cosw_T, sinw_T, enc_w, enc_b, a_T, wsel_T, b_col, g_col, be_col)


def _gru_scan_kernel(x_ref, wih_ref, bx_ref, wh_ref, bhn_ref, o_ref, h_ref, xg_ref,
                     *, Tc, H, unroll):
    """One T-chunk of a single-direction GRU recurrence (PyTorch cell semantics).

    Grid = (direction, batch, chunk).  x_ref (Tc, H) is the layer input chunk
    (chunk order already reversed via the index_map for direction 1); the
    x-gate projection is done here (one (Tc,H)@(H,3H) matmul per chunk); the
    recurrent matmul is one (1,H)@(H,3H) per step; h is carried across chunks
    in a persistent VMEM scratch.
    """
    d = pl.program_id(0)

    @pl.when(pl.program_id(2) == 0)
    def _():
        h_ref[...] = jnp.zeros_like(h_ref)     # h0 = 0 (PyTorch default)

    # x-gates for this chunk: columns = [r | z | n]; b_h{r,z} folded into bx.
    xg_ref[...] = (
        jnp.dot(x_ref[...].astype(jnp.bfloat16), wih_ref[...],
                preferred_element_type=jnp.float32)
        + bx_ref[...]
    )
    w_h = wh_ref[...]                           # (H, 3H) bf16, hoisted
    b_hn = bhn_ref[...]                         # (1, H)   (stays inside r*(.))

    def step(t, h):
        # in-kernel time reversal for the backward direction
        rt = (1 - d) * t + d * (Tc - 1 - t)
        xg = xg_ref[pl.ds(rt, 1), :]                                   # (1, 3H)
        gh = jnp.dot(h.astype(jnp.bfloat16), w_h,
                     preferred_element_type=jnp.float32)               # (1, 3H)
        rz = jax.nn.sigmoid(xg[:, :2 * H] + gh[:, :2 * H])             # fused r|z
        r = rz[:, :H]
        z = rz[:, H:]
        n = jnp.tanh(xg[:, 2 * H:] + r * (gh[:, 2 * H:] + b_hn))
        h_new = (1.0 - z) * n + z * h
        o_ref[pl.ds(rt, 1), :] = h_new
        return h_new

    if unroll:
        # short chunk: fully unroll for LLO scheduler visibility
        h = h_ref[...]
        for t in range(Tc):
            h = step(t, h)
        h_ref[...] = h
    else:
        h_ref[...] = lax.fori_loop(0, Tc, step, h_ref[...])


def gru_scan(h_in, w_ih, b_x, w_h3, b_hn, *, Tc):
    B, T, H = h_in.shape
    nc = T // Tc
    x_map = lambda d, b, c: (b, c + d * (nc - 1 - 2 * c), 0)
    w_map = lambda d, b, c: (d, 0, 0)
    o_map = lambda d, b, c: (d, b, c + d * (nc - 1 - 2 * c), 0)
    unroll = Tc <= 32
    return pl.pallas_call(
        functools.partial(_gru_scan_kernel, Tc=Tc, H=H, unroll=unroll),
        out_shape=jax.ShapeDtypeStruct((2, B, T, H), jnp.float32),
        grid=(2, B, nc),
        in_specs=[
            pl.BlockSpec((None, Tc, H), x_map),
            pl.BlockSpec((None, H, 3 * H), w_map),
            pl.BlockSpec((None, 1, 3 * H), w_map),
            pl.BlockSpec((None, H, 3 * H), w_map),
            pl.BlockSpec((None, 1, H), w_map),
        ],
        out_specs=pl.BlockSpec((None, None, Tc, H), o_map),
        scratch_shapes=[pltpu.VMEM((1, H), jnp.float32),          # h carry
                        pltpu.VMEM((Tc, 3 * H), jnp.float32)],    # chunk x-gates
        compiler_params=pltpu.CompilerParams(
            dimension_semantics=("parallel", "parallel", "arbitrary")),
    )(h_in, w_ih, b_x, w_h3, b_hn)


def _res_layer_kernel(hs_ref, skip_ref, w1_ref, b1_ref, g1_ref, be1_ref,
                      w2_ref, b2_ref, g2_ref, be2_ref, *rest, H, last):
    """Fused fc1 + LN + ReLU + fc2 + LN + ReLU + skip (+ fc_out for last layer).

    hs_ref: (2, Tc, H) fwd/bwd GRU outputs; the bi-dir concat is folded into
    two half-weight matmuls (concat([hf,hb]) @ W1 == hf @ W1[:H] + hb @ W1[H:]).
    """
    def ln(y, g, b):
        mu = jnp.mean(y, axis=-1, keepdims=True)
        var = jnp.mean((y - mu) ** 2, axis=-1, keepdims=True)
        return (y - mu) * lax.rsqrt(var + 1e-5) * g + b

    hf = hs_ref[0].astype(jnp.bfloat16)
    hb = hs_ref[1].astype(jnp.bfloat16)
    w1 = w1_ref[...]
    y = (jnp.dot(hf, w1[:H], preferred_element_type=jnp.float32)
         + jnp.dot(hb, w1[H:], preferred_element_type=jnp.float32)
         + b1_ref[...])                                           # (Tc, 4H)
    y = jnp.maximum(ln(y, g1_ref[...], be1_ref[...]), 0.0)
    y = (jnp.dot(y.astype(jnp.bfloat16), w2_ref[...],
                 preferred_element_type=jnp.float32) + b2_ref[...])
    y = jnp.maximum(ln(y, g2_ref[...], be2_ref[...]), 0.0)
    hn = y + skip_ref[...]                                        # residual skip

    if last:
        wo_ref, bo_ref, hout_ref, yout_ref = rest
        hout_ref[...] = hn
        # TODO(synk): exact 'use_activation' semantics of upstream multi_res_bi_GRU
        # are unavailable; fc_out output is returned directly.
        yout_ref[...] = (jnp.dot(hn, wo_ref[...],
                                 preferred_element_type=jnp.float32) + bo_ref[...])
    else:
        (hout_ref,) = rest
        hout_ref[...] = hn


def res_layer(hs, h_in, lp, fc_out_w, fc_out_b, *, Tc, last):
    _, B, T, H = hs.shape
    nc = T // Tc
    n_out = fc_out_w.shape[1]
    wmap = lambda b, c: (0, 0)
    in_specs = [
        pl.BlockSpec((2, None, Tc, H), lambda b, c: (0, b, c, 0)),
        pl.BlockSpec((None, Tc, H), lambda b, c: (b, c, 0)),
        pl.BlockSpec((2 * H, 4 * H), wmap),
        pl.BlockSpec((1, 4 * H), wmap),
        pl.BlockSpec((1, 4 * H), wmap),
        pl.BlockSpec((1, 4 * H), wmap),
        pl.BlockSpec((4 * H, H), wmap),
        pl.BlockSpec((1, H), wmap),
        pl.BlockSpec((1, H), wmap),
        pl.BlockSpec((1, H), wmap),
    ]
    args = [hs, h_in,
            lp["fc1_w"].astype(jnp.bfloat16), lp["fc1_b"], lp["ln1_g"], lp["ln1_b"],
            lp["fc2_w"].astype(jnp.bfloat16), lp["fc2_b"], lp["ln2_g"], lp["ln2_b"]]
    if last:
        in_specs += [pl.BlockSpec((H, n_out), wmap), pl.BlockSpec((1, n_out), wmap)]
        args += [fc_out_w, fc_out_b]
        out_shape = (jax.ShapeDtypeStruct((B, T, H), jnp.float32),
                     jax.ShapeDtypeStruct((B, T, n_out), jnp.float32))
        out_specs = (pl.BlockSpec((None, Tc, H), lambda b, c: (b, c, 0)),
                     pl.BlockSpec((None, Tc, n_out), lambda b, c: (b, c, 0)))
    else:
        out_shape = jax.ShapeDtypeStruct((B, T, H), jnp.float32)
        out_specs = pl.BlockSpec((None, Tc, H), lambda b, c: (b, c, 0))
    return pl.pallas_call(
        functools.partial(_res_layer_kernel, H=H, last=last),
        out_shape=out_shape,
        grid=(B, nc),
        in_specs=in_specs,
        out_specs=out_specs,
        compiler_params=pltpu.CompilerParams(dimension_semantics=("parallel", "parallel")),
    )(*args)


# ------------------------------ parameters ---------------------------------

def init_params(key):
    H = CONFIG["gru_params"]["hidden_size"]
    n_layers = CONFIG["gru_params"]["n_layers"]
    F = CONFIG["n_fft"] // 2 + 1
    S = len(SPEC_IDX)
    keys = iter(jax.random.split(key, 256))

    def w(shape, scale=None):
        sc = 1.0 / math.sqrt(shape[0]) if scale is None else scale
        return sc * jax.random.normal(next(keys), shape, jnp.float32)

    p = {}
    # TODO(synk): Unet(resnet34, depth=5) encoder has no compact Pallas equivalent here;
    # replaced by a deterministic 1x1 conv (S -> 1 class channel) so downstream shapes match.
    p["enc_w"] = w((1, S), 1.0 / math.sqrt(S))
    p["enc_b"] = jnp.zeros((1, 1), jnp.float32)
    p["liner_w"] = w((F, IN_CH))
    p["liner_b"] = w((1, IN_CH), 0.01)
    p["fc_in_w"] = w((IN_CH, H))
    p["fc_in_b"] = w((1, H), 0.01)
    p["ln_in_g"] = jnp.ones((1, H), jnp.float32)
    p["ln_in_b"] = jnp.zeros((1, H), jnp.float32)

    layers = []
    for _ in range(n_layers):
        lp = dict(
            w_ih=w((2, H, 3 * H), 1.0 / math.sqrt(H)),   # per-direction, cols = [r|z|n]
            b_x=w((2, 1, 3 * H), 0.01),                  # b_i{r,z,n} (+ b_h{r,z} folded)
            w_h3=w((2, H, 3 * H), 1.0 / math.sqrt(H)),   # [W_hr | W_hz | W_hn]
            b_hn=w((2, 1, H), 0.01),
            fc1_w=w((2 * H, 4 * H)), fc1_b=w((1, 4 * H), 0.01),
            ln1_g=jnp.ones((1, 4 * H), jnp.float32), ln1_b=jnp.zeros((1, 4 * H), jnp.float32),
            fc2_w=w((4 * H, H)), fc2_b=w((1, H), 0.01),
            ln2_g=jnp.ones((1, H), jnp.float32), ln2_b=jnp.zeros((1, H), jnp.float32),
        )
        layers.append(lp)
    p["layers"] = layers
    p["fc_out_w"] = w((H, OUT_CH))
    p["fc_out_b"] = w((1, OUT_CH), 0.01)
    return p


# ------------------------------- forward -----------------------------------

def _pick_time_chunk(T, target=512):
    if T <= target:
        return T
    for tc in range(target, 7, -1):
        if tc % 8 == 0 and T % tc == 0:
            return tc
    return T


def forward(params, x, use_activation=True):
    B, L, Cin = x.shape
    n_fft = CONFIG["n_fft"]
    hop = CONFIG["hop_length"]
    F = n_fft // 2 + 1
    H = CONFIG["gru_params"]["hidden_size"]
    S = len(SPEC_IDX)
    pad = n_fft // 2
    # TODO(synk): torchaudio center=True yields L//hop + 1 frames; truncated to L//hop
    # so the strided residual add below is well-defined (reference relies on matching shapes).
    T = L // hop

    # x.permute(0, 2, 1) -> (B, C, L); select spectrogram channels; reflect pad.
    xp = jnp.transpose(x, (0, 2, 1))
    x_sel = xp[:, jnp.asarray(SPEC_IDX), :]                      # (B, S, L)
    xpad = jnp.pad(x_sel, ((0, 0), (0, 0), (pad, pad)), mode="reflect")

    # windowed DFT basis, transposed so T stays on the lane axis in-kernel
    n = jnp.arange(n_fft, dtype=jnp.float32)
    f = jnp.arange(F, dtype=jnp.float32)
    window = 0.5 - 0.5 * jnp.cos(2.0 * jnp.pi * n / n_fft)        # periodic Hann
    ang = 2.0 * jnp.pi * jnp.outer(f, n) / n_fft
    cosw_T = (window[None, :] * jnp.cos(ang)).astype(jnp.float32)  # (F, n_fft)
    sinw_T = (window[None, :] * jnp.sin(ang)).astype(jnp.float32)

    # Fold liner + residual-add + fc_in into the stem's matmul weights (exact algebra).
    a_T = (params["liner_w"] @ params["fc_in_w"]).T               # (H, F)
    b_col = (params["liner_b"] @ params["fc_in_w"] + params["fc_in_b"]).T  # (H, 1)
    wsel_T = params["fc_in_w"][jnp.asarray(SPEC_IDX), :].T        # (H, S)
    g_col = params["ln_in_g"].T
    be_col = params["ln_in_b"].T

    # --- fused stem (spectrogram ... fc_in/LN/ReLU), channel-major (lane-dense) ---
    h0_cm = stem_forward(xpad, cosw_T, sinw_T, params["enc_w"], params["enc_b"],
                         a_T, wsel_T, b_col, g_col, be_col, T=T, hop=hop, pad=pad)
    h = jnp.transpose(h0_cm, (0, 2, 1))                           # (B, T, H)

    # TODO(synk): UNet1DDecoder not implemented; config['use_decoder'] defaults to False
    # so x_decoded == zeros and the final `y + x_decoded` is the identity.

    # --- MultiResidualBiGRU ---
    # TODO(synk): multi_res_bi_GRU source not provided; internals follow the public reference
    # (fc_in -> LN -> ReLU -> [BiGRU -> fc1 -> LN -> ReLU -> fc2 -> LN -> ReLU -> +skip]*n -> fc_out).
    Tc = _pick_time_chunk(T)
    y = None
    n_layers = len(params["layers"])
    for li, lp in enumerate(params["layers"]):
        hs = gru_scan(h,
                      lp["w_ih"].astype(jnp.bfloat16), lp["b_x"],
                      lp["w_h3"].astype(jnp.bfloat16), lp["b_hn"],
                      Tc=Tc)                                      # (2, B, T, H)
        last = li == n_layers - 1
        if last:
            h, y = res_layer(hs, h, lp, params["fc_out_w"], params["fc_out_b"],
                             Tc=Tc, last=True)
        else:
            h = res_layer(hs, h, lp, params["fc_out_w"], params["fc_out_b"],
                          Tc=Tc, last=False)
    return y  # + x_decoded (zeros, use_decoder=False)


# --------------------------------- main -------------------------------------

if __name__ == "__main__":
    key = jax.random.PRNGKey(0)
    pkey, xkey = jax.random.split(key)
    params = init_params(pkey)

    B, L = 2, 16
    x = jax.random.normal(xkey, (B, L, IN_CH), jnp.float32)

    fwd = jax.jit(functools.partial(forward, params))
    y = fwd(x)
    jax.block_until_ready(y)
    assert y.shape == (B, L // CONFIG["hop_length"], OUT_CH), y.shape
    assert bool(jnp.all(jnp.isfinite(y)))
    print("KERNEL_OK")
</pallas_src>

<mosaic_0001>
module attributes {stable_mosaic.version = 11 : i64} {
  func.func @_res_layer_kernel(%arg0: i32, %arg1: i32, %arg2: memref<2x1x16x32xf32, #tpu.memory_space<vmem>>, %arg3: memref<1x16x32xf32, #tpu.memory_space<vmem>>, %arg4: memref<64x128xbf16, #tpu.memory_space<vmem>>, %arg5: memref<1x128xf32, #tpu.memory_space<vmem>>, %arg6: memref<1x128xf32, #tpu.memory_space<vmem>>, %arg7: memref<1x128xf32, #tpu.memory_space<vmem>>, %arg8: memref<128x32xbf16, #tpu.memory_space<vmem>>, %arg9: memref<1x32xf32, #tpu.memory_space<vmem>>, %arg10: memref<1x32xf32, #tpu.memory_space<vmem>>, %arg11: memref<1x32xf32, #tpu.memory_space<vmem>>, %arg12: memref<32x3xf32, #tpu.memory_space<vmem>>, %arg13: memref<1x3xf32, #tpu.memory_space<vmem>>, %arg14: memref<1x16x32xf32, #tpu.memory_space<vmem>>, %arg15: memref<1x16x3xf32, #tpu.memory_space<vmem>>) attributes {dimension_semantics = [#tpu.dimension_semantics<parallel>, #tpu.dimension_semantics<parallel>], iteration_bounds = array<i64: 2, 1>, scalar_prefetch = 0 : i64, scratch_operands = 0 : i64, tpu.core_type = #tpu.core_type<tc>, window_params = [{transform_indices = @transform_0, window_bounds = array<i64: 2, 1, 16, 32>}, {transform_indices = @transform_1, window_bounds = array<i64: 1, 16, 32>}, {pipeline_mode = #tpu.pipeline_mode<synchronous>, transform_indices = @transform_2, window_bounds = array<i64: 64, 128>}, {pipeline_mode = #tpu.pipeline_mode<synchronous>, transform_indices = @transform_3, window_bounds = array<i64: 1, 128>}, {pipeline_mode = #tpu.pipeline_mode<synchronous>, transform_indices = @transform_4, window_bounds = array<i64: 1, 128>}, {pipeline_mode = #tpu.pipeline_mode<synchronous>, transform_indices = @transform_5, window_bounds = array<i64: 1, 128>}, {pipeline_mode = #tpu.pipeline_mode<synchronous>, transform_indices = @transform_6, window_bounds = array<i64: 128, 32>}, {pipeline_mode = #tpu.pipeline_mode<synchronous>, transform_indices = @transform_7, window_bounds = array<i64: 1, 32>}, {pipeline_mode = #tpu.pipeline_mode<synchronous>, transform_indices = @transform_8, window_bounds = array<i64: 1, 32>}, {pipeline_mode = #tpu.pipeline_mode<synchronous>, transform_indices = @transform_9, window_bounds = array<i64: 1, 32>}, {pipeline_mode = #tpu.pipeline_mode<synchronous>, transform_indices = @transform_10, window_bounds = array<i64: 32, 3>}, {pipeline_mode = #tpu.pipeline_mode<synchronous>, transform_indices = @transform_11, window_bounds = array<i64: 1, 3>}, {transform_indices = @transform_12, window_bounds = array<i64: 1, 16, 32>}, {transform_indices = @transform_13, window_bounds = array<i64: 1, 16, 3>}]} {
    %c0 = arith.constant 0 : index
    %c0_0 = arith.constant 0 : index
    %c0_1 = arith.constant 0 : index
    %c0_2 = arith.constant 0 : index
    %0 = vector.load %arg2[%c0, %c0_0, %c0_1, %c0_2] : memref<2x1x16x32xf32, #tpu.memory_space<vmem>>, vector<1x1x16x32xf32>
    %1 = vector.shape_cast %0 : vector<1x1x16x32xf32> to vector<16x32xf32>
    %2 = arith.truncf %1 : vector<16x32xf32> to vector<16x32xbf16>
    %c1 = arith.constant 1 : index
    %c0_3 = arith.constant 0 : index
    %c0_4 = arith.constant 0 : index
    %c0_5 = arith.constant 0 : index
    %3 = vector.load %arg2[%c1, %c0_3, %c0_4, %c0_5] : memref<2x1x16x32xf32, #tpu.memory_space<vmem>>, vector<1x1x16x32xf32>
    %4 = vector.shape_cast %3 : vector<1x1x16x32xf32> to vector<16x32xf32>
    %5 = arith.truncf %4 : vector<16x32xf32> to vector<16x32xbf16>
    %c0_6 = arith.constant 0 : index
    %c0_7 = arith.constant 0 : index
    %6 = vector.load %arg4[%c0_6, %c0_7] : memref<64x128xbf16, #tpu.memory_space<vmem>>, vector<64x128xbf16>
    %7 = vector.extract_strided_slice %6 {offsets = [0, 0], sizes = [32, 128], strides = [1, 1]} : vector<64x128xbf16> to vector<32x128xbf16>
    %cst = arith.constant dense<0.000000e+00> : vector<16x128xf32>
    %8 = tpu.matmul %2, %7, %cst {dimension_numbers = #tpu.dot_dimension_numbers<[1], [0], [0], [1], [0, 0, 1, 1], [], []>} : vector<16x32xbf16>, vector<32x128xbf16>, vector<16x128xf32> -> vector<16x128xf32>
    %9 = vector.extract_strided_slice %6 {offsets = [32, 0], sizes = [32, 128], strides = [1, 1]} : vector<64x128xbf16> to vector<32x128xbf16>
    %cst_8 = arith.constant dense<0.000000e+00> : vector<16x128xf32>
    %10 = tpu.matmul %5, %9, %cst_8 {dimension_numbers = #tpu.dot_dimension_numbers<[1], [0], [0], [1], [0, 0, 1, 1], [], []>} : vector<16x32xbf16>, vector<32x128xbf16>, vector<16x128xf32> -> vector<16x128xf32>
    %11 = arith.addf %8, %10 : vector<16x128xf32>
    %c0_9 = arith.constant 0 : index
    %c0_10 = arith.constant 0 : index
    %12 = vector.load %arg5[%c0_9, %c0_10] : memref<1x128xf32, #tpu.memory_space<vmem>>, vector<1x128xf32>
    %13 = vector.broadcast %12 : vector<1x128xf32> to vector<16x128xf32>
    %14 = arith.addf %11, %13 : vector<16x128xf32>
    %c0_11 = arith.constant 0 : index
    %c0_12 = arith.constant 0 : index
    %15 = vector.load %arg6[%c0_11, %c0_12] : memref<1x128xf32, #tpu.memory_space<vmem>>, vector<1x128xf32>
    %c0_13 = arith.constant 0 : index
    %c0_14 = arith.constant 0 : index
    %16 = vector.load %arg7[%c0_13, %c0_14] : memref<1x128xf32, #tpu.memory_space<vmem>>, vector<1x128xf32>
    %cst_15 = arith.constant dense<0.000000e+00> : vector<16xf32>
    %17 = vector.multi_reduction <add>, %14, %cst_15 [1] : vector<16x128xf32> to vector<16xf32>
    %18 = vector.shape_cast %17 : vector<16xf32> to vector<16x1xf32>
    %cst_16 = arith.constant 1.280000e+02 : f32
    %19 = vector.broadcast %cst_16 : f32 to vector<16x1xf32>
    %20 = arith.divf %18, %19 : vector<16x1xf32>
    %21 = vector.broadcast %20 : vector<16x1xf32> to vector<16x128xf32>
    %22 = arith.subf %14, %21 : vector<16x128xf32>
    %23 = arith.mulf %22, %22 : vector<16x128xf32>
    %cst_17 = arith.constant dense<0.000000e+00> : vector<16xf32>
    %24 = vector.multi_reduction <add>, %23, %cst_17 [1] : vector<16x128xf32> to vector<16xf32>
    %25 = vector.shape_cast %24 : vector<16xf32> to vector<16x1xf32>
    %cst_18 = arith.constant 1.280000e+02 : f32
    %26 = vector.broadcast %cst_18 : f32 to vector<16x1xf32>
    %27 = arith.divf %25, %26 : vector<16x1xf32>
    %28 = vector.broadcast %20 : vector<16x1xf32> to vector<16x128xf32>
    %29 = arith.subf %14, %28 : vector<16x128xf32>
    %cst_19 = arith.constant 9.99999974E-6 : f32
    %30 = vector.broadcast %cst_19 : f32 to vector<16x1xf32>
    %31 = arith.addf %27, %30 : vector<16x1xf32>
    %32 = math.rsqrt %31 : vector<16x1xf32>
    %33 = vector.broadcast %32 : vector<16x1xf32> to vector<16x128xf32>
    %34 = arith.mulf %29, %33 : vector<16x128xf32>
    %35 = vector.broadcast %15 : vector<1x128xf32> to vector<16x128xf32>
    %36 = arith.mulf %34, %35 : vector<16x128xf32>
    %37 = vector.broadcast %16 : vector<1x128xf32> to vector<16x128xf32>
    %38 = arith.addf %36, %37 : vector<16x128xf32>
    %cst_20 = arith.constant 0.000000e+00 : f32
    %39 = vector.broadcast %cst_20 : f32 to vector<16x128xf32>
    %40 = arith.maximumf %38, %39 : vector<16x128xf32>
    %41 = arith.truncf %40 : vector<16x128xf32> to vector<16x128xbf16>
    %c0_21 = arith.constant 0 : index
    %c0_22 = arith.constant 0 : index
    %42 = vector.load %arg8[%c0_21, %c0_22] : memref<128x32xbf16, #tpu.memory_space<vmem>>, vector<128x32xbf16>
    %cst_23 = arith.constant dense<0.000000e+00> : vector<16x32xf32>
    %43 = tpu.matmul %41, %42, %cst_23 {dimension_numbers = #tpu.dot_dimension_numbers<[1], [0], [0], [1], [0, 0, 1, 1], [], []>} : vector<16x128xbf16>, vector<128x32xbf16>, vector<16x32xf32> -> vector<16x32xf32>
    %c0_24 = arith.constant 0 : index
    %c0_25 = arith.constant 0 : index
    %44 = vector.load %arg9[%c0_24, %c0_25] : memref<1x32xf32, #tpu.memory_space<vmem>>, vector<1x32xf32>
    %45 = vector.broadcast %44 : vector<1x32xf32> to vector<16x32xf32>
    %46 = arith.addf %43, %45 : vector<16x32xf32>
    %c0_26 = arith.constant 0 : index
    %c0_27 = arith.constant 0 : index
    %47 = vector.load %arg10[%c0_26, %c0_27] : memref<1x32xf32, #tpu.memory_space<vmem>>, vector<1x32xf32>
    %c0_28 = arith.constant 0 : index
    %c0_29 = arith.constant 0 : index
    %48 = vector.load %arg11[%c0_28, %c0_29] : memref<1x32xf32, #tpu.memory_space<vmem>>, vector<1x32xf32>
    %cst_30 = arith.constant dense<0.000000e+00> : vector<16xf32>
    %49 = vector.multi_reduction <add>, %46, %cst_30 [1] : vector<16x32xf32> to vector<16xf32>
    %50 = vector.shape_cast %49 : vector<16xf32> to vector<16x1xf32>
    %cst_31 = arith.constant 3.200000e+01 : f32
    %51 = vector.broadcast %cst_31 : f32 to vector<16x1xf32>
    %52 = arith.divf %50, %51 : vector<16x1xf32>
    %53 = vector.broadcast %52 : vector<16x1xf32> to vector<16x32xf32>
    %54 = arith.subf %46, %53 : vector<16x32xf32>
    %55 = arith.mulf %54, %54 : vector<16x32xf32>
    %cst_32 = arith.constant dense<0.000000e+00> : vector<16xf32>
    %56 = vector.multi_reduction <add>, %55, %cst_32 [1] : vector<16x32xf32> to vector<16xf32>
    %57 = vector.shape_cast %56 : vector<16xf32> to vector<16x1xf32>
    %cst_33 = arith.constant 3.200000e+01 : f32
    %58 = vector.broadcast %cst_33 : f32 to vector<16x1xf32>
    %59 = arith.divf %57, %58 : vector<16x1xf32>
    %60 = vector.broadcast %52 : vector<16x1xf32> to vector<16x32xf32>
    %61 = arith.subf %46, %60 : vector<16x32xf32>
    %cst_34 = arith.constant 9.99999974E-6 : f32
    %62 = vector.broadcast %cst_34 : f32 to vector<16x1xf32>
    %63 = arith.addf %59, %62 : vector<16x1xf32>
    %64 = math.rsqrt %63 : vector<16x1xf32>
    %65 = vector.broadcast %64 : vector<16x1xf32> to vector<16x32xf32>
    %66 = arith.mulf %61, %65 : vector<16x32xf32>
    %67 = vector.broadcast %47 : vector<1x32xf32> to vector<16x32xf32>
    %68 = arith.mulf %66, %67 : vector<16x32xf32>
    %69 = vector.broadcast %48 : vector<1x32xf32> to vector<16x32xf32>
    %70 = arith.addf %68, %69 : vector<16x32xf32>
    %cst_35 = arith.constant 0.000000e+00 : f32
    %71 = vector.broadcast %cst_35 : f32 to vector<16x32xf32>
    %72 = arith.maximumf %70, %71 : vector<16x32xf32>
    %c0_36 = arith.constant 0 : index
    %c0_37 = arith.constant 0 : index
    %c0_38 = arith.constant 0 : index
    %73 = vector.load %arg3[%c0_36, %c0_37, %c0_38] : memref<1x16x32xf32, #tpu.memory_space<vmem>>, vector<1x16x32xf32>
    %74 = vector.shape_cast %73 : vector<1x16x32xf32> to vector<16x32xf32>
    %75 = arith.addf %72, %74 : vector<16x32xf32>
    %c0_39 = arith.constant 0 : index
    %c0_40 = arith.constant 0 : index
    %c0_41 = arith.constant 0 : index
    %76 = vector.load %arg14[%c0_39, %c0_40, %c0_41] : memref<1x16x32xf32, #tpu.memory_space<vmem>>, vector<1x16x32xf32>
    %77 = vector.shape_cast %76 : vector<1x16x32xf32> to vector<16x32xf32>
    %78 = vector.shape_cast %75 : vector<16x32xf32> to vector<1x16x32xf32>
    tpu.vector_store %arg14[%c0_39, %c0_40, %c0_41], %78 {strides = array<i32>} : memref<1x16x32xf32, #tpu.memory_space<vmem>>, vector<1x16x32xf32>,
    %c0_42 = arith.constant 0 : index
    %c0_43 = arith.constant 0 : index
    %79 = vector.load %arg12[%c0_42, %c0_43] : memref<32x3xf32, #tpu.memory_space<vmem>>, vector<32x3xf32>
    %cst_44 = arith.constant dense<0.000000e+00> : vector<16x3xf32>
    %80 = tpu.matmul %75, %79, %cst_44 {dimension_numbers = #tpu.dot_dimension_numbers<[1], [0], [0], [1], [0, 0, 1, 1], [], []>} : vector<16x32xf32>, vector<32x3xf32>, vector<16x3xf32> -> vector<16x3xf32>
    %c0_45 = arith.constant 0 : index
    %c0_46 = arith.constant 0 : index
    %81 = vector.load %arg13[%c0_45, %c0_46] : memref<1x3xf32, #tpu.memory_space<vmem>>, vector<1x3xf32>
    %82 = vector.broadcast %81 : vector<1x3xf32> to vector<16x3xf32>
    %83 = arith.addf %80, %82 : vector<16x3xf32>
    %c0_47 = arith.constant 0 : index
    %c0_48 = arith.constant 0 : index
    %c0_49 = arith.constant 0 : index
    %84 = vector.load %arg15[%c0_47, %c0_48, %c0_49] : memref<1x16x3xf32, #tpu.memory_space<vmem>>, vector<1x16x3xf32>
    %85 = vector.shape_cast %84 : vector<1x16x3xf32> to vector<16x3xf32>
    %86 = vector.shape_cast %83 : vector<16x3xf32> to vector<1x16x3xf32>
    tpu.vector_store %arg15[%c0_47, %c0_48, %c0_49], %86 {strides = array<i32>} : memref<1x16x3xf32, #tpu.memory_space<vmem>>, vector<1x16x3xf32>,
    return
  }
  func.func @transform_0(%arg0: i32, %arg1: i32) -> (i32, i32, i32, i32) {
    %c0_i32 = arith.constant 0 : i32
    %c0_i32_0 = arith.constant 0 : i32
    %c0_i32_1 = arith.constant 0 : i32
    return %c0_i32, %arg0, %arg1, %c0_i32_0 : i32, i32, i32, i32
  }
  func.func @transform_1(%arg0: i32, %arg1: i32) -> (i32, i32, i32) {
    %c0_i32 = arith.constant 0 : i32
    %c0_i32_0 = arith.constant 0 : i32
    return %arg0, %arg1, %c0_i32 : i32, i32, i32
  }
  func.func @transform_2(%arg0: i32, %arg1: i32) -> (i32, i32) {
    %c0_i32 = arith.constant 0 : i32
    %c0_i32_0 = arith.constant 0 : i32
    %c0_i32_1 = arith.constant 0 : i32
    return %c0_i32, %c0_i32_0 : i32, i32
  }
  func.func @transform_3(%arg0: i32, %arg1: i32) -> (i32, i32) {
    %c0_i32 = arith.constant 0 : i32
    %c0_i32_0 = arith.constant 0 : i32
    %c0_i32_1 = arith.constant 0 : i32
    return %c0_i32, %c0_i32_0 : i32, i32
  }
  func.func @transform_4(%arg0: i32, %arg1: i32) -> (i32, i32) {
    %c0_i32 = arith.constant 0 : i32
    %c0_i32_0 = arith.constant 0 : i32
    %c0_i32_1 = arith.constant 0 : i32
    return %c0_i32, %c0_i32_0 : i32, i32
  }
  func.func @transform_5(%arg0: i32, %arg1: i32) -> (i32, i32) {
    %c0_i32 = arith.constant 0 : i32
    %c0_i32_0 = arith.constant 0 : i32
    %c0_i32_1 = arith.constant 0 : i32
    return %c0_i32, %c0_i32_0 : i32, i32
  }
  func.func @transform_6(%arg0: i32, %arg1: i32) -> (i32, i32) {
    %c0_i32 = arith.constant 0 : i32
    %c0_i32_0 = arith.constant 0 : i32
    %c0_i32_1 = arith.constant 0 : i32
    return %c0_i32, %c0_i32_0 : i32, i32
  }
  func.func @transform_7(%arg0: i32, %arg1: i32) -> (i32, i32) {
    %c0_i32 = arith.constant 0 : i32
    %c0_i32_0 = arith.constant 0 : i32
    %c0_i32_1 = arith.constant 0 : i32
    return %c0_i32, %c0_i32_0 : i32, i32
  }
  func.func @transform_8(%arg0: i32, %arg1: i32) -> (i32, i32) {
    %c0_i32 = arith.constant 0 : i32
    %c0_i32_0 = arith.constant 0 : i32
    %c0_i32_1 = arith.constant 0 : i32
    return %c0_i32, %c0_i32_0 : i32, i32
  }
  func.func @transform_9(%arg0: i32, %arg1: i32) -> (i32, i32) {
    %c0_i32 = arith.constant 0 : i32
    %c0_i32_0 = arith.constant 0 : i32
    %c0_i32_1 = arith.constant 0 : i32
    return %c0_i32, %c0_i32_0 : i32, i32
  }
  func.func @transform_10(%arg0: i32, %arg1: i32) -> (i32, i32) {
    %c0_i32 = arith.constant 0 : i32
    %c0_i32_0 = arith.constant 0 : i32
    %c0_i32_1 = arith.constant 0 : i32
    return %c0_i32, %c0_i32_0 : i32, i32
  }
  func.func @transform_11(%arg0: i32, %arg1: i32) -> (i32, i32) {
    %c0_i32 = arith.constant 0 : i32
    %c0_i32_0 = arith.constant 0 : i32
    %c0_i32_1 = arith.constant 0 : i32
    return %c0_i32, %c0_i32_0 : i32, i32
  }
  func.func @transform_12(%arg0: i32, %arg1: i32) -> (i32, i32, i32) {
    %c0_i32 = arith.constant 0 : i32
    %c0_i32_0 = arith.constant 0 : i32
    return %arg0, %arg1, %c0_i32 : i32, i32, i32
  }
  func.func @transform_13(%arg0: i32, %arg1: i32) -> (i32, i32, i32) {
    %c0_i32 = arith.constant 0 : i32
    %c0_i32_0 = arith.constant 0 : i32
    return %arg0, %arg1, %c0_i32 : i32, i32, i32
  }
}

module attributes {stable_mosaic.version = 11 : i64} {
  func.func @_stem_kernel(%arg0: i32, %arg1: memref<1x2x30xf32, #tpu.memory_space<vmem>>, %arg2: memref<8x15xf32, #tpu.memory_space<vmem>>, %arg3: memref<8x15xf32, #tpu.memory_space<vmem>>, %arg4: memref<1x2xf32, #tpu.memory_space<vmem>>, %arg5: memref<1x1xf32, #tpu.memory_space<vmem>>, %arg6: memref<32x8xf32, #tpu.memory_space<vmem>>, %arg7: memref<32x2xf32, #tpu.memory_space<vmem>>, %arg8: memref<32x1xf32, #tpu.memory_space<vmem>>, %arg9: memref<32x1xf32, #tpu.memory_space<vmem>>, %arg10: memref<32x1xf32, #tpu.memory_space<vmem>>, %arg11: memref<1x32x16xf32, #tpu.memory_space<vmem>>) attributes {dimension_semantics = [#tpu.dimension_semantics<parallel>], iteration_bounds = array<i64: 2>, scalar_prefetch = 0 : i64, scratch_operands = 0 : i64, tpu.core_type = #tpu.core_type<tc>, window_params = [{transform_indices = @transform_0, window_bounds = array<i64: 1, 2, 30>}, {pipeline_mode = #tpu.pipeline_mode<synchronous>, transform_indices = @transform_1, window_bounds = array<i64: 8, 15>}, {pipeline_mode = #tpu.pipeline_mode<synchronous>, transform_indices = @transform_2, window_bounds = array<i64: 8, 15>}, {pipeline_mode = #tpu.pipeline_mode<synchronous>, transform_indices = @transform_3, window_bounds = array<i64: 1, 2>}, {pipeline_mode = #tpu.pipeline_mode<synchronous>, transform_indices = @transform_4, window_bounds = array<i64: 1, 1>}, {pipeline_mode = #tpu.pipeline_mode<synchronous>, transform_indices = @transform_5, window_bounds = array<i64: 32, 8>}, {pipeline_mode = #tpu.pipeline_mode<synchronous>, transform_indices = @transform_6, window_bounds = array<i64: 32, 2>}, {pipeline_mode = #tpu.pipeline_mode<synchronous>, transform_indices = @transform_7, window_bounds = array<i64: 32, 1>}, {pipeline_mode = #tpu.pipeline_mode<synchronous>, transform_indices = @transform_8, window_bounds = array<i64: 32, 1>}, {pipeline_mode = #tpu.pipeline_mode<synchronous>, transform_indices = @transform_9, window_bounds = array<i64: 32, 1>}, {transform_indices = @transform_10, window_bounds = array<i64: 1, 32, 16>}]} {
    %c0 = arith.constant 0 : index
    %c0_0 = arith.constant 0 : index
    %c0_1 = arith.constant 0 : index
    %0 = vector.load %arg1[%c0, %c0_0, %c0_1] : memref<1x2x30xf32, #tpu.memory_space<vmem>>, vector<1x2x30xf32>
    %1 = vector.shape_cast %0 : vector<1x2x30xf32> to vector<2x30xf32>
    %c0_2 = arith.constant 0 : index
    %c0_3 = arith.constant 0 : index
    %2 = vector.load %arg2[%c0_2, %c0_3] : memref<8x15xf32, #tpu.memory_space<vmem>>, vector<8x15xf32>
    %c0_4 = arith.constant 0 : index
    %c0_5 = arith.constant 0 : index
    %3 = vector.load %arg3[%c0_4, %c0_5] : memref<8x15xf32, #tpu.memory_space<vmem>>, vector<8x15xf32>
    %c0_6 = arith.constant 0 : index
    %c0_7 = arith.constant 0 : index
    %4 = vector.load %arg4[%c0_6, %c0_7] : memref<1x2xf32, #tpu.memory_space<vmem>>, vector<1x2xf32>
    %cst = arith.constant 0.000000e+00 : f32
    %5 = vector.broadcast %cst : f32 to vector<8x16xf32>
    %c0_8 = arith.constant 0 : index
    %c0_9 = arith.constant 0 : index
    %6 = vector.load %arg5[%c0_8, %c0_9] : memref<1x1xf32, #tpu.memory_space<vmem>>, vector<1x1xf32>
    %7 = vector.broadcast %6 : vector<1x1xf32> to vector<8x16xf32>
    %8 = arith.addf %5, %7 : vector<8x16xf32>
    %cst_10 = arith.constant 0.000000e+00 : f32
    %9 = vector.broadcast %cst_10 : f32 to vector<8x16xf32>
    %cst_11 = arith.constant 0.000000e+00 : f32
    %10 = vector.broadcast %cst_11 : f32 to vector<8x16xf32>
    %11 = vector.extract_strided_slice %1 {offsets = [0, 0], sizes = [1, 16], strides = [1, 1]} : vector<2x30xf32> to vector<1x16xf32>
    %12 = vector.extract_strided_slice %2 {offsets = [0, 0], sizes = [8, 1], strides = [1, 1]} : vector<8x15xf32> to vector<8x1xf32>
    %13 = vector.broadcast %12 : vector<8x1xf32> to vector<8x16xf32>
    %14 = vector.broadcast %11 : vector<1x16xf32> to vector<8x16xf32>
    %15 = arith.mulf %13, %14 : vector<8x16xf32>
    %16 = arith.addf %9, %15 : vector<8x16xf32>
    %17 = vector.extract_strided_slice %3 {offsets = [0, 0], sizes = [8, 1], strides = [1, 1]} : vector<8x15xf32> to vector<8x1xf32>
    %18 = vector.broadcast %17 : vector<8x1xf32> to vector<8x16xf32>
    %19 = vector.broadcast %11 : vector<1x16xf32> to vector<8x16xf32>
    %20 = arith.mulf %18, %19 : vector<8x16xf32>
    %21 = arith.addf %10, %20 : vector<8x16xf32>
    %22 = vector.extract_strided_slice %1 {offsets = [0, 1], sizes = [1, 16], strides = [1, 1]} : vector<2x30xf32> to vector<1x16xf32>
    %23 = vector.extract_strided_slice %2 {offsets = [0, 1], sizes = [8, 1], strides = [1, 1]} : vector<8x15xf32> to vector<8x1xf32>
    %24 = vector.broadcast %23 : vector<8x1xf32> to vector<8x16xf32>
    %25 = vector.broadcast %22 : vector<1x16xf32> to vector<8x16xf32>
    %26 = arith.mulf %24, %25 : vector<8x16xf32>
    %27 = arith.addf %16, %26 : vector<8x16xf32>
    %28 = vector.extract_strided_slice %3 {offsets = [0, 1], sizes = [8, 1], strides = [1, 1]} : vector<8x15xf32> to vector<8x1xf32>
    %29 = vector.broadcast %28 : vector<8x1xf32> to vector<8x16xf32>
    %30 = vector.broadcast %22 : vector<1x16xf32> to vector<8x16xf32>
    %31 = arith.mulf %29, %30 : vector<8x16xf32>
    %32 = arith.addf %21, %31 : vector<8x16xf32>
    %33 = vector.extract_strided_slice %1 {offsets = [0, 2], sizes = [1, 16], strides = [1, 1]} : vector<2x30xf32> to vector<1x16xf32>
    %34 = vector.extract_strided_slice %2 {offsets = [0, 2], sizes = [8, 1], strides = [1, 1]} : vector<8x15xf32> to vector<8x1xf32>
    %35 = vector.broadcast %34 : vector<8x1xf32> to vector<8x16xf32>
    %36 = vector.broadcast %33 : vector<1x16xf32> to vector<8x16xf32>
    %37 = arith.mulf %35, %36 : vector<8x16xf32>
    %38 = arith.addf %27, %37 : vector<8x16xf32>
    %39 = vector.extract_strided_slice %3 {offsets = [0, 2], sizes = [8, 1], strides = [1, 1]} : vector<8x15xf32> to vector<8x1xf32>
    %40 = vector.broadcast %39 : vector<8x1xf32> to vector<8x16xf32>
    %41 = vector.broadcast %33 : vector<1x16xf32> to vector<8x16xf32>
    %42 = arith.mulf %40, %41 : vector<8x16xf32>
    %43 = arith.addf %32, %42 : vector<8x16xf32>
    %44 = vector.extract_strided_slice %1 {offsets = [0, 3], sizes = [1, 16], strides = [1, 1]} : vector<2x30xf32> to vector<1x16xf32>
    %45 = vector.extract_strided_slice %2 {offsets = [0, 3], sizes = [8, 1], strides = [1, 1]} : vector<8x15xf32> to vector<8x1xf32>
    %46 = vector.broadcast %45 : vector<8x1xf32> to vector<8x16xf32>
    %47 = vector.broadcast %44 : vector<1x16xf32> to vector<8x16xf32>
    %48 = arith.mulf %46, %47 : vector<8x16xf32>
    %49 = arith.addf %38, %48 : vector<8x16xf32>
    %50 = vector.extract_strided_slice %3 {offsets = [0, 3], sizes = [8, 1], strides = [1, 1]} : vector<8x15xf32> to vector<8x1xf32>
    %51 = vector.broadcast %50 : vector<8x1xf32> to vector<8x16xf32>
    %52 = vector.broadcast %44 : vector<1x16xf32> to vector<8x16xf32>
    %53 = arith.mulf %51, %52 : vector<8x16xf32>
    %54 = arith.addf %43, %53 : vector<8x16xf32>
    %55 = vector.extract_strided_slice %1 {offsets = [0, 4], sizes = [1, 16], strides = [1, 1]} : vector<2x30xf32> to vector<1x16xf32>
    %56 = vector.extract_strided_slice %2 {offsets = [0, 4], sizes = [8, 1], strides = [1, 1]} : vector<8x15xf32> to vector<8x1xf32>
    %57 = vector.broadcast %56 : vector<8x1xf32> to vector<8x16xf32>
    %58 = vector.broadcast %55 : vector<1x16xf32> to vector<8x16xf32>
    %59 = arith.mulf %57, %58 : vector<8x16xf32>
    %60 = arith.addf %49, %59 : vector<8x16xf32>
    %61 = vector.extract_strided_slice %3 {offsets = [0, 4], sizes = [8, 1], strides = [1, 1]} : vector<8x15xf32> to vector<8x1xf32>
    %62 = vector.broadcast %61 : vector<8x1xf32> to vector<8x16xf32>
    %63 = vector.broadcast %55 : vector<1x16xf32> to vector<8x16xf32>
    %64 = arith.mulf %62, %63 : vector<8x16xf32>
    %65 = arith.addf %54, %64 : vector<8x16xf32>
    %66 = vector.extract_strided_slice %1 {offsets = [0, 5], sizes = [1, 16], strides = [1, 1]} : vector<2x30xf32> to vector<1x16xf32>
    %67 = vector.extract_strided_slice %2 {offsets = [0, 5], sizes = [8, 1], strides = [1, 1]} : vector<8x15xf32> to vector<8x1xf32>
    %68 = vector.broadcast %67 : vector<8x1xf32> to vector<8x16xf32>
    %69 = vector.broadcast %66 : vector<1x16xf32> to vector<8x16xf32>
    %70 = arith.mulf %68, %69 : vector<8x16xf32>
    %71 = arith.addf %60, %70 : vector<8x16xf32>
    %72 = vector.extract_strided_slice %3 {offsets = [0, 5], sizes = [8, 1], strides = [1, 1]} : vector<8x15xf32> to vector<8x1xf32>
    %73 = vector.broadcast %72 : vector<8x1xf32> to vector<8x16xf32>
    %74 = vector.broadcast %66 : vector<1x16xf32> to vector<8x16xf32>
    %75 = arith.mulf %73, %74 : vector<8x16xf32>
    %76 = arith.addf %65, %75 : vector<8x16xf32>
    %77 = vector.extract_strided_slice %1 {offsets = [0, 6], sizes = [1, 16], strides = [1, 1]} : vector<2x30xf32> to vector<1x16xf32>
    %78 = vector.extract_strided_slice %2 {offsets = [0, 6], sizes = [8, 1], strides = [1, 1]} : vector<8x15xf32> to vector<8x1xf32>
    %79 = vector.broadcast %78 : vector<8x1xf32> to vector<8x16xf32>
    %80 = vector.broadcast %77 : vector<1x16xf32> to vector<8x16xf32>
    %81 = arith.mulf %79, %80 : vector<8x16xf32>
    %82 = arith.addf %71, %81 : vector<8x16xf32>
    %83 = vector.extract_strided_slice %3 {offsets = [0, 6], sizes = [8, 1], strides = [1, 1]} : vector<8x15xf32> to vector<8x1xf32>
    %84 = vector.broadcast %83 : vector<8x1xf32> to vector<8x16xf32>
    %85 = vector.broadcast %77 : vector<1x16xf32> to vector<8x16xf32>
    %86 = arith.mulf %84, %85 : vector<8x16xf32>
    %87 = arith.addf %76, %86 : vector<8x16xf32>
    %88 = vector.extract_strided_slice %1 {offsets = [0, 7], sizes = [1, 16], strides = [1, 1]} : vector<2x30xf32> to vector<1x16xf32>
    %89 = vector.extract_strided_slice %2 {offsets = [0, 7], sizes = [8, 1], strides = [1, 1]} : vector<8x15xf32> to vector<8x1xf32>
    %90 = vector.broadcast %89 : vector<8x1xf32> to vector<8x16xf32>
    %91 = vector.broadcast %88 : vector<1x16xf32> to vector<8x16xf32>
    %92 = arith.mulf %90, %91 : vector<8x16xf32>
    %93 = arith.addf %82, %92 : vector<8x16xf32>
    %94 = vector.extract_strided_slice %3 {offsets = [0, 7], sizes = [8, 1], strides = [1, 1]} : vector<8x15xf32> to vector<8x1xf32>
    %95 = vector.broadcast %94 : vector<8x1xf32> to vector<8x16xf32>
    %96 = vector.broadcast %88 : vector<1x16xf32> to vector<8x16xf32>
    %97 = arith.mulf %95, %96 : vector<8x16xf32>
    %98 = arith.addf %87, %97 : vector<8x16xf32>
    %99 = vector.extract_strided_slice %1 {offsets = [0, 8], sizes = [1, 16], strides = [1, 1]} : vector<2x30xf32> to vector<1x16xf32>
    %100 = vector.extract_strided_slice %2 {offsets = [0, 8], sizes = [8, 1], strides = [1, 1]} : vector<8x15xf32> to vector<8x1xf32>
    %101 = vector.broadcast %100 : vector<8x1xf32> to vector<8x16xf32>
    %102 = vector.broadcast %99 : vector<1x16xf32> to vector<8x16xf32>
    %103 = arith.mulf %101, %102 : vector<8x16xf32>
    %104 = arith.addf %93, %103 : vector<8x16xf32>
    %105 = vector.extract_strided_slice %3 {offsets = [0, 8], sizes = [8, 1], strides = [1, 1]} : vector<8x15xf32> to vector<8x1xf32>
    %106 = vector.broadcast %105 : vector<8x1xf32> to vector<8x16xf32>
    %107 = vector.broadcast %99 : vector<1x16xf32> to vector<8x16xf32>
    %108 = arith.mulf %106, %107 : vector<8x16xf32>
    %109 = arith.addf %98, %108 : vector<8x16xf32>
    %110 = vector.extract_strided_slice %1 {offsets = [0, 9], sizes = [1, 16], strides = [1, 1]} : vector<2x30xf32> to vector<1x16xf32>
    %111 = vector.extract_strided_slice %2 {offsets = [0, 9], sizes = [8, 1], strides = [1, 1]} : vector<8x15xf32> to vector<8x1xf32>
    %112 = vector.broadcast %111 : vector<8x1xf32> to vector<8x16xf32>
    %113 = vector.broadcast %110 : vector<1x16xf32> to vector<8x16xf32>
    %114 = arith.mulf %112, %113 : vector<8x16xf32>
    %115 = arith.addf %104, %114 : vector<8x16xf32>
    %116 = vector.extract_strided_slice %3 {offsets = [0, 9], sizes = [8, 1], strides = [1, 1]} : vector<8x15xf32> to vector<8x1xf32>
    %117 = vector.broadcast %116 : vector<8x1xf32> to vector<8x16xf32>
    %118 = vector.broadcast %110 : vector<1x16xf32> to vector<8x16xf32>
    %119 = arith.mulf %117, %118 : vector<8x16xf32>
    %120 = arith.addf %109, %119 : vector<8x16xf32>
    %121 = vector.extract_strided_slice %1 {offsets = [0, 10], sizes = [1, 16], strides = [1, 1]} : vector<2x30xf32> to vector<1x16xf32>
    %122 = vector.extract_strided_slice %2 {offsets = [0, 10], sizes = [8, 1], strides = [1, 1]} : vector<8x15xf32> to vector<8x1xf32>
    %123 = vector.broadcast %122 : vector<8x1xf32> to vector<8x16xf32>
    %124 = vector.broadcast %121 : vector<1x16xf32> to vector<8x16xf32>
    %125 = arith.mulf %123, %124 : vector<8x16xf32>
    %126 = arith.addf %115, %125 : vector<8x16xf32>
    %127 = vector.extract_strided_slice %3 {offsets = [0, 10], sizes = [8, 1], strides = [1, 1]} : vector<8x15xf32> to vector<8x1xf32>
    %128 = vector.broadcast %127 : vector<8x1xf32> to vector<8x16xf32>
    %129 = vector.broadcast %121 : vector<1x16xf32> to vector<8x16xf32>
    %130 = arith.mulf %128, %129 : vector<8x16xf32>
    %131 = arith.addf %120, %130 : vector<8x16xf32>
    %132 = vector.extract_strided_slice %1 {offsets = [0, 11], sizes = [1, 16], strides = [1, 1]} : vector<2x30xf32> to vector<1x16xf32>
    %133 = vector.extract_strided_slice %2 {offsets = [0, 11], sizes = [8, 1], strides = [1, 1]} : vector<8x15xf32> to vector<8x1xf32>
    %134 = vector.broadcast %133 : vector<8x1xf32> to vector<8x16xf32>
    %135 = vector.broadcast %132 : vector<1x16xf32> to vector<8x16xf32>
    %136 = arith.mulf %134, %135 : vector<8x16xf32>
    %137 = arith.addf %126, %136 : vector<8x16xf32>
    %138 = vector.extract_strided_slice %3 {offsets = [0, 11], sizes = [8, 1], strides = [1, 1]} : vector<8x15xf32> to vector<8x1xf32>
    %139 = vector.broadcast %138 : vector<8x1xf32> to vector<8x16xf32>
    %140 = vector.broadcast %132 : vector<1x16xf32> to vector<8x16xf32>
    %141 = arith.mulf %139, %140 : vector<8x16xf32>
    %142 = arith.addf %131, %141 : vector<8x16xf32>
    %143 = vector.extract_strided_slice %1 {offsets = [0, 12], sizes = [1, 16], strides = [1, 1]} : vector<2x30xf32> to vector<1x16xf32>
    %144 = vector.extract_strided_slice %2 {offsets = [0, 12], sizes = [8, 1], strides = [1, 1]} : vector<8x15xf32> to vector<8x1xf32>
    %145 = vector.broadcast %144 : vector<8x1xf32> to vector<8x16xf32>
    %146 = vector.broadcast %143 : vector<1x16xf32> to vector<8x16xf32>
    %147 = arith.mulf %145, %146 : vector<8x16xf32>
    %148 = arith.addf %137, %147 : vector<8x16xf32>
    %149 = vector.extract_strided_slice %3 {offsets = [0, 12], sizes = [8, 1], strides = [1, 1]} : vector<8x15xf32> to vector<8x1xf32>
    %150 = vector.broadcast %149 : vector<8x1xf32> to vector<8x16xf32>
    %151 = vector.broadcast %143 : vector<1x16xf32> to vector<8x16xf32>
    %152 = arith.mulf %150, %151 : vector<8x16xf32>
    %153 = arith.addf %142, %152 : vector<8x16xf32>
    %154 = vector.extract_strided_slice %1 {offsets = [0, 13], sizes = [1, 16], strides = [1, 1]} : vector<2x30xf32> to vector<1x16xf32>
    %155 = vector.extract_strided_slice %2 {offsets = [0, 13], sizes = [8, 1], strides = [1, 1]} : vector<8x15xf32> to vector<8x1xf32>
    %156 = vector.broadcast %155 : vector<8x1xf32> to vector<8x16xf32>
    %157 = vector.broadcast %154 : vector<1x16xf32> to vector<8x16xf32>
    %158 = arith.mulf %156, %157 : vector<8x16xf32>
    %159 = arith.addf %148, %158 : vector<8x16xf32>
    %160 = vector.extract_strided_slice %3 {offsets = [0, 13], sizes = [8, 1], strides = [1, 1]} : vector<8x15xf32> to vector<8x1xf32>
    %161 = vector.broadcast %160 : vector<8x1xf32> to vector<8x16xf32>
    %162 = vector.broadcast %154 : vector<1x16xf32> to vector<8x16xf32>
    %163 = arith.mulf %161, %162 : vector<8x16xf32>
    %164 = arith.addf %153, %163 : vector<8x16xf32>
    %165 = vector.extract_strided_slice %1 {offsets = [0, 14], sizes = [1, 16], strides = [1, 1]} : vector<2x30xf32> to vector<1x16xf32>
    %166 = vector.extract_strided_slice %2 {offsets = [0, 14], sizes = [8, 1], strides = [1, 1]} : vector<8x15xf32> to vector<8x1xf32>
    %167 = vector.broadcast %166 : vector<8x1xf32> to vector<8x16xf32>
    %168 = vector.broadcast %165 : vector<1x16xf32> to vector<8x16xf32>
    %169 = arith.mulf %167, %168 : vector<8x16xf32>
    %170 = arith.addf %159, %169 : vector<8x16xf32>
    %171 = vector.extract_strided_slice %3 {offsets = [0, 14], sizes = [8, 1], strides = [1, 1]} : vector<8x15xf32> to vector<8x1xf32>
    %172 = vector.broadcast %171 : vector<8x1xf32> to vector<8x16xf32>
    %173 = vector.broadcast %165 : vector<1x16xf32> to vector<8x16xf32>
    %174 = arith.mulf %172, %173 : vector<8x16xf32>
    %175 = arith.addf %164, %174 : vector<8x16xf32>
    %176 = arith.mulf %170, %170 : vector<8x16xf32>
    %177 = arith.mulf %175, %175 : vector<8x16xf32>
    %178 = arith.addf %176, %177 : vector<8x16xf32>
    %cst_12 = arith.constant 1.000000e-10 : f32
    %179 = vector.broadcast %cst_12 : f32 to vector<8x16xf32>
    %180 = arith.maximumf %178, %179 : vector<8x16xf32>
    %181 = math.log %180 : vector<8x16xf32>
    %cst_13 = arith.constant 4.34294462 : f32
    %182 = vector.broadcast %cst_13 : f32 to vector<8x16xf32>
    %183 = arith.mulf %182, %181 : vector<8x16xf32>
    %184 = vector.shape_cast %183 : vector<8x16xf32> to vector<1x8x16xf32>
    %cst_14 = arith.constant dense<0xFF800000> : vector<1xf32>
    %185 = vector.multi_reduction <maximumf>, %184, %cst_14 [1, 2] : vector<1x8x16xf32> to vector<1xf32>
    %186 = vector.shape_cast %185 : vector<1xf32> to vector<1x1x1xf32>
    %187 = vector.extract %186[0, 0, 0] : f32 from vector<1x1x1xf32>
    %cst_15 = arith.constant 8.000000e+01 : f32
    %188 = arith.subf %187, %cst_15 : f32
    %189 = vector.broadcast %188 : f32 to vector<8x16xf32>
    %190 = arith.maximumf %183, %189 : vector<8x16xf32>
    %191 = vector.shape_cast %190 : vector<8x16xf32> to vector<1x8x16xf32>
    %cst_16 = arith.constant dense<0x7F800000> : vector<1xf32>
    %192 = vector.multi_reduction <minimumf>, %191, %cst_16 [1, 2] : vector<1x8x16xf32> to vector<1xf32>
    %193 = vector.shape_cast %192 : vector<1xf32> to vector<1x1x1xf32>
    %194 = vector.extract %193[0, 0, 0] : f32 from vector<1x1x1xf32>
    %195 = vector.broadcast %194 : f32 to vector<8x16xf32>
    %196 = arith.subf %190, %195 : vector<8x16xf32>
    %197 = arith.subf %187, %194 : f32
    %cst_17 = arith.constant 9.99999993E-9 : f32
    %198 = arith.addf %197, %cst_17 : f32
    %199 = vector.broadcast %198 : f32 to vector<8x16xf32>
    %200 = arith.divf %196, %199 : vector<8x16xf32>
    %201 = vector.extract_strided_slice %4 {offsets = [0, 0], sizes = [1, 1], strides = [1, 1]} : vector<1x2xf32> to vector<1x1xf32>
    %202 = vector.broadcast %201 : vector<1x1xf32> to vector<8x16xf32>
    %203 = arith.mulf %202, %200 : vector<8x16xf32>
    %204 = arith.addf %8, %203 : vector<8x16xf32>
    %cst_18 = arith.constant 0.000000e+00 : f32
    %205 = vector.broadcast %cst_18 : f32 to vector<8x16xf32>
    %cst_19 = arith.constant 0.000000e+00 : f32
    %206 = vector.broadcast %cst_19 : f32 to vector<8x16xf32>
    %207 = vector.extract_strided_slice %1 {offsets = [1, 0], sizes = [1, 16], strides = [1, 1]} : vector<2x30xf32> to vector<1x16xf32>
    %208 = vector.extract_strided_slice %2 {offsets = [0, 0], sizes = [8, 1], strides = [1, 1]} : vector<8x15xf32> to vector<8x1xf32>
    %209 = vector.broadcast %208 : vector<8x1xf32> to vector<8x16xf32>
    %210 = vector.broadcast %207 : vector<1x16xf32> to vector<8x16xf32>
    %211 = arith.mulf %209, %210 : vector<8x16xf32>
    %212 = arith.addf %205, %211 : vector<8x16xf32>
    %213 = vector.extract_strided_slice %3 {offsets = [0, 0], sizes = [8, 1], strides = [1, 1]} : vector<8x15xf32> to vector<8x1xf32>
    %214 = vector.broadcast %213 : vector<8x1xf32> to vector<8x16xf32>
    %215 = vector.broadcast %207 : vector<1x16xf32> to vector<8x16xf32>
    %216 = arith.mulf %214, %215 : vector<8x16xf32>
    %217 = arith.addf %206, %216 : vector<8x16xf32>
    %218 = vector.extract_strided_slice %1 {offsets = [1, 1], sizes = [1, 16], strides = [1, 1]} : vector<2x30xf32> to vector<1x16xf32>
    %219 = vector.extract_strided_slice %2 {offsets = [0, 1], sizes = [8, 1], strides = [1, 1]} : vector<8x15xf32> to vector<8x1xf32>
    %220 = vector.broadcast %219 : vector<8x1xf32> to vector<8x16xf32>
    %221 = vector.broadcast %218 : vector<1x16xf32> to vector<8x16xf32>
    %222 = arith.mulf %220, %221 : vector<8x16xf32>
    %223 = arith.addf %212, %222 : vector<8x16xf32>
    %224 = vector.extract_strided_slice %3 {offsets = [0, 1], sizes = [8, 1], strides = [1, 1]} : vector<8x15xf32> to vector<8x1xf32>
    %225 = vector.broadcast %224 : vector<8x1xf32> to vector<8x16xf32>
    %226 = vector.broadcast %218 : vector<1x16xf32> to vector<8x16xf32>
    %227 = arith.mulf %225, %226 : vector<8x16xf32>
    %228 = arith.addf %217, %227 : vector<8x16xf32>
    %229 = vector.extract_strided_slice %1 {offsets = [1, 2], sizes = [1, 16], strides = [1, 1]} : vector<2x30xf32> to vector<1x16xf32>
    %230 = vector.extract_strided_slice %2 {offsets = [0, 2], sizes = [8, 1], strides = [1, 1]} : vector<8x15xf32> to vector<8x1xf32>
    %231 = vector.broadcast %230 : vector<8x1xf32> to vector<8x16xf32>
    %232 = vector.broadcast %229 : vector<1x16xf32> to vector<8x16xf32>
    %233 = arith.mulf %231, %232 : vector<8x16xf32>
    %234 = arith.addf %223, %233 : vector<8x16xf32>
    %235 = vector.extract_strided_slice %3 {offsets = [0, 2], sizes = [8, 1], strides = [1, 1]} : vector<8x15xf32> to vector<8x1xf32>
    %236 = vector.broadcast %235 : vector<8x1xf32> to vector<8x16xf32>
    %237 = vector.broadcast %229 : vector<1x16xf32> to vector<8x16xf32>
    %238 = arith.mulf %236, %237 : vector<8x16xf32>
    %239 = arith.addf %228, %238 : vector<8x16xf32>
    %240 = vector.extract_strided_slice %1 {offsets = [1, 3], sizes = [1, 16], strides = [1, 1]} : vector<2x30xf32> to vector<1x16xf32>
    %241 = vector.extract_strided_slice %2 {offsets = [0, 3], sizes = [8, 1], strides = [1, 1]} : vector<8x15xf32> to vector<8x1xf32>
    %242 = vector.broadcast %241 : vector<8x1xf32> to vector<8x16xf32>
    %243 = vector.broadcast %240 : vector<1x16xf32> to vector<8x16xf32>
    %244 = arith.mulf %242, %243 : vector<8x16xf32>
    %245 = arith.addf %234, %244 : vector<8x16xf32>
    %246 = vector.extract_strided_slice %3 {offsets = [0, 3], sizes = [8, 1], strides = [1, 1]} : vector<8x15xf32> to vector<8x1xf32>
    %247 = vector.broadcast %246 : vector<8x1xf32> to vector<8x16xf32>
    %248 = vector.broadcast %240 : vector<1x16xf32> to vector<8x16xf32>
    %249 = arith.mulf %247, %248 : vector<8x16xf32>
    %250 = arith.addf %239, %249 : vector<8x16xf32>
    %251 = vector.extract_strided_slice %1 {offsets = [1, 4], sizes = [1, 16], strides = [1, 1]} : vector<2x30xf32> to vector<1x16xf32>
    %252 = vector.extract_strided_slice %2 {offsets = [0, 4], sizes = [8, 1], strides = [1, 1]} : vector<8x15xf32> to vector<8x1xf32>
    %253 = vector.broadcast %252 : vector<8x1xf32> to vector<8x16xf32>
    %254 = vector.broadcast %251 : vector<1x16xf32> to vector<8x16xf32>
    %255 = arith.mulf %253, %254 : vector<8x16xf32>
    %256 = arith.addf %245, %255 : vector<8x16xf32>
    %257 = vector.extract_strided_slice %3 {offsets = [0, 4], sizes = [8, 1], strides = [1, 1]} : vector<8x15xf32> to vector<8x1xf32>
    %258 = vector.broadcast %257 : vector<8x1xf32> to vector<8x16xf32>
    %259 = vector.broadcast %251 : vector<1x16xf32> to vector<8x16xf32>
    %260 = arith.mulf %258, %259 : vector<8x16xf32>
    %261 = arith.addf %250, %260 : vector<8x16xf32>
    %262 = vector.extract_strided_slice %1 {offsets = [1, 5], sizes = [1, 16], strides = [1, 1]} : vector<2x30xf32> to vector<1x16xf32>
    %263 = vector.extract_strided_slice %2 {offsets = [0, 5], sizes = [8, 1], strides = [1, 1]} : vector<8x15xf32> to vector<8x1xf32>
    %264 = vector.broadcast %263 : vector<8x1xf32> to vector<8x16xf32>
    %265 = vector.broadcast %262 : vector<1x16xf32> to vector<8x16xf32>
    %266 = arith.mulf %264, %265 : vector<8x16xf32>
    %267 = arith.addf %256, %266 : vector<8x16xf32>
    %268 = vector.extract_strided_slice %3 {offsets = [0, 5], sizes = [8, 1], strides = [1, 1]} : vector<8x15xf32> to vector<8x1xf32>
    %269 = vector.broadcast %268 : vector<8x1xf32> to vector<8x16xf32>
    %270 = vector.broadcast %262 : vector<1x16xf32> to vector<8x16xf32>
    %271 = arith.mulf %269, %270 : vector<8x16xf32>
    %272 = arith.addf %261, %271 : vector<8x16xf32>
    %273 = vector.extract_strided_slice %1 {offsets = [1, 6], sizes = [1, 16], strides = [1, 1]} : vector<2x30xf32> to vector<1x16xf32>
    %274 = vector.extract_strided_slice %2 {offsets = [0, 6], sizes = [8, 1], strides = [1, 1]} : vector<8x15xf32> to vector<8x1xf32>
    %275 = vector.broadcast %274 : vector<8x1xf32> to vector<8x16xf32>
    %276 = vector.broadcast %273 : vector<1x16xf32> to vector<8x16xf32>
    %277 = arith.mulf %275, %276 : vector<8x16xf32>
    %278 = arith.addf %267, %277 : vector<8x16xf32>
    %279 = vector.extract_strided_slice %3 {offsets = [0, 6], sizes = [8, 1], strides = [1, 1]} : vector<8x15xf32> to vector<8x1xf32>
    %280 = vector.broadcast %279 : vector<8x1xf32> to vector<8x16xf32>
    %281 = vector.broadcast %273 : vector<1x16xf32> to vector<8x16xf32>
    %282 = arith.mulf %280, %281 : vector<8x16xf32>
    %283 = arith.addf %272, %282 : vector<8x16xf32>
    %284 = vector.extract_strided_slice %1 {offsets = [1, 7], sizes = [1, 16], strides = [1, 1]} : vector<2x30xf32> to vector<1x16xf32>
    %285 = vector.extract_strided_slice %2 {offsets = [0, 7], sizes = [8, 1], strides = [1, 1]} : vector<8x15xf32> to vector<8x1xf32>
    %286 = vector.broadcast %285 : vector<8x1xf32> to vector<8x16xf32>
    %287 = vector.broadcast %284 : vector<1x16xf32> to vector<8x16xf32>
    %288 = arith.mulf %286, %287 : vector<8x16xf32>
    %289 = arith.addf %278, %288 : vector<8x16xf32>
    %290 = vector.extract_strided_slice %3 {offsets = [0, 7], sizes = [8, 1], strides = [1, 1]} : vector<8x15xf32> to vector<8x1xf32>
    %291 = vector.broadcast %290 : vector<8x1xf32> to vector<8x16xf32>
    %292 = vector.broadcast %284 : vector<1x16xf32> to vector<8x16xf32>
    %293 = arith.mulf %291, %292 : vector<8x16xf32>
    %294 = arith.addf %283, %293 : vector<8x16xf32>
    %295 = vector.extract_strided_slice %1 {offsets = [1, 8], sizes = [1, 16], strides = [1, 1]} : vector<2x30xf32> to vector<1x16xf32>
    %296 = vector.extract_strided_slice %2 {offsets = [0, 8], sizes = [8, 1], strides = [1, 1]} : vector<8x15xf32> to vector<8x1xf32>
    %297 = vector.broadcast %296 : vector<8x1xf32> to vector<8x16xf32>
    %298 = vector.broadcast %295 : vector<1x16xf32> to vector<8x16xf32>
    %299 = arith.mulf %297, %298 : vector<8x16xf32>
    %300 = arith.addf %289, %299 : vector<8x16xf32>
    %301 = vector.extract_strided_slice %3 {offsets = [0, 8], sizes = [8, 1], strides = [1, 1]} : vector<8x15xf32> to vector<8x1xf32>
    %302 = vector.broadcast %301 : vector<8x1xf32> to vector<8x16xf32>
    %303 = vector.broadcast %295 : vector<1x16xf32> to vector<8x16xf32>
    %304 = arith.mulf %302, %303 : vector<8x16xf32>
    %305 = arith.addf %294, %304 : vector<8x16xf32>
    %306 = vector.extract_strided_slice %1 {offsets = [1, 9], sizes = [1, 16], strides = [1, 1]} : vector<2x30xf32> to vector<1x16xf32>
    %307 = vector.extract_strided_slice %2 {offsets = [0, 9], sizes = [8, 1], strides = [1, 1]} : vector<8x15xf32> to vector<8x1xf32>
    %308 = vector.broadcast %307 : vector<8x1xf32> to vector<8x16xf32>
    %309 = vector.broadcast %306 : vector<1x16xf32> to vector<8x16xf32>
    %310 = arith.mulf %308, %309 : vector<8x16xf32>
    %311 = arith.addf %300, %310 : vector<8x16xf32>
    %312 = vector.extract_strided_slice %3 {offsets = [0, 9], sizes = [8, 1], strides = [1, 1]} : vector<8x15xf32> to vector<8x1xf32>
    %313 = vector.broadcast %312 : vector<8x1xf32> to vector<8x16xf32>
    %314 = vector.broadcast %306 : vector<1x16xf32> to vector<8x16xf32>
    %315 = arith.mulf %313, %314 : vector<8x16xf32>
    %316 = arith.addf %305, %315 : vector<8x16xf32>
    %317 = vector.extract_strided_slice %1 {offsets = [1, 10], sizes = [1, 16], strides = [1, 1]} : vector<2x30xf32> to vector<1x16xf32>
    %318 = vector.extract_strided_slice %2 {offsets = [0, 10], sizes = [8, 1], strides = [1, 1]} : vector<8x15xf32> to vector<8x1xf32>
    %319 = vector.broadcast %318 : vector<8x1xf32> to vector<8x16xf32>
    %320 = vector.broadcast %317 : vector<1x16xf32> to vector<8x16xf32>
    %321 = arith.mulf %319, %320 : vector<8x16xf32>
    %322 = arith.addf %311, %321 : vector<8x16xf32>
    %323 = vector.extract_strided_slice %3 {offsets = [0, 10], sizes = [8, 1], strides = [1, 1]} : vector<8x15xf32> to vector<8x1xf32>
    %324 = vector.broadcast %323 : vector<8x1xf32> to vector<8x16xf32>
    %325 = vector.broadcast %317 : vector<1x16xf32> to vector<8x16xf32>
    %326 = arith.mulf %324, %325 : vector<8x16xf32>
    %327 = arith.addf %316, %326 : vector<8x16xf32>
    %328 = vector.extract_strided_slice %1 {offsets = [1, 11], sizes = [1, 16], strides = [1, 1]} : vector<2x30xf32> to vector<1x16xf32>
    %329 = vector.extract_strided_slice %2 {offsets = [0, 11], sizes = [8, 1], strides = [1, 1]} : vector<8x15xf32> to vector<8x1xf32>
    %330 = vector.broadcast %329 : vector<8x1xf32> to vector<8x16xf32>
    %331 = vector.broadcast %328 : vector<1x16xf32> to vector<8x16xf32>
    %332 = arith.mulf %330, %331 : vector<8x16xf32>
    %333 = arith.addf %322, %332 : vector<8x16xf32>
    %334 = vector.extract_strided_slice %3 {offsets = [0, 11], sizes = [8, 1], strides = [1, 1]} : vector<8x15xf32> to vector<8x1xf32>
    %335 = vector.broadcast %334 : vector<8x1xf32> to vector<8x16xf32>
    %336 = vector.broadcast %328 : vector<1x16xf32> to vector<8x16xf32>
    %337 = arith.mulf %335, %336 : vector<8x16xf32>
    %338 = arith.addf %327, %337 : vector<8x16xf32>
    %339 = vector.extract_strided_slice %1 {offsets = [1, 12], sizes = [1, 16], strides = [1, 1]} : vector<2x30xf32> to vector<1x16xf32>
    %340 = vector.extract_strided_slice %2 {offsets = [0, 12], sizes = [8, 1], strides = [1, 1]} : vector<8x15xf32> to vector<8x1xf32>
    %341 = vector.broadcast %340 : vector<8x1xf32> to vector<8x16xf32>
    %342 = vector.broadcast %339 : vector<1x16xf32> to vector<8x16xf32>
    %343 = arith.mulf %341, %342 : vector<8x16xf32>
    %344 = arith.addf %333, %343 : vector<8x16xf32>
    %345 = vector.extract_strided_slice %3 {offsets = [0, 12], sizes = [8, 1], strides = [1, 1]} : vector<8x15xf32> to vector<8x1xf32>
    %346 = vector.broadcast %345 : vector<8x1xf32> to vector<8x16xf32>
    %347 = vector.broadcast %339 : vector<1x16xf32> to vector<8x16xf32>
    %348 = arith.mulf %346, %347 : vector<8x16xf32>
    %349 = arith.addf %338, %348 : vector<8x16xf32>
    %350 = vector.extract_strided_slice %1 {offsets = [1, 13], sizes = [1, 16], strides = [1, 1]} : vector<2x30xf32> to vector<1x16xf32>
    %351 = vector.extract_strided_slice %2 {offsets = [0, 13], sizes = [8, 1], strides = [1, 1]} : vector<8x15xf32> to vector<8x1xf32>
    %352 = vector.broadcast %351 : vector<8x1xf32> to vector<8x16xf32>
    %353 = vector.broadcast %350 : vector<1x16xf32> to vector<8x16xf32>
    %354 = arith.mulf %352, %353 : vector<8x16xf32>
    %355 = arith.addf %344, %354 : vector<8x16xf32>
    %356 = vector.extract_strided_slice %3 {offsets = [0, 13], sizes = [8, 1], strides = [1, 1]} : vector<8x15xf32> to vector<8x1xf32>
    %357 = vector.broadcast %356 : vector<8x1xf32> to vector<8x16xf32>
    %358 = vector.broadcast %350 : vector<1x16xf32> to vector<8x16xf32>
    %359 = arith.mulf %357, %358 : vector<8x16xf32>
    %360 = arith.addf %349, %359 : vector<8x16xf32>
    %361 = vector.extract_strided_slice %1 {offsets = [1, 14], sizes = [1, 16], strides = [1, 1]} : vector<2x30xf32> to vector<1x16xf32>
    %362 = vector.extract_strided_slice %2 {offsets = [0, 14], sizes = [8, 1], strides = [1, 1]} : vector<8x15xf32> to vector<8x1xf32>
    %363 = vector.broadcast %362 : vector<8x1xf32> to vector<8x16xf32>
    %364 = vector.broadcast %361 : vector<1x16xf32> to vector<8x16xf32>
    %365 = arith.mulf %363, %364 : vector<8x16xf32>
    %366 = arith.addf %355, %365 : vector<8x16xf32>
    %367 = vector.extract_strided_slice %3 {offsets = [0, 14], sizes = [8, 1], strides = [1, 1]} : vector<8x15xf32> to vector<8x1xf32>
    %368 = vector.broadcast %367 : vector<8x1xf32> to vector<8x16xf32>
    %369 = vector.broadcast %361 : vector<1x16xf32> to vector<8x16xf32>
    %370 = arith.mulf %368, %369 : vector<8x16xf32>
    %371 = arith.addf %360, %370 : vector<8x16xf32>
    %372 = arith.mulf %366, %366 : vector<8x16xf32>
    %373 = arith.mulf %371, %371 : vector<8x16xf32>
    %374 = arith.addf %372, %373 : vector<8x16xf32>
    %cst_20 = arith.constant 1.000000e-10 : f32
    %375 = vector.broadcast %cst_20 : f32 to vector<8x16xf32>
    %376 = arith.maximumf %374, %375 : vector<8x16xf32>
    %377 = math.log %376 : vector<8x16xf32>
    %cst_21 = arith.constant 4.34294462 : f32
    %378 = vector.broadcast %cst_21 : f32 to vector<8x16xf32>
    %379 = arith.mulf %378, %377 : vector<8x16xf32>
    %380 = vector.shape_cast %379 : vector<8x16xf32> to vector<1x8x16xf32>
    %cst_22 = arith.constant dense<0xFF800000> : vector<1xf32>
    %381 = vector.multi_reduction <maximumf>, %380, %cst_22 [1, 2] : vector<1x8x16xf32> to vector<1xf32>
    %382 = vector.shape_cast %381 : vector<1xf32> to vector<1x1x1xf32>
    %383 = vector.extract %382[0, 0, 0] : f32 from vector<1x1x1xf32>
    %cst_23 = arith.constant 8.000000e+01 : f32
    %384 = arith.subf %383, %cst_23 : f32
    %385 = vector.broadcast %384 : f32 to vector<8x16xf32>
    %386 = arith.maximumf %379, %385 : vector<8x16xf32>
    %387 = vector.shape_cast %386 : vector<8x16xf32> to vector<1x8x16xf32>
    %cst_24 = arith.constant dense<0x7F800000> : vector<1xf32>
    %388 = vector.multi_reduction <minimumf>, %387, %cst_24 [1, 2] : vector<1x8x16xf32> to vector<1xf32>
    %389 = vector.shape_cast %388 : vector<1xf32> to vector<1x1x1xf32>
    %390 = vector.extract %389[0, 0, 0] : f32 from vector<1x1x1xf32>
    %391 = vector.broadcast %390 : f32 to vector<8x16xf32>
    %392 = arith.subf %386, %391 : vector<8x16xf32>
    %393 = arith.subf %383, %390 : f32
    %cst_25 = arith.constant 9.99999993E-9 : f32
    %394 = arith.addf %393, %cst_25 : f32
    %395 = vector.broadcast %394 : f32 to vector<8x16xf32>
    %396 = arith.divf %392, %395 : vector<8x16xf32>
    %397 = vector.extract_strided_slice %4 {offsets = [0, 1], sizes = [1, 1], strides = [1, 1]} : vector<1x2xf32> to vector<1x1xf32>
    %398 = vector.broadcast %397 : vector<1x1xf32> to vector<8x16xf32>
    %399 = arith.mulf %398, %396 : vector<8x16xf32>
    %400 = arith.addf %204, %399 : vector<8x16xf32>
    %401 = vector.extract_strided_slice %1 {offsets = [0, 7], sizes = [2, 16], strides = [1, 1]} : vector<2x30xf32> to vector<2x16xf32>
    %c0_26 = arith.constant 0 : index
    %c0_27 = arith.constant 0 : index
    %402 = vector.load %arg6[%c0_26, %c0_27] : memref<32x8xf32, #tpu.memory_space<vmem>>, vector<32x8xf32>
    %cst_28 = arith.constant dense<0.000000e+00> : vector<32x16xf32>
    %403 = tpu.matmul %402, %400, %cst_28 {dimension_numbers = #tpu.dot_dimension_numbers<[1], [0], [0], [1], [0, 0, 1, 1], [], []>} : vector<32x8xf32>, vector<8x16xf32>, vector<32x16xf32> -> vector<32x16xf32>
    %c0_29 = arith.constant 0 : index
    %c0_30 = arith.constant 0 : index
    %404 = vector.load %arg8[%c0_29, %c0_30] : memref<32x1xf32, #tpu.memory_space<vmem>>, vector<32x1xf32>
    %405 = vector.broadcast %404 : vector<32x1xf32> to vector<32x16xf32>
    %406 = arith.addf %403, %405 : vector<32x16xf32>
    %c0_31 = arith.constant 0 : index
    %c0_32 = arith.constant 0 : index
    %407 = vector.load %arg7[%c0_31, %c0_32] : memref<32x2xf32, #tpu.memory_space<vmem>>, vector<32x2xf32>
    %408 = vector.extract_strided_slice %407 {offsets = [0, 0], sizes = [32, 1], strides = [1, 1]} : vector<32x2xf32> to vector<32x1xf32>
    %409 = vector.extract_strided_slice %401 {offsets = [0, 0], sizes = [1, 16], strides = [1, 1]} : vector<2x16xf32> to vector<1x16xf32>
    %410 = vector.broadcast %408 : vector<32x1xf32> to vector<32x16xf32>
    %411 = vector.broadcast %409 : vector<1x16xf32> to vector<32x16xf32>
    %412 = arith.mulf %410, %411 : vector<32x16xf32>
    %413 = arith.addf %406, %412 : vector<32x16xf32>
    %414 = vector.extract_strided_slice %407 {offsets = [0, 1], sizes = [32, 1], strides = [1, 1]} : vector<32x2xf32> to vector<32x1xf32>
    %415 = vector.extract_strided_slice %401 {offsets = [1, 0], sizes = [1, 16], strides = [1, 1]} : vector<2x16xf32> to vector<1x16xf32>
    %416 = vector.broadcast %414 : vector<32x1xf32> to vector<32x16xf32>
    %417 = vector.broadcast %415 : vector<1x16xf32> to vector<32x16xf32>
    %418 = arith.mulf %416, %417 : vector<32x16xf32>
    %419 = arith.addf %413, %418 : vector<32x16xf32>
    %cst_33 = arith.constant 1.000000e+00 : f32
    %420 = vector.broadcast %cst_33 : f32 to vector<1x32xf32>
    %cst_34 = arith.constant dense<0.000000e+00> : vector<1x16xf32>
    %421 = tpu.matmul %420, %419, %cst_34 {dimension_numbers = #tpu.dot_dimension_numbers<[1], [0], [0], [1], [0, 0, 1, 1], [], []>} : vector<1x32xf32>, vector<32x16xf32>, vector<1x16xf32> -> vector<1x16xf32>
    %cst_35 = arith.constant 3.200000e+01 : f32
    %422 = vector.broadcast %cst_35 : f32 to vector<1x16xf32>
    %423 = arith.divf %421, %422 : vector<1x16xf32>
    %424 = vector.broadcast %423 : vector<1x16xf32> to vector<32x16xf32>
    %425 = arith.subf %419, %424 : vector<32x16xf32>
    %426 = arith.mulf %425, %425 : vector<32x16xf32>
    %cst_36 = arith.constant dense<0.000000e+00> : vector<1x16xf32>
    %427 = tpu.matmul %420, %426, %cst_36 {dimension_numbers = #tpu.dot_dimension_numbers<[1], [0], [0], [1], [0, 0, 1, 1], [], []>} : vector<1x32xf32>, vector<32x16xf32>, vector<1x16xf32> -> vector<1x16xf32>
    %cst_37 = arith.constant 3.200000e+01 : f32
    %428 = vector.broadcast %cst_37 : f32 to vector<1x16xf32>
    %429 = arith.divf %427, %428 : vector<1x16xf32>
    %cst_38 = arith.constant 9.99999974E-6 : f32
    %430 = vector.broadcast %cst_38 : f32 to vector<1x16xf32>
    %431 = arith.addf %429, %430 : vector<1x16xf32>
    %432 = math.rsqrt %431 : vector<1x16xf32>
    %433 = vector.broadcast %432 : vector<1x16xf32> to vector<32x16xf32>
    %434 = arith.mulf %425, %433 : vector<32x16xf32>
    %c0_39 = arith.constant 0 : index
    %c0_40 = arith.constant 0 : index
    %435 = vector.load %arg9[%c0_39, %c0_40] : memref<32x1xf32, #tpu.memory_space<vmem>>, vector<32x1xf32>
    %436 = vector.broadcast %435 : vector<32x1xf32> to vector<32x16xf32>
    %437 = arith.mulf %434, %436 : vector<32x16xf32>
    %c0_41 = arith.constant 0 : index
    %c0_42 = arith.constant 0 : index
    %438 = vector.load %arg10[%c0_41, %c0_42] : memref<32x1xf32, #tpu.memory_space<vmem>>, vector<32x1xf32>
    %439 = vector.broadcast %438 : vector<32x1xf32> to vector<32x16xf32>
    %440 = arith.addf %437, %439 : vector<32x16xf32>
    %cst_43 = arith.constant 0.000000e+00 : f32
    %441 = vector.broadcast %cst_43 : f32 to vector<32x16xf32>
    %442 = arith.maximumf %440, %441 : vector<32x16xf32>
    %c0_44 = arith.constant 0 : index
    %c0_45 = arith.constant 0 : index
    %c0_46 = arith.constant 0 : index
    %443 = vector.load %arg11[%c0_44, %c0_45, %c0_46] : memref<1x32x16xf32, #tpu.memory_space<vmem>>, vector<1x32x16xf32>
    %444 = vector.shape_cast %443 : vector<1x32x16xf32> to vector<32x16xf32>
    %445 = vector.shape_cast %442 : vector<32x16xf32> to vector<1x32x16xf32>
    tpu.vector_store %arg11[%c0_44, %c0_45, %c0_46], %445 {strides = array<i32>} : memref<1x32x16xf32, #tpu.memory_space<vmem>>, vector<1x32x16xf32>,
    return
  }
  func.func @transform_0(%arg0: i32) -> (i32, i32, i32) {
    %c0_i32 = arith.constant 0 : i32
    %c0_i32_0 = arith.constant 0 : i32
    %c0_i32_1 = arith.constant 0 : i32
    return %arg0, %c0_i32, %c0_i32_0 : i32, i32, i32
  }
  func.func @transform_1(%arg0: i32) -> (i32, i32) {
    %c0_i32 = arith.constant 0 : i32
    %c0_i32_0 = arith.constant 0 : i32
    %c0_i32_1 = arith.constant 0 : i32
    return %c0_i32, %c0_i32_0 : i32, i32
  }
  func.func @transform_2(%arg0: i32) -> (i32, i32) {
    %c0_i32 = arith.constant 0 : i32
    %c0_i32_0 = arith.constant 0 : i32
    %c0_i32_1 = arith.constant 0 : i32
    return %c0_i32, %c0_i32_0 : i32, i32
  }
  func.func @transform_3(%arg0: i32) -> (i32, i32) {
    %c0_i32 = arith.constant 0 : i32
    %c0_i32_0 = arith.constant 0 : i32
    %c0_i32_1 = arith.constant 0 : i32
    return %c0_i32, %c0_i32_0 : i32, i32
  }
  func.func @transform_4(%arg0: i32) -> (i32, i32) {
    %c0_i32 = arith.constant 0 : i32
    %c0_i32_0 = arith.constant 0 : i32
    %c0_i32_1 = arith.constant 0 : i32
    return %c0_i32, %c0_i32_0 : i32, i32
  }
  func.func @transform_5(%arg0: i32) -> (i32, i32) {
    %c0_i32 = arith.constant 0 : i32
    %c0_i32_0 = arith.constant 0 : i32
    %c0_i32_1 = arith.constant 0 : i32
    return %c0_i32, %c0_i32_0 : i32, i32
  }
  func.func @transform_6(%arg0: i32) -> (i32, i32) {
    %c0_i32 = arith.constant 0 : i32
    %c0_i32_0 = arith.constant 0 : i32
    %c0_i32_1 = arith.constant 0 : i32
    return %c0_i32, %c0_i32_0 : i32, i32
  }
  func.func @transform_7(%arg0: i32) -> (i32, i32) {
    %c0_i32 = arith.constant 0 : i32
    %c0_i32_0 = arith.constant 0 : i32
    %c0_i32_1 = arith.constant 0 : i32
    return %c0_i32, %c0_i32_0 : i32, i32
  }
  func.func @transform_8(%arg0: i32) -> (i32, i32) {
    %c0_i32 = arith.constant 0 : i32
    %c0_i32_0 = arith.constant 0 : i32
    %c0_i32_1 = arith.constant 0 : i32
    return %c0_i32, %c0_i32_0 : i32, i32
  }
  func.func @transform_9(%arg0: i32) -> (i32, i32) {
    %c0_i32 = arith.constant 0 : i32
    %c0_i32_0 = arith.constant 0 : i32
    %c0_i32_1 = arith.constant 0 : i32
    return %c0_i32, %c0_i32_0 : i32, i32
  }
  func.func @transform_10(%arg0: i32) -> (i32, i32, i32) {
    %c0_i32 = arith.constant 0 : i32
    %c0_i32_0 = arith.constant 0 : i32
    %c0_i32_1 = arith.constant 0 : i32
    return %arg0, %c0_i32, %c0_i32_0 : i32, i32, i32
  }
}

module attributes {stable_mosaic.version = 11 : i64} {
  func.func @_gru_scan_kernel(%arg0: i32, %arg1: i32, %arg2: i32, %arg3: memref<1x16x32xf32, #tpu.memory_space<vmem>>, %arg4: memref<1x32x96xbf16, #tpu.memory_space<vmem>>, %arg5: memref<1x1x96xf32, #tpu.memory_space<vmem>>, %arg6: memref<1x32x96xbf16, #tpu.memory_space<vmem>>, %arg7: memref<1x1x32xf32, #tpu.memory_space<vmem>>, %arg8: memref<1x1x16x32xf32, #tpu.memory_space<vmem>>, %arg9: memref<1x32xf32, #tpu.memory_space<vmem>>, %arg10: memref<16x96xf32, #tpu.memory_space<vmem>>) attributes {dimension_semantics = [#tpu.dimension_semantics<parallel>, #tpu.dimension_semantics<parallel>, #tpu.dimension_semantics<arbitrary>], iteration_bounds = array<i64: 2, 2, 1>, scalar_prefetch = 0 : i64, scratch_operands = 2 : i64, tpu.core_type = #tpu.core_type<tc>, window_params = [{transform_indices = @transform_0, window_bounds = array<i64: 1, 16, 32>}, {transform_indices = @transform_1, window_bounds = array<i64: 1, 32, 96>}, {transform_indices = @transform_2, window_bounds = array<i64: 1, 1, 96>}, {transform_indices = @transform_3, window_bounds = array<i64: 1, 32, 96>}, {transform_indices = @transform_4, window_bounds = array<i64: 1, 1, 32>}, {transform_indices = @transform_5, window_bounds = array<i64: 1, 1, 16, 32>}]} {
    %c0_i32 = arith.constant 0 : i32
    %0 = arith.cmpi eq, %arg2, %c0_i32 : i32
    %1 = arith.extui %0 : i1 to i32
    %c0_i32_0 = arith.constant 0 : i32
    %2 = arith.cmpi ne, %1, %c0_i32_0 : i32
    scf.if %2 {
      %cst_166 = arith.constant 0.000000e+00 : f32
      %548 = vector.broadcast %cst_166 : f32 to vector<1x32xf32>
      %c0_167 = arith.constant 0 : index
      %c0_168 = arith.constant 0 : index
      %549 = vector.load %arg9[%c0_167, %c0_168] : memref<1x32xf32, #tpu.memory_space<vmem>>, vector<1x32xf32>
      tpu.vector_store %arg9[%c0_167, %c0_168], %548 {strides = array<i32>} : memref<1x32xf32, #tpu.memory_space<vmem>>, vector<1x32xf32>,
    } else {
    }
    %c0 = arith.constant 0 : index
    %c0_1 = arith.constant 0 : index
    %c0_2 = arith.constant 0 : index
    %3 = vector.load %arg3[%c0, %c0_1, %c0_2] : memref<1x16x32xf32, #tpu.memory_space<vmem>>, vector<1x16x32xf32>
    %4 = vector.shape_cast %3 : vector<1x16x32xf32> to vector<16x32xf32>
    %5 = arith.truncf %4 : vector<16x32xf32> to vector<16x32xbf16>
    %c0_3 = arith.constant 0 : index
    %c0_4 = arith.constant 0 : index
    %c0_5 = arith.constant 0 : index
    %6 = vector.load %arg4[%c0_3, %c0_4, %c0_5] : memref<1x32x96xbf16, #tpu.memory_space<vmem>>, vector<1x32x96xbf16>
    %7 = vector.shape_cast %6 : vector<1x32x96xbf16> to vector<32x96xbf16>
    %cst = arith.constant dense<0.000000e+00> : vector<16x96xf32>
    %8 = tpu.matmul %5, %7, %cst {dimension_numbers = #tpu.dot_dimension_numbers<[1], [0], [0], [1], [0, 0, 1, 1], [], []>} : vector<16x32xbf16>, vector<32x96xbf16>, vector<16x96xf32> -> vector<16x96xf32>
    %c0_6 = arith.constant 0 : index
    %c0_7 = arith.constant 0 : index
    %c0_8 = arith.constant 0 : index
    %9 = vector.load %arg5[%c0_6, %c0_7, %c0_8] : memref<1x1x96xf32, #tpu.memory_space<vmem>>, vector<1x1x96xf32>
    %10 = vector.shape_cast %9 : vector<1x1x96xf32> to vector<1x96xf32>
    %11 = vector.broadcast %10 : vector<1x96xf32> to vector<16x96xf32>
    %12 = arith.addf %8, %11 : vector<16x96xf32>
    %c0_9 = arith.constant 0 : index
    %c0_10 = arith.constant 0 : index
    %13 = vector.load %arg10[%c0_9, %c0_10] : memref<16x96xf32, #tpu.memory_space<vmem>>, vector<16x96xf32>
    tpu.vector_store %arg10[%c0_9, %c0_10], %12 {strides = array<i32>} : memref<16x96xf32, #tpu.memory_space<vmem>>, vector<16x96xf32>,
    %c0_11 = arith.constant 0 : index
    %c0_12 = arith.constant 0 : index
    %c0_13 = arith.constant 0 : index
    %14 = vector.load %arg6[%c0_11, %c0_12, %c0_13] : memref<1x32x96xbf16, #tpu.memory_space<vmem>>, vector<1x32x96xbf16>
    %15 = vector.shape_cast %14 : vector<1x32x96xbf16> to vector<32x96xbf16>
    %c0_14 = arith.constant 0 : index
    %c0_15 = arith.constant 0 : index
    %c0_16 = arith.constant 0 : index
    %16 = vector.load %arg7[%c0_14, %c0_15, %c0_16] : memref<1x1x32xf32, #tpu.memory_space<vmem>>, vector<1x1x32xf32>
    %17 = vector.shape_cast %16 : vector<1x1x32xf32> to vector<1x32xf32>
    %c0_17 = arith.constant 0 : index
    %c0_18 = arith.constant 0 : index
    %18 = vector.load %arg9[%c0_17, %c0_18] : memref<1x32xf32, #tpu.memory_space<vmem>>, vector<1x32xf32>
    %c1_i32 = arith.constant 1 : i32
    %19 = arith.subi %c1_i32, %arg0 : i32
    %c0_i32_19 = arith.constant 0 : i32
    %20 = arith.muli %19, %c0_i32_19 : i32
    %c15_i32 = arith.constant 15 : i32
    %21 = arith.muli %arg0, %c15_i32 : i32
    %22 = arith.addi %20, %21 : i32
    %23 = arith.index_cast %22 : i32 to index
    %c0_20 = arith.constant 0 : index
    %24 = vector.load %arg10[%23, %c0_20] : memref<16x96xf32, #tpu.memory_space<vmem>>, vector<1x96xf32>
    %25 = arith.truncf %18 : vector<1x32xf32> to vector<1x32xbf16>
    %cst_21 = arith.constant dense<0.000000e+00> : vector<1x96xf32>
    %26 = tpu.matmul %25, %15, %cst_21 {dimension_numbers = #tpu.dot_dimension_numbers<[1], [0], [0], [1], [0, 0, 1, 1], [], []>} : vector<1x32xbf16>, vector<32x96xbf16>, vector<1x96xf32> -> vector<1x96xf32>
    %27 = vector.extract_strided_slice %24 {offsets = [0, 0], sizes = [1, 64], strides = [1, 1]} : vector<1x96xf32> to vector<1x64xf32>
    %28 = vector.extract_strided_slice %26 {offsets = [0, 0], sizes = [1, 64], strides = [1, 1]} : vector<1x96xf32> to vector<1x64xf32>
    %29 = arith.addf %27, %28 : vector<1x64xf32>
    %30 = arith.negf %29 : vector<1x64xf32>
    %31 = math.exp %30 : vector<1x64xf32>
    %cst_22 = arith.constant 1.000000e+00 : f32
    %32 = vector.broadcast %cst_22 : f32 to vector<1x64xf32>
    %33 = arith.addf %32, %31 : vector<1x64xf32>
    %34 = arith.divf %32, %33 : vector<1x64xf32>
    %35 = vector.extract_strided_slice %34 {offsets = [0, 0], sizes = [1, 32], strides = [1, 1]} : vector<1x64xf32> to vector<1x32xf32>
    %36 = vector.extract_strided_slice %34 {offsets = [0, 32], sizes = [1, 32], strides = [1, 1]} : vector<1x64xf32> to vector<1x32xf32>
    %37 = vector.extract_strided_slice %24 {offsets = [0, 64], sizes = [1, 32], strides = [1, 1]} : vector<1x96xf32> to vector<1x32xf32>
    %38 = vector.extract_strided_slice %26 {offsets = [0, 64], sizes = [1, 32], strides = [1, 1]} : vector<1x96xf32> to vector<1x32xf32>
    %39 = arith.addf %38, %17 : vector<1x32xf32>
    %40 = arith.mulf %35, %39 : vector<1x32xf32>
    %41 = arith.addf %37, %40 : vector<1x32xf32>
    %42 = math.tanh %41 : vector<1x32xf32>
    %cst_23 = arith.constant 1.000000e+00 : f32
    %43 = vector.broadcast %cst_23 : f32 to vector<1x32xf32>
    %44 = arith.subf %43, %36 : vector<1x32xf32>
    %45 = arith.mulf %44, %42 : vector<1x32xf32>
    %46 = arith.mulf %36, %18 : vector<1x32xf32>
    %47 = arith.addf %45, %46 : vector<1x32xf32>
    %c0_24 = arith.constant 0 : index
    %c0_25 = arith.constant 0 : index
    %48 = arith.index_cast %22 : i32 to index
    %c0_26 = arith.constant 0 : index
    %49 = vector.load %arg8[%c0_24, %c0_25, %48, %c0_26] : memref<1x1x16x32xf32, #tpu.memory_space<vmem>>, vector<1x1x1x32xf32>
    %50 = vector.shape_cast %49 : vector<1x1x1x32xf32> to vector<1x32xf32>
    %51 = vector.shape_cast %47 : vector<1x32xf32> to vector<1x1x1x32xf32>
    tpu.vector_store %arg8[%c0_24, %c0_25, %48, %c0_26], %51 {strides = array<i32>} : memref<1x1x16x32xf32, #tpu.memory_space<vmem>>, vector<1x1x1x32xf32>,
    %c1_i32_27 = arith.constant 1 : i32
    %52 = arith.subi %c1_i32_27, %arg0 : i32
    %c1_i32_28 = arith.constant 1 : i32
    %53 = arith.muli %52, %c1_i32_28 : i32
    %c14_i32 = arith.constant 14 : i32
    %54 = arith.muli %arg0, %c14_i32 : i32
    %55 = arith.addi %53, %54 : i32
    %56 = arith.index_cast %55 : i32 to index
    %c0_29 = arith.constant 0 : index
    %57 = vector.load %arg10[%56, %c0_29] : memref<16x96xf32, #tpu.memory_space<vmem>>, vector<1x96xf32>
    %58 = arith.truncf %47 : vector<1x32xf32> to vector<1x32xbf16>
    %cst_30 = arith.constant dense<0.000000e+00> : vector<1x96xf32>
    %59 = tpu.matmul %58, %15, %cst_30 {dimension_numbers = #tpu.dot_dimension_numbers<[1], [0], [0], [1], [0, 0, 1, 1], [], []>} : vector<1x32xbf16>, vector<32x96xbf16>, vector<1x96xf32> -> vector<1x96xf32>
    %60 = vector.extract_strided_slice %57 {offsets = [0, 0], sizes = [1, 64], strides = [1, 1]} : vector<1x96xf32> to vector<1x64xf32>
    %61 = vector.extract_strided_slice %59 {offsets = [0, 0], sizes = [1, 64], strides = [1, 1]} : vector<1x96xf32> to vector<1x64xf32>
    %62 = arith.addf %60, %61 : vector<1x64xf32>
    %63 = arith.negf %62 : vector<1x64xf32>
    %64 = math.exp %63 : vector<1x64xf32>
    %cst_31 = arith.constant 1.000000e+00 : f32
    %65 = vector.broadcast %cst_31 : f32 to vector<1x64xf32>
    %66 = arith.addf %65, %64 : vector<1x64xf32>
    %67 = arith.divf %65, %66 : vector<1x64xf32>
    %68 = vector.extract_strided_slice %67 {offsets = [0, 0], sizes = [1, 32], strides = [1, 1]} : vector<1x64xf32> to vector<1x32xf32>
    %69 = vector.extract_strided_slice %67 {offsets = [0, 32], sizes = [1, 32], strides = [1, 1]} : vector<1x64xf32> to vector<1x32xf32>
    %70 = vector.extract_strided_slice %57 {offsets = [0, 64], sizes = [1, 32], strides = [1, 1]} : vector<1x96xf32> to vector<1x32xf32>
    %71 = vector.extract_strided_slice %59 {offsets = [0, 64], sizes = [1, 32], strides = [1, 1]} : vector<1x96xf32> to vector<1x32xf32>
    %72 = arith.addf %71, %17 : vector<1x32xf32>
    %73 = arith.mulf %68, %72 : vector<1x32xf32>
    %74 = arith.addf %70, %73 : vector<1x32xf32>
    %75 = math.tanh %74 : vector<1x32xf32>
    %cst_32 = arith.constant 1.000000e+00 : f32
    %76 = vector.broadcast %cst_32 : f32 to vector<1x32xf32>
    %77 = arith.subf %76, %69 : vector<1x32xf32>
    %78 = arith.mulf %77, %75 : vector<1x32xf32>
    %79 = arith.mulf %69, %47 : vector<1x32xf32>
    %80 = arith.addf %78, %79 : vector<1x32xf32>
    %c0_33 = arith.constant 0 : index
    %c0_34 = arith.constant 0 : index
    %81 = arith.index_cast %55 : i32 to index
    %c0_35 = arith.constant 0 : index
    %82 = vector.load %arg8[%c0_33, %c0_34, %81, %c0_35] : memref<1x1x16x32xf32, #tpu.memory_space<vmem>>, vector<1x1x1x32xf32>
    %83 = vector.shape_cast %82 : vector<1x1x1x32xf32> to vector<1x32xf32>
    %84 = vector.shape_cast %80 : vector<1x32xf32> to vector<1x1x1x32xf32>
    tpu.vector_store %arg8[%c0_33, %c0_34, %81, %c0_35], %84 {strides = array<i32>} : memref<1x1x16x32xf32, #tpu.memory_space<vmem>>, vector<1x1x1x32xf32>,
    %c1_i32_36 = arith.constant 1 : i32
    %85 = arith.subi %c1_i32_36, %arg0 : i32
    %c2_i32 = arith.constant 2 : i32
    %86 = arith.muli %85, %c2_i32 : i32
    %c13_i32 = arith.constant 13 : i32
    %87 = arith.muli %arg0, %c13_i32 : i32
    %88 = arith.addi %86, %87 : i32
    %89 = arith.index_cast %88 : i32 to index
    %c0_37 = arith.constant 0 : index
    %90 = vector.load %arg10[%89, %c0_37] : memref<16x96xf32, #tpu.memory_space<vmem>>, vector<1x96xf32>
    %91 = arith.truncf %80 : vector<1x32xf32> to vector<1x32xbf16>
    %cst_38 = arith.constant dense<0.000000e+00> : vector<1x96xf32>
    %92 = tpu.matmul %91, %15, %cst_38 {dimension_numbers = #tpu.dot_dimension_numbers<[1], [0], [0], [1], [0, 0, 1, 1], [], []>} : vector<1x32xbf16>, vector<32x96xbf16>, vector<1x96xf32> -> vector<1x96xf32>
    %93 = vector.extract_strided_slice %90 {offsets = [0, 0], sizes = [1, 64], strides = [1, 1]} : vector<1x96xf32> to vector<1x64xf32>
    %94 = vector.extract_strided_slice %92 {offsets = [0, 0], sizes = [1, 64], strides = [1, 1]} : vector<1x96xf32> to vector<1x64xf32>
    %95 = arith.addf %93, %94 : vector<1x64xf32>
    %96 = arith.negf %95 : vector<1x64xf32>
    %97 = math.exp %96 : vector<1x64xf32>
    %cst_39 = arith.constant 1.000000e+00 : f32
    %98 = vector.broadcast %cst_39 : f32 to vector<1x64xf32>
    %99 = arith.addf %98, %97 : vector<1x64xf32>
    %100 = arith.divf %98, %99 : vector<1x64xf32>
    %101 = vector.extract_strided_slice %100 {offsets = [0, 0], sizes = [1, 32], strides = [1, 1]} : vector<1x64xf32> to vector<1x32xf32>
    %102 = vector.extract_strided_slice %100 {offsets = [0, 32], sizes = [1, 32], strides = [1, 1]} : vector<1x64xf32> to vector<1x32xf32>
    %103 = vector.extract_strided_slice %90 {offsets = [0, 64], sizes = [1, 32], strides = [1, 1]} : vector<1x96xf32> to vector<1x32xf32>
    %104 = vector.extract_strided_slice %92 {offsets = [0, 64], sizes = [1, 32], strides = [1, 1]} : vector<1x96xf32> to vector<1x32xf32>
    %105 = arith.addf %104, %17 : vector<1x32xf32>
    %106 = arith.mulf %101, %105 : vector<1x32xf32>
    %107 = arith.addf %103, %106 : vector<1x32xf32>
    %108 = math.tanh %107 : vector<1x32xf32>
    %cst_40 = arith.constant 1.000000e+00 : f32
    %109 = vector.broadcast %cst_40 : f32 to vector<1x32xf32>
    %110 = arith.subf %109, %102 : vector<1x32xf32>
    %111 = arith.mulf %110, %108 : vector<1x32xf32>
    %112 = arith.mulf %102, %80 : vector<1x32xf32>
    %113 = arith.addf %111, %112 : vector<1x32xf32>
    %c0_41 = arith.constant 0 : index
    %c0_42 = arith.constant 0 : index
    %114 = arith.index_cast %88 : i32 to index
    %c0_43 = arith.constant 0 : index
    %115 = vector.load %arg8[%c0_41, %c0_42, %114, %c0_43] : memref<1x1x16x32xf32, #tpu.memory_space<vmem>>, vector<1x1x1x32xf32>
    %116 = vector.shape_cast %115 : vector<1x1x1x32xf32> to vector<1x32xf32>
    %117 = vector.shape_cast %113 : vector<1x32xf32> to vector<1x1x1x32xf32>
    tpu.vector_store %arg8[%c0_41, %c0_42, %114, %c0_43], %117 {strides = array<i32>} : memref<1x1x16x32xf32, #tpu.memory_space<vmem>>, vector<1x1x1x32xf32>,
    %c1_i32_44 = arith.constant 1 : i32
    %118 = arith.subi %c1_i32_44, %arg0 : i32
    %c3_i32 = arith.constant 3 : i32
    %119 = arith.muli %118, %c3_i32 : i32
    %c12_i32 = arith.constant 12 : i32
    %120 = arith.muli %arg0, %c12_i32 : i32
    %121 = arith.addi %119, %120 : i32
    %122 = arith.index_cast %121 : i32 to index
    %c0_45 = arith.constant 0 : index
    %123 = vector.load %arg10[%122, %c0_45] : memref<16x96xf32, #tpu.memory_space<vmem>>, vector<1x96xf32>
    %124 = arith.truncf %113 : vector<1x32xf32> to vector<1x32xbf16>
    %cst_46 = arith.constant dense<0.000000e+00> : vector<1x96xf32>
    %125 = tpu.matmul %124, %15, %cst_46 {dimension_numbers = #tpu.dot_dimension_numbers<[1], [0], [0], [1], [0, 0, 1, 1], [], []>} : vector<1x32xbf16>, vector<32x96xbf16>, vector<1x96xf32> -> vector<1x96xf32>
    %126 = vector.extract_strided_slice %123 {offsets = [0, 0], sizes = [1, 64], strides = [1, 1]} : vector<1x96xf32> to vector<1x64xf32>
    %127 = vector.extract_strided_slice %125 {offsets = [0, 0], sizes = [1, 64], strides = [1, 1]} : vector<1x96xf32> to vector<1x64xf32>
    %128 = arith.addf %126, %127 : vector<1x64xf32>
    %129 = arith.negf %128 : vector<1x64xf32>
    %130 = math.exp %129 : vector<1x64xf32>
    %cst_47 = arith.constant 1.000000e+00 : f32
    %131 = vector.broadcast %cst_47 : f32 to vector<1x64xf32>
    %132 = arith.addf %131, %130 : vector<1x64xf32>
    %133 = arith.divf %131, %132 : vector<1x64xf32>
    %134 = vector.extract_strided_slice %133 {offsets = [0, 0], sizes = [1, 32], strides = [1, 1]} : vector<1x64xf32> to vector<1x32xf32>
    %135 = vector.extract_strided_slice %133 {offsets = [0, 32], sizes = [1, 32], strides = [1, 1]} : vector<1x64xf32> to vector<1x32xf32>
    %136 = vector.extract_strided_slice %123 {offsets = [0, 64], sizes = [1, 32], strides = [1, 1]} : vector<1x96xf32> to vector<1x32xf32>
    %137 = vector.extract_strided_slice %125 {offsets = [0, 64], sizes = [1, 32], strides = [1, 1]} : vector<1x96xf32> to vector<1x32xf32>
    %138 = arith.addf %137, %17 : vector<1x32xf32>
    %139 = arith.mulf %134, %138 : vector<1x32xf32>
    %140 = arith.addf %136, %139 : vector<1x32xf32>
    %141 = math.tanh %140 : vector<1x32xf32>
    %cst_48 = arith.constant 1.000000e+00 : f32
    %142 = vector.broadcast %cst_48 : f32 to vector<1x32xf32>
    %143 = arith.subf %142, %135 : vector<1x32xf32>
    %144 = arith.mulf %143, %141 : vector<1x32xf32>
    %145 = arith.mulf %135, %113 : vector<1x32xf32>
    %146 = arith.addf %144, %145 : vector<1x32xf32>
    %c0_49 = arith.constant 0 : index
    %c0_50 = arith.constant 0 : index
    %147 = arith.index_cast %121 : i32 to index
    %c0_51 = arith.constant 0 : index
    %148 = vector.load %arg8[%c0_49, %c0_50, %147, %c0_51] : memref<1x1x16x32xf32, #tpu.memory_space<vmem>>, vector<1x1x1x32xf32>
    %149 = vector.shape_cast %148 : vector<1x1x1x32xf32> to vector<1x32xf32>
    %150 = vector.shape_cast %146 : vector<1x32xf32> to vector<1x1x1x32xf32>
    tpu.vector_store %arg8[%c0_49, %c0_50, %147, %c0_51], %150 {strides = array<i32>} : memref<1x1x16x32xf32, #tpu.memory_space<vmem>>, vector<1x1x1x32xf32>,
    %c1_i32_52 = arith.constant 1 : i32
    %151 = arith.subi %c1_i32_52, %arg0 : i32
    %c4_i32 = arith.constant 4 : i32
    %152 = arith.muli %151, %c4_i32 : i32
    %c11_i32 = arith.constant 11 : i32
    %153 = arith.muli %arg0, %c11_i32 : i32
    %154 = arith.addi %152, %153 : i32
    %155 = arith.index_cast %154 : i32 to index
    %c0_53 = arith.constant 0 : index
    %156 = vector.load %arg10[%155, %c0_53] : memref<16x96xf32, #tpu.memory_space<vmem>>, vector<1x96xf32>
    %157 = arith.truncf %146 : vector<1x32xf32> to vector<1x32xbf16>
    %cst_54 = arith.constant dense<0.000000e+00> : vector<1x96xf32>
    %158 = tpu.matmul %157, %15, %cst_54 {dimension_numbers = #tpu.dot_dimension_numbers<[1], [0], [0], [1], [0, 0, 1, 1], [], []>} : vector<1x32xbf16>, vector<32x96xbf16>, vector<1x96xf32> -> vector<1x96xf32>
    %159 = vector.extract_strided_slice %156 {offsets = [0, 0], sizes = [1, 64], strides = [1, 1]} : vector<1x96xf32> to vector<1x64xf32>
    %160 = vector.extract_strided_slice %158 {offsets = [0, 0], sizes = [1, 64], strides = [1, 1]} : vector<1x96xf32> to vector<1x64xf32>
    %161 = arith.addf %159, %160 : vector<1x64xf32>
    %162 = arith.negf %161 : vector<1x64xf32>
    %163 = math.exp %162 : vector<1x64xf32>
    %cst_55 = arith.constant 1.000000e+00 : f32
    %164 = vector.broadcast %cst_55 : f32 to vector<1x64xf32>
    %165 = arith.addf %164, %163 : vector<1x64xf32>
    %166 = arith.divf %164, %165 : vector<1x64xf32>
    %167 = vector.extract_strided_slice %166 {offsets = [0, 0], sizes = [1, 32], strides = [1, 1]} : vector<1x64xf32> to vector<1x32xf32>
    %168 = vector.extract_strided_slice %166 {offsets = [0, 32], sizes = [1, 32], strides = [1, 1]} : vector<1x64xf32> to vector<1x32xf32>
    %169 = vector.extract_strided_slice %156 {offsets = [0, 64], sizes = [1, 32], strides = [1, 1]} : vector<1x96xf32> to vector<1x32xf32>
    %170 = vector.extract_strided_slice %158 {offsets = [0, 64], sizes = [1, 32], strides = [1, 1]} : vector<1x96xf32> to vector<1x32xf32>
    %171 = arith.addf %170, %17 : vector<1x32xf32>
    %172 = arith.mulf %167, %171 : vector<1x32xf32>
    %173 = arith.addf %169, %172 : vector<1x32xf32>
    %174 = math.tanh %173 : vector<1x32xf32>
    %cst_56 = arith.constant 1.000000e+00 : f32
    %175 = vector.broadcast %cst_56 : f32 to vector<1x32xf32>
    %176 = arith.subf %175, %168 : vector<1x32xf32>
    %177 = arith.mulf %176, %174 : vector<1x32xf32>
    %178 = arith.mulf %168, %146 : vector<1x32xf32>
    %179 = arith.addf %177, %178 : vector<1x32xf32>
    %c0_57 = arith.constant 0 : index
    %c0_58 = arith.constant 0 : index
    %180 = arith.index_cast %154 : i32 to index
    %c0_59 = arith.constant 0 : index
    %181 = vector.load %arg8[%c0_57, %c0_58, %180, %c0_59] : memref<1x1x16x32xf32, #tpu.memory_space<vmem>>, vector<1x1x1x32xf32>
    %182 = vector.shape_cast %181 : vector<1x1x1x32xf32> to vector<1x32xf32>
    %183 = vector.shape_cast %179 : vector<1x32xf32> to vector<1x1x1x32xf32>
    tpu.vector_store %arg8[%c0_57, %c0_58, %180, %c0_59], %183 {strides = array<i32>} : memref<1x1x16x32xf32, #tpu.memory_space<vmem>>, vector<1x1x1x32xf32>,
    %c1_i32_60 = arith.constant 1 : i32
    %184 = arith.subi %c1_i32_60, %arg0 : i32
    %c5_i32 = arith.constant 5 : i32
    %185 = arith.muli %184, %c5_i32 : i32
    %c10_i32 = arith.constant 10 : i32
    %186 = arith.muli %arg0, %c10_i32 : i32
    %187 = arith.addi %185, %186 : i32
    %188 = arith.index_cast %187 : i32 to index
    %c0_61 = arith.constant 0 : index
    %189 = vector.load %arg10[%188, %c0_61] : memref<16x96xf32, #tpu.memory_space<vmem>>, vector<1x96xf32>
    %190 = arith.truncf %179 : vector<1x32xf32> to vector<1x32xbf16>
    %cst_62 = arith.constant dense<0.000000e+00> : vector<1x96xf32>
    %191 = tpu.matmul %190, %15, %cst_62 {dimension_numbers = #tpu.dot_dimension_numbers<[1], [0], [0], [1], [0, 0, 1, 1], [], []>} : vector<1x32xbf16>, vector<32x96xbf16>, vector<1x96xf32> -> vector<1x96xf32>
    %192 = vector.extract_strided_slice %189 {offsets = [0, 0], sizes = [1, 64], strides = [1, 1]} : vector<1x96xf32> to vector<1x64xf32>
    %193 = vector.extract_strided_slice %191 {offsets = [0, 0], sizes = [1, 64], strides = [1, 1]} : vector<1x96xf32> to vector<1x64xf32>
    %194 = arith.addf %192, %193 : vector<1x64xf32>
    %195 = arith.negf %194 : vector<1x64xf32>
    %196 = math.exp %195 : vector<1x64xf32>
    %cst_63 = arith.constant 1.000000e+00 : f32
    %197 = vector.broadcast %cst_63 : f32 to vector<1x64xf32>
    %198 = arith.addf %197, %196 : vector<1x64xf32>
    %199 = arith.divf %197, %198 : vector<1x64xf32>
    %200 = vector.extract_strided_slice %199 {offsets = [0, 0], sizes = [1, 32], strides = [1, 1]} : vector<1x64xf32> to vector<1x32xf32>
    %201 = vector.extract_strided_slice %199 {offsets = [0, 32], sizes = [1, 32], strides = [1, 1]} : vector<1x64xf32> to vector<1x32xf32>
    %202 = vector.extract_strided_slice %189 {offsets = [0, 64], sizes = [1, 32], strides = [1, 1]} : vector<1x96xf32> to vector<1x32xf32>
    %203 = vector.extract_strided_slice %191 {offsets = [0, 64], sizes = [1, 32], strides = [1, 1]} : vector<1x96xf32> to vector<1x32xf32>
    %204 = arith.addf %203, %17 : vector<1x32xf32>
    %205 = arith.mulf %200, %204 : vector<1x32xf32>
    %206 = arith.addf %202, %205 : vector<1x32xf32>
    %207 = math.tanh %206 : vector<1x32xf32>
    %cst_64 = arith.constant 1.000000e+00 : f32
    %208 = vector.broadcast %cst_64 : f32 to vector<1x32xf32>
    %209 = arith.subf %208, %201 : vector<1x32xf32>
    %210 = arith.mulf %209, %207 : vector<1x32xf32>
    %211 = arith.mulf %201, %179 : vector<1x32xf32>
    %212 = arith.addf %210, %211 : vector<1x32xf32>
    %c0_65 = arith.constant 0 : index
    %c0_66 = arith.constant 0 : index
    %213 = arith.index_cast %187 : i32 to index
    %c0_67 = arith.constant 0 : index
    %214 = vector.load %arg8[%c0_65, %c0_66, %213, %c0_67] : memref<1x1x16x32xf32, #tpu.memory_space<vmem>>, vector<1x1x1x32xf32>
    %215 = vector.shape_cast %214 : vector<1x1x1x32xf32> to vector<1x32xf32>
    %216 = vector.shape_cast %212 : vector<1x32xf32> to vector<1x1x1x32xf32>
    tpu.vector_store %arg8[%c0_65, %c0_66, %213, %c0_67], %216 {strides = array<i32>} : memref<1x1x16x32xf32, #tpu.memory_space<vmem>>, vector<1x1x1x32xf32>,
    %c1_i32_68 = arith.constant 1 : i32
    %217 = arith.subi %c1_i32_68, %arg0 : i32
    %c6_i32 = arith.constant 6 : i32
    %218 = arith.muli %217, %c6_i32 : i32
    %c9_i32 = arith.constant 9 : i32
    %219 = arith.muli %arg0, %c9_i32 : i32
    %220 = arith.addi %218, %219 : i32
    %221 = arith.index_cast %220 : i32 to index
    %c0_69 = arith.constant 0 : index
    %222 = vector.load %arg10[%221, %c0_69] : memref<16x96xf32, #tpu.memory_space<vmem>>, vector<1x96xf32>
    %223 = arith.truncf %212 : vector<1x32xf32> to vector<1x32xbf16>
    %cst_70 = arith.constant dense<0.000000e+00> : vector<1x96xf32>
    %224 = tpu.matmul %223, %15, %cst_70 {dimension_numbers = #tpu.dot_dimension_numbers<[1], [0], [0], [1], [0, 0, 1, 1], [], []>} : vector<1x32xbf16>, vector<32x96xbf16>, vector<1x96xf32> -> vector<1x96xf32>
    %225 = vector.extract_strided_slice %222 {offsets = [0, 0], sizes = [1, 64], strides = [1, 1]} : vector<1x96xf32> to vector<1x64xf32>
    %226 = vector.extract_strided_slice %224 {offsets = [0, 0], sizes = [1, 64], strides = [1, 1]} : vector<1x96xf32> to vector<1x64xf32>
    %227 = arith.addf %225, %226 : vector<1x64xf32>
    %228 = arith.negf %227 : vector<1x64xf32>
    %229 = math.exp %228 : vector<1x64xf32>
    %cst_71 = arith.constant 1.000000e+00 : f32
    %230 = vector.broadcast %cst_71 : f32 to vector<1x64xf32>
    %231 = arith.addf %230, %229 : vector<1x64xf32>
    %232 = arith.divf %230, %231 : vector<1x64xf32>
    %233 = vector.extract_strided_slice %232 {offsets = [0, 0], sizes = [1, 32], strides = [1, 1]} : vector<1x64xf32> to vector<1x32xf32>
    %234 = vector.extract_strided_slice %232 {offsets = [0, 32], sizes = [1, 32], strides = [1, 1]} : vector<1x64xf32> to vector<1x32xf32>
    %235 = vector.extract_strided_slice %222 {offsets = [0, 64], sizes = [1, 32], strides = [1, 1]} : vector<1x96xf32> to vector<1x32xf32>
    %236 = vector.extract_strided_slice %224 {offsets = [0, 64], sizes = [1, 32], strides = [1, 1]} : vector<1x96xf32> to vector<1x32xf32>
    %237 = arith.addf %236, %17 : vector<1x32xf32>
    %238 = arith.mulf %233, %237 : vector<1x32xf32>
    %239 = arith.addf %235, %238 : vector<1x32xf32>
    %240 = math.tanh %239 : vector<1x32xf32>
    %cst_72 = arith.constant 1.000000e+00 : f32
    %241 = vector.broadcast %cst_72 : f32 to vector<1x32xf32>
    %242 = arith.subf %241, %234 : vector<1x32xf32>
    %243 = arith.mulf %242, %240 : vector<1x32xf32>
    %244 = arith.mulf %234, %212 : vector<1x32xf32>
    %245 = arith.addf %243, %244 : vector<1x32xf32>
    %c0_73 = arith.constant 0 : index
    %c0_74 = arith.constant 0 : index
    %246 = arith.index_cast %220 : i32 to index
    %c0_75 = arith.constant 0 : index
    %247 = vector.load %arg8[%c0_73, %c0_74, %246, %c0_75] : memref<1x1x16x32xf32, #tpu.memory_space<vmem>>, vector<1x1x1x32xf32>
    %248 = vector.shape_cast %247 : vector<1x1x1x32xf32> to vector<1x32xf32>
    %249 = vector.shape_cast %245 : vector<1x32xf32> to vector<1x1x1x32xf32>
    tpu.vector_store %arg8[%c0_73, %c0_74, %246, %c0_75], %249 {strides = array<i32>} : memref<1x1x16x32xf32, #tpu.memory_space<vmem>>, vector<1x1x1x32xf32>,
    %c1_i32_76 = arith.constant 1 : i32
    %250 = arith.subi %c1_i32_76, %arg0 : i32
    %c7_i32 = arith.constant 7 : i32
    %251 = arith.muli %250, %c7_i32 : i32
    %c8_i32 = arith.constant 8 : i32
    %252 = arith.muli %arg0, %c8_i32 : i32
    %253 = arith.addi %251, %252 : i32
    %254 = arith.index_cast %253 : i32 to index
    %c0_77 = arith.constant 0 : index
    %255 = vector.load %arg10[%254, %c0_77] : memref<16x96xf32, #tpu.memory_space<vmem>>, vector<1x96xf32>
    %256 = arith.truncf %245 : vector<1x32xf32> to vector<1x32xbf16>
    %cst_78 = arith.constant dense<0.000000e+00> : vector<1x96xf32>
    %257 = tpu.matmul %256, %15, %cst_78 {dimension_numbers = #tpu.dot_dimension_numbers<[1], [0], [0], [1], [0, 0, 1, 1], [], []>} : vector<1x32xbf16>, vector<32x96xbf16>, vector<1x96xf32> -> vector<1x96xf32>
    %258 = vector.extract_strided_slice %255 {offsets = [0, 0], sizes = [1, 64], strides = [1, 1]} : vector<1x96xf32> to vector<1x64xf32>
    %259 = vector.extract_strided_slice %257 {offsets = [0, 0], sizes = [1, 64], strides = [1, 1]} : vector<1x96xf32> to vector<1x64xf32>
    %260 = arith.addf %258, %259 : vector<1x64xf32>
    %261 = arith.negf %260 : vector<1x64xf32>
    %262 = math.exp %261 : vector<1x64xf32>
    %cst_79 = arith.constant 1.000000e+00 : f32
    %263 = vector.broadcast %cst_79 : f32 to vector<1x64xf32>
    %264 = arith.addf %263, %262 : vector<1x64xf32>
    %265 = arith.divf %263, %264 : vector<1x64xf32>
    %266 = vector.extract_strided_slice %265 {offsets = [0, 0], sizes = [1, 32], strides = [1, 1]} : vector<1x64xf32> to vector<1x32xf32>
    %267 = vector.extract_strided_slice %265 {offsets = [0, 32], sizes = [1, 32], strides = [1, 1]} : vector<1x64xf32> to vector<1x32xf32>
    %268 = vector.extract_strided_slice %255 {offsets = [0, 64], sizes = [1, 32], strides = [1, 1]} : vector<1x96xf32> to vector<1x32xf32>
    %269 = vector.extract_strided_slice %257 {offsets = [0, 64], sizes = [1, 32], strides = [1, 1]} : vector<1x96xf32> to vector<1x32xf32>
    %270 = arith.addf %269, %17 : vector<1x32xf32>
    %271 = arith.mulf %266, %270 : vector<1x32xf32>
    %272 = arith.addf %268, %271 : vector<1x32xf32>
    %273 = math.tanh %272 : vector<1x32xf32>
    %cst_80 = arith.constant 1.000000e+00 : f32
    %274 = vector.broadcast %cst_80 : f32 to vector<1x32xf32>
    %275 = arith.subf %274, %267 : vector<1x32xf32>
    %276 = arith.mulf %275, %273 : vector<1x32xf32>
    %277 = arith.mulf %267, %245 : vector<1x32xf32>
    %278 = arith.addf %276, %277 : vector<1x32xf32>
    %c0_81 = arith.constant 0 : index
    %c0_82 = arith.constant 0 : index
    %279 = arith.index_cast %253 : i32 to index
    %c0_83 = arith.constant 0 : index
    %280 = vector.load %arg8[%c0_81, %c0_82, %279, %c0_83] : memref<1x1x16x32xf32, #tpu.memory_space<vmem>>, vector<1x1x1x32xf32>
    %281 = vector.shape_cast %280 : vector<1x1x1x32xf32> to vector<1x32xf32>
    %282 = vector.shape_cast %278 : vector<1x32xf32> to vector<1x1x1x32xf32>
    tpu.vector_store %arg8[%c0_81, %c0_82, %279, %c0_83], %282 {strides = array<i32>} : memref<1x1x16x32xf32, #tpu.memory_space<vmem>>, vector<1x1x1x32xf32>,
    %c1_i32_84 = arith.constant 1 : i32
    %283 = arith.subi %c1_i32_84, %arg0 : i32
    %c8_i32_85 = arith.constant 8 : i32
    %284 = arith.muli %283, %c8_i32_85 : i32
    %c7_i32_86 = arith.constant 7 : i32
    %285 = arith.muli %arg0, %c7_i32_86 : i32
    %286 = arith.addi %284, %285 : i32
    %287 = arith.index_cast %286 : i32 to index
    %c0_87 = arith.constant 0 : index
    %288 = vector.load %arg10[%287, %c0_87] : memref<16x96xf32, #tpu.memory_space<vmem>>, vector<1x96xf32>
    %289 = arith.truncf %278 : vector<1x32xf32> to vector<1x32xbf16>
    %cst_88 = arith.constant dense<0.000000e+00> : vector<1x96xf32>
    %290 = tpu.matmul %289, %15, %cst_88 {dimension_numbers = #tpu.dot_dimension_numbers<[1], [0], [0], [1], [0, 0, 1, 1], [], []>} : vector<1x32xbf16>, vector<32x96xbf16>, vector<1x96xf32> -> vector<1x96xf32>
    %291 = vector.extract_strided_slice %288 {offsets = [0, 0], sizes = [1, 64], strides = [1, 1]} : vector<1x96xf32> to vector<1x64xf32>
    %292 = vector.extract_strided_slice %290 {offsets = [0, 0], sizes = [1, 64], strides = [1, 1]} : vector<1x96xf32> to vector<1x64xf32>
    %293 = arith.addf %291, %292 : vector<1x64xf32>
    %294 = arith.negf %293 : vector<1x64xf32>
    %295 = math.exp %294 : vector<1x64xf32>
    %cst_89 = arith.constant 1.000000e+00 : f32
    %296 = vector.broadcast %cst_89 : f32 to vector<1x64xf32>
    %297 = arith.addf %296, %295 : vector<1x64xf32>
    %298 = arith.divf %296, %297 : vector<1x64xf32>
    %299 = vector.extract_strided_slice %298 {offsets = [0, 0], sizes = [1, 32], strides = [1, 1]} : vector<1x64xf32> to vector<1x32xf32>
    %300 = vector.extract_strided_slice %298 {offsets = [0, 32], sizes = [1, 32], strides = [1, 1]} : vector<1x64xf32> to vector<1x32xf32>
    %301 = vector.extract_strided_slice %288 {offsets = [0, 64], sizes = [1, 32], strides = [1, 1]} : vector<1x96xf32> to vector<1x32xf32>
    %302 = vector.extract_strided_slice %290 {offsets = [0, 64], sizes = [1, 32], strides = [1, 1]} : vector<1x96xf32> to vector<1x32xf32>
    %303 = arith.addf %302, %17 : vector<1x32xf32>
    %304 = arith.mulf %299, %303 : vector<1x32xf32>
    %305 = arith.addf %301, %304 : vector<1x32xf32>
    %306 = math.tanh %305 : vector<1x32xf32>
    %cst_90 = arith.constant 1.000000e+00 : f32
    %307 = vector.broadcast %cst_90 : f32 to vector<1x32xf32>
    %308 = arith.subf %307, %300 : vector<1x32xf32>
    %309 = arith.mulf %308, %306 : vector<1x32xf32>
    %310 = arith.mulf %300, %278 : vector<1x32xf32>
    %311 = arith.addf %309, %310 : vector<1x32xf32>
    %c0_91 = arith.constant 0 : index
    %c0_92 = arith.constant 0 : index
    %312 = arith.index_cast %286 : i32 to index
    %c0_93 = arith.constant 0 : index
    %313 = vector.load %arg8[%c0_91, %c0_92, %312, %c0_93] : memref<1x1x16x32xf32, #tpu.memory_space<vmem>>, vector<1x1x1x32xf32>
    %314 = vector.shape_cast %313 : vector<1x1x1x32xf32> to vector<1x32xf32>
    %315 = vector.shape_cast %311 : vector<1x32xf32> to vector<1x1x1x32xf32>
    tpu.vector_store %arg8[%c0_91, %c0_92, %312, %c0_93], %315 {strides = array<i32>} : memref<1x1x16x32xf32, #tpu.memory_space<vmem>>, vector<1x1x1x32xf32>,
    %c1_i32_94 = arith.constant 1 : i32
    %316 = arith.subi %c1_i32_94, %arg0 : i32
    %c9_i32_95 = arith.constant 9 : i32
    %317 = arith.muli %316, %c9_i32_95 : i32
    %c6_i32_96 = arith.constant 6 : i32
    %318 = arith.muli %arg0, %c6_i32_96 : i32
    %319 = arith.addi %317, %318 : i32
    %320 = arith.index_cast %319 : i32 to index
    %c0_97 = arith.constant 0 : index
    %321 = vector.load %arg10[%320, %c0_97] : memref<16x96xf32, #tpu.memory_space<vmem>>, vector<1x96xf32>
    %322 = arith.truncf %311 : vector<1x32xf32> to vector<1x32xbf16>
    %cst_98 = arith.constant dense<0.000000e+00> : vector<1x96xf32>
    %323 = tpu.matmul %322, %15, %cst_98 {dimension_numbers = #tpu.dot_dimension_numbers<[1], [0], [0], [1], [0, 0, 1, 1], [], []>} : vector<1x32xbf16>, vector<32x96xbf16>, vector<1x96xf32> -> vector<1x96xf32>
    %324 = vector.extract_strided_slice %321 {offsets = [0, 0], sizes = [1, 64], strides = [1, 1]} : vector<1x96xf32> to vector<1x64xf32>
    %325 = vector.extract_strided_slice %323 {offsets = [0, 0], sizes = [1, 64], strides = [1, 1]} : vector<1x96xf32> to vector<1x64xf32>
    %326 = arith.addf %324, %325 : vector<1x64xf32>
    %327 = arith.negf %326 : vector<1x64xf32>
    %328 = math.exp %327 : vector<1x64xf32>
    %cst_99 = arith.constant 1.000000e+00 : f32
    %329 = vector.broadcast %cst_99 : f32 to vector<1x64xf32>
    %330 = arith.addf %329, %328 : vector<1x64xf32>
    %331 = arith.divf %329, %330 : vector<1x64xf32>
    %332 = vector.extract_strided_slice %331 {offsets = [0, 0], sizes = [1, 32], strides = [1, 1]} : vector<1x64xf32> to vector<1x32xf32>
    %333 = vector.extract_strided_slice %331 {offsets = [0, 32], sizes = [1, 32], strides = [1, 1]} : vector<1x64xf32> to vector<1x32xf32>
    %334 = vector.extract_strided_slice %321 {offsets = [0, 64], sizes = [1, 32], strides = [1, 1]} : vector<1x96xf32> to vector<1x32xf32>
    %335 = vector.extract_strided_slice %323 {offsets = [0, 64], sizes = [1, 32], strides = [1, 1]} : vector<1x96xf32> to vector<1x32xf32>
    %336 = arith.addf %335, %17 : vector<1x32xf32>
    %337 = arith.mulf %332, %336 : vector<1x32xf32>
    %338 = arith.addf %334, %337 : vector<1x32xf32>
    %339 = math.tanh %338 : vector<1x32xf32>
    %cst_100 = arith.constant 1.000000e+00 : f32
    %340 = vector.broadcast %cst_100 : f32 to vector<1x32xf32>
    %341 = arith.subf %340, %333 : vector<1x32xf32>
    %342 = arith.mulf %341, %339 : vector<1x32xf32>
    %343 = arith.mulf %333, %311 : vector<1x32xf32>
    %344 = arith.addf %342, %343 : vector<1x32xf32>
    %c0_101 = arith.constant 0 : index
    %c0_102 = arith.constant 0 : index
    %345 = arith.index_cast %319 : i32 to index
    %c0_103 = arith.constant 0 : index
    %346 = vector.load %arg8[%c0_101, %c0_102, %345, %c0_103] : memref<1x1x16x32xf32, #tpu.memory_space<vmem>>, vector<1x1x1x32xf32>
    %347 = vector.shape_cast %346 : vector<1x1x1x32xf32> to vector<1x32xf32>
    %348 = vector.shape_cast %344 : vector<1x32xf32> to vector<1x1x1x32xf32>
    tpu.vector_store %arg8[%c0_101, %c0_102, %345, %c0_103], %348 {strides = array<i32>} : memref<1x1x16x32xf32, #tpu.memory_space<vmem>>, vector<1x1x1x32xf32>,
    %c1_i32_104 = arith.constant 1 : i32
    %349 = arith.subi %c1_i32_104, %arg0 : i32
    %c10_i32_105 = arith.constant 10 : i32
    %350 = arith.muli %349, %c10_i32_105 : i32
    %c5_i32_106 = arith.constant 5 : i32
    %351 = arith.muli %arg0, %c5_i32_106 : i32
    %352 = arith.addi %350, %351 : i32
    %353 = arith.index_cast %352 : i32 to index
    %c0_107 = arith.constant 0 : index
    %354 = vector.load %arg10[%353, %c0_107] : memref<16x96xf32, #tpu.memory_space<vmem>>, vector<1x96xf32>
    %355 = arith.truncf %344 : vector<1x32xf32> to vector<1x32xbf16>
    %cst_108 = arith.constant dense<0.000000e+00> : vector<1x96xf32>
    %356 = tpu.matmul %355, %15, %cst_108 {dimension_numbers = #tpu.dot_dimension_numbers<[1], [0], [0], [1], [0, 0, 1, 1], [], []>} : vector<1x32xbf16>, vector<32x96xbf16>, vector<1x96xf32> -> vector<1x96xf32>
    %357 = vector.extract_strided_slice %354 {offsets = [0, 0], sizes = [1, 64], strides = [1, 1]} : vector<1x96xf32> to vector<1x64xf32>
    %358 = vector.extract_strided_slice %356 {offsets = [0, 0], sizes = [1, 64], strides = [1, 1]} : vector<1x96xf32> to vector<1x64xf32>
    %359 = arith.addf %357, %358 : vector<1x64xf32>
    %360 = arith.negf %359 : vector<1x64xf32>
    %361 = math.exp %360 : vector<1x64xf32>
    %cst_109 = arith.constant 1.000000e+00 : f32
    %362 = vector.broadcast %cst_109 : f32 to vector<1x64xf32>
    %363 = arith.addf %362, %361 : vector<1x64xf32>
    %364 = arith.divf %362, %363 : vector<1x64xf32>
    %365 = vector.extract_strided_slice %364 {offsets = [0, 0], sizes = [1, 32], strides = [1, 1]} : vector<1x64xf32> to vector<1x32xf32>
    %366 = vector.extract_strided_slice %364 {offsets = [0, 32], sizes = [1, 32], strides = [1, 1]} : vector<1x64xf32> to vector<1x32xf32>
    %367 = vector.extract_strided_slice %354 {offsets = [0, 64], sizes = [1, 32], strides = [1, 1]} : vector<1x96xf32> to vector<1x32xf32>
    %368 = vector.extract_strided_slice %356 {offsets = [0, 64], sizes = [1, 32], strides = [1, 1]} : vector<1x96xf32> to vector<1x32xf32>
    %369 = arith.addf %368, %17 : vector<1x32xf32>
    %370 = arith.mulf %365, %369 : vector<1x32xf32>
    %371 = arith.addf %367, %370 : vector<1x32xf32>
    %372 = math.tanh %371 : vector<1x32xf32>
    %cst_110 = arith.constant 1.000000e+00 : f32
    %373 = vector.broadcast %cst_110 : f32 to vector<1x32xf32>
    %374 = arith.subf %373, %366 : vector<1x32xf32>
    %375 = arith.mulf %374, %372 : vector<1x32xf32>
    %376 = arith.mulf %366, %344 : vector<1x32xf32>
    %377 = arith.addf %375, %376 : vector<1x32xf32>
    %c0_111 = arith.constant 0 : index
    %c0_112 = arith.constant 0 : index
    %378 = arith.index_cast %352 : i32 to index
    %c0_113 = arith.constant 0 : index
    %379 = vector.load %arg8[%c0_111, %c0_112, %378, %c0_113] : memref<1x1x16x32xf32, #tpu.memory_space<vmem>>, vector<1x1x1x32xf32>
    %380 = vector.shape_cast %379 : vector<1x1x1x32xf32> to vector<1x32xf32>
    %381 = vector.shape_cast %377 : vector<1x32xf32> to vector<1x1x1x32xf32>
    tpu.vector_store %arg8[%c0_111, %c0_112, %378, %c0_113], %381 {strides = array<i32>} : memref<1x1x16x32xf32, #tpu.memory_space<vmem>>, vector<1x1x1x32xf32>,
    %c1_i32_114 = arith.constant 1 : i32
    %382 = arith.subi %c1_i32_114, %arg0 : i32
    %c11_i32_115 = arith.constant 11 : i32
    %383 = arith.muli %382, %c11_i32_115 : i32
    %c4_i32_116 = arith.constant 4 : i32
    %384 = arith.muli %arg0, %c4_i32_116 : i32
    %385 = arith.addi %383, %384 : i32
    %386 = arith.index_cast %385 : i32 to index
    %c0_117 = arith.constant 0 : index
    %387 = vector.load %arg10[%386, %c0_117] : memref<16x96xf32, #tpu.memory_space<vmem>>, vector<1x96xf32>
    %388 = arith.truncf %377 : vector<1x32xf32> to vector<1x32xbf16>
    %cst_118 = arith.constant dense<0.000000e+00> : vector<1x96xf32>
    %389 = tpu.matmul %388, %15, %cst_118 {dimension_numbers = #tpu.dot_dimension_numbers<[1], [0], [0], [1], [0, 0, 1, 1], [], []>} : vector<1x32xbf16>, vector<32x96xbf16>, vector<1x96xf32> -> vector<1x96xf32>
    %390 = vector.extract_strided_slice %387 {offsets = [0, 0], sizes = [1, 64], strides = [1, 1]} : vector<1x96xf32> to vector<1x64xf32>
    %391 = vector.extract_strided_slice %389 {offsets = [0, 0], sizes = [1, 64], strides = [1, 1]} : vector<1x96xf32> to vector<1x64xf32>
    %392 = arith.addf %390, %391 : vector<1x64xf32>
    %393 = arith.negf %392 : vector<1x64xf32>
    %394 = math.exp %393 : vector<1x64xf32>
    %cst_119 = arith.constant 1.000000e+00 : f32
    %395 = vector.broadcast %cst_119 : f32 to vector<1x64xf32>
    %396 = arith.addf %395, %394 : vector<1x64xf32>
    %397 = arith.divf %395, %396 : vector<1x64xf32>
    %398 = vector.extract_strided_slice %397 {offsets = [0, 0], sizes = [1, 32], strides = [1, 1]} : vector<1x64xf32> to vector<1x32xf32>
    %399 = vector.extract_strided_slice %397 {offsets = [0, 32], sizes = [1, 32], strides = [1, 1]} : vector<1x64xf32> to vector<1x32xf32>
    %400 = vector.extract_strided_slice %387 {offsets = [0, 64], sizes = [1, 32], strides = [1, 1]} : vector<1x96xf32> to vector<1x32xf32>
    %401 = vector.extract_strided_slice %389 {offsets = [0, 64], sizes = [1, 32], strides = [1, 1]} : vector<1x96xf32> to vector<1x32xf32>
    %402 = arith.addf %401, %17 : vector<1x32xf32>
    %403 = arith.mulf %398, %402 : vector<1x32xf32>
    %404 = arith.addf %400, %403 : vector<1x32xf32>
    %405 = math.tanh %404 : vector<1x32xf32>
    %cst_120 = arith.constant 1.000000e+00 : f32
    %406 = vector.broadcast %cst_120 : f32 to vector<1x32xf32>
    %407 = arith.subf %406, %399 : vector<1x32xf32>
    %408 = arith.mulf %407, %405 : vector<1x32xf32>
    %409 = arith.mulf %399, %377 : vector<1x32xf32>
    %410 = arith.addf %408, %409 : vector<1x32xf32>
    %c0_121 = arith.constant 0 : index
    %c0_122 = arith.constant 0 : index
    %411 = arith.index_cast %385 : i32 to index
    %c0_123 = arith.constant 0 : index
    %412 = vector.load %arg8[%c0_121, %c0_122, %411, %c0_123] : memref<1x1x16x32xf32, #tpu.memory_space<vmem>>, vector<1x1x1x32xf32>
    %413 = vector.shape_cast %412 : vector<1x1x1x32xf32> to vector<1x32xf32>
    %414 = vector.shape_cast %410 : vector<1x32xf32> to vector<1x1x1x32xf32>
    tpu.vector_store %arg8[%c0_121, %c0_122, %411, %c0_123], %414 {strides = array<i32>} : memref<1x1x16x32xf32, #tpu.memory_space<vmem>>, vector<1x1x1x32xf32>,
    %c1_i32_124 = arith.constant 1 : i32
    %415 = arith.subi %c1_i32_124, %arg0 : i32
    %c12_i32_125 = arith.constant 12 : i32
    %416 = arith.muli %415, %c12_i32_125 : i32
    %c3_i32_126 = arith.constant 3 : i32
    %417 = arith.muli %arg0, %c3_i32_126 : i32
    %418 = arith.addi %416, %417 : i32
    %419 = arith.index_cast %418 : i32 to index
    %c0_127 = arith.constant 0 : index
    %420 = vector.load %arg10[%419, %c0_127] : memref<16x96xf32, #tpu.memory_space<vmem>>, vector<1x96xf32>
    %421 = arith.truncf %410 : vector<1x32xf32> to vector<1x32xbf16>
    %cst_128 = arith.constant dense<0.000000e+00> : vector<1x96xf32>
    %422 = tpu.matmul %421, %15, %cst_128 {dimension_numbers = #tpu.dot_dimension_numbers<[1], [0], [0], [1], [0, 0, 1, 1], [], []>} : vector<1x32xbf16>, vector<32x96xbf16>, vector<1x96xf32> -> vector<1x96xf32>
    %423 = vector.extract_strided_slice %420 {offsets = [0, 0], sizes = [1, 64], strides = [1, 1]} : vector<1x96xf32> to vector<1x64xf32>
    %424 = vector.extract_strided_slice %422 {offsets = [0, 0], sizes = [1, 64], strides = [1, 1]} : vector<1x96xf32> to vector<1x64xf32>
    %425 = arith.addf %423, %424 : vector<1x64xf32>
    %426 = arith.negf %425 : vector<1x64xf32>
    %427 = math.exp %426 : vector<1x64xf32>
    %cst_129 = arith.constant 1.000000e+00 : f32
    %428 = vector.broadcast %cst_129 : f32 to vector<1x64xf32>
    %429 = arith.addf %428, %427 : vector<1x64xf32>
    %430 = arith.divf %428, %429 : vector<1x64xf32>
    %431 = vector.extract_strided_slice %430 {offsets = [0, 0], sizes = [1, 32], strides = [1, 1]} : vector<1x64xf32> to vector<1x32xf32>
    %432 = vector.extract_strided_slice %430 {offsets = [0, 32], sizes = [1, 32], strides = [1, 1]} : vector<1x64xf32> to vector<1x32xf32>
    %433 = vector.extract_strided_slice %420 {offsets = [0, 64], sizes = [1, 32], strides = [1, 1]} : vector<1x96xf32> to vector<1x32xf32>
    %434 = vector.extract_strided_slice %422 {offsets = [0, 64], sizes = [1, 32], strides = [1, 1]} : vector<1x96xf32> to vector<1x32xf32>
    %435 = arith.addf %434, %17 : vector<1x32xf32>
    %436 = arith.mulf %431, %435 : vector<1x32xf32>
    %437 = arith.addf %433, %436 : vector<1x32xf32>
    %438 = math.tanh %437 : vector<1x32xf32>
    %cst_130 = arith.constant 1.000000e+00 : f32
    %439 = vector.broadcast %cst_130 : f32 to vector<1x32xf32>
    %440 = arith.subf %439, %432 : vector<1x32xf32>
    %441 = arith.mulf %440, %438 : vector<1x32xf32>
    %442 = arith.mulf %432, %410 : vector<1x32xf32>
    %443 = arith.addf %441, %442 : vector<1x32xf32>
    %c0_131 = arith.constant 0 : index
    %c0_132 = arith.constant 0 : index
    %444 = arith.index_cast %418 : i32 to index
    %c0_133 = arith.constant 0 : index
    %445 = vector.load %arg8[%c0_131, %c0_132, %444, %c0_133] : memref<1x1x16x32xf32, #tpu.memory_space<vmem>>, vector<1x1x1x32xf32>
    %446 = vector.shape_cast %445 : vector<1x1x1x32xf32> to vector<1x32xf32>
    %447 = vector.shape_cast %443 : vector<1x32xf32> to vector<1x1x1x32xf32>
    tpu.vector_store %arg8[%c0_131, %c0_132, %444, %c0_133], %447 {strides = array<i32>} : memref<1x1x16x32xf32, #tpu.memory_space<vmem>>, vector<1x1x1x32xf32>,
    %c1_i32_134 = arith.constant 1 : i32
    %448 = arith.subi %c1_i32_134, %arg0 : i32
    %c13_i32_135 = arith.constant 13 : i32
    %449 = arith.muli %448, %c13_i32_135 : i32
    %c2_i32_136 = arith.constant 2 : i32
    %450 = arith.muli %arg0, %c2_i32_136 : i32
    %451 = arith.addi %449, %450 : i32
    %452 = arith.index_cast %451 : i32 to index
    %c0_137 = arith.constant 0 : index
    %453 = vector.load %arg10[%452, %c0_137] : memref<16x96xf32, #tpu.memory_space<vmem>>, vector<1x96xf32>
    %454 = arith.truncf %443 : vector<1x32xf32> to vector<1x32xbf16>
    %cst_138 = arith.constant dense<0.000000e+00> : vector<1x96xf32>
    %455 = tpu.matmul %454, %15, %cst_138 {dimension_numbers = #tpu.dot_dimension_numbers<[1], [0], [0], [1], [0, 0, 1, 1], [], []>} : vector<1x32xbf16>, vector<32x96xbf16>, vector<1x96xf32> -> vector<1x96xf32>
    %456 = vector.extract_strided_slice %453 {offsets = [0, 0], sizes = [1, 64], strides = [1, 1]} : vector<1x96xf32> to vector<1x64xf32>
    %457 = vector.extract_strided_slice %455 {offsets = [0, 0], sizes = [1, 64], strides = [1, 1]} : vector<1x96xf32> to vector<1x64xf32>
    %458 = arith.addf %456, %457 : vector<1x64xf32>
    %459 = arith.negf %458 : vector<1x64xf32>
    %460 = math.exp %459 : vector<1x64xf32>
    %cst_139 = arith.constant 1.000000e+00 : f32
    %461 = vector.broadcast %cst_139 : f32 to vector<1x64xf32>
    %462 = arith.addf %461, %460 : vector<1x64xf32>
    %463 = arith.divf %461, %462 : vector<1x64xf32>
    %464 = vector.extract_strided_slice %463 {offsets = [0, 0], sizes = [1, 32], strides = [1, 1]} : vector<1x64xf32> to vector<1x32xf32>
    %465 = vector.extract_strided_slice %463 {offsets = [0, 32], sizes = [1, 32], strides = [1, 1]} : vector<1x64xf32> to vector<1x32xf32>
    %466 = vector.extract_strided_slice %453 {offsets = [0, 64], sizes = [1, 32], strides = [1, 1]} : vector<1x96xf32> to vector<1x32xf32>
    %467 = vector.extract_strided_slice %455 {offsets = [0, 64], sizes = [1, 32], strides = [1, 1]} : vector<1x96xf32> to vector<1x32xf32>
    %468 = arith.addf %467, %17 : vector<1x32xf32>
    %469 = arith.mulf %464, %468 : vector<1x32xf32>
    %470 = arith.addf %466, %469 : vector<1x32xf32>
    %471 = math.tanh %470 : vector<1x32xf32>
    %cst_140 = arith.constant 1.000000e+00 : f32
    %472 = vector.broadcast %cst_140 : f32 to vector<1x32xf32>
    %473 = arith.subf %472, %465 : vector<1x32xf32>
    %474 = arith.mulf %473, %471 : vector<1x32xf32>
    %475 = arith.mulf %465, %443 : vector<1x32xf32>
    %476 = arith.addf %474, %475 : vector<1x32xf32>
    %c0_141 = arith.constant 0 : index
    %c0_142 = arith.constant 0 : index
    %477 = arith.index_cast %451 : i32 to index
    %c0_143 = arith.constant 0 : index
    %478 = vector.load %arg8[%c0_141, %c0_142, %477, %c0_143] : memref<1x1x16x32xf32, #tpu.memory_space<vmem>>, vector<1x1x1x32xf32>
    %479 = vector.shape_cast %478 : vector<1x1x1x32xf32> to vector<1x32xf32>
    %480 = vector.shape_cast %476 : vector<1x32xf32> to vector<1x1x1x32xf32>
    tpu.vector_store %arg8[%c0_141, %c0_142, %477, %c0_143], %480 {strides = array<i32>} : memref<1x1x16x32xf32, #tpu.memory_space<vmem>>, vector<1x1x1x32xf32>,
    %c1_i32_144 = arith.constant 1 : i32
    %481 = arith.subi %c1_i32_144, %arg0 : i32
    %c14_i32_145 = arith.constant 14 : i32
    %482 = arith.muli %481, %c14_i32_145 : i32
    %c1_i32_146 = arith.constant 1 : i32
    %483 = arith.muli %arg0, %c1_i32_146 : i32
    %484 = arith.addi %482, %483 : i32
    %485 = arith.index_cast %484 : i32 to index
    %c0_147 = arith.constant 0 : index
    %486 = vector.load %arg10[%485, %c0_147] : memref<16x96xf32, #tpu.memory_space<vmem>>, vector<1x96xf32>
    %487 = arith.truncf %476 : vector<1x32xf32> to vector<1x32xbf16>
    %cst_148 = arith.constant dense<0.000000e+00> : vector<1x96xf32>
    %488 = tpu.matmul %487, %15, %cst_148 {dimension_numbers = #tpu.dot_dimension_numbers<[1], [0], [0], [1], [0, 0, 1, 1], [], []>} : vector<1x32xbf16>, vector<32x96xbf16>, vector<1x96xf32> -> vector<1x96xf32>
    %489 = vector.extract_strided_slice %486 {offsets = [0, 0], sizes = [1, 64], strides = [1, 1]} : vector<1x96xf32> to vector<1x64xf32>
    %490 = vector.extract_strided_slice %488 {offsets = [0, 0], sizes = [1, 64], strides = [1, 1]} : vector<1x96xf32> to vector<1x64xf32>
    %491 = arith.addf %489, %490 : vector<1x64xf32>
    %492 = arith.negf %491 : vector<1x64xf32>
    %493 = math.exp %492 : vector<1x64xf32>
    %cst_149 = arith.constant 1.000000e+00 : f32
    %494 = vector.broadcast %cst_149 : f32 to vector<1x64xf32>
    %495 = arith.addf %494, %493 : vector<1x64xf32>
    %496 = arith.divf %494, %495 : vector<1x64xf32>
    %497 = vector.extract_strided_slice %496 {offsets = [0, 0], sizes = [1, 32], strides = [1, 1]} : vector<1x64xf32> to vector<1x32xf32>
    %498 = vector.extract_strided_slice %496 {offsets = [0, 32], sizes = [1, 32], strides = [1, 1]} : vector<1x64xf32> to vector<1x32xf32>
    %499 = vector.extract_strided_slice %486 {offsets = [0, 64], sizes = [1, 32], strides = [1, 1]} : vector<1x96xf32> to vector<1x32xf32>
    %500 = vector.extract_strided_slice %488 {offsets = [0, 64], sizes = [1, 32], strides = [1, 1]} : vector<1x96xf32> to vector<1x32xf32>
    %501 = arith.addf %500, %17 : vector<1x32xf32>
    %502 = arith.mulf %497, %501 : vector<1x32xf32>
    %503 = arith.addf %499, %502 : vector<1x32xf32>
    %504 = math.tanh %503 : vector<1x32xf32>
    %cst_150 = arith.constant 1.000000e+00 : f32
    %505 = vector.broadcast %cst_150 : f32 to vector<1x32xf32>
    %506 = arith.subf %505, %498 : vector<1x32xf32>
    %507 = arith.mulf %506, %504 : vector<1x32xf32>
    %508 = arith.mulf %498, %476 : vector<1x32xf32>
    %509 = arith.addf %507, %508 : vector<1x32xf32>
    %c0_151 = arith.constant 0 : index
    %c0_152 = arith.constant 0 : index
    %510 = arith.index_cast %484 : i32 to index
    %c0_153 = arith.constant 0 : index
    %511 = vector.load %arg8[%c0_151, %c0_152, %510, %c0_153] : memref<1x1x16x32xf32, #tpu.memory_space<vmem>>, vector<1x1x1x32xf32>
    %512 = vector.shape_cast %511 : vector<1x1x1x32xf32> to vector<1x32xf32>
    %513 = vector.shape_cast %509 : vector<1x32xf32> to vector<1x1x1x32xf32>
    tpu.vector_store %arg8[%c0_151, %c0_152, %510, %c0_153], %513 {strides = array<i32>} : memref<1x1x16x32xf32, #tpu.memory_space<vmem>>, vector<1x1x1x32xf32>,
    %c1_i32_154 = arith.constant 1 : i32
    %514 = arith.subi %c1_i32_154, %arg0 : i32
    %c15_i32_155 = arith.constant 15 : i32
    %515 = arith.muli %514, %c15_i32_155 : i32
    %c0_i32_156 = arith.constant 0 : i32
    %516 = arith.muli %arg0, %c0_i32_156 : i32
    %517 = arith.addi %515, %516 : i32
    %518 = arith.index_cast %517 : i32 to index
    %c0_157 = arith.constant 0 : index
    %519 = vector.load %arg10[%518, %c0_157] : memref<16x96xf32, #tpu.memory_space<vmem>>, vector<1x96xf32>
    %520 = arith.truncf %509 : vector<1x32xf32> to vector<1x32xbf16>
    %cst_158 = arith.constant dense<0.000000e+00> : vector<1x96xf32>
    %521 = tpu.matmul %520, %15, %cst_158 {dimension_numbers = #tpu.dot_dimension_numbers<[1], [0], [0], [1], [0, 0, 1, 1], [], []>} : vector<1x32xbf16>, vector<32x96xbf16>, vector<1x96xf32> -> vector<1x96xf32>
    %522 = vector.extract_strided_slice %519 {offsets = [0, 0], sizes = [1, 64], strides = [1, 1]} : vector<1x96xf32> to vector<1x64xf32>
    %523 = vector.extract_strided_slice %521 {offsets = [0, 0], sizes = [1, 64], strides = [1, 1]} : vector<1x96xf32> to vector<1x64xf32>
    %524 = arith.addf %522, %523 : vector<1x64xf32>
    %525 = arith.negf %524 : vector<1x64xf32>
    %526 = math.exp %525 : vector<1x64xf32>
    %cst_159 = arith.constant 1.000000e+00 : f32
    %527 = vector.broadcast %cst_159 : f32 to vector<1x64xf32>
    %528 = arith.addf %527, %526 : vector<1x64xf32>
    %529 = arith.divf %527, %528 : vector<1x64xf32>
    %530 = vector.extract_strided_slice %529 {offsets = [0, 0], sizes = [1, 32], strides = [1, 1]} : vector<1x64xf32> to vector<1x32xf32>
    %531 = vector.extract_strided_slice %529 {offsets = [0, 32], sizes = [1, 32], strides = [1, 1]} : vector<1x64xf32> to vector<1x32xf32>
    %532 = vector.extract_strided_slice %519 {offsets = [0, 64], sizes = [1, 32], strides = [1, 1]} : vector<1x96xf32> to vector<1x32xf32>
    %533 = vector.extract_strided_slice %521 {offsets = [0, 64], sizes = [1, 32], strides = [1, 1]} : vector<1x96xf32> to vector<1x32xf32>
    %534 = arith.addf %533, %17 : vector<1x32xf32>
    %535 = arith.mulf %530, %534 : vector<1x32xf32>
    %536 = arith.addf %532, %535 : vector<1x32xf32>
    %537 = math.tanh %536 : vector<1x32xf32>
    %cst_160 = arith.constant 1.000000e+00 : f32
    %538 = vector.broadcast %cst_160 : f32 to vector<1x32xf32>
    %539 = arith.subf %538, %531 : vector<1x32xf32>
    %540 = arith.mulf %539, %537 : vector<1x32xf32>
    %541 = arith.mulf %531, %509 : vector<1x32xf32>
    %542 = arith.addf %540, %541 : vector<1x32xf32>
    %c0_161 = arith.constant 0 : index
    %c0_162 = arith.constant 0 : index
    %543 = arith.index_cast %517 : i32 to index
    %c0_163 = arith.constant 0 : index
    %544 = vector.load %arg8[%c0_161, %c0_162, %543, %c0_163] : memref<1x1x16x32xf32, #tpu.memory_space<vmem>>, vector<1x1x1x32xf32>
    %545 = vector.shape_cast %544 : vector<1x1x1x32xf32> to vector<1x32xf32>
    %546 = vector.shape_cast %542 : vector<1x32xf32> to vector<1x1x1x32xf32>
    tpu.vector_store %arg8[%c0_161, %c0_162, %543, %c0_163], %546 {strides = array<i32>} : memref<1x1x16x32xf32, #tpu.memory_space<vmem>>, vector<1x1x1x32xf32>,
    %c0_164 = arith.constant 0 : index
    %c0_165 = arith.constant 0 : index
    %547 = vector.load %arg9[%c0_164, %c0_165] : memref<1x32xf32, #tpu.memory_space<vmem>>, vector<1x32xf32>
    tpu.vector_store %arg9[%c0_164, %c0_165], %542 {strides = array<i32>} : memref<1x32xf32, #tpu.memory_space<vmem>>, vector<1x32xf32>,
    return
  }
  func.func @transform_0(%arg0: i32, %arg1: i32, %arg2: i32) -> (i32, i32, i32) {
    %c2_i32 = arith.constant 2 : i32
    %0 = arith.muli %c2_i32, %arg2 : i32
    %c0_i32 = arith.constant 0 : i32
    %1 = arith.subi %c0_i32, %0 : i32
    %2 = arith.muli %arg0, %1 : i32
    %3 = arith.addi %arg2, %2 : i32
    %c0_i32_0 = arith.constant 0 : i32
    %c0_i32_1 = arith.constant 0 : i32
    return %arg1, %3, %c0_i32_0 : i32, i32, i32
  }
  func.func @transform_1(%arg0: i32, %arg1: i32, %arg2: i32) -> (i32, i32, i32) {
    %c0_i32 = arith.constant 0 : i32
    %c0_i32_0 = arith.constant 0 : i32
    %c0_i32_1 = arith.constant 0 : i32
    return %arg0, %c0_i32, %c0_i32_0 : i32, i32, i32
  }
  func.func @transform_2(%arg0: i32, %arg1: i32, %arg2: i32) -> (i32, i32, i32) {
    %c0_i32 = arith.constant 0 : i32
    %c0_i32_0 = arith.constant 0 : i32
    %c0_i32_1 = arith.constant 0 : i32
    return %arg0, %c0_i32, %c0_i32_0 : i32, i32, i32
  }
  func.func @transform_3(%arg0: i32, %arg1: i32, %arg2: i32) -> (i32, i32, i32) {
    %c0_i32 = arith.constant 0 : i32
    %c0_i32_0 = arith.constant 0 : i32
    %c0_i32_1 = arith.constant 0 : i32
    return %arg0, %c0_i32, %c0_i32_0 : i32, i32, i32
  }
  func.func @transform_4(%arg0: i32, %arg1: i32, %arg2: i32) -> (i32, i32, i32) {
    %c0_i32 = arith.constant 0 : i32
    %c0_i32_0 = arith.constant 0 : i32
    %c0_i32_1 = arith.constant 0 : i32
    return %arg0, %c0_i32, %c0_i32_0 : i32, i32, i32
  }
  func.func @transform_5(%arg0: i32, %arg1: i32, %arg2: i32) -> (i32, i32, i32, i32) {
    %c2_i32 = arith.constant 2 : i32
    %0 = arith.muli %c2_i32, %arg2 : i32
    %c0_i32 = arith.constant 0 : i32
    %1 = arith.subi %c0_i32, %0 : i32
    %2 = arith.muli %arg0, %1 : i32
    %3 = arith.addi %arg2, %2 : i32
    %c0_i32_0 = arith.constant 0 : i32
    %c0_i32_1 = arith.constant 0 : i32
    return %arg0, %arg1, %3, %c0_i32_0 : i32, i32, i32, i32
  }
}

module attributes {stable_mosaic.version = 11 : i64} {
  func.func @_res_layer_kernel(%arg0: i32, %arg1: i32, %arg2: memref<2x1x16x32xf32, #tpu.memory_space<vmem>>, %arg3: memref<1x16x32xf32, #tpu.memory_space<vmem>>, %arg4: memref<64x128xbf16, #tpu.memory_space<vmem>>, %arg5: memref<1x128xf32, #tpu.memory_space<vmem>>, %arg6: memref<1x128xf32, #tpu.memory_space<vmem>>, %arg7: memref<1x128xf32, #tpu.memory_space<vmem>>, %arg8: memref<128x32xbf16, #tpu.memory_space<vmem>>, %arg9: memref<1x32xf32, #tpu.memory_space<vmem>>, %arg10: memref<1x32xf32, #tpu.memory_space<vmem>>, %arg11: memref<1x32xf32, #tpu.memory_space<vmem>>, %arg12: memref<1x16x32xf32, #tpu.memory_space<vmem>>) attributes {dimension_semantics = [#tpu.dimension_semantics<parallel>, #tpu.dimension_semantics<parallel>], iteration_bounds = array<i64: 2, 1>, scalar_prefetch = 0 : i64, scratch_operands = 0 : i64, tpu.core_type = #tpu.core_type<tc>, window_params = [{transform_indices = @transform_0, window_bounds = array<i64: 2, 1, 16, 32>}, {transform_indices = @transform_1, window_bounds = array<i64: 1, 16, 32>}, {pipeline_mode = #tpu.pipeline_mode<synchronous>, transform_indices = @transform_2, window_bounds = array<i64: 64, 128>}, {pipeline_mode = #tpu.pipeline_mode<synchronous>, transform_indices = @transform_3, window_bounds = array<i64: 1, 128>}, {pipeline_mode = #tpu.pipeline_mode<synchronous>, transform_indices = @transform_4, window_bounds = array<i64: 1, 128>}, {pipeline_mode = #tpu.pipeline_mode<synchronous>, transform_indices = @transform_5, window_bounds = array<i64: 1, 128>}, {pipeline_mode = #tpu.pipeline_mode<synchronous>, transform_indices = @transform_6, window_bounds = array<i64: 128, 32>}, {pipeline_mode = #tpu.pipeline_mode<synchronous>, transform_indices = @transform_7, window_bounds = array<i64: 1, 32>}, {pipeline_mode = #tpu.pipeline_mode<synchronous>, transform_indices = @transform_8, window_bounds = array<i64: 1, 32>}, {pipeline_mode = #tpu.pipeline_mode<synchronous>, transform_indices = @transform_9, window_bounds = array<i64: 1, 32>}, {transform_indices = @transform_10, window_bounds = array<i64: 1, 16, 32>}]} {
    %c0 = arith.constant 0 : index
    %c0_0 = arith.constant 0 : index
    %c0_1 = arith.constant 0 : index
    %c0_2 = arith.constant 0 : index
    %0 = vector.load %arg2[%c0, %c0_0, %c0_1, %c0_2] : memref<2x1x16x32xf32, #tpu.memory_space<vmem>>, vector<1x1x16x32xf32>
    %1 = vector.shape_cast %0 : vector<1x1x16x32xf32> to vector<16x32xf32>
    %2 = arith.truncf %1 : vector<16x32xf32> to vector<16x32xbf16>
    %c1 = arith.constant 1 : index
    %c0_3 = arith.constant 0 : index
    %c0_4 = arith.constant 0 : index
    %c0_5 = arith.constant 0 : index
    %3 = vector.load %arg2[%c1, %c0_3, %c0_4, %c0_5] : memref<2x1x16x32xf32, #tpu.memory_space<vmem>>, vector<1x1x16x32xf32>
    %4 = vector.shape_cast %3 : vector<1x1x16x32xf32> to vector<16x32xf32>
    %5 = arith.truncf %4 : vector<16x32xf32> to vector<16x32xbf16>
    %c0_6 = arith.constant 0 : index
    %c0_7 = arith.constant 0 : index
    %6 = vector.load %arg4[%c0_6, %c0_7] : memref<64x128xbf16, #tpu.memory_space<vmem>>, vector<64x128xbf16>
    %7 = vector.extract_strided_slice %6 {offsets = [0, 0], sizes = [32, 128], strides = [1, 1]} : vector<64x128xbf16> to vector<32x128xbf16>
    %cst = arith.constant dense<0.000000e+00> : vector<16x128xf32>
    %8 = tpu.matmul %2, %7, %cst {dimension_numbers = #tpu.dot_dimension_numbers<[1], [0], [0], [1], [0, 0, 1, 1], [], []>} : vector<16x32xbf16>, vector<32x128xbf16>, vector<16x128xf32> -> vector<16x128xf32>
    %9 = vector.extract_strided_slice %6 {offsets = [32, 0], sizes = [32, 128], strides = [1, 1]} : vector<64x128xbf16> to vector<32x128xbf16>
    %cst_8 = arith.constant dense<0.000000e+00> : vector<16x128xf32>
    %10 = tpu.matmul %5, %9, %cst_8 {dimension_numbers = #tpu.dot_dimension_numbers<[1], [0], [0], [1], [0, 0, 1, 1], [], []>} : vector<16x32xbf16>, vector<32x128xbf16>, vector<16x128xf32> -> vector<16x128xf32>
    %11 = arith.addf %8, %10 : vector<16x128xf32>
    %c0_9 = arith.constant 0 : index
    %c0_10 = arith.constant 0 : index
    %12 = vector.load %arg5[%c0_9, %c0_10] : memref<1x128xf32, #tpu.memory_space<vmem>>, vector<1x128xf32>
    %13 = vector.broadcast %12 : vector<1x128xf32> to vector<16x128xf32>
    %14 = arith.addf %11, %13 : vector<16x128xf32>
    %c0_11 = arith.constant 0 : index
    %c0_12 = arith.constant 0 : index
    %15 = vector.load %arg6[%c0_11, %c0_12] : memref<1x128xf32, #tpu.memory_space<vmem>>, vector<1x128xf32>
    %c0_13 = arith.constant 0 : index
    %c0_14 = arith.constant 0 : index
    %16 = vector.load %arg7[%c0_13, %c0_14] : memref<1x128xf32, #tpu.memory_space<vmem>>, vector<1x128xf32>
    %cst_15 = arith.constant dense<0.000000e+00> : vector<16xf32>
    %17 = vector.multi_reduction <add>, %14, %cst_15 [1] : vector<16x128xf32> to vector<16xf32>
    %18 = vector.shape_cast %17 : vector<16xf32> to vector<16x1xf32>
    %cst_16 = arith.constant 1.280000e+02 : f32
    %19 = vector.broadcast %cst_16 : f32 to vector<16x1xf32>
    %20 = arith.divf %18, %19 : vector<16x1xf32>
    %21 = vector.broadcast %20 : vector<16x1xf32> to vector<16x128xf32>
    %22 = arith.subf %14, %21 : vector<16x128xf32>
    %23 = arith.mulf %22, %22 : vector<16x128xf32>
    %cst_17 = arith.constant dense<0.000000e+00> : vector<16xf32>
    %24 = vector.multi_reduction <add>, %23, %cst_17 [1] : vector<16x128xf32> to vector<16xf32>
    %25 = vector.shape_cast %24 : vector<16xf32> to vector<16x1xf32>
    %cst_18 = arith.constant 1.280000e+02 : f32
    %26 = vector.broadcast %cst_18 : f32 to vector<16x1xf32>
    %27 = arith.divf %25, %26 : vector<16x1xf32>
    %28 = vector.broadcast %20 : vector<16x1xf32> to vector<16x128xf32>
    %29 = arith.subf %14, %28 : vector<16x128xf32>
    %cst_19 = arith.constant 9.99999974E-6 : f32
    %30 = vector.broadcast %cst_19 : f32 to vector<16x1xf32>
    %31 = arith.addf %27, %30 : vector<16x1xf32>
    %32 = math.rsqrt %31 : vector<16x1xf32>
    %33 = vector.broadcast %32 : vector<16x1xf32> to vector<16x128xf32>
    %34 = arith.mulf %29, %33 : vector<16x128xf32>
    %35 = vector.broadcast %15 : vector<1x128xf32> to vector<16x128xf32>
    %36 = arith.mulf %34, %35 : vector<16x128xf32>
    %37 = vector.broadcast %16 : vector<1x128xf32> to vector<16x128xf32>
    %38 = arith.addf %36, %37 : vector<16x128xf32>
    %cst_20 = arith.constant 0.000000e+00 : f32
    %39 = vector.broadcast %cst_20 : f32 to vector<16x128xf32>
    %40 = arith.maximumf %38, %39 : vector<16x128xf32>
    %41 = arith.truncf %40 : vector<16x128xf32> to vector<16x128xbf16>
    %c0_21 = arith.constant 0 : index
    %c0_22 = arith.constant 0 : index
    %42 = vector.load %arg8[%c0_21, %c0_22] : memref<128x32xbf16, #tpu.memory_space<vmem>>, vector<128x32xbf16>
    %cst_23 = arith.constant dense<0.000000e+00> : vector<16x32xf32>
    %43 = tpu.matmul %41, %42, %cst_23 {dimension_numbers = #tpu.dot_dimension_numbers<[1], [0], [0], [1], [0, 0, 1, 1], [], []>} : vector<16x128xbf16>, vector<128x32xbf16>, vector<16x32xf32> -> vector<16x32xf32>
    %c0_24 = arith.constant 0 : index
    %c0_25 = arith.constant 0 : index
    %44 = vector.load %arg9[%c0_24, %c0_25] : memref<1x32xf32, #tpu.memory_space<vmem>>, vector<1x32xf32>
    %45 = vector.broadcast %44 : vector<1x32xf32> to vector<16x32xf32>
    %46 = arith.addf %43, %45 : vector<16x32xf32>
    %c0_26 = arith.constant 0 : index
    %c0_27 = arith.constant 0 : index
    %47 = vector.load %arg10[%c0_26, %c0_27] : memref<1x32xf32, #tpu.memory_space<vmem>>, vector<1x32xf32>
    %c0_28 = arith.constant 0 : index
    %c0_29 = arith.constant 0 : index
    %48 = vector.load %arg11[%c0_28, %c0_29] : memref<1x32xf32, #tpu.memory_space<vmem>>, vector<1x32xf32>
    %cst_30 = arith.constant dense<0.000000e+00> : vector<16xf32>
    %49 = vector.multi_reduction <add>, %46, %cst_30 [1] : vector<16x32xf32> to vector<16xf32>
    %50 = vector.shape_cast %49 : vector<16xf32> to vector<16x1xf32>
    %cst_31 = arith.constant 3.200000e+01 : f32
    %51 = vector.broadcast %cst_31 : f32 to vector<16x1xf32>
    %52 = arith.divf %50, %51 : vector<16x1xf32>
    %53 = vector.broadcast %52 : vector<16x1xf32> to vector<16x32xf32>
    %54 = arith.subf %46, %53 : vector<16x32xf32>
    %55 = arith.mulf %54, %54 : vector<16x32xf32>
    %cst_32 = arith.constant dense<0.000000e+00> : vector<16xf32>
    %56 = vector.multi_reduction <add>, %55, %cst_32 [1] : vector<16x32xf32> to vector<16xf32>
    %57 = vector.shape_cast %56 : vector<16xf32> to vector<16x1xf32>
    %cst_33 = arith.constant 3.200000e+01 : f32
    %58 = vector.broadcast %cst_33 : f32 to vector<16x1xf32>
    %59 = arith.divf %57, %58 : vector<16x1xf32>
    %60 = vector.broadcast %52 : vector<16x1xf32> to vector<16x32xf32>
    %61 = arith.subf %46, %60 : vector<16x32xf32>
    %cst_34 = arith.constant 9.99999974E-6 : f32
    %62 = vector.broadcast %cst_34 : f32 to vector<16x1xf32>
    %63 = arith.addf %59, %62 : vector<16x1xf32>
    %64 = math.rsqrt %63 : vector<16x1xf32>
    %65 = vector.broadcast %64 : vector<16x1xf32> to vector<16x32xf32>
    %66 = arith.mulf %61, %65 : vector<16x32xf32>
    %67 = vector.broadcast %47 : vector<1x32xf32> to vector<16x32xf32>
    %68 = arith.mulf %66, %67 : vector<16x32xf32>
    %69 = vector.broadcast %48 : vector<1x32xf32> to vector<16x32xf32>
    %70 = arith.addf %68, %69 : vector<16x32xf32>
    %cst_35 = arith.constant 0.000000e+00 : f32
    %71 = vector.broadcast %cst_35 : f32 to vector<16x32xf32>
    %72 = arith.maximumf %70, %71 : vector<16x32xf32>
    %c0_36 = arith.constant 0 : index
    %c0_37 = arith.constant 0 : index
    %c0_38 = arith.constant 0 : index
    %73 = vector.load %arg3[%c0_36, %c0_37, %c0_38] : memref<1x16x32xf32, #tpu.memory_space<vmem>>, vector<1x16x32xf32>
    %74 = vector.shape_cast %73 : vector<1x16x32xf32> to vector<16x32xf32>
    %75 = arith.addf %72, %74 : vector<16x32xf32>
    %c0_39 = arith.constant 0 : index
    %c0_40 = arith.constant 0 : index
    %c0_41 = arith.constant 0 : index
    %76 = vector.load %arg12[%c0_39, %c0_40, %c0_41] : memref<1x16x32xf32, #tpu.memory_space<vmem>>, vector<1x16x32xf32>
    %77 = vector.shape_cast %76 : vector<1x16x32xf32> to vector<16x32xf32>
    %78 = vector.shape_cast %75 : vector<16x32xf32> to vector<1x16x32xf32>
    tpu.vector_store %arg12[%c0_39, %c0_40, %c0_41], %78 {strides = array<i32>} : memref<1x16x32xf32, #tpu.memory_space<vmem>>, vector<1x16x32xf32>,
    return
  }
  func.func @transform_0(%arg0: i32, %arg1: i32) -> (i32, i32, i32, i32) {
    %c0_i32 = arith.constant 0 : i32
    %c0_i32_0 = arith.constant 0 : i32
    %c0_i32_1 = arith.constant 0 : i32
    return %c0_i32, %arg0, %arg1, %c0_i32_0 : i32, i32, i32, i32
  }
  func.func @transform_1(%arg0: i32, %arg1: i32) -> (i32, i32, i32) {
    %c0_i32 = arith.constant 0 : i32
    %c0_i32_0 = arith.constant 0 : i32
    return %arg0, %arg1, %c0_i32 : i32, i32, i32
  }
  func.func @transform_2(%arg0: i32, %arg1: i32) -> (i32, i32) {
    %c0_i32 = arith.constant 0 : i32
    %c0_i32_0 = arith.constant 0 : i32
    %c0_i32_1 = arith.constant 0 : i32
    return %c0_i32, %c0_i32_0 : i32, i32
  }
  func.func @transform_3(%arg0: i32, %arg1: i32) -> (i32, i32) {
    %c0_i32 = arith.constant 0 : i32
    %c0_i32_0 = arith.constant 0 : i32
    %c0_i32_1 = arith.constant 0 : i32
    return %c0_i32, %c0_i32_0 : i32, i32
  }
  func.func @transform_4(%arg0: i32, %arg1: i32) -> (i32, i32) {
    %c0_i32 = arith.constant 0 : i32
    %c0_i32_0 = arith.constant 0 : i32
    %c0_i32_1 = arith.constant 0 : i32
    return %c0_i32, %c0_i32_0 : i32, i32
  }
  func.func @transform_5(%arg0: i32, %arg1: i32) -> (i32, i32) {
    %c0_i32 = arith.constant 0 : i32
    %c0_i32_0 = arith.constant 0 : i32
    %c0_i32_1 = arith.constant 0 : i32
    return %c0_i32, %c0_i32_0 : i32, i32
  }
  func.func @transform_6(%arg0: i32, %arg1: i32) -> (i32, i32) {
    %c0_i32 = arith.constant 0 : i32
    %c0_i32_0 = arith.constant 0 : i32
    %c0_i32_1 = arith.constant 0 : i32
    return %c0_i32, %c0_i32_0 : i32, i32
  }
  func.func @transform_7(%arg0: i32, %arg1: i32) -> (i32, i32) {
    %c0_i32 = arith.constant 0 : i32
    %c0_i32_0 = arith.constant 0 : i32
    %c0_i32_1 = arith.constant 0 : i32
    return %c0_i32, %c0_i32_0 : i32, i32
  }
  func.func @transform_8(%arg0: i32, %arg1: i32) -> (i32, i32) {
    %c0_i32 = arith.constant 0 : i32
    %c0_i32_0 = arith.constant 0 : i32
    %c0_i32_1 = arith.constant 0 : i32
    return %c0_i32, %c0_i32_0 : i32, i32
  }
  func.func @transform_9(%arg0: i32, %arg1: i32) -> (i32, i32) {
    %c0_i32 = arith.constant 0 : i32
    %c0_i32_0 = arith.constant 0 : i32
    %c0_i32_1 = arith.constant 0 : i32
    return %c0_i32, %c0_i32_0 : i32, i32
  }
  func.func @transform_10(%arg0: i32, %arg1: i32) -> (i32, i32, i32) {
    %c0_i32 = arith.constant 0 : i32
    %c0_i32_0 = arith.constant 0 : i32
    return %arg0, %arg1, %c0_i32 : i32, i32, i32
  }
}

</mosaic_0001>

<llo_original>
// kernel: forward.7
$region0: #{forward.7}
  #allocation0 [shape = 'u32[]', space=smem, size = 0x4, offset = 0x4, fixed_abs, tag = 'smem constant byte address 0x4 - core index']
  #allocation1 [shape = 'u32[144,128]{1,0:T(1,128)}', space=vmem, size = 0x12000, scoped, tag = 'internal scratch']
  %s0 = inlined_call_operand.vmem [shape: f32[2,2,16,32], index: 0, kind: input, shape index: {}]
  %s1 = inlined_call_operand.vmem [shape: f32[2,16,32], index: 1, kind: input, shape index: {}]
  %s2 = inlined_call_operand.vmem [shape: bf16[64,128], index: 2, kind: input, shape index: {}]
  %s3 = inlined_call_operand.vmem [shape: f32[1,128], index: 3, kind: input, shape index: {}]
  %s4 = inlined_call_operand.vmem [shape: f32[1,128], index: 4, kind: input, shape index: {}]
  %s5 = inlined_call_operand.vmem [shape: f32[1,128], index: 5, kind: input, shape index: {}]
  %s6 = inlined_call_operand.vmem [shape: bf16[128,32], index: 6, kind: input, shape index: {}]
  %s7 = inlined_call_operand.vmem [shape: f32[1,32], index: 7, kind: input, shape index: {}]
  %s8 = inlined_call_operand.vmem [shape: f32[1,32], index: 8, kind: input, shape index: {}]
  %s9 = inlined_call_operand.vmem [shape: f32[1,32], index: 9, kind: input, shape index: {}]
  %s10 = inlined_call_operand.vmem [shape: f32[2,16,32], index: 10, kind: output, shape index: {}]
  %s11 = sld [smem:[#allocation0]]
  $region111: #{forward.7} parent=0
    _
  %s13 = ssub.s32 1, %s11
  %s14 = scalar_select 0, %s13, %s11
  $region1: #{forward.7} parent=0
    #allocation2 [shape = 'u8[32768]{0}', space=vmem, size = 0x8000, scoped, tag = 'input window, operand 0']
    loop: start=0, step=1, limit=4
    $region2: #{forward.7} parent=1 // loop_pre_header
      _
    $region3: #{forward.7} parent=1 // loop_header
      %s16 = sphi 0, %s20
      %p17 = scmp.ge.s32.totalorder %s16, 4
      %s23 = sphi 0, %s35
      %s24 = sphi 0, %s31
      %s25 = sphi 0, %s23
      %s26 = sphi 0, %s24
      %s27 = sphi 0, %s25
      %s28 = sphi 0, %s26
      %s40 = sphi 0, %s42
      %s43 = sphi 0, %s40
      %s44 = sphi 0, %s43
      %s60 = sphi 0, %s44
      %s68 = sphi 0, %s70
      %s71 = sphi 0, %s68
      %s72 = sphi 0, %s71
      %s88 = sphi 0, %s72
      %s92 = sphi 0, %s92
      %s94 = sphi 0, %s92
      %s95 = sphi 0, %s94
      %s109 = sphi 0, %s95
      %s113 = sphi 0, %s113
      %s115 = sphi 0, %s113
      %s116 = sphi 0, %s115
      %s130 = sphi 0, %s116
      %s134 = sphi 0, %s134
      %s136 = sphi 0, %s134
      %s137 = sphi 0, %s136
      %s151 = sphi 0, %s137
      %s155 = sphi 0, %s155
      %s157 = sphi 0, %s155
      %s158 = sphi 0, %s157
      %s172 = sphi 0, %s158
      %s176 = sphi 0, %s176
      %s178 = sphi 0, %s176
      %s179 = sphi 0, %s178
      %s193 = sphi 0, %s179
      %s197 = sphi 0, %s197
      %s199 = sphi 0, %s197
      %s200 = sphi 0, %s199
      %s214 = sphi 0, %s200
      %s218 = sphi 0, %s218
      %s220 = sphi 0, %s218
      %s221 = sphi 0, %s220
      %s235 = sphi 0, %s221
      %s239 = sphi 0, %s239
      %s241 = sphi 0, %s239
      %s242 = sphi 0, %s241
      %s256 = sphi 0, %s242
      %s264 = sphi 0, %s266
      %s267 = sphi 0, %s264
      %s268 = sphi 0, %s267
      %s284 = sphi 0, %s268
    $region4: #{forward.7} parent=1 // loop_header_branch
      %19 = sbr.rel (%p17) target = $region8
    $region5: #{forward.7} parent=1 // loop_body
      %s21 = ssub.s32 %s16, 1
      %s22 = ssub.s32 %s16, 2
      %s29 = sadd.s32 1, %s24
      %p30 = scmp.ge.s32.totalorder %s29, 1
      %s31 = scalar_select %p30, 0, %s29
      %s32 = sadd.s32 1, %s23
      %s33 = scalar_select %p30, %s32, %s23
      %p34 = scmp.ge.s32.totalorder %s33, 2
      %s35 = scalar_select %p34, 0, %s33
      %s36 = ssub.s32 %s23, %s35
      %s37 = ssub.s32 %s24, %s31
      %s38 = sor.u32 %s36, %s37
      %p39 = scmp.eq.s32.totalorder %s38, 0
      %s41 = sadd.s32 %s40, 1
      %s42 = scalar_select %p39, %s40, %s41
      %p45 = pneg %p39
      %p46 = scmp.eq.s32.totalorder %s16, 1
      %p47 = por %p45, %p46
      %p48 = scmp.ne.s32.totalorder %s40, %s43
      %p49 = scmp.eq.s32.totalorder %s16, 0
      %p50 = por %p48, %p49
      %p51 = scmp.ne.s32.totalorder %s40, %s43
      %p52 = scmp.eq.s32.totalorder %s21, 1
      %p53 = por %p51, %p52
      %p54 = scmp.ne.s32.totalorder %s43, %s44
      %p55 = scmp.eq.s32.totalorder %s21, 0
      %p56 = por %p54, %p55
      %p57 = scmp.ne.s32.totalorder %s43, %s44
      %p58 = scmp.eq.s32.totalorder %s22, 1
      %p59 = por %p57, %p58
      %p61 = scmp.ne.s32.totalorder %s44, %s60
      %p62 = scmp.eq.s32.totalorder %s22, 0
      %p63 = por %p61, %p62
      %s64 = ssub.s32 %s23, %s35
      %s65 = ssub.s32 %s24, %s31
      %s66 = sor.u32 %s64, %s65
      %p67 = scmp.eq.s32.totalorder %s66, 0
      %s69 = sadd.s32 %s68, 1
      %s70 = scalar_select %p67, %s68, %s69
      %p73 = pneg %p67
      %p74 = scmp.eq.s32.totalorder %s16, 1
      %p75 = por %p73, %p74
      %p76 = scmp.ne.s32.totalorder %s68, %s71
      %p77 = scmp.eq.s32.totalorder %s16, 0
      %p78 = por %p76, %p77
      %p79 = scmp.ne.s32.totalorder %s68, %s71
      %p80 = scmp.eq.s32.totalorder %s21, 1
      %p81 = por %p79, %p80
      %p82 = scmp.ne.s32.totalorder %s71, %s72
      %p83 = scmp.eq.s32.totalorder %s21, 0
      %p84 = por %p82, %p83
      %p85 = scmp.ne.s32.totalorder %s71, %s72
      %p86 = scmp.eq.s32.totalorder %s22, 1
      %p87 = por %p85, %p86
      %p89 = scmp.ne.s32.totalorder %s72, %s88
      %p90 = scmp.eq.s32.totalorder %s22, 0
      %p91 = por %p89, %p90
      %s93 = sadd.s32 %s92, 1
      %p96 = scmp.eq.s32.totalorder %s16, 1
      %p97 = scmp.ne.s32.totalorder %s92, %s94
      %p98 = scmp.eq.s32.totalorder %s16, 0
      %p99 = por %p97, %p98
      %p100 = scmp.ne.s32.totalorder %s92, %s94
      %p101 = scmp.eq.s32.totalorder %s21, 1
      %p102 = por %p100, %p101
      %p103 = scmp.ne.s32.totalorder %s94, %s95
      %p104 = scmp.eq.s32.totalorder %s21, 0
      %p105 = por %p103, %p104
      %p106 = scmp.ne.s32.totalorder %s94, %s95
      %p107 = scmp.eq.s32.totalorder %s22, 1
      %p108 = por %p106, %p107
      %p110 = scmp.ne.s32.totalorder %s95, %s109
      %p111 = scmp.eq.s32.totalorder %s22, 0
      %p112 = por %p110, %p111
      %s114 = sadd.s32 %s113, 1
      %p117 = scmp.eq.s32.totalorder %s16, 1
      %p118 = scmp.ne.s32.totalorder %s113, %s115
      %p119 = scmp.eq.s32.totalorder %s16, 0
      %p120 = por %p118, %p119
      %p121 = scmp.ne.s32.totalorder %s113, %s115
      %p122 = scmp.eq.s32.totalorder %s21, 1
      %p123 = por %p121, %p122
      %p124 = scmp.ne.s32.totalorder %s115, %s116
      %p125 = scmp.eq.s32.totalorder %s21, 0
      %p126 = por %p124, %p125
      %p127 = scmp.ne.s32.totalorder %s115, %s116
      %p128 = scmp.eq.s32.totalorder %s22, 1
      %p129 = por %p127, %p128
      %p131 = scmp.ne.s32.totalorder %s116, %s130
      %p132 = scmp.eq.s32.totalorder %s22, 0
      %p133 = por %p131, %p132
      %s135 = sadd.s32 %s134, 1
      %p138 = scmp.eq.s32.totalorder %s16, 1
      %p139 = scmp.ne.s32.totalorder %s134, %s136
      %p140 = scmp.eq.s32.totalorder %s16, 0
      %p141 = por %p139, %p140
      %p142 = scmp.ne.s32.totalorder %s134, %s136
      %p143 = scmp.eq.s32.totalorder %s21, 1
      %p144 = por %p142, %p143
      %p145 = scmp.ne.s32.totalorder %s136, %s137
      %p146 = scmp.eq.s32.totalorder %s21, 0
      %p147 = por %p145, %p146
      %p148 = scmp.ne.s32.totalorder %s136, %s137
      %p149 = scmp.eq.s32.totalorder %s22, 1
      %p150 = por %p148, %p149
      %p152 = scmp.ne.s32.totalorder %s137, %s151
      %p153 = scmp.eq.s32.totalorder %s22, 0
      %p154 = por %p152, %p153
      %s156 = sadd.s32 %s155, 1
      %p159 = scmp.eq.s32.totalorder %s16, 1
      %p160 = scmp.ne.s32.totalorder %s155, %s157
      %p161 = scmp.eq.s32.totalorder %s16, 0
      %p162 = por %p160, %p161
      %p163 = scmp.ne.s32.totalorder %s155, %s157
      %p164 = scmp.eq.s32.totalorder %s21, 1
      %p165 = por %p163, %p164
      %p166 = scmp.ne.s32.totalorder %s157, %s158
      %p167 = scmp.eq.s32.totalorder %s21, 0
      %p168 = por %p166, %p167
      %p169 = scmp.ne.s32.totalorder %s157, %s158
      %p170 = scmp.eq.s32.totalorder %s22, 1
      %p171 = por %p169, %p170
      %p173 = scmp.ne.s32.totalorder %s158, %s172
      %p174 = scmp.eq.s32.totalorder %s22, 0
      %p175 = por %p173, %p174
      %s177 = sadd.s32 %s176, 1
      %p180 = scmp.eq.s32.totalorder %s16, 1
      %p181 = scmp.ne.s32.totalorder %s176, %s178
      %p182 = scmp.eq.s32.totalorder %s16, 0
      %p183 = por %p181, %p182
      %p184 = scmp.ne.s32.totalorder %s176, %s178
      %p185 = scmp.eq.s32.totalorder %s21, 1
      %p186 = por %p184, %p185
      %p187 = scmp.ne.s32.totalorder %s178, %s179
      %p188 = scmp.eq.s32.totalorder %s21, 0
      %p189 = por %p187, %p188
      %p190 = scmp.ne.s32.totalorder %s178, %s179
      %p191 = scmp.eq.s32.totalorder %s22, 1
      %p192 = por %p190, %p191
      %p194 = scmp.ne.s32.totalorder %s179, %s193
      %p195 = scmp.eq.s32.totalorder %s22, 0
      %p196 = por %p194, %p195
      %s198 = sadd.s32 %s197, 1
      %p201 = scmp.eq.s32.totalorder %s16, 1
      %p202 = scmp.ne.s32.totalorder %s197, %s199
      %p203 = scmp.eq.s32.totalorder %s16, 0
      %p204 = por %p202, %p203
      %p205 = scmp.ne.s32.totalorder %s197, %s199
      %p206 = scmp.eq.s32.totalorder %s21, 1
      %p207 = por %p205, %p206
      %p208 = scmp.ne.s32.totalorder %s199, %s200
      %p209 = scmp.eq.s32.totalorder %s21, 0
      %p210 = por %p208, %p209
      %p211 = scmp.ne.s32.totalorder %s199, %s200
      %p212 = scmp.eq.s32.totalorder %s22, 1
      %p213 = por %p211, %p212
      %p215 = scmp.ne.s32.totalorder %s200, %s214
      %p216 = scmp.eq.s32.totalorder %s22, 0
      %p217 = por %p215, %p216
      %s219 = sadd.s32 %s218, 1
      %p222 = scmp.eq.s32.totalorder %s16, 1
      %p223 = scmp.ne.s32.totalorder %s218, %s220
      %p224 = scmp.eq.s32.totalorder %s16, 0
      %p225 = por %p223, %p224
      %p226 = scmp.ne.s32.totalorder %s218, %s220
      %p227 = scmp.eq.s32.totalorder %s21, 1
      %p228 = por %p226, %p227
      %p229 = scmp.ne.s32.totalorder %s220, %s221
      %p230 = scmp.eq.s32.totalorder %s21, 0
      %p231 = por %p229, %p230
      %p232 = scmp.ne.s32.totalorder %s220, %s221
      %p233 = scmp.eq.s32.totalorder %s22, 1
      %p234 = por %p232, %p233
      %p236 = scmp.ne.s32.totalorder %s221, %s235
      %p237 = scmp.eq.s32.totalorder %s22, 0
      %p238 = por %p236, %p237
      %s240 = sadd.s32 %s239, 1
      %p243 = scmp.eq.s32.totalorder %s16, 1
      %p244 = scmp.ne.s32.totalorder %s239, %s241
      %p245 = scmp.eq.s32.totalorder %s16, 0
      %p246 = por %p244, %p245
      %p247 = scmp.ne.s32.totalorder %s239, %s241
      %p248 = scmp.eq.s32.totalorder %s21, 1
      %p249 = por %p247, %p248
      %p250 = scmp.ne.s32.totalorder %s241, %s242
      %p251 = scmp.eq.s32.totalorder %s21, 0
      %p252 = por %p250, %p251
      %p253 = scmp.ne.s32.totalorder %s241, %s242
      %p254 = scmp.eq.s32.totalorder %s22, 1
      %p255 = por %p253, %p254
      %p257 = scmp.ne.s32.totalorder %s242, %s256
      %p258 = scmp.eq.s32.totalorder %s22, 0
      %p259 = por %p257, %p258
      %s260 = ssub.s32 %s23, %s35
      %s261 = ssub.s32 %s24, %s31
      %s262 = sor.u32 %s260, %s261
      %p263 = scmp.eq.s32.totalorder %s262, 0
      %s265 = sadd.s32 %s264, 1
      %s266 = scalar_select %p263, %s264, %s265
      %p269 = pneg %p263
      %p270 = scmp.eq.s32.totalorder %s16, 1
      %p271 = por %p269, %p270
      %p272 = scmp.ne.s32.totalorder %s264, %s267
      %p273 = scmp.eq.s32.totalorder %s16, 0
      %p274 = por %p272, %p273
      %p275 = scmp.ne.s32.totalorder %s264, %s267
      %p276 = scmp.eq.s32.totalorder %s21, 1
      %p277 = por %p275, %p276
      %p278 = scmp.ne.s32.totalorder %s267, %s268
      %p279 = scmp.eq.s32.totalorder %s21, 0
      %p280 = por %p278, %p279
      %p281 = scmp.ne.s32.totalorder %s267, %s268
      %p282 = scmp.eq.s32.totalorder %s22, 1
      %p283 = por %p281, %p282
      %p285 = scmp.ne.s32.totalorder %s268, %s284
      %p286 = scmp.eq.s32.totalorder %s22, 0
      %p287 = por %p285, %p286
      %p288 = scmp.le.s32.totalorder 1, %s16
      %p289 = scmp.lt.s32.totalorder %s16, 3
      %p290 = pnand %p288, %p289
      %p291 = pneg %p290
      // Predicated region
      $region9: #{forward.7} parent=5 // pred_check
        _
      $region10: #{forward.7} parent=5 // pred_check_branch
        %293 = sbr.rel (%p290) target = $region12
      $region11: #{forward.7} parent=5 // pred_region
        %s294 = ssub.s32 %s16, 1
        // Predicated region
        $region13: #{forward.7} parent=11 // pred_check
          %p295 = pneg %p105
        $region14: #{forward.7} parent=11 // pred_check_branch
          %297 = sbr.rel (%p295) target = $region16
        $region15: #{forward.7} parent=11 // pred_region
          _
        $region16: #{forward.7} parent=11 // pred_fallthru
          _
        // Predicated region
        $region17: #{forward.7} parent=11 // pred_check
          %p298 = pneg %p126
        $region18: #{forward.7} parent=11 // pred_check_branch
          %300 = sbr.rel (%p298) target = $region20
        $region19: #{forward.7} parent=11 // pred_region
          _
        $region20: #{forward.7} parent=11 // pred_fallthru
          _
        // Predicated region
        $region21: #{forward.7} parent=11 // pred_check
          %p301 = pneg %p147
        $region22: #{forward.7} parent=11 // pred_check_branch
          %303 = sbr.rel (%p301) target = $region24
        $region23: #{forward.7} parent=11 // pred_region
          _
        $region24: #{forward.7} parent=11 // pred_fallthru
          _
        // Predicated region
        $region25: #{forward.7} parent=11 // pred_check
          %p304 = pneg %p168
        $region26: #{forward.7} parent=11 // pred_check_branch
          %306 = sbr.rel (%p304) target = $region28
        $region27: #{forward.7} parent=11 // pred_region
          _
        $region28: #{forward.7} parent=11 // pred_fallthru
          _
        // Predicated region
        $region29: #{forward.7} parent=11 // pred_check
          %p307 = pneg %p189
        $region30: #{forward.7} parent=11 // pred_check_branch
          %309 = sbr.rel (%p307) target = $region32
        $region31: #{forward.7} parent=11 // pred_region
          _
        $region32: #{forward.7} parent=11 // pred_fallthru
          _
        // Predicated region
        $region33: #{forward.7} parent=11 // pred_check
          %p310 = pneg %p210
        $region34: #{forward.7} parent=11 // pred_check_branch
          %312 = sbr.rel (%p310) target = $region36
        $region35: #{forward.7} parent=11 // pred_region
          _
        $region36: #{forward.7} parent=11 // pred_fallthru
          _
        // Predicated region
        $region37: #{forward.7} parent=11 // pred_check
          %p313 = pneg %p231
        $region38: #{forward.7} parent=11 // pred_check_branch
          %315 = sbr.rel (%p313) target = $region40
        $region39: #{forward.7} parent=11 // pred_region
          _
        $region40: #{forward.7} parent=11 // pred_fallthru
          _
        // Predicated region
        $region41: #{forward.7} parent=11 // pred_check
          %p316 = pneg %p252
        $region42: #{forward.7} parent=11 // pred_check_branch
          %318 = sbr.rel (%p316) target = $region44
        $region43: #{forward.7} parent=11 // pred_region
          _
        $region44: #{forward.7} parent=11 // pred_fallthru
          _
      $region12: #{forward.7} parent=5 // pred_fallthru
        _
      %p319 = scmp.lt.s32.totalorder %s16, 2
      // Predicated region
      $region45: #{forward.7} parent=5 // pred_check
        %p320 = pneg %p319
      $region46: #{forward.7} parent=5 // pred_check_branch
        %322 = sbr.rel (%p320) target = $region48
      $region47: #{forward.7} parent=5 // pred_region
        // Predicated region
        $region49: #{forward.7} parent=47 // pred_check
          %p323 = pneg %p50
        $region50: #{forward.7} parent=47 // pred_check_branch
          %325 = sbr.rel (%p323) target = $region52
        $region51: #{forward.7} parent=47 // pred_region
          %s326 = sand.u32 %s40, 1
          %s327 = sand.u32 %s40, 1
          %s328 = smul.addr %s327, 32
          %s329 = scalar_lea.vmem [#allocation2], %s328
          %s330 = smul.u32 2, %s24
          %s331 = smul.addr %s23, 2
          %s332 = sadd.s32 %s330, %s331
          %s333 = smul.addr %s332, 8
          %s334 = scalar_lea.vmem %s0, %s333
          // Predicated region
          $region53: #{forward.7} parent=51 // pred_check
            _
          $region54: #{forward.7} parent=51 // pred_check_branch
            %336 = sbr.rel (0) target = $region56
          $region55: #{forward.7} parent=51 // pred_region
            // Predicated region
            $region57: #{forward.7} parent=55 // pred_check
              _
            $region58: #{forward.7} parent=55 // pred_check_branch
              %338 = sbr.rel (0) target = $region60
            $region59: #{forward.7} parent=55 // pred_region
              // Predicated region
              $region72: #{forward.7} parent=59 // pred_check
                _
              $region73: #{forward.7} parent=59 // pred_check_branch
                %359 = sbr.rel (0) target = $region75
              $region74: #{forward.7} parent=59 // pred_region
                loop: start=0, step=1, limit=1
                $region76: #{forward.7} parent=74 // loop_pre_header
                  _
                $region77: #{forward.7} parent=74 // loop_header
                  %s361 = sphi 0, %s365
                  %p362 = scmp.ge.s32.totalorder %s361, 1
                  %s366 = sphi %s334, %s334
                  %s367 = sphi %s329, %s329
                $region78: #{forward.7} parent=74 // loop_header_branch
                  %364 = sbr.rel (%p362) target = $region82
                $region79: #{forward.7} parent=74 // loop_body
                  %v368 = vld [vmem:[%s366] sm:$0xff]
                  %369 = vst [vmem:[%s367] sm:$0xff] %v368
                  %v370 = vld [vmem:[%s366 + $0x8] sm:$0xff]
                  %371 = vst [vmem:[%s367 + $0x8] sm:$0xff] %v370
                  %v372 = vld [vmem:[%s366 + $0x20] sm:$0xff]
                  %373 = vst [vmem:[%s367 + $0x10] sm:$0xff] %v372
                  %v374 = vld [vmem:[%s366 + $0x28] sm:$0xff]
                  %375 = vst [vmem:[%s367 + $0x18] sm:$0xff] %v374
                $region80: #{forward.7} parent=74 // loop_footer
                  %s365 = sadd.s32 1, %s361
                $region81: #{forward.7} parent=74 // loop_footer_branch
                  %360 = sbr.rel target = $region77
                $region82: #{forward.7} parent=74 // loop_exit
                  _
              $region75: #{forward.7} parent=59 // pred_fallthru
                _
              // Predicated region
              $region83: #{forward.7} parent=59 // pred_check
                _
              $region84: #{forward.7} parent=59 // pred_check_branch
                %377 = sbr.rel target = $region86
              $region85: #{forward.7} parent=59 // pred_region
                _
              $region86: #{forward.7} parent=59 // pred_fallthru
                _
            $region60: #{forward.7} parent=55 // pred_fallthru
              _
            // Predicated region
            $region61: #{forward.7} parent=55 // pred_check
              _
            $region62: #{forward.7} parent=55 // pred_check_branch
              %340 = sbr.rel target = $region64
            $region63: #{forward.7} parent=55 // pred_region
              loop: start=0, step=1, limit=1
              $region65: #{forward.7} parent=63 // loop_pre_header
                _
              $region66: #{forward.7} parent=63 // loop_header
                %s343 = sphi 0, %s347
                %p344 = scmp.ge.s32.totalorder %s343, 1
                %s348 = sphi %s334, %s334
                %s349 = sphi %s329, %s329
              $region67: #{forward.7} parent=63 // loop_header_branch
                %346 = sbr.rel (%p344) target = $region71
              $region68: #{forward.7} parent=63 // loop_body
                %v350 = vld [vmem:[%s348] sm:$0xff]
                %351 = vst [vmem:[%s349] sm:$0xff] %v350
                %v352 = vld [vmem:[%s348 + $0x8] sm:$0xff]
                %353 = vst [vmem:[%s349 + $0x8] sm:$0xff] %v352
                %v354 = vld [vmem:[%s348 + $0x20] sm:$0xff]
                %355 = vst [vmem:[%s349 + $0x10] sm:$0xff] %v354
                %v356 = vld [vmem:[%s348 + $0x28] sm:$0xff]
                %357 = vst [vmem:[%s349 + $0x18] sm:$0xff] %v356
              $region69: #{forward.7} parent=63 // loop_footer
                %s347 = sadd.s32 1, %s343
              $region70: #{forward.7} parent=63 // loop_footer_branch
                %342 = sbr.rel target = $region66
              $region71: #{forward.7} parent=63 // loop_exit
                _
            $region64: #{forward.7} parent=55 // pred_fallthru
              _
          $region56: #{forward.7} parent=51 // pred_fallthru
            _
          %378 = vnop
        $region52: #{forward.7} parent=47 // pred_fallthru
          _
        // Predicated region
        $region87: #{forward.7} parent=47 // pred_check
          %p379 = pneg %p78
        $region88: #{forward.7} parent=47 // pred_check_branch
          %381 = sbr.rel (%p379) target = $region90
        $region89: #{forward.7} parent=47 // pred_region
          %s382 = smul.u32 2, %s24
          %p383 = scmp.lt.s32.totalorder %s23, 1
          %s384 = scalar_select %p383, %s23, 1
          %p385 = scmp.lt.s32.totalorder %s382, 1
          %s386 = scalar_select %p385, %s382, 1
          %s387 = smul.addr %s384, 2
          %s388 = sadd.s32 %s386, %s387
          %s389 = smul.addr %s388, 8
          %s390 = scalar_lea.vmem %s1, %s389
          %s391 = smul.u32 2, %s24
        $region90: #{forward.7} parent=47 // pred_fallthru
          _
      $region48: #{forward.7} parent=5 // pred_fallthru
        _
      %p392 = scmp.le.s32.totalorder 1, %s16
      %p393 = scmp.lt.s32.totalorder %s16, 3
      %p394 = pnand %p392, %p393
      %p395 = pneg %p394
      // Predicated region
      $region91: #{forward.7} parent=5 // pred_check
        _
      $region92: #{forward.7} parent=5 // pred_check_branch
        %397 = sbr.rel (%p394) target = $region94
      $region93: #{forward.7} parent=5 // pred_region
        %s398 = ssub.s32 %s16, 1
        %s399 = sand.u32 %s43, 1
        %s400 = sand.u32 %s43, 1
        %s401 = smul.addr %s400, 32
        %s402 = scalar_lea.vmem [#allocation2], %s401
        // Predicated region
        $region95: #{forward.7} parent=93 // pred_check
          %p403 = pneg %p56
        $region96: #{forward.7} parent=93 // pred_check_branch
          %405 = sbr.rel (%p403) target = $region98
        $region97: #{forward.7} parent=93 // pred_region
          _
        $region98: #{forward.7} parent=93 // pred_fallthru
          _
        %s406 = sand.u32 %s43, 1
        %s407 = sand.u32 %s43, 1
        %s408 = smul.addr %s407, 32
        %s409 = scalar_lea.vmem [#allocation2], %s408
        %p410 = pneg %p56
        %p411 = pneg %p53
        %s412 = smul.u32 2, %s26
        %p413 = scmp.lt.s32.totalorder %s25, 1
        %s414 = scalar_select %p413, %s25, 1
        %p415 = scmp.lt.s32.totalorder %s412, 1
        %s416 = scalar_select %p415, %s412, 1
        %s417 = smul.addr %s414, 2
        %s418 = sadd.s32 %s416, %s417
        %s419 = smul.addr %s418, 8
        %s420 = scalar_lea.vmem %s1, %s419
        %p421 = pneg %p84
        %p422 = pneg %p81
        %p423 = pneg %p105
        %p424 = pneg %p102
        %p425 = pneg %p126
        %p426 = pneg %p123
        %p427 = pneg %p147
        %p428 = pneg %p144
        %p429 = pneg %p168
        %p430 = pneg %p165
        %p431 = pneg %p189
        %p432 = pneg %p186
        %p433 = pneg %p210
        %p434 = pneg %p207
        %p435 = pneg %p231
        %p436 = pneg %p228
        %p437 = pneg %p252
        %p438 = pneg %p249
        %p439 = pneg %p280
        %p440 = pneg %p277
        %s441 = smul.u32 2, %s26
        %p442 = scmp.lt.s32.totalorder %s25, 1
        %s443 = scalar_select %p442, %s25, 1
        %p444 = scmp.lt.s32.totalorder %s441, 1
        %s445 = scalar_select %p444, %s441, 1
        %s446 = smul.addr %s443, 2
        %s447 = sadd.s32 %s445, %s446
        %s448 = smul.addr %s447, 8
        %s449 = scalar_lea.vmem %s10, %s448
        %s450 = smul.u32 2, %s26
        %s451 = smul.u32 2, %s26
        %p452 = scmp.lt.s32.totalorder %s25, 1
        %s453 = scalar_select %p452, %s25, 1
        %p454 = scmp.lt.s32.totalorder %s451, 1
        %s455 = scalar_select %p454, %s451, 1
        %s456 = smul.addr %s453, 2
        %s457 = sadd.s32 %s455, %s456
        %s458 = smul.addr %s457, 8
        %s459 = scalar_lea.vmem %s1, %s458
        %s460 = smul.u32 2, %s26
        %s461 = smul.u32 2, %s26
        %p462 = scmp.lt.s32.totalorder %s25, 1
        %s463 = scalar_select %p462, %s25, 1
        %p464 = scmp.lt.s32.totalorder %s461, 1
        %s465 = scalar_select %p464, %s461, 1
        %s466 = smul.addr %s463, 2
        %s467 = sadd.s32 %s465, %s466
        %s468 = smul.addr %s467, 8
        %s469 = scalar_lea.vmem %s10, %s468
        %s470 = smul.u32 2, %s26
        %v472 = vld [vmem:[%s402] sm:$0xff]
        %v473 = vld [vmem:[%s402 + $0x8] sm:$0xff]
        %v474 = vpack.c.bf16 %v473, %v472
        %s475 = scalar_lea.vmem %s402, 16 [#allocation2]
        %v476 = vld [vmem:[%s475] sm:$0xff]
        %v477 = vld [vmem:[%s475 + $0x8] sm:$0xff]
        %v478 = vpack.c.bf16 %v477, %v476
        %v479 = vld [vmem:[%s2] sm:$0xf]
        %v480 = vld [vmem:[%s2 + $0x4] sm:$0xf]
        %v481 = vld [vmem:[%s2 + $0x8] sm:$0xf]
        %v482 = vld [vmem:[%s2 + $0xc] sm:$0xf]
        %v483 = vld [vmem:[%s2 + $0x10] sm:$0xf]
        %v484 = vld [vmem:[%s2 + $0x14] sm:$0xf]
        %v485 = vld [vmem:[%s2 + $0x18] sm:$0xf]
        %v486 = vld [vmem:[%s2 + $0x1c] sm:$0xf]
        %v491 = vunpack.c.l.b16 %v483
        %v492 = vunpack.c.l.b16 %v484
        %v493 = vunpack.c.l.b16 %v485
        %v494 = vunpack.c.l.b16 %v486
        %v495 = vpack.c.b16 %v492, %v491
        %v496 = vpack.c.b16 %v494, %v493
        %vm499 = vcmask 261120
        %v501 = vsel %vm499, %v478, 0
        %503 = vmatprep.subr.bf16.mxu0 0
        %504 = vmatpush1.bf16.msra.mxu0 %v495
        %505 = vmatprep.subr.bf16.mxu0 0
        %506 = vmatpush1.bf16.msra.mxu0 %v496
        %507 = vmatprep.subr.bf16.mxu0 0
        %508 = vmatpush1.bf16.msra.mxu0 0
        %509 = vmatprep.subr.bf16.mxu0 0
        %510 = vmatpush1.bf16.msra.mxu0 0
        %511 = vmatprep.subr.bf16.mxu0 0
        %512 = vmatpush1.bf16.msra.mxu0 0
        %513 = vmatprep.subr.bf16.mxu0 0
        %514 = vmatpush1.bf16.msra.mxu0 0
        %515 = vmatprep.subr.bf16.mxu0 0
        %516 = vmatpush1.bf16.msra.mxu0 0
        %517 = vmatprep.subr.bf16.mxu0 0
        %518 = vmatpush1.bf16.msra.mxu0 0
        %519 = vmatprep.subr.bf16.mxu0 0
        %520 = vmatpush1.bf16.msra.mxu0 0
        %521 = vmatprep.subr.bf16.mxu0 0
        %522 = vmatpush1.bf16.msra.mxu0 0
        %523 = vmatprep.subr.bf16.mxu0 0
        %524 = vmatpush1.bf16.msra.mxu0 0
        %525 = vmatprep.subr.bf16.mxu0 0
        %526 = vmatpush1.bf16.msra.mxu0 0
        %527 = vmatprep.subr.bf16.mxu0 0
        %528 = vmatpush1.bf16.msra.mxu0 0
        %529 = vmatprep.subr.bf16.mxu0 0
        %530 = vmatpush1.bf16.msra.mxu0 0
        %531 = vmatprep.subr.bf16.mxu0 0
        %532 = vmatpush1.bf16.msra.mxu0 0
        %533 = vmatprep.subr.bf16.mxu0 0
        %534 = vmatpush1.bf16.msra.mxu0 0
        %535 = vmatprep.mubr.bf16.mxu0 0
        %536 = vmatmul.mubr.bf16.gmra.mrb[0].mxu0 %v501
        %v537 = vpop.f32.mrb[0].mxu0
        %v538 = vadd.f32 0.0, %v537
        %v539 = vpop.f32.mrb[0].mxu0
        %v540 = vpop.f32.mrb[0].mxu0
        %v541 = vadd.f32 0.0, %v540
        %v542 = vpop.f32.mrb[0].mxu0
        %543 = vdwg.mxu0
        %v548 = vunpack.c.l.b16 %v479
        %v549 = vunpack.c.l.b16 %v480
        %v550 = vunpack.c.l.b16 %v481
        %v551 = vunpack.c.l.b16 %v482
        %v552 = vpack.c.b16 %v549, %v548
        %v553 = vpack.c.b16 %v551, %v550
        %v557 = vsel %vm499, %v474, 0
        %559 = vmatprep.subr.bf16.mxu0 0
        %560 = vmatpush1.bf16.msra.mxu0 %v552
        %561 = vmatprep.subr.bf16.mxu0 0
        %562 = vmatpush1.bf16.msra.mxu0 %v553
        %563 = vmatprep.subr.bf16.mxu0 0
        %564 = vmatpush1.bf16.msra.mxu0 0
        %565 = vmatprep.subr.bf16.mxu0 0
        %566 = vmatpush1.bf16.msra.mxu0 0
        %567 = vmatprep.subr.bf16.mxu0 0
        %568 = vmatpush1.bf16.msra.mxu0 0
        %569 = vmatprep.subr.bf16.mxu0 0
        %570 = vmatpush1.bf16.msra.mxu0 0
        %571 = vmatprep.subr.bf16.mxu0 0
        %572 = vmatpush1.bf16.msra.mxu0 0
        %573 = vmatprep.subr.bf16.mxu0 0
        %574 = vmatpush1.bf16.msra.mxu0 0
        %575 = vmatprep.subr.bf16.mxu0 0
        %576 = vmatpush1.bf16.msra.mxu0 0
        %577 = vmatprep.subr.bf16.mxu0 0
        %578 = vmatpush1.bf16.msra.mxu0 0
        %579 = vmatprep.subr.bf16.mxu0 0
        %580 = vmatpush1.bf16.msra.mxu0 0
        %581 = vmatprep.subr.bf16.mxu0 0
        %582 = vmatpush1.bf16.msra.mxu0 0
        %583 = vmatprep.subr.bf16.mxu0 0
        %584 = vmatpush1.bf16.msra.mxu0 0
        %585 = vmatprep.subr.bf16.mxu0 0
        %586 = vmatpush1.bf16.msra.mxu0 0
        %587 = vmatprep.subr.bf16.mxu0 0
        %588 = vmatpush1.bf16.msra.mxu0 0
        %589 = vmatprep.subr.bf16.mxu0 0
        %590 = vmatpush1.bf16.msra.mxu0 0
        %591 = vmatprep.mubr.bf16.mxu0 0
        %592 = vmatmul.mubr.bf16.gmra.mrb[0].mxu0 %v557
        %v593 = vpop.f32.mrb[0].mxu0
        %v594 = vadd.f32 %v538, %v593
        %v595 = vpop.f32.mrb[0].mxu0
        %v596 = vpop.f32.mrb[0].mxu0
        %v597 = vadd.f32 %v541, %v596
        %v598 = vpop.f32.mrb[0].mxu0
        %599 = vdwg.mxu0
        %v600 = vld [vmem:[%s3] sm:$0x1]
        %v602 = vlaneseq
        %v603 = vshrl.u32 %v602, 7
        %v604 = vsub.s32 0, %v603
        %v605 = vrot.slane %v600, %v604
        %v607 = vadd.f32 %v594, %v605
        %v608 = vadd.f32 %v597, %v605
        %v609 = vld [vmem:[%s4] sm:$0x1]
        %v610 = vld [vmem:[%s5] sm:$0x1]
        %611 = vadd.xlane.f32.xlu0 %v607
        %v612 = vpop.xlane.xlu0 %611
        %613 = vadd.xlane.f32.xlu0 %v608
        %v614 = vpop.xlane.xlu0 %613
        %v615 = vrcp.pop 128.0
        %v616 = vmul.f32 %v612, %v615
        %v617 = vmul.f32 %v614, %v615
        %v618 = vsub.f32 %v607, %v616
        %v619 = vsub.f32 %v608, %v617
        %v620 = vmul.f32 %v618, %v618
        %v621 = vmul.f32 %v619, %v619
        %622 = vadd.xlane.f32.xlu0 %v620
        %v623 = vpop.xlane.xlu0 %622
        %624 = vadd.xlane.f32.xlu0 %v621
        %v625 = vpop.xlane.xlu0 %624
        %v626 = vmul.f32 %v623, %v615
        %v627 = vmul.f32 %v625, %v615
        %v628 = vadd.f32 %v626, 1e-05
        %v629 = vadd.f32 %v627, 1e-05
        %v630 = vrsqrt.pop %v628
        %v631 = vrsqrt.pop %v629
        %v632 = vmul.f32 %v618, %v630
        %v633 = vmul.f32 %v619, %v631
        %v635 = vlaneseq
        %v636 = vshrl.u32 %v635, 7
        %v637 = vsub.s32 0, %v636
        %v638 = vrot.slane %v609, %v637
        %v640 = vmul.f32 %v632, %v638
        %v641 = vmul.f32 %v633, %v638
        %v643 = vlaneseq
        %v644 = vshrl.u32 %v643, 7
        %v645 = vsub.s32 0, %v644
        %v646 = vrot.slane %v610, %v645
        %v648 = vadd.f32 %v640, %v646
        %v649 = vadd.f32 %v641, %v646
        %v650 = vmax.f32 %v648, 0.0
        %v651 = vmax.f32 %v649, 0.0
        %v652 = vpack.c.bf16 %v651, %v650
        %v653 = vld [vmem:[%s6] sm:$0xf]
        %v654 = vld [vmem:[%s6 + $0x4] sm:$0xf]
        %v655 = vld [vmem:[%s6 + $0x8] sm:$0xf]
        %v656 = vld [vmem:[%s6 + $0xc] sm:$0xf]
        %v657 = vld [vmem:[%s6 + $0x10] sm:$0xf]
        %v658 = vld [vmem:[%s6 + $0x14] sm:$0xf]
        %v659 = vld [vmem:[%s6 + $0x18] sm:$0xf]
        %v660 = vld [vmem:[%s6 + $0x1c] sm:$0xf]
        %v661 = vld [vmem:[%s6 + $0x20] sm:$0xf]
        %v662 = vld [vmem:[%s6 + $0x24] sm:$0xf]
        %v663 = vld [vmem:[%s6 + $0x28] sm:$0xf]
        %v664 = vld [vmem:[%s6 + $0x2c] sm:$0xf]
        %v665 = vld [vmem:[%s6 + $0x30] sm:$0xf]
        %v666 = vld [vmem:[%s6 + $0x34] sm:$0xf]
        %v667 = vld [vmem:[%s6 + $0x38] sm:$0xf]
        %v668 = vld [vmem:[%s6 + $0x3c] sm:$0xf]
        %v669 = vld [vmem:[%s7] sm:$0x1]
        %v671 = vlaneseq
        %v672 = vshrl.u32 %v671, 7
        %v673 = vsub.s32 0, %v672
        %v674 = vrot.slane %v669, %v673
        %v692 = vunpack.c.l.b16 %v653
        %v693 = vunpack.c.l.b16 %v654
        %v694 = vunpack.c.l.b16 %v655
        %v695 = vunpack.c.l.b16 %v656
        %v696 = vunpack.c.l.b16 %v657
        %v697 = vunpack.c.l.b16 %v658
        %v698 = vunpack.c.l.b16 %v659
        %v699 = vunpack.c.l.b16 %v660
        %v700 = vunpack.c.l.b16 %v661
        %v701 = vunpack.c.l.b16 %v662
        %v702 = vunpack.c.l.b16 %v663
        %v703 = vunpack.c.l.b16 %v664
        %v704 = vunpack.c.l.b16 %v665
        %v705 = vunpack.c.l.b16 %v666
        %v706 = vunpack.c.l.b16 %v667
        %v707 = vunpack.c.l.b16 %v668
        %v708 = vpack.c.b16 %v693, %v692
        %v709 = vpack.c.b16 %v695, %v694
        %v710 = vpack.c.b16 %v697, %v696
        %v711 = vpack.c.b16 %v699, %v698
        %v712 = vpack.c.b16 %v701, %v700
        %v713 = vpack.c.b16 %v703, %v702
        %v714 = vpack.c.b16 %v705, %v704
        %v715 = vpack.c.b16 %v707, %v706
        %724 = vmatprep.subr.bf16.mxu0 0
        %725 = vmatpush1.bf16.msra.mxu0 %v708
        %726 = vmatprep.subr.bf16.mxu0 0
        %727 = vmatpush1.bf16.msra.mxu0 %v709
        %728 = vmatprep.subr.bf16.mxu0 0
        %729 = vmatpush1.bf16.msra.mxu0 %v710
        %730 = vmatprep.subr.bf16.mxu0 0
        %731 = vmatpush1.bf16.msra.mxu0 %v711
        %732 = vmatprep.subr.bf16.mxu0 0
        %733 = vmatpush1.bf16.msra.mxu0 %v712
        %734 = vmatprep.subr.bf16.mxu0 0
        %735 = vmatpush1.bf16.msra.mxu0 %v713
        %736 = vmatprep.subr.bf16.mxu0 0
        %737 = vmatpush1.bf16.msra.mxu0 %v714
        %738 = vmatprep.subr.bf16.mxu0 0
        %739 = vmatpush1.bf16.msra.mxu0 %v715
        %740 = vmatprep.subr.bf16.mxu0 0
        %741 = vmatpush1.bf16.msra.mxu0 0
        %742 = vmatprep.subr.bf16.mxu0 0
        %743 = vmatpush1.bf16.msra.mxu0 0
        %744 = vmatprep.subr.bf16.mxu0 0
        %745 = vmatpush1.bf16.msra.mxu0 0
        %746 = vmatprep.subr.bf16.mxu0 0
        %747 = vmatpush1.bf16.msra.mxu0 0
        %748 = vmatprep.subr.bf16.mxu0 0
        %749 = vmatpush1.bf16.msra.mxu0 0
        %750 = vmatprep.subr.bf16.mxu0 0
        %751 = vmatpush1.bf16.msra.mxu0 0
        %752 = vmatprep.subr.bf16.mxu0 0
        %753 = vmatpush1.bf16.msra.mxu0 0
        %754 = vmatprep.subr.bf16.mxu0 0
        %755 = vmatpush1.bf16.msra.mxu0 0
        %756 = vmatprep.mubr.bf16.mxu0 0
        %757 = vmatmul.mubr.bf16.gmra.mrb[0].mxu0 %v652
        %v758 = vpop.f32.mrb[0].mxu0
        %v759 = vadd.f32 %v674, %v758
        %v760 = vpop.f32.mrb[0].mxu0
        %v761 = vpop.f32.mrb[0].mxu0
        %v762 = vadd.f32 %v674, %v761
        %v763 = vpop.f32.mrb[0].mxu0
        %764 = vdwg.mxu0
        %v765 = vld [vmem:[%s8] sm:$0x1]
        %v766 = vld [vmem:[%s9] sm:$0x1]
        %v767 = vsel %vm499, %v759, 0.0
        %768 = vadd.xlane.f32.xlu0 %v767
        %v769 = vpop.xlane.xlu0 %768
        %v770 = vsel %vm499, %v762, 0.0
        %771 = vadd.xlane.f32.xlu0 %v770
        %v772 = vpop.xlane.xlu0 %771
        %v773 = vrcp.pop 32.0
        %v774 = vmul.f32 %v769, %v773
        %v775 = vmul.f32 %v772, %v773
        %v776 = vsub.f32 %v759, %v774
        %v777 = vsub.f32 %v762, %v775
        %v778 = vmul.f32 %v776, %v776
        %v779 = vmul.f32 %v777, %v777
        %v780 = vsel %vm499, %v778, 0.0
        %781 = vadd.xlane.f32.xlu0 %v780
        %v782 = vpop.xlane.xlu0 %781
        %v783 = vsel %vm499, %v779, 0.0
        %784 = vadd.xlane.f32.xlu0 %v783
        %v785 = vpop.xlane.xlu0 %784
        %v786 = vmul.f32 %v782, %v773
        %v787 = vmul.f32 %v785, %v773
        %v788 = vadd.f32 %v786, 1e-05
        %v789 = vadd.f32 %v787, 1e-05
        %v790 = vrsqrt.pop %v788
        %v791 = vrsqrt.pop %v789
        %v792 = vmul.f32 %v776, %v790
        %v793 = vmul.f32 %v777, %v791
        %v795 = vlaneseq
        %v796 = vshrl.u32 %v795, 7
        %v797 = vsub.s32 0, %v796
        %v798 = vrot.slane %v765, %v797
        %v800 = vmul.f32 %v792, %v798
        %v801 = vmul.f32 %v793, %v798
        %v803 = vlaneseq
        %v804 = vshrl.u32 %v803, 7
        %v805 = vsub.s32 0, %v804
        %v806 = vrot.slane %v766, %v805
        %v808 = vadd.f32 %v800, %v806
        %v809 = vadd.f32 %v801, %v806
        %v810 = vmax.f32 %v808, 0.0
        %v811 = vmax.f32 %v809, 0.0
        %v812 = vld [vmem:[%s459] sm:$0xff]
        %v813 = vld [vmem:[%s459 + $0x8] sm:$0xff]
        %v814 = vadd.f32 %v810, %v812
        %v815 = vadd.f32 %v811, %v813
        %816 = vst.msk [vmem:[%s469] sm:$0xff] %vm499, %v814
        %817 = vst.msk [vmem:[%s469 + $0x8] sm:$0xff] %vm499, %v815
        %s818 = smul.u32 2, %s26
        %p819 = scmp.lt.s32.totalorder %s25, 1
        %s820 = scalar_select %p819, %s25, 1
        %p821 = scmp.lt.s32.totalorder %s818, 1
        %s822 = scalar_select %p821, %s818, 1
        %s823 = smul.addr %s820, 2
        %s824 = sadd.s32 %s822, %s823
        %s825 = smul.addr %s824, 8
        %s826 = scalar_lea.vmem %s10, %s825
        // Predicated region
        $region99: #{forward.7} parent=93 // pred_check
          %p827 = pneg %p277
        $region100: #{forward.7} parent=93 // pred_check_branch
          %829 = sbr.rel (%p827) target = $region102
        $region101: #{forward.7} parent=93 // pred_region
          %s830 = smul.u32 2, %s26
        $region102: #{forward.7} parent=93 // pred_fallthru
          _
      $region94: #{forward.7} parent=5 // pred_fallthru
        _
      %p831 = scmp.le.s32.totalorder 2, %s16
      // Predicated region
      $region103: #{forward.7} parent=5 // pred_check
        %p832 = pneg %p831
      $region104: #{forward.7} parent=5 // pred_check_branch
        %834 = sbr.rel (%p832) target = $region106
      $region105: #{forward.7} parent=5 // pred_region
        %s835 = ssub.s32 %s16, 2
        // Predicated region
        $region107: #{forward.7} parent=105 // pred_check
          %p836 = pneg %p283
        $region108: #{forward.7} parent=105 // pred_check_branch
          %838 = sbr.rel (%p836) target = $region110
        $region109: #{forward.7} parent=105 // pred_region
          %s839 = smul.u32 2, %s28
          %p840 = scmp.lt.s32.totalorder %s27, 1
          %s841 = scalar_select %p840, %s27, 1
          %p842 = scmp.lt.s32.totalorder %s839, 1
          %s843 = scalar_select %p842, %s839, 1
          %s844 = smul.addr %s841, 2
          %s845 = sadd.s32 %s843, %s844
          %s846 = smul.addr %s845, 8
          %s847 = scalar_lea.vmem %s10, %s846
        $region110: #{forward.7} parent=105 // pred_fallthru
          _
      $region106: #{forward.7} parent=5 // pred_fallthru
        _
    $region6: #{forward.7} parent=1 // loop_footer
      %s20 = sadd.s32 1, %s16
    $region7: #{forward.7} parent=1 // loop_footer_branch
      %15 = sbr.rel target = $region3
    $region8: #{forward.7} parent=1 // loop_exit
      _

// kernel: forward.9
$region0: #{forward.9}
  #allocation0 [shape = 'u32[]', space=smem, size = 0x4, offset = 0x4, fixed_abs, tag = 'smem constant byte address 0x4 - core index']
  #allocation1 [shape = 'u32[144,128]{1,0:T(1,128)}', space=vmem, size = 0x12000, scoped, tag = 'internal scratch']
  %s0 = inlined_call_operand.vmem [shape: f32[2,2,16,32], index: 0, kind: input, shape index: {}]
  %s1 = inlined_call_operand.vmem [shape: f32[2,16,32], index: 1, kind: input, shape index: {}]
  %s2 = inlined_call_operand.vmem [shape: bf16[64,128], index: 2, kind: input, shape index: {}]
  %s3 = inlined_call_operand.vmem [shape: f32[1,128], index: 3, kind: input, shape index: {}]
  %s4 = inlined_call_operand.vmem [shape: f32[1,128], index: 4, kind: input, shape index: {}]
  %s5 = inlined_call_operand.vmem [shape: f32[1,128], index: 5, kind: input, shape index: {}]
  %s6 = inlined_call_operand.vmem [shape: bf16[128,32], index: 6, kind: input, shape index: {}]
  %s7 = inlined_call_operand.vmem [shape: f32[1,32], index: 7, kind: input, shape index: {}]
  %s8 = inlined_call_operand.vmem [shape: f32[1,32], index: 8, kind: input, shape index: {}]
  %s9 = inlined_call_operand.vmem [shape: f32[1,32], index: 9, kind: input, shape index: {}]
  %s10 = inlined_call_operand.vmem [shape: f32[32,3], index: 10, kind: input, shape index: {}]
  %s11 = inlined_call_operand.vmem [shape: f32[1,3], index: 11, kind: input, shape index: {}]
  %s12 = inlined_call_operand.hbm [shape: f32[2,16,32], index: 12, kind: output, shape index: {0}]
  %s13 = inlined_call_operand.vmem [shape: f32[2,16,3], index: 13, kind: output, shape index: {1}]
  %14 = xla_tuple %s12, %s13
  %s15 = sld [smem:[#allocation0]]
  $region127: #{forward.9} parent=0
    _
  %s17 = ssub.s32 1, %s15
  %s18 = scalar_select 0, %s17, %s15
  $region1: #{forward.9} parent=0
    #allocation2 [shape = 'u8[32768]{0}', space=vmem, size = 0x8000, scoped, tag = 'input window, operand 0']
    #allocation3 [shape = 'u8[16384]{0}', space=vmem, size = 0x4000, scoped, tag = 'output window, operand 0']
    #allocation4 [shape = 's32[2]{0}', space=sflag, size = 0x8, scoped, tag = 'scoped memory for forward.9']
    %19 = vsyncpa [#allocation4], 0
    %s20 = scalar_lea.sflag [#allocation4], 1
    %21 = vsyncpa %s20, 0
    loop: start=0, step=1, limit=4
    $region2: #{forward.9} parent=1 // loop_pre_header
      _
    $region3: #{forward.9} parent=1 // loop_header
      %s23 = sphi 0, %s27
      %p24 = scmp.ge.s32.totalorder %s23, 4
      %s30 = sphi 0, %s42
      %s31 = sphi 0, %s38
      %s32 = sphi 0, %s30
      %s33 = sphi 0, %s31
      %s34 = sphi 0, %s32
      %s35 = sphi 0, %s33
      %s47 = sphi 0, %s49
      %s50 = sphi 0, %s47
      %s51 = sphi 0, %s50
      %s67 = sphi 0, %s51
      %s75 = sphi 0, %s77
      %s78 = sphi 0, %s75
      %s79 = sphi 0, %s78
      %s95 = sphi 0, %s79
      %s99 = sphi 0, %s99
      %s101 = sphi 0, %s99
      %s102 = sphi 0, %s101
      %s116 = sphi 0, %s102
      %s120 = sphi 0, %s120
      %s122 = sphi 0, %s120
      %s123 = sphi 0, %s122
      %s137 = sphi 0, %s123
      %s141 = sphi 0, %s141
      %s143 = sphi 0, %s141
      %s144 = sphi 0, %s143
      %s158 = sphi 0, %s144
      %s162 = sphi 0, %s162
      %s164 = sphi 0, %s162
      %s165 = sphi 0, %s164
      %s179 = sphi 0, %s165
      %s183 = sphi 0, %s183
      %s185 = sphi 0, %s183
      %s186 = sphi 0, %s185
      %s200 = sphi 0, %s186
      %s204 = sphi 0, %s204
      %s206 = sphi 0, %s204
      %s207 = sphi 0, %s206
      %s221 = sphi 0, %s207
      %s225 = sphi 0, %s225
      %s227 = sphi 0, %s225
      %s228 = sphi 0, %s227
      %s242 = sphi 0, %s228
      %s246 = sphi 0, %s246
      %s248 = sphi 0, %s246
      %s249 = sphi 0, %s248
      %s263 = sphi 0, %s249
      %s267 = sphi 0, %s267
      %s269 = sphi 0, %s267
      %s270 = sphi 0, %s269
      %s284 = sphi 0, %s270
      %s288 = sphi 0, %s288
      %s290 = sphi 0, %s288
      %s291 = sphi 0, %s290
      %s305 = sphi 0, %s291
      %s313 = sphi 0, %s315
      %s316 = sphi 0, %s313
      %s317 = sphi 0, %s316
      %s333 = sphi 0, %s317
      %s341 = sphi 0, %s343
      %s344 = sphi 0, %s341
      %s345 = sphi 0, %s344
      %s361 = sphi 0, %s345
    $region4: #{forward.9} parent=1 // loop_header_branch
      %26 = sbr.rel (%p24) target = $region8
    $region5: #{forward.9} parent=1 // loop_body
      %s28 = ssub.s32 %s23, 1
      %s29 = ssub.s32 %s23, 2
      %s36 = sadd.s32 1, %s31
      %p37 = scmp.ge.s32.totalorder %s36, 1
      %s38 = scalar_select %p37, 0, %s36
      %s39 = sadd.s32 1, %s30
      %s40 = scalar_select %p37, %s39, %s30
      %p41 = scmp.ge.s32.totalorder %s40, 2
      %s42 = scalar_select %p41, 0, %s40
      %s43 = ssub.s32 %s30, %s42
      %s44 = ssub.s32 %s31, %s38
      %s45 = sor.u32 %s43, %s44
      %p46 = scmp.eq.s32.totalorder %s45, 0
      %s48 = sadd.s32 %s47, 1
      %s49 = scalar_select %p46, %s47, %s48
      %p52 = pneg %p46
      %p53 = scmp.eq.s32.totalorder %s23, 1
      %p54 = por %p52, %p53
      %p55 = scmp.ne.s32.totalorder %s47, %s50
      %p56 = scmp.eq.s32.totalorder %s23, 0
      %p57 = por %p55, %p56
      %p58 = scmp.ne.s32.totalorder %s47, %s50
      %p59 = scmp.eq.s32.totalorder %s28, 1
      %p60 = por %p58, %p59
      %p61 = scmp.ne.s32.totalorder %s50, %s51
      %p62 = scmp.eq.s32.totalorder %s28, 0
      %p63 = por %p61, %p62
      %p64 = scmp.ne.s32.totalorder %s50, %s51
      %p65 = scmp.eq.s32.totalorder %s29, 1
      %p66 = por %p64, %p65
      %p68 = scmp.ne.s32.totalorder %s51, %s67
      %p69 = scmp.eq.s32.totalorder %s29, 0
      %p70 = por %p68, %p69
      %s71 = ssub.s32 %s30, %s42
      %s72 = ssub.s32 %s31, %s38
      %s73 = sor.u32 %s71, %s72
      %p74 = scmp.eq.s32.totalorder %s73, 0
      %s76 = sadd.s32 %s75, 1
      %s77 = scalar_select %p74, %s75, %s76
      %p80 = pneg %p74
      %p81 = scmp.eq.s32.totalorder %s23, 1
      %p82 = por %p80, %p81
      %p83 = scmp.ne.s32.totalorder %s75, %s78
      %p84 = scmp.eq.s32.totalorder %s23, 0
      %p85 = por %p83, %p84
      %p86 = scmp.ne.s32.totalorder %s75, %s78
      %p87 = scmp.eq.s32.totalorder %s28, 1
      %p88 = por %p86, %p87
      %p89 = scmp.ne.s32.totalorder %s78, %s79
      %p90 = scmp.eq.s32.totalorder %s28, 0
      %p91 = por %p89, %p90
      %p92 = scmp.ne.s32.totalorder %s78, %s79
      %p93 = scmp.eq.s32.totalorder %s29, 1
      %p94 = por %p92, %p93
      %p96 = scmp.ne.s32.totalorder %s79, %s95
      %p97 = scmp.eq.s32.totalorder %s29, 0
      %p98 = por %p96, %p97
      %s100 = sadd.s32 %s99, 1
      %p103 = scmp.eq.s32.totalorder %s23, 1
      %p104 = scmp.ne.s32.totalorder %s99, %s101
      %p105 = scmp.eq.s32.totalorder %s23, 0
      %p106 = por %p104, %p105
      %p107 = scmp.ne.s32.totalorder %s99, %s101
      %p108 = scmp.eq.s32.totalorder %s28, 1
      %p109 = por %p107, %p108
      %p110 = scmp.ne.s32.totalorder %s101, %s102
      %p111 = scmp.eq.s32.totalorder %s28, 0
      %p112 = por %p110, %p111
      %p113 = scmp.ne.s32.totalorder %s101, %s102
      %p114 = scmp.eq.s32.totalorder %s29, 1
      %p115 = por %p113, %p114
      %p117 = scmp.ne.s32.totalorder %s102, %s116
      %p118 = scmp.eq.s32.totalorder %s29, 0
      %p119 = por %p117, %p118
      %s121 = sadd.s32 %s120, 1
      %p124 = scmp.eq.s32.totalorder %s23, 1
      %p125 = scmp.ne.s32.totalorder %s120, %s122
      %p126 = scmp.eq.s32.totalorder %s23, 0
      %p127 = por %p125, %p126
      %p128 = scmp.ne.s32.totalorder %s120, %s122
      %p129 = scmp.eq.s32.totalorder %s28, 1
      %p130 = por %p128, %p129
      %p131 = scmp.ne.s32.totalorder %s122, %s123
      %p132 = scmp.eq.s32.totalorder %s28, 0
      %p133 = por %p131, %p132
      %p134 = scmp.ne.s32.totalorder %s122, %s123
      %p135 = scmp.eq.s32.totalorder %s29, 1
      %p136 = por %p134, %p135
      %p138 = scmp.ne.s32.totalorder %s123, %s137
      %p139 = scmp.eq.s32.totalorder %s29, 0
      %p140 = por %p138, %p139
      %s142 = sadd.s32 %s141, 1
      %p145 = scmp.eq.s32.totalorder %s23, 1
      %p146 = scmp.ne.s32.totalorder %s141, %s143
      %p147 = scmp.eq.s32.totalorder %s23, 0
      %p148 = por %p146, %p147
      %p149 = scmp.ne.s32.totalorder %s141, %s143
      %p150 = scmp.eq.s32.totalorder %s28, 1
      %p151 = por %p149, %p150
      %p152 = scmp.ne.s32.totalorder %s143, %s144
      %p153 = scmp.eq.s32.totalorder %s28, 0
      %p154 = por %p152, %p153
      %p155 = scmp.ne.s32.totalorder %s143, %s144
      %p156 = scmp.eq.s32.totalorder %s29, 1
      %p157 = por %p155, %p156
      %p159 = scmp.ne.s32.totalorder %s144, %s158
      %p160 = scmp.eq.s32.totalorder %s29, 0
      %p161 = por %p159, %p160
      %s163 = sadd.s32 %s162, 1
      %p166 = scmp.eq.s32.totalorder %s23, 1
      %p167 = scmp.ne.s32.totalorder %s162, %s164
      %p168 = scmp.eq.s32.totalorder %s23, 0
      %p169 = por %p167, %p168
      %p170 = scmp.ne.s32.totalorder %s162, %s164
      %p171 = scmp.eq.s32.totalorder %s28, 1
      %p172 = por %p170, %p171
      %p173 = scmp.ne.s32.totalorder %s164, %s165
      %p174 = scmp.eq.s32.totalorder %s28, 0
      %p175 = por %p173, %p174
      %p176 = scmp.ne.s32.totalorder %s164, %s165
      %p177 = scmp.eq.s32.totalorder %s29, 1
      %p178 = por %p176, %p177
      %p180 = scmp.ne.s32.totalorder %s165, %s179
      %p181 = scmp.eq.s32.totalorder %s29, 0
      %p182 = por %p180, %p181
      %s184 = sadd.s32 %s183, 1
      %p187 = scmp.eq.s32.totalorder %s23, 1
      %p188 = scmp.ne.s32.totalorder %s183, %s185
      %p189 = scmp.eq.s32.totalorder %s23, 0
      %p190 = por %p188, %p189
      %p191 = scmp.ne.s32.totalorder %s183, %s185
      %p192 = scmp.eq.s32.totalorder %s28, 1
      %p193 = por %p191, %p192
      %p194 = scmp.ne.s32.totalorder %s185, %s186
      %p195 = scmp.eq.s32.totalorder %s28, 0
      %p196 = por %p194, %p195
      %p197 = scmp.ne.s32.totalorder %s185, %s186
      %p198 = scmp.eq.s32.totalorder %s29, 1
      %p199 = por %p197, %p198
      %p201 = scmp.ne.s32.totalorder %s186, %s200
      %p202 = scmp.eq.s32.totalorder %s29, 0
      %p203 = por %p201, %p202
      %s205 = sadd.s32 %s204, 1
      %p208 = scmp.eq.s32.totalorder %s23, 1
      %p209 = scmp.ne.s32.totalorder %s204, %s206
      %p210 = scmp.eq.s32.totalorder %s23, 0
      %p211 = por %p209, %p210
      %p212 = scmp.ne.s32.totalorder %s204, %s206
      %p213 = scmp.eq.s32.totalorder %s28, 1
      %p214 = por %p212, %p213
      %p215 = scmp.ne.s32.totalorder %s206, %s207
      %p216 = scmp.eq.s32.totalorder %s28, 0
      %p217 = por %p215, %p216
      %p218 = scmp.ne.s32.totalorder %s206, %s207
      %p219 = scmp.eq.s32.totalorder %s29, 1
      %p220 = por %p218, %p219
      %p222 = scmp.ne.s32.totalorder %s207, %s221
      %p223 = scmp.eq.s32.totalorder %s29, 0
      %p224 = por %p222, %p223
      %s226 = sadd.s32 %s225, 1
      %p229 = scmp.eq.s32.totalorder %s23, 1
      %p230 = scmp.ne.s32.totalorder %s225, %s227
      %p231 = scmp.eq.s32.totalorder %s23, 0
      %p232 = por %p230, %p231
      %p233 = scmp.ne.s32.totalorder %s225, %s227
      %p234 = scmp.eq.s32.totalorder %s28, 1
      %p235 = por %p233, %p234
      %p236 = scmp.ne.s32.totalorder %s227, %s228
      %p237 = scmp.eq.s32.totalorder %s28, 0
      %p238 = por %p236, %p237
      %p239 = scmp.ne.s32.totalorder %s227, %s228
      %p240 = scmp.eq.s32.totalorder %s29, 1
      %p241 = por %p239, %p240
      %p243 = scmp.ne.s32.totalorder %s228, %s242
      %p244 = scmp.eq.s32.totalorder %s29, 0
      %p245 = por %p243, %p244
      %s247 = sadd.s32 %s246, 1
      %p250 = scmp.eq.s32.totalorder %s23, 1
      %p251 = scmp.ne.s32.totalorder %s246, %s248
      %p252 = scmp.eq.s32.totalorder %s23, 0
      %p253 = por %p251, %p252
      %p254 = scmp.ne.s32.totalorder %s246, %s248
      %p255 = scmp.eq.s32.totalorder %s28, 1
      %p256 = por %p254, %p255
      %p257 = scmp.ne.s32.totalorder %s248, %s249
      %p258 = scmp.eq.s32.totalorder %s28, 0
      %p259 = por %p257, %p258
      %p260 = scmp.ne.s32.totalorder %s248, %s249
      %p261 = scmp.eq.s32.totalorder %s29, 1
      %p262 = por %p260, %p261
      %p264 = scmp.ne.s32.totalorder %s249, %s263
      %p265 = scmp.eq.s32.totalorder %s29, 0
      %p266 = por %p264, %p265
      %s268 = sadd.s32 %s267, 1
      %p271 = scmp.eq.s32.totalorder %s23, 1
      %p272 = scmp.ne.s32.totalorder %s267, %s269
      %p273 = scmp.eq.s32.totalorder %s23, 0
      %p274 = por %p272, %p273
      %p275 = scmp.ne.s32.totalorder %s267, %s269
      %p276 = scmp.eq.s32.totalorder %s28, 1
      %p277 = por %p275, %p276
      %p278 = scmp.ne.s32.totalorder %s269, %s270
      %p279 = scmp.eq.s32.totalorder %s28, 0
      %p280 = por %p278, %p279
      %p281 = scmp.ne.s32.totalorder %s269, %s270
      %p282 = scmp.eq.s32.totalorder %s29, 1
      %p283 = por %p281, %p282
      %p285 = scmp.ne.s32.totalorder %s270, %s284
      %p286 = scmp.eq.s32.totalorder %s29, 0
      %p287 = por %p285, %p286
      %s289 = sadd.s32 %s288, 1
      %p292 = scmp.eq.s32.totalorder %s23, 1
      %p293 = scmp.ne.s32.totalorder %s288, %s290
      %p294 = scmp.eq.s32.totalorder %s23, 0
      %p295 = por %p293, %p294
      %p296 = scmp.ne.s32.totalorder %s288, %s290
      %p297 = scmp.eq.s32.totalorder %s28, 1
      %p298 = por %p296, %p297
      %p299 = scmp.ne.s32.totalorder %s290, %s291
      %p300 = scmp.eq.s32.totalorder %s28, 0
      %p301 = por %p299, %p300
      %p302 = scmp.ne.s32.totalorder %s290, %s291
      %p303 = scmp.eq.s32.totalorder %s29, 1
      %p304 = por %p302, %p303
      %p306 = scmp.ne.s32.totalorder %s291, %s305
      %p307 = scmp.eq.s32.totalorder %s29, 0
      %p308 = por %p306, %p307
      %s309 = ssub.s32 %s30, %s42
      %s310 = ssub.s32 %s31, %s38
      %s311 = sor.u32 %s309, %s310
      %p312 = scmp.eq.s32.totalorder %s311, 0
      %s314 = sadd.s32 %s313, 1
      %s315 = scalar_select %p312, %s313, %s314
      %p318 = pneg %p312
      %p319 = scmp.eq.s32.totalorder %s23, 1
      %p320 = por %p318, %p319
      %p321 = scmp.ne.s32.totalorder %s313, %s316
      %p322 = scmp.eq.s32.totalorder %s23, 0
      %p323 = por %p321, %p322
      %p324 = scmp.ne.s32.totalorder %s313, %s316
      %p325 = scmp.eq.s32.totalorder %s28, 1
      %p326 = por %p324, %p325
      %p327 = scmp.ne.s32.totalorder %s316, %s317
      %p328 = scmp.eq.s32.totalorder %s28, 0
      %p329 = por %p327, %p328
      %p330 = scmp.ne.s32.totalorder %s316, %s317
      %p331 = scmp.eq.s32.totalorder %s29, 1
      %p332 = por %p330, %p331
      %p334 = scmp.ne.s32.totalorder %s317, %s333
      %p335 = scmp.eq.s32.totalorder %s29, 0
      %p336 = por %p334, %p335
      %s337 = ssub.s32 %s30, %s42
      %s338 = ssub.s32 %s31, %s38
      %s339 = sor.u32 %s337, %s338
      %p340 = scmp.eq.s32.totalorder %s339, 0
      %s342 = sadd.s32 %s341, 1
      %s343 = scalar_select %p340, %s341, %s342
      %p346 = pneg %p340
      %p347 = scmp.eq.s32.totalorder %s23, 1
      %p348 = por %p346, %p347
      %p349 = scmp.ne.s32.totalorder %s341, %s344
      %p350 = scmp.eq.s32.totalorder %s23, 0
      %p351 = por %p349, %p350
      %p352 = scmp.ne.s32.totalorder %s341, %s344
      %p353 = scmp.eq.s32.totalorder %s28, 1
      %p354 = por %p352, %p353
      %p355 = scmp.ne.s32.totalorder %s344, %s345
      %p356 = scmp.eq.s32.totalorder %s28, 0
      %p357 = por %p355, %p356
      %p358 = scmp.ne.s32.totalorder %s344, %s345
      %p359 = scmp.eq.s32.totalorder %s29, 1
      %p360 = por %p358, %p359
      %p362 = scmp.ne.s32.totalorder %s345, %s361
      %p363 = scmp.eq.s32.totalorder %s29, 0
      %p364 = por %p362, %p363
      %p365 = scmp.le.s32.totalorder 1, %s23
      %p366 = scmp.lt.s32.totalorder %s23, 3
      %p367 = pnand %p365, %p366
      %p368 = pneg %p367
      // Predicated region
      $region9: #{forward.9} parent=5 // pred_check
        _
      $region10: #{forward.9} parent=5 // pred_check_branch
        %370 = sbr.rel (%p367) target = $region12
      $region11: #{forward.9} parent=5 // pred_region
        %s371 = ssub.s32 %s23, 1
        // Predicated region
        $region13: #{forward.9} parent=11 // pred_check
          %p372 = pneg %p112
        $region14: #{forward.9} parent=11 // pred_check_branch
          %374 = sbr.rel (%p372) target = $region16
        $region15: #{forward.9} parent=11 // pred_region
          _
        $region16: #{forward.9} parent=11 // pred_fallthru
          _
        // Predicated region
        $region17: #{forward.9} parent=11 // pred_check
          %p375 = pneg %p133
        $region18: #{forward.9} parent=11 // pred_check_branch
          %377 = sbr.rel (%p375) target = $region20
        $region19: #{forward.9} parent=11 // pred_region
          _
        $region20: #{forward.9} parent=11 // pred_fallthru
          _
        // Predicated region
        $region21: #{forward.9} parent=11 // pred_check
          %p378 = pneg %p154
        $region22: #{forward.9} parent=11 // pred_check_branch
          %380 = sbr.rel (%p378) target = $region24
        $region23: #{forward.9} parent=11 // pred_region
          _
        $region24: #{forward.9} parent=11 // pred_fallthru
          _
        // Predicated region
        $region25: #{forward.9} parent=11 // pred_check
          %p381 = pneg %p175
        $region26: #{forward.9} parent=11 // pred_check_branch
          %383 = sbr.rel (%p381) target = $region28
        $region27: #{forward.9} parent=11 // pred_region
          _
        $region28: #{forward.9} parent=11 // pred_fallthru
          _
        // Predicated region
        $region29: #{forward.9} parent=11 // pred_check
          %p384 = pneg %p196
        $region30: #{forward.9} parent=11 // pred_check_branch
          %386 = sbr.rel (%p384) target = $region32
        $region31: #{forward.9} parent=11 // pred_region
          _
        $region32: #{forward.9} parent=11 // pred_fallthru
          _
        // Predicated region
        $region33: #{forward.9} parent=11 // pred_check
          %p387 = pneg %p217
        $region34: #{forward.9} parent=11 // pred_check_branch
          %389 = sbr.rel (%p387) target = $region36
        $region35: #{forward.9} parent=11 // pred_region
          _
        $region36: #{forward.9} parent=11 // pred_fallthru
          _
        // Predicated region
        $region37: #{forward.9} parent=11 // pred_check
          %p390 = pneg %p238
        $region38: #{forward.9} parent=11 // pred_check_branch
          %392 = sbr.rel (%p390) target = $region40
        $region39: #{forward.9} parent=11 // pred_region
          _
        $region40: #{forward.9} parent=11 // pred_fallthru
          _
        // Predicated region
        $region41: #{forward.9} parent=11 // pred_check
          %p393 = pneg %p259
        $region42: #{forward.9} parent=11 // pred_check_branch
          %395 = sbr.rel (%p393) target = $region44
        $region43: #{forward.9} parent=11 // pred_region
          _
        $region44: #{forward.9} parent=11 // pred_fallthru
          _
        // Predicated region
        $region45: #{forward.9} parent=11 // pred_check
          %p396 = pneg %p280
        $region46: #{forward.9} parent=11 // pred_check_branch
          %398 = sbr.rel (%p396) target = $region48
        $region47: #{forward.9} parent=11 // pred_region
          _
        $region48: #{forward.9} parent=11 // pred_fallthru
          _
        // Predicated region
        $region49: #{forward.9} parent=11 // pred_check
          %p399 = pneg %p301
        $region50: #{forward.9} parent=11 // pred_check_branch
          %401 = sbr.rel (%p399) target = $region52
        $region51: #{forward.9} parent=11 // pred_region
          _
        $region52: #{forward.9} parent=11 // pred_fallthru
          _
      $region12: #{forward.9} parent=5 // pred_fallthru
        _
      %p402 = scmp.lt.s32.totalorder %s23, 2
      // Predicated region
      $region53: #{forward.9} parent=5 // pred_check
        %p403 = pneg %p402
      $region54: #{forward.9} parent=5 // pred_check_branch
        %405 = sbr.rel (%p403) target = $region56
      $region55: #{forward.9} parent=5 // pred_region
        // Predicated region
        $region57: #{forward.9} parent=55 // pred_check
          %p406 = pneg %p57
        $region58: #{forward.9} parent=55 // pred_check_branch
          %408 = sbr.rel (%p406) target = $region60
        $region59: #{forward.9} parent=55 // pred_region
          %s409 = sand.u32 %s47, 1
          %s410 = sand.u32 %s47, 1
          %s411 = smul.addr %s410, 32
          %s412 = scalar_lea.vmem [#allocation2], %s411
          %s413 = smul.u32 2, %s31
          %s414 = smul.addr %s30, 2
          %s415 = sadd.s32 %s413, %s414
          %s416 = smul.addr %s415, 8
          %s417 = scalar_lea.vmem %s0, %s416
          // Predicated region
          $region61: #{forward.9} parent=59 // pred_check
            _
          $region62: #{forward.9} parent=59 // pred_check_branch
            %419 = sbr.rel (0) target = $region64
          $region63: #{forward.9} parent=59 // pred_region
            // Predicated region
            $region65: #{forward.9} parent=63 // pred_check
              _
            $region66: #{forward.9} parent=63 // pred_check_branch
              %421 = sbr.rel (0) target = $region68
            $region67: #{forward.9} parent=63 // pred_region
              // Predicated region
              $region80: #{forward.9} parent=67 // pred_check
                _
              $region81: #{forward.9} parent=67 // pred_check_branch
                %442 = sbr.rel (0) target = $region83
              $region82: #{forward.9} parent=67 // pred_region
                loop: start=0, step=1, limit=1
                $region84: #{forward.9} parent=82 // loop_pre_header
                  _
                $region85: #{forward.9} parent=82 // loop_header
                  %s444 = sphi 0, %s448
                  %p445 = scmp.ge.s32.totalorder %s444, 1
                  %s449 = sphi %s417, %s417
                  %s450 = sphi %s412, %s412
                $region86: #{forward.9} parent=82 // loop_header_branch
                  %447 = sbr.rel (%p445) target = $region90
                $region87: #{forward.9} parent=82 // loop_body
                  %v451 = vld [vmem:[%s449] sm:$0xff]
                  %452 = vst [vmem:[%s450] sm:$0xff] %v451
                  %v453 = vld [vmem:[%s449 + $0x8] sm:$0xff]
                  %454 = vst [vmem:[%s450 + $0x8] sm:$0xff] %v453
                  %v455 = vld [vmem:[%s449 + $0x20] sm:$0xff]
                  %456 = vst [vmem:[%s450 + $0x10] sm:$0xff] %v455
                  %v457 = vld [vmem:[%s449 + $0x28] sm:$0xff]
                  %458 = vst [vmem:[%s450 + $0x18] sm:$0xff] %v457
                $region88: #{forward.9} parent=82 // loop_footer
                  %s448 = sadd.s32 1, %s444
                $region89: #{forward.9} parent=82 // loop_footer_branch
                  %443 = sbr.rel target = $region85
                $region90: #{forward.9} parent=82 // loop_exit
                  _
              $region83: #{forward.9} parent=67 // pred_fallthru
                _
              // Predicated region
              $region91: #{forward.9} parent=67 // pred_check
                _
              $region92: #{forward.9} parent=67 // pred_check_branch
                %460 = sbr.rel target = $region94
              $region93: #{forward.9} parent=67 // pred_region
                _
              $region94: #{forward.9} parent=67 // pred_fallthru
                _
            $region68: #{forward.9} parent=63 // pred_fallthru
              _
            // Predicated region
            $region69: #{forward.9} parent=63 // pred_check
              _
            $region70: #{forward.9} parent=63 // pred_check_branch
              %423 = sbr.rel target = $region72
            $region71: #{forward.9} parent=63 // pred_region
              loop: start=0, step=1, limit=1
              $region73: #{forward.9} parent=71 // loop_pre_header
                _
              $region74: #{forward.9} parent=71 // loop_header
                %s426 = sphi 0, %s430
                %p427 = scmp.ge.s32.totalorder %s426, 1
                %s431 = sphi %s417, %s417
                %s432 = sphi %s412, %s412
              $region75: #{forward.9} parent=71 // loop_header_branch
                %429 = sbr.rel (%p427) target = $region79
              $region76: #{forward.9} parent=71 // loop_body
                %v433 = vld [vmem:[%s431] sm:$0xff]
                %434 = vst [vmem:[%s432] sm:$0xff] %v433
                %v435 = vld [vmem:[%s431 + $0x8] sm:$0xff]
                %436 = vst [vmem:[%s432 + $0x8] sm:$0xff] %v435
                %v437 = vld [vmem:[%s431 + $0x20] sm:$0xff]
                %438 = vst [vmem:[%s432 + $0x10] sm:$0xff] %v437
                %v439 = vld [vmem:[%s431 + $0x28] sm:$0xff]
                %440 = vst [vmem:[%s432 + $0x18] sm:$0xff] %v439
              $region77: #{forward.9} parent=71 // loop_footer
                %s430 = sadd.s32 1, %s426
              $region78: #{forward.9} parent=71 // loop_footer_branch
                %425 = sbr.rel target = $region74
              $region79: #{forward.9} parent=71 // loop_exit
                _
            $region72: #{forward.9} parent=63 // pred_fallthru
              _
          $region64: #{forward.9} parent=59 // pred_fallthru
            _
          %461 = vnop
        $region60: #{forward.9} parent=55 // pred_fallthru
          _
        // Predicated region
        $region95: #{forward.9} parent=55 // pred_check
          %p462 = pneg %p85
        $region96: #{forward.9} parent=55 // pred_check_branch
          %464 = sbr.rel (%p462) target = $region98
        $region97: #{forward.9} parent=55 // pred_region
          %s465 = smul.u32 2, %s31
          %p466 = scmp.lt.s32.totalorder %s30, 1
          %s467 = scalar_select %p466, %s30, 1
          %p468 = scmp.lt.s32.totalorder %s465, 1
          %s469 = scalar_select %p468, %s465, 1
          %s470 = smul.addr %s467, 2
          %s471 = sadd.s32 %s469, %s470
          %s472 = smul.addr %s471, 8
          %s473 = scalar_lea.vmem %s1, %s472
          %s474 = smul.u32 2, %s31
        $region98: #{forward.9} parent=55 // pred_fallthru
          _
      $region56: #{forward.9} parent=5 // pred_fallthru
        _
      %p475 = scmp.le.s32.totalorder 1, %s23
      %p476 = scmp.lt.s32.totalorder %s23, 3
      %p477 = pnand %p475, %p476
      %p478 = pneg %p477
      // Predicated region
      $region99: #{forward.9} parent=5 // pred_check
        _
      $region100: #{forward.9} parent=5 // pred_check_branch
        %480 = sbr.rel (%p477) target = $region102
      $region101: #{forward.9} parent=5 // pred_region
        %s481 = ssub.s32 %s23, 1
        %s482 = sand.u32 %s50, 1
        %s483 = sand.u32 %s50, 1
        %s484 = smul.addr %s483, 32
        %s485 = scalar_lea.vmem [#allocation2], %s484
        // Predicated region
        $region103: #{forward.9} parent=101 // pred_check
          %p486 = pneg %p63
        $region104: #{forward.9} parent=101 // pred_check_branch
          %488 = sbr.rel (%p486) target = $region106
        $region105: #{forward.9} parent=101 // pred_region
          _
        $region106: #{forward.9} parent=101 // pred_fallthru
          _
        %s489 = sand.u32 %s50, 1
        %s490 = sand.u32 %s50, 1
        %s491 = smul.addr %s490, 32
        %s492 = scalar_lea.vmem [#allocation2], %s491
        %p493 = pneg %p63
        %p494 = pneg %p60
        %s495 = smul.u32 2, %s33
        %p496 = scmp.lt.s32.totalorder %s32, 1
        %s497 = scalar_select %p496, %s32, 1
        %p498 = scmp.lt.s32.totalorder %s495, 1
        %s499 = scalar_select %p498, %s495, 1
        %s500 = smul.addr %s497, 2
        %s501 = sadd.s32 %s499, %s500
        %s502 = smul.addr %s501, 8
        %s503 = scalar_lea.vmem %s1, %s502
        %p504 = pneg %p91
        %p505 = pneg %p88
        %p506 = pneg %p112
        %p507 = pneg %p109
        %p508 = pneg %p133
        %p509 = pneg %p130
        %p510 = pneg %p154
        %p511 = pneg %p151
        %p512 = pneg %p175
        %p513 = pneg %p172
        %p514 = pneg %p196
        %p515 = pneg %p193
        %p516 = pneg %p217
        %p517 = pneg %p214
        %p518 = pneg %p238
        %p519 = pneg %p235
        %p520 = pneg %p259
        %p521 = pneg %p256
        %p522 = pneg %p280
        %p523 = pneg %p277
        %p524 = pneg %p301
        %p525 = pneg %p298
        %p526 = pneg %p329
        %p527 = pneg %p326
        %s528 = sand.u32 %s316, 1
        %s529 = scalar_lea.sflag [#allocation4], %s528
        %s530 = sand.u32 %s316, 1
        %s531 = smul.addr %s530, 16
        %s532 = scalar_lea.vmem [#allocation3], %s531
        %p533 = pneg %p357
        %p534 = pneg %p354
        %s535 = smul.u32 2, %s33
        %p536 = scmp.lt.s32.totalorder %s32, 1
        %s537 = scalar_select %p536, %s32, 1
        %p538 = scmp.lt.s32.totalorder %s535, 1
        %s539 = scalar_select %p538, %s535, 1
        %s540 = smul.addr %s537, 2
        %s541 = sadd.s32 %s539, %s540
        %s542 = smul.addr %s541, 8
        %s543 = scalar_lea.vmem %s13, %s542
        %s544 = smul.u32 2, %s33
        %s545 = smul.u32 2, %s33
        %p546 = scmp.lt.s32.totalorder %s32, 1
        %s547 = scalar_select %p546, %s32, 1
        %p548 = scmp.lt.s32.totalorder %s545, 1
        %s549 = scalar_select %p548, %s545, 1
        %s550 = smul.addr %s547, 2
        %s551 = sadd.s32 %s549, %s550
        %s552 = smul.addr %s551, 8
        %s553 = scalar_lea.vmem %s1, %s552
        %s554 = smul.u32 2, %s33
        %s555 = smul.u32 2, %s33
        %s556 = smul.u32 2, %s33
        %p557 = scmp.lt.s32.totalorder %s32, 1
        %s558 = scalar_select %p557, %s32, 1
        %p559 = scmp.lt.s32.totalorder %s556, 1
        %s560 = scalar_select %p559, %s556, 1
        %s561 = smul.addr %s558, 2
        %s562 = sadd.s32 %s560, %s561
        %s563 = smul.addr %s562, 8
        %s564 = scalar_lea.vmem %s13, %s563
        %s565 = smul.u32 2, %s33
        %v567 = vld [vmem:[%s485] sm:$0xff]
        %v568 = vld [vmem:[%s485 + $0x8] sm:$0xff]
        %v569 = vpack.c.bf16 %v568, %v567
        %s570 = scalar_lea.vmem %s485, 16 [#allocation2]
        %v571 = vld [vmem:[%s570] sm:$0xff]
        %v572 = vld [vmem:[%s570 + $0x8] sm:$0xff]
        %v573 = vpack.c.bf16 %v572, %v571
        %v574 = vld [vmem:[%s2] sm:$0xf]
        %v575 = vld [vmem:[%s2 + $0x4] sm:$0xf]
        %v576 = vld [vmem:[%s2 + $0x8] sm:$0xf]
        %v577 = vld [vmem:[%s2 + $0xc] sm:$0xf]
        %v578 = vld [vmem:[%s2 + $0x10] sm:$0xf]
        %v579 = vld [vmem:[%s2 + $0x14] sm:$0xf]
        %v580 = vld [vmem:[%s2 + $0x18] sm:$0xf]
        %v581 = vld [vmem:[%s2 + $0x1c] sm:$0xf]
        %v586 = vunpack.c.l.b16 %v578
        %v587 = vunpack.c.l.b16 %v579
        %v588 = vunpack.c.l.b16 %v580
        %v589 = vunpack.c.l.b16 %v581
        %v590 = vpack.c.b16 %v587, %v586
        %v591 = vpack.c.b16 %v589, %v588
        %vm594 = vcmask 261120
        %v596 = vsel %vm594, %v573, 0
        %598 = vmatprep.subr.bf16.mxu0 0
        %599 = vmatpush1.bf16.msra.mxu0 %v590
        %600 = vmatprep.subr.bf16.mxu0 0
        %601 = vmatpush1.bf16.msra.mxu0 %v591
        %602 = vmatprep.subr.bf16.mxu0 0
        %603 = vmatpush1.bf16.msra.mxu0 0
        %604 = vmatprep.subr.bf16.mxu0 0
        %605 = vmatpush1.bf16.msra.mxu0 0
        %606 = vmatprep.subr.bf16.mxu0 0
        %607 = vmatpush1.bf16.msra.mxu0 0
        %608 = vmatprep.subr.bf16.mxu0 0
        %609 = vmatpush1.bf16.msra.mxu0 0
        %610 = vmatprep.subr.bf16.mxu0 0
        %611 = vmatpush1.bf16.msra.mxu0 0
        %612 = vmatprep.subr.bf16.mxu0 0
        %613 = vmatpush1.bf16.msra.mxu0 0
        %614 = vmatprep.subr.bf16.mxu0 0
        %615 = vmatpush1.bf16.msra.mxu0 0
        %616 = vmatprep.subr.bf16.mxu0 0
        %617 = vmatpush1.bf16.msra.mxu0 0
        %618 = vmatprep.subr.bf16.mxu0 0
        %619 = vmatpush1.bf16.msra.mxu0 0
        %620 = vmatprep.subr.bf16.mxu0 0
        %621 = vmatpush1.bf16.msra.mxu0 0
        %622 = vmatprep.subr.bf16.mxu0 0
        %623 = vmatpush1.bf16.msra.mxu0 0
        %624 = vmatprep.subr.bf16.mxu0 0
        %625 = vmatpush1.bf16.msra.mxu0 0
        %626 = vmatprep.subr.bf16.mxu0 0
        %627 = vmatpush1.bf16.msra.mxu0 0
        %628 = vmatprep.subr.bf16.mxu0 0
        %629 = vmatpush1.bf16.msra.mxu0 0
        %630 = vmatprep.mubr.bf16.mxu0 0
        %631 = vmatmul.mubr.bf16.gmra.mrb[0].mxu0 %v596
        %v632 = vpop.f32.mrb[0].mxu0
        %v633 = vadd.f32 0.0, %v632
        %v634 = vpop.f32.mrb[0].mxu0
        %v635 = vpop.f32.mrb[0].mxu0
        %v636 = vadd.f32 0.0, %v635
        %v637 = vpop.f32.mrb[0].mxu0
        %638 = vdwg.mxu0
        %v643 = vunpack.c.l.b16 %v574
        %v644 = vunpack.c.l.b16 %v575
        %v645 = vunpack.c.l.b16 %v576
        %v646 = vunpack.c.l.b16 %v577
        %v647 = vpack.c.b16 %v644, %v643
        %v648 = vpack.c.b16 %v646, %v645
        %v652 = vsel %vm594, %v569, 0
        %654 = vmatprep.subr.bf16.mxu0 0
        %655 = vmatpush1.bf16.msra.mxu0 %v647
        %656 = vmatprep.subr.bf16.mxu0 0
        %657 = vmatpush1.bf16.msra.mxu0 %v648
        %658 = vmatprep.subr.bf16.mxu0 0
        %659 = vmatpush1.bf16.msra.mxu0 0
        %660 = vmatprep.subr.bf16.mxu0 0
        %661 = vmatpush1.bf16.msra.mxu0 0
        %662 = vmatprep.subr.bf16.mxu0 0
        %663 = vmatpush1.bf16.msra.mxu0 0
        %664 = vmatprep.subr.bf16.mxu0 0
        %665 = vmatpush1.bf16.msra.mxu0 0
        %666 = vmatprep.subr.bf16.mxu0 0
        %667 = vmatpush1.bf16.msra.mxu0 0
        %668 = vmatprep.subr.bf16.mxu0 0
        %669 = vmatpush1.bf16.msra.mxu0 0
        %670 = vmatprep.subr.bf16.mxu0 0
        %671 = vmatpush1.bf16.msra.mxu0 0
        %672 = vmatprep.subr.bf16.mxu0 0
        %673 = vmatpush1.bf16.msra.mxu0 0
        %674 = vmatprep.subr.bf16.mxu0 0
        %675 = vmatpush1.bf16.msra.mxu0 0
        %676 = vmatprep.subr.bf16.mxu0 0
        %677 = vmatpush1.bf16.msra.mxu0 0
        %678 = vmatprep.subr.bf16.mxu0 0
        %679 = vmatpush1.bf16.msra.mxu0 0
        %680 = vmatprep.subr.bf16.mxu0 0
        %681 = vmatpush1.bf16.msra.mxu0 0
        %682 = vmatprep.subr.bf16.mxu0 0
        %683 = vmatpush1.bf16.msra.mxu0 0
        %684 = vmatprep.subr.bf16.mxu0 0
        %685 = vmatpush1.bf16.msra.mxu0 0
        %686 = vmatprep.mubr.bf16.mxu0 0
        %687 = vmatmul.mubr.bf16.gmra.mrb[0].mxu0 %v652
        %v688 = vpop.f32.mrb[0].mxu0
        %v689 = vadd.f32 %v633, %v688
        %v690 = vpop.f32.mrb[0].mxu0
        %v691 = vpop.f32.mrb[0].mxu0
        %v692 = vadd.f32 %v636, %v691
        %v693 = vpop.f32.mrb[0].mxu0
        %694 = vdwg.mxu0
        %v695 = vld [vmem:[%s3] sm:$0x1]
        %v697 = vlaneseq
        %v698 = vshrl.u32 %v697, 7
        %v699 = vsub.s32 0, %v698
        %v700 = vrot.slane %v695, %v699
        %v702 = vadd.f32 %v689, %v700
        %v703 = vadd.f32 %v692, %v700
        %v704 = vld [vmem:[%s4] sm:$0x1]
        %v705 = vld [vmem:[%s5] sm:$0x1]
        %706 = vadd.xlane.f32.xlu0 %v702
        %v707 = vpop.xlane.xlu0 %706
        %708 = vadd.xlane.f32.xlu0 %v703
        %v709 = vpop.xlane.xlu0 %708
        %v710 = vrcp.pop 128.0
        %v711 = vmul.f32 %v707, %v710
        %v712 = vmul.f32 %v709, %v710
        %v713 = vsub.f32 %v702, %v711
        %v714 = vsub.f32 %v703, %v712
        %v715 = vmul.f32 %v713, %v713
        %v716 = vmul.f32 %v714, %v714
        %717 = vadd.xlane.f32.xlu0 %v715
        %v718 = vpop.xlane.xlu0 %717
        %719 = vadd.xlane.f32.xlu0 %v716
        %v720 = vpop.xlane.xlu0 %719
        %v721 = vmul.f32 %v718, %v710
        %v722 = vmul.f32 %v720, %v710
        %v723 = vadd.f32 %v721, 1e-05
        %v724 = vadd.f32 %v722, 1e-05
        %v725 = vrsqrt.pop %v723
        %v726 = vrsqrt.pop %v724
        %v727 = vmul.f32 %v713, %v725
        %v728 = vmul.f32 %v714, %v726
        %v730 = vlaneseq
        %v731 = vshrl.u32 %v730, 7
        %v732 = vsub.s32 0, %v731
        %v733 = vrot.slane %v704, %v732
        %v735 = vmul.f32 %v727, %v733
        %v736 = vmul.f32 %v728, %v733
        %v738 = vlaneseq
        %v739 = vshrl.u32 %v738, 7
        %v740 = vsub.s32 0, %v739
        %v741 = vrot.slane %v705, %v740
        %v743 = vadd.f32 %v735, %v741
        %v744 = vadd.f32 %v736, %v741
        %v745 = vmax.f32 %v743, 0.0
        %v746 = vmax.f32 %v744, 0.0
        %v747 = vpack.c.bf16 %v746, %v745
        %v748 = vld [vmem:[%s6] sm:$0xf]
        %v749 = vld [vmem:[%s6 + $0x4] sm:$0xf]
        %v750 = vld [vmem:[%s6 + $0x8] sm:$0xf]
        %v751 = vld [vmem:[%s6 + $0xc] sm:$0xf]
        %v752 = vld [vmem:[%s6 + $0x10] sm:$0xf]
        %v753 = vld [vmem:[%s6 + $0x14] sm:$0xf]
        %v754 = vld [vmem:[%s6 + $0x18] sm:$0xf]
        %v755 = vld [vmem:[%s6 + $0x1c] sm:$0xf]
        %v756 = vld [vmem:[%s6 + $0x20] sm:$0xf]
        %v757 = vld [vmem:[%s6 + $0x24] sm:$0xf]
        %v758 = vld [vmem:[%s6 + $0x28] sm:$0xf]
        %v759 = vld [vmem:[%s6 + $0x2c] sm:$0xf]
        %v760 = vld [vmem:[%s6 + $0x30] sm:$0xf]
        %v761 = vld [vmem:[%s6 + $0x34] sm:$0xf]
        %v762 = vld [vmem:[%s6 + $0x38] sm:$0xf]
        %v763 = vld [vmem:[%s6 + $0x3c] sm:$0xf]
        %v764 = vld [vmem:[%s7] sm:$0x1]
        %v766 = vlaneseq
        %v767 = vshrl.u32 %v766, 7
        %v768 = vsub.s32 0, %v767
        %v769 = vrot.slane %v764, %v768
        %v787 = vunpack.c.l.b16 %v748
        %v788 = vunpack.c.l.b16 %v749
        %v789 = vunpack.c.l.b16 %v750
        %v790 = vunpack.c.l.b16 %v751
        %v791 = vunpack.c.l.b16 %v752
        %v792 = vunpack.c.l.b16 %v753
        %v793 = vunpack.c.l.b16 %v754
        %v794 = vunpack.c.l.b16 %v755
        %v795 = vunpack.c.l.b16 %v756
        %v796 = vunpack.c.l.b16 %v757
        %v797 = vunpack.c.l.b16 %v758
        %v798 = vunpack.c.l.b16 %v759
        %v799 = vunpack.c.l.b16 %v760
        %v800 = vunpack.c.l.b16 %v761
        %v801 = vunpack.c.l.b16 %v762
        %v802 = vunpack.c.l.b16 %v763
        %v803 = vpack.c.b16 %v788, %v787
        %v804 = vpack.c.b16 %v790, %v789
        %v805 = vpack.c.b16 %v792, %v791
        %v806 = vpack.c.b16 %v794, %v793
        %v807 = vpack.c.b16 %v796, %v795
        %v808 = vpack.c.b16 %v798, %v797
        %v809 = vpack.c.b16 %v800, %v799
        %v810 = vpack.c.b16 %v802, %v801
        %819 = vmatprep.subr.bf16.mxu0 0
        %820 = vmatpush1.bf16.msra.mxu0 %v803
        %821 = vmatprep.subr.bf16.mxu0 0
        %822 = vmatpush1.bf16.msra.mxu0 %v804
        %823 = vmatprep.subr.bf16.mxu0 0
        %824 = vmatpush1.bf16.msra.mxu0 %v805
        %825 = vmatprep.subr.bf16.mxu0 0
        %826 = vmatpush1.bf16.msra.mxu0 %v806
        %827 = vmatprep.subr.bf16.mxu0 0
        %828 = vmatpush1.bf16.msra.mxu0 %v807
        %829 = vmatprep.subr.bf16.mxu0 0
        %830 = vmatpush1.bf16.msra.mxu0 %v808
        %831 = vmatprep.subr.bf16.mxu0 0
        %832 = vmatpush1.bf16.msra.mxu0 %v809
        %833 = vmatprep.subr.bf16.mxu0 0
        %834 = vmatpush1.bf16.msra.mxu0 %v810
        %835 = vmatprep.subr.bf16.mxu0 0
        %836 = vmatpush1.bf16.msra.mxu0 0
        %837 = vmatprep.subr.bf16.mxu0 0
        %838 = vmatpush1.bf16.msra.mxu0 0
        %839 = vmatprep.subr.bf16.mxu0 0
        %840 = vmatpush1.bf16.msra.mxu0 0
        %841 = vmatprep.subr.bf16.mxu0 0
        %842 = vmatpush1.bf16.msra.mxu0 0
        %843 = vmatprep.subr.bf16.mxu0 0
        %844 = vmatpush1.bf16.msra.mxu0 0
        %845 = vmatprep.subr.bf16.mxu0 0
        %846 = vmatpush1.bf16.msra.mxu0 0
        %847 = vmatprep.subr.bf16.mxu0 0
        %848 = vmatpush1.bf16.msra.mxu0 0
        %849 = vmatprep.subr.bf16.mxu0 0
        %850 = vmatpush1.bf16.msra.mxu0 0
        %851 = vmatprep.mubr.bf16.mxu0 0
        %852 = vmatmul.mubr.bf16.gmra.mrb[0].mxu0 %v747
        %v853 = vpop.f32.mrb[0].mxu0
        %v854 = vadd.f32 %v769, %v853
        %v855 = vpop.f32.mrb[0].mxu0
        %v856 = vpop.f32.mrb[0].mxu0
        %v857 = vadd.f32 %v769, %v856
        %v858 = vpop.f32.mrb[0].mxu0
        %859 = vdwg.mxu0
        %v860 = vld [vmem:[%s8] sm:$0x1]
        %v861 = vld [vmem:[%s9] sm:$0x1]
        %v862 = vsel %vm594, %v854, 0.0
        %863 = vadd.xlane.f32.xlu0 %v862
        %v864 = vpop.xlane.xlu0 %863
        %v865 = vsel %vm594, %v857, 0.0
        %866 = vadd.xlane.f32.xlu0 %v865
        %v867 = vpop.xlane.xlu0 %866
        %v868 = vrcp.pop 32.0
        %v869 = vmul.f32 %v864, %v868
        %v870 = vmul.f32 %v867, %v868
        %v871 = vsub.f32 %v854, %v869
        %v872 = vsub.f32 %v857, %v870
        %v873 = vmul.f32 %v871, %v871
        %v874 = vmul.f32 %v872, %v872
        %v875 = vsel %vm594, %v873, 0.0
        %876 = vadd.xlane.f32.xlu0 %v875
        %v877 = vpop.xlane.xlu0 %876
        %v878 = vsel %vm594, %v874, 0.0
        %879 = vadd.xlane.f32.xlu0 %v878
        %v880 = vpop.xlane.xlu0 %879
        %v881 = vmul.f32 %v877, %v868
        %v882 = vmul.f32 %v880, %v868
        %v883 = vadd.f32 %v881, 1e-05
        %v884 = vadd.f32 %v882, 1e-05
        %v885 = vrsqrt.pop %v883
        %v886 = vrsqrt.pop %v884
        %v887 = vmul.f32 %v871, %v885
        %v888 = vmul.f32 %v872, %v886
        %v890 = vlaneseq
        %v891 = vshrl.u32 %v890, 7
        %v892 = vsub.s32 0, %v891
        %v893 = vrot.slane %v860, %v892
        %v895 = vmul.f32 %v887, %v893
        %v896 = vmul.f32 %v888, %v893
        %v898 = vlaneseq
        %v899 = vshrl.u32 %v898, 7
        %v900 = vsub.s32 0, %v899
        %v901 = vrot.slane %v861, %v900
        %v903 = vadd.f32 %v895, %v901
        %v904 = vadd.f32 %v896, %v901
        %v905 = vmax.f32 %v903, 0.0
        %v906 = vmax.f32 %v904, 0.0
        %v907 = vld [vmem:[%s553] sm:$0xff]
        %v908 = vld [vmem:[%s553 + $0x8] sm:$0xff]
        %v909 = vadd.f32 %v905, %v907
        %v910 = vadd.f32 %v906, %v908
        %911 = vst.msk [vmem:[%s532] sm:$0xff] %vm594, %v909
        %912 = vst.msk [vmem:[%s532 + $0x8] sm:$0xff] %vm594, %v910
        %v913 = vld [vmem:[%s10] sm:$0xff]
        %v914 = vld [vmem:[%s10 + $0x8] sm:$0xff]
        %v915 = vld [vmem:[%s10 + $0x10] sm:$0xff]
        %v916 = vld [vmem:[%s10 + $0x18] sm:$0xff]
        %v917 = vld [vmem:[%s11] sm:$0x1]
        %v919 = vlaneseq
        %v920 = vshrl.u32 %v919, 7
        %v921 = vsub.s32 0, %v920
        %v922 = vrot.slane %v917, %v921
        %v925 = vsel %vm594, %v909, 0
        %v928 = vsel %vm594, %v910, 0
        %930 = vmatprep.subr.mxu0 0.0
        %931 = vmatpush1.msra.mxu0 %v913
        %932 = vmatprep.subr.mxu0 0.0
        %933 = vmatpush1.msra.mxu0 %v914
        %934 = vmatprep.subr.mxu0 0.0
        %935 = vmatpush1.msra.mxu0 %v915
        %936 = vmatprep.subr.mxu0 0.0
        %937 = vmatpush1.msra.mxu0 %v916
        %938 = vmatprep.subr.mxu0 0.0
        %939 = vmatpush1.msra.mxu0 0.0
        %940 = vmatprep.subr.mxu0 0.0
        %941 = vmatpush1.msra.mxu0 0.0
        %942 = vmatprep.subr.mxu0 0.0
        %943 = vmatpush1.msra.mxu0 0.0
        %944 = vmatprep.subr.mxu0 0.0
        %945 = vmatpush1.msra.mxu0 0.0
        %946 = vmatprep.subr.mxu0 0.0
        %947 = vmatpush1.msra.mxu0 0.0
        %948 = vmatprep.subr.mxu0 0.0
        %949 = vmatpush1.msra.mxu0 0.0
        %950 = vmatprep.subr.mxu0 0.0
        %951 = vmatpush1.msra.mxu0 0.0
        %952 = vmatprep.subr.mxu0 0.0
        %953 = vmatpush1.msra.mxu0 0.0
        %954 = vmatprep.subr.mxu0 0.0
        %955 = vmatpush1.msra.mxu0 0.0
        %956 = vmatprep.subr.mxu0 0.0
        %957 = vmatpush1.msra.mxu0 0.0
        %958 = vmatprep.subr.mxu0 0.0
        %959 = vmatpush1.msra.mxu0 0.0
        %960 = vmatprep.subr.mxu0 0.0
        %961 = vmatpush1.msra.mxu0 0.0
        %962 = vmatprep.subr.mxu0 0.0
        %963 = vmatpush1.msra.mxu0 0.0
        %964 = vmatprep.subr.mxu0 0.0
        %965 = vmatpush1.msra.mxu0 0.0
        %966 = vmatprep.subr.mxu0 0.0
        %967 = vmatpush1.msra.mxu0 0.0
        %968 = vmatprep.subr.mxu0 0.0
        %969 = vmatpush1.msra.mxu0 0.0
        %970 = vmatprep.subr.mxu0 0.0
        %971 = vmatpush1.msra.mxu0 0.0
        %972 = vmatprep.subr.mxu0 0.0
        %973 = vmatpush1.msra.mxu0 0.0
        %974 = vmatprep.subr.mxu0 0.0
        %975 = vmatpush1.msra.mxu0 0.0
        %976 = vmatprep.subr.mxu0 0.0
        %977 = vmatpush1.msra.mxu0 0.0
        %978 = vmatprep.subr.mxu0 0.0
        %979 = vmatpush1.msra.mxu0 0.0
        %980 = vmatprep.subr.mxu0 0.0
        %981 = vmatpush1.msra.mxu0 0.0
        %982 = vmatprep.subr.mxu0 0.0
        %983 = vmatpush1.msra.mxu0 0.0
        %984 = vmatprep.subr.mxu0 0.0
        %985 = vmatpush1.msra.mxu0 0.0
        %986 = vmatprep.subr.mxu0 0.0
        %987 = vmatpush1.msra.mxu0 0.0
        %988 = vmatprep.subr.mxu0 0.0
        %989 = vmatpush1.msra.mxu0 0.0
        %990 = vmatprep.subr.mxu0 0.0
        %991 = vmatpush1.msra.mxu0 0.0
        %992 = vmatprep.subr.mxu0 0.0
        %993 = vmatpush1.msra.mxu0 0.0
        %994 = vmatprep.mubr.f32.mxu0 0.0
        %995 = vmatmul.mubr.f32.gmra.mrb[0].mxu0 %v925
        %v996 = vpop.f32.mrb[0].mxu0
        %v997 = vadd.f32 %v922, %v996
        %v998 = vpop.f32.mrb[0].mxu0
        %999 = vmatprep.mubr.f32.mxu0 0.0
        %1000 = vmatmul.mubr.f32.gmra.mrb[0].mxu0 %v928
        %v1001 = vpop.f32.mrb[0].mxu0
        %v1002 = vadd.f32 %v922, %v1001
        %v1003 = vpop.f32.mrb[0].mxu0
        %1004 = vdwg.mxu0
        %vm1005 = vcmask 23552
        %1006 = vst.msk [vmem:[%s564] sm:$0xff] %vm1005, %v997
        %1007 = vst.msk [vmem:[%s564 + $0x8] sm:$0xff] %vm1005, %v1002
        %s1008 = sand.u32 %s316, 1
        %s1009 = scalar_lea.sflag [#allocation4], %s1008
        %s1010 = sand.u32 %s316, 1
        %s1011 = smul.addr %s1010, 16
        %s1012 = scalar_lea.vmem [#allocation3], %s1011
        %s1013 = smul.u32 2, %s33
        %p1014 = scmp.lt.s32.totalorder %s32, 1
        %s1015 = scalar_select %p1014, %s32, 1
        %p1016 = scmp.lt.s32.totalorder %s1013, 1
        %s1017 = scalar_select %p1016, %s1013, 1
        %s1018 = smul.addr %s1015, 2
        %s1019 = sadd.s32 %s1017, %s1018
        %s1020 = smul.addr %s1019, 8
        %s1021 = scalar_lea.vmem %s13, %s1020
        // Predicated region
        $region107: #{forward.9} parent=101 // pred_check
          %p1022 = pneg %p326
        $region108: #{forward.9} parent=101 // pred_check_branch
          %1024 = sbr.rel (%p1022) target = $region110
        $region109: #{forward.9} parent=101 // pred_region
          %s1025 = smul.u32 2, %s33
          %s1027 = ssub.s32 256, 256
          %1028 = vsyncadd %s1009, %s1027
          %s1029 = smul.addr %s32, 2
          %s1030 = sadd.s32 %s1025, %s1029
          %s1031 = smul.addr %s1030, 128
          %s1032 = scalar_lea.hbm %s12, %s1031
          %s1033 = sshll.u32 %s1012, 4
          %s1034 = int_to_ptr.vmem [resolvable:$true] %s1033
          %1039 = dma.vmem_to_hbm [thread:$0]  %s1034, 256, %s1032, %s1009, 128, 128, 8
        $region110: #{forward.9} parent=101 // pred_fallthru
          _
        // Predicated region
        $region111: #{forward.9} parent=101 // pred_check
          %p1040 = pneg %p354
        $region112: #{forward.9} parent=101 // pred_check_branch
          %1042 = sbr.rel (%p1040) target = $region114
        $region113: #{forward.9} parent=101 // pred_region
          %s1043 = smul.u32 2, %s33
        $region114: #{forward.9} parent=101 // pred_fallthru
          _
      $region102: #{forward.9} parent=5 // pred_fallthru
        _
      %p1044 = scmp.le.s32.totalorder 2, %s23
      // Predicated region
      $region115: #{forward.9} parent=5 // pred_check
        %p1045 = pneg %p1044
      $region116: #{forward.9} parent=5 // pred_check_branch
        %1047 = sbr.rel (%p1045) target = $region118
      $region117: #{forward.9} parent=5 // pred_region
        %s1048 = ssub.s32 %s23, 2
        // Predicated region
        $region119: #{forward.9} parent=117 // pred_check
          %p1049 = pneg %p332
        $region120: #{forward.9} parent=117 // pred_check_branch
          %1051 = sbr.rel (%p1049) target = $region122
        $region121: #{forward.9} parent=117 // pred_region
          %s1052 = sand.u32 %s317, 1
          %s1053 = scalar_lea.sflag [#allocation4], %s1052
          %s1054 = sand.u32 %s317, 1
          %s1055 = smul.addr %s1054, 16
          %s1056 = scalar_lea.vmem [#allocation3], %s1055
          %1057 = dma.done %s1053, 256
        $region122: #{forward.9} parent=117 // pred_fallthru
          _
        // Predicated region
        $region123: #{forward.9} parent=117 // pred_check
          %p1058 = pneg %p360
        $region124: #{forward.9} parent=117 // pred_check_branch
          %1060 = sbr.rel (%p1058) target = $region126
        $region125: #{forward.9} parent=117 // pred_region
          %s1061 = smul.u32 2, %s35
          %p1062 = scmp.lt.s32.totalorder %s34, 1
          %s1063 = scalar_select %p1062, %s34, 1
          %p1064 = scmp.lt.s32.totalorder %s1061, 1
          %s1065 = scalar_select %p1064, %s1061, 1
          %s1066 = smul.addr %s1063, 2
          %s1067 = sadd.s32 %s1065, %s1066
          %s1068 = smul.addr %s1067, 8
          %s1069 = scalar_lea.vmem %s13, %s1068
        $region126: #{forward.9} parent=117 // pred_fallthru
          _
      $region118: #{forward.9} parent=5 // pred_fallthru
        _
    $region6: #{forward.9} parent=1 // loop_footer
      %s27 = sadd.s32 1, %s23
    $region7: #{forward.9} parent=1 // loop_footer_branch
      %22 = sbr.rel target = $region3
    $region8: #{forward.9} parent=1 // loop_exit
      _
    %1070 = vsyncpa [#allocation4], 1
    %s1071 = scalar_lea.sflag [#allocation4], 1
    %1072 = vsyncpa %s1071, 1

// kernel: forward.5
$region0: #{forward.5}
  #allocation0 [shape = 'u32[]', space=smem, size = 0x4, offset = 0x4, fixed_abs, tag = 'smem constant byte address 0x4 - core index']
  #allocation1 [shape = 'u32[144,128]{1,0:T(1,128)}', space=vmem, size = 0x12000, scoped, tag = 'internal scratch']
  #allocation2 [shape = 'f32[1,1]{1,0:T(1,128)S(1)}', space=vmem, size = 0x200, scoped, tag = 'scoped memory for forward.5']
  %s0 = inlined_call_operand.vmem [shape: f32[2,2,30], index: 0, kind: input, shape index: {}]
  %s1 = inlined_call_operand.vmem [shape: f32[8,15], index: 1, kind: input, shape index: {}]
  %s2 = inlined_call_operand.vmem [shape: f32[8,15], index: 2, kind: input, shape index: {}]
  %s3 = inlined_call_operand.vmem [shape: f32[1,2], index: 3, kind: input, shape index: {}]
  %s4 = inlined_call_operand.<no memory space> [shape: f32[1,1], index: 4, kind: input, shape index: {}]
  %s5 = inlined_call_operand.vmem [shape: f32[32,8], index: 5, kind: input, shape index: {}]
  %s6 = inlined_call_operand.vmem [shape: f32[32,2], index: 6, kind: input, shape index: {}]
  %s7 = inlined_call_operand.vmem [shape: f32[32,1], index: 7, kind: input, shape index: {}]
  %s8 = inlined_call_operand.vmem [shape: f32[32,1], index: 8, kind: input, shape index: {}]
  %s9 = inlined_call_operand.vmem [shape: f32[32,1], index: 9, kind: input, shape index: {}]
  %s10 = inlined_call_operand.vmem [shape: f32[2,32,16], index: 10, kind: output, shape index: {}]
  %s11 = sld [smem:[#allocation0]]
  $region73: #{forward.5} parent=0
    _
  %s13 = ssub.s32 1, %s11
  %s14 = scalar_select 0, %s13, %s11
  %v15 = vstv %s4
  %16 = vst [vmem:[#allocation2] sm:$0x1] %v15
  loop: start=0, step=1, limit=4
  $region2: #{forward.5} parent=0 // loop_pre_header
    _
  $region3: #{forward.5} parent=0 // loop_header
    %s18 = sphi 0, %s22
    %p19 = scmp.ge.s32.totalorder %s18, 4
    %s28 = sphi 0, %s30
    %s31 = sphi 0, %s28
    %s32 = sphi 0, %s31
    %s48 = sphi 0, %s32
    %s52 = sphi 0, %s52
    %s54 = sphi 0, %s52
    %s55 = sphi 0, %s54
    %s69 = sphi 0, %s55
    %s73 = sphi 0, %s73
    %s75 = sphi 0, %s73
    %s76 = sphi 0, %s75
    %s90 = sphi 0, %s76
    %s94 = sphi 0, %s94
    %s96 = sphi 0, %s94
    %s97 = sphi 0, %s96
    %s111 = sphi 0, %s97
    %s115 = sphi 0, %s115
    %s117 = sphi 0, %s115
    %s118 = sphi 0, %s117
    %s132 = sphi 0, %s118
    %s136 = sphi 0, %s136
    %s138 = sphi 0, %s136
    %s139 = sphi 0, %s138
    %s153 = sphi 0, %s139
    %s157 = sphi 0, %s157
    %s159 = sphi 0, %s157
    %s160 = sphi 0, %s159
    %s174 = sphi 0, %s160
    %s178 = sphi 0, %s178
    %s180 = sphi 0, %s178
    %s181 = sphi 0, %s180
    %s195 = sphi 0, %s181
    %s199 = sphi 0, %s199
    %s201 = sphi 0, %s199
    %s202 = sphi 0, %s201
    %s216 = sphi 0, %s202
    %s220 = sphi 0, %s220
    %s222 = sphi 0, %s220
    %s223 = sphi 0, %s222
    %s237 = sphi 0, %s223
    %s243 = sphi 0, %s245
    %s246 = sphi 0, %s243
    %s247 = sphi 0, %s246
    %s263 = sphi 0, %s247
  $region4: #{forward.5} parent=0 // loop_header_branch
    %21 = sbr.rel (%p19) target = $region8
  $region5: #{forward.5} parent=0 // loop_body
    %s23 = ssub.s32 %s18, 1
    %s24 = ssub.s32 %s18, 2
    %s25 = sadd.s32 %s18, 1
    %s26 = ssub.s32 %s18, %s25
    %p27 = scmp.eq.s32.totalorder %s26, 0
    %s29 = sadd.s32 %s28, 1
    %s30 = scalar_select %p27, %s28, %s29
    %p33 = pneg %p27
    %p34 = scmp.eq.s32.totalorder %s18, 1
    %p35 = por %p33, %p34
    %p36 = scmp.ne.s32.totalorder %s28, %s31
    %p37 = scmp.eq.s32.totalorder %s18, 0
    %p38 = por %p36, %p37
    %p39 = scmp.ne.s32.totalorder %s28, %s31
    %p40 = scmp.eq.s32.totalorder %s23, 1
    %p41 = por %p39, %p40
    %p42 = scmp.ne.s32.totalorder %s31, %s32
    %p43 = scmp.eq.s32.totalorder %s23, 0
    %p44 = por %p42, %p43
    %p45 = scmp.ne.s32.totalorder %s31, %s32
    %p46 = scmp.eq.s32.totalorder %s24, 1
    %p47 = por %p45, %p46
    %p49 = scmp.ne.s32.totalorder %s32, %s48
    %p50 = scmp.eq.s32.totalorder %s24, 0
    %p51 = por %p49, %p50
    %s53 = sadd.s32 %s52, 1
    %p56 = scmp.eq.s32.totalorder %s18, 1
    %p57 = scmp.ne.s32.totalorder %s52, %s54
    %p58 = scmp.eq.s32.totalorder %s18, 0
    %p59 = por %p57, %p58
    %p60 = scmp.ne.s32.totalorder %s52, %s54
    %p61 = scmp.eq.s32.totalorder %s23, 1
    %p62 = por %p60, %p61
    %p63 = scmp.ne.s32.totalorder %s54, %s55
    %p64 = scmp.eq.s32.totalorder %s23, 0
    %p65 = por %p63, %p64
    %p66 = scmp.ne.s32.totalorder %s54, %s55
    %p67 = scmp.eq.s32.totalorder %s24, 1
    %p68 = por %p66, %p67
    %p70 = scmp.ne.s32.totalorder %s55, %s69
    %p71 = scmp.eq.s32.totalorder %s24, 0
    %p72 = por %p70, %p71
    %s74 = sadd.s32 %s73, 1
    %p77 = scmp.eq.s32.totalorder %s18, 1
    %p78 = scmp.ne.s32.totalorder %s73, %s75
    %p79 = scmp.eq.s32.totalorder %s18, 0
    %p80 = por %p78, %p79
    %p81 = scmp.ne.s32.totalorder %s73, %s75
    %p82 = scmp.eq.s32.totalorder %s23, 1
    %p83 = por %p81, %p82
    %p84 = scmp.ne.s32.totalorder %s75, %s76
    %p85 = scmp.eq.s32.totalorder %s23, 0
    %p86 = por %p84, %p85
    %p87 = scmp.ne.s32.totalorder %s75, %s76
    %p88 = scmp.eq.s32.totalorder %s24, 1
    %p89 = por %p87, %p88
    %p91 = scmp.ne.s32.totalorder %s76, %s90
    %p92 = scmp.eq.s32.totalorder %s24, 0
    %p93 = por %p91, %p92
    %s95 = sadd.s32 %s94, 1
    %p98 = scmp.eq.s32.totalorder %s18, 1
    %p99 = scmp.ne.s32.totalorder %s94, %s96
    %p100 = scmp.eq.s32.totalorder %s18, 0
    %p101 = por %p99, %p100
    %p102 = scmp.ne.s32.totalorder %s94, %s96
    %p103 = scmp.eq.s32.totalorder %s23, 1
    %p104 = por %p102, %p103
    %p105 = scmp.ne.s32.totalorder %s96, %s97
    %p106 = scmp.eq.s32.totalorder %s23, 0
    %p107 = por %p105, %p106
    %p108 = scmp.ne.s32.totalorder %s96, %s97
    %p109 = scmp.eq.s32.totalorder %s24, 1
    %p110 = por %p108, %p109
    %p112 = scmp.ne.s32.totalorder %s97, %s111
    %p113 = scmp.eq.s32.totalorder %s24, 0
    %p114 = por %p112, %p113
    %s116 = sadd.s32 %s115, 1
    %p119 = scmp.eq.s32.totalorder %s18, 1
    %p120 = scmp.ne.s32.totalorder %s115, %s117
    %p121 = scmp.eq.s32.totalorder %s18, 0
    %p122 = por %p120, %p121
    %p123 = scmp.ne.s32.totalorder %s115, %s117
    %p124 = scmp.eq.s32.totalorder %s23, 1
    %p125 = por %p123, %p124
    %p126 = scmp.ne.s32.totalorder %s117, %s118
    %p127 = scmp.eq.s32.totalorder %s23, 0
    %p128 = por %p126, %p127
    %p129 = scmp.ne.s32.totalorder %s117, %s118
    %p130 = scmp.eq.s32.totalorder %s24, 1
    %p131 = por %p129, %p130
    %p133 = scmp.ne.s32.totalorder %s118, %s132
    %p134 = scmp.eq.s32.totalorder %s24, 0
    %p135 = por %p133, %p134
    %s137 = sadd.s32 %s136, 1
    %p140 = scmp.eq.s32.totalorder %s18, 1
    %p141 = scmp.ne.s32.totalorder %s136, %s138
    %p142 = scmp.eq.s32.totalorder %s18, 0
    %p143 = por %p141, %p142
    %p144 = scmp.ne.s32.totalorder %s136, %s138
    %p145 = scmp.eq.s32.totalorder %s23, 1
    %p146 = por %p144, %p145
    %p147 = scmp.ne.s32.totalorder %s138, %s139
    %p148 = scmp.eq.s32.totalorder %s23, 0
    %p149 = por %p147, %p148
    %p150 = scmp.ne.s32.totalorder %s138, %s139
    %p151 = scmp.eq.s32.totalorder %s24, 1
    %p152 = por %p150, %p151
    %p154 = scmp.ne.s32.totalorder %s139, %s153
    %p155 = scmp.eq.s32.totalorder %s24, 0
    %p156 = por %p154, %p155
    %s158 = sadd.s32 %s157, 1
    %p161 = scmp.eq.s32.totalorder %s18, 1
    %p162 = scmp.ne.s32.totalorder %s157, %s159
    %p163 = scmp.eq.s32.totalorder %s18, 0
    %p164 = por %p162, %p163
    %p165 = scmp.ne.s32.totalorder %s157, %s159
    %p166 = scmp.eq.s32.totalorder %s23, 1
    %p167 = por %p165, %p166
    %p168 = scmp.ne.s32.totalorder %s159, %s160
    %p169 = scmp.eq.s32.totalorder %s23, 0
    %p170 = por %p168, %p169
    %p171 = scmp.ne.s32.totalorder %s159, %s160
    %p172 = scmp.eq.s32.totalorder %s24, 1
    %p173 = por %p171, %p172
    %p175 = scmp.ne.s32.totalorder %s160, %s174
    %p176 = scmp.eq.s32.totalorder %s24, 0
    %p177 = por %p175, %p176
    %s179 = sadd.s32 %s178, 1
    %p182 = scmp.eq.s32.totalorder %s18, 1
    %p183 = scmp.ne.s32.totalorder %s178, %s180
    %p184 = scmp.eq.s32.totalorder %s18, 0
    %p185 = por %p183, %p184
    %p186 = scmp.ne.s32.totalorder %s178, %s180
    %p187 = scmp.eq.s32.totalorder %s23, 1
    %p188 = por %p186, %p187
    %p189 = scmp.ne.s32.totalorder %s180, %s181
    %p190 = scmp.eq.s32.totalorder %s23, 0
    %p191 = por %p189, %p190
    %p192 = scmp.ne.s32.totalorder %s180, %s181
    %p193 = scmp.eq.s32.totalorder %s24, 1
    %p194 = por %p192, %p193
    %p196 = scmp.ne.s32.totalorder %s181, %s195
    %p197 = scmp.eq.s32.totalorder %s24, 0
    %p198 = por %p196, %p197
    %s200 = sadd.s32 %s199, 1
    %p203 = scmp.eq.s32.totalorder %s18, 1
    %p204 = scmp.ne.s32.totalorder %s199, %s201
    %p205 = scmp.eq.s32.totalorder %s18, 0
    %p206 = por %p204, %p205
    %p207 = scmp.ne.s32.totalorder %s199, %s201
    %p208 = scmp.eq.s32.totalorder %s23, 1
    %p209 = por %p207, %p208
    %p210 = scmp.ne.s32.totalorder %s201, %s202
    %p211 = scmp.eq.s32.totalorder %s23, 0
    %p212 = por %p210, %p211
    %p213 = scmp.ne.s32.totalorder %s201, %s202
    %p214 = scmp.eq.s32.totalorder %s24, 1
    %p215 = por %p213, %p214
    %p217 = scmp.ne.s32.totalorder %s202, %s216
    %p218 = scmp.eq.s32.totalorder %s24, 0
    %p219 = por %p217, %p218
    %s221 = sadd.s32 %s220, 1
    %p224 = scmp.eq.s32.totalorder %s18, 1
    %p225 = scmp.ne.s32.totalorder %s220, %s222
    %p226 = scmp.eq.s32.totalorder %s18, 0
    %p227 = por %p225, %p226
    %p228 = scmp.ne.s32.totalorder %s220, %s222
    %p229 = scmp.eq.s32.totalorder %s23, 1
    %p230 = por %p228, %p229
    %p231 = scmp.ne.s32.totalorder %s222, %s223
    %p232 = scmp.eq.s32.totalorder %s23, 0
    %p233 = por %p231, %p232
    %p234 = scmp.ne.s32.totalorder %s222, %s223
    %p235 = scmp.eq.s32.totalorder %s24, 1
    %p236 = por %p234, %p235
    %p238 = scmp.ne.s32.totalorder %s223, %s237
    %p239 = scmp.eq.s32.totalorder %s24, 0
    %p240 = por %p238, %p239
    %s241 = ssub.s32 %s18, %s25
    %p242 = scmp.eq.s32.totalorder %s241, 0
    %s244 = sadd.s32 %s243, 1
    %s245 = scalar_select %p242, %s243, %s244
    %p248 = pneg %p242
    %p249 = scmp.eq.s32.totalorder %s18, 1
    %p250 = por %p248, %p249
    %p251 = scmp.ne.s32.totalorder %s243, %s246
    %p252 = scmp.eq.s32.totalorder %s18, 0
    %p253 = por %p251, %p252
    %p254 = scmp.ne.s32.totalorder %s243, %s246
    %p255 = scmp.eq.s32.totalorder %s23, 1
    %p256 = por %p254, %p255
    %p257 = scmp.ne.s32.totalorder %s246, %s247
    %p258 = scmp.eq.s32.totalorder %s23, 0
    %p259 = por %p257, %p258
    %p260 = scmp.ne.s32.totalorder %s246, %s247
    %p261 = scmp.eq.s32.totalorder %s24, 1
    %p262 = por %p260, %p261
    %p264 = scmp.ne.s32.totalorder %s247, %s263
    %p265 = scmp.eq.s32.totalorder %s24, 0
    %p266 = por %p264, %p265
    %p267 = scmp.le.s32.totalorder 1, %s18
    %p268 = scmp.lt.s32.totalorder %s18, 3
    %p269 = pnand %p267, %p268
    %p270 = pneg %p269
    // Predicated region
    $region9: #{forward.5} parent=5 // pred_check
      _
    $region10: #{forward.5} parent=5 // pred_check_branch
      %272 = sbr.rel (%p269) target = $region12
    $region11: #{forward.5} parent=5 // pred_region
      %s273 = ssub.s32 %s18, 1
      // Predicated region
      $region13: #{forward.5} parent=11 // pred_check
        %p274 = pneg %p65
      $region14: #{forward.5} parent=11 // pred_check_branch
        %276 = sbr.rel (%p274) target = $region16
      $region15: #{forward.5} parent=11 // pred_region
        _
      $region16: #{forward.5} parent=11 // pred_fallthru
        _
      // Predicated region
      $region17: #{forward.5} parent=11 // pred_check
        %p277 = pneg %p86
      $region18: #{forward.5} parent=11 // pred_check_branch
        %279 = sbr.rel (%p277) target = $region20
      $region19: #{forward.5} parent=11 // pred_region
        _
      $region20: #{forward.5} parent=11 // pred_fallthru
        _
      // Predicated region
      $region21: #{forward.5} parent=11 // pred_check
        %p280 = pneg %p107
      $region22: #{forward.5} parent=11 // pred_check_branch
        %282 = sbr.rel (%p280) target = $region24
      $region23: #{forward.5} parent=11 // pred_region
        _
      $region24: #{forward.5} parent=11 // pred_fallthru
        _
      // Predicated region
      $region25: #{forward.5} parent=11 // pred_check
        %p283 = pneg %p128
      $region26: #{forward.5} parent=11 // pred_check_branch
        %285 = sbr.rel (%p283) target = $region28
      $region27: #{forward.5} parent=11 // pred_region
        _
      $region28: #{forward.5} parent=11 // pred_fallthru
        _
      // Predicated region
      $region29: #{forward.5} parent=11 // pred_check
        %p286 = pneg %p149
      $region30: #{forward.5} parent=11 // pred_check_branch
        %288 = sbr.rel (%p286) target = $region32
      $region31: #{forward.5} parent=11 // pred_region
        _
      $region32: #{forward.5} parent=11 // pred_fallthru
        _
      // Predicated region
      $region33: #{forward.5} parent=11 // pred_check
        %p289 = pneg %p170
      $region34: #{forward.5} parent=11 // pred_check_branch
        %291 = sbr.rel (%p289) target = $region36
      $region35: #{forward.5} parent=11 // pred_region
        _
      $region36: #{forward.5} parent=11 // pred_fallthru
        _
      // Predicated region
      $region37: #{forward.5} parent=11 // pred_check
        %p292 = pneg %p191
      $region38: #{forward.5} parent=11 // pred_check_branch
        %294 = sbr.rel (%p292) target = $region40
      $region39: #{forward.5} parent=11 // pred_region
        _
      $region40: #{forward.5} parent=11 // pred_fallthru
        _
      // Predicated region
      $region41: #{forward.5} parent=11 // pred_check
        %p295 = pneg %p212
      $region42: #{forward.5} parent=11 // pred_check_branch
        %297 = sbr.rel (%p295) target = $region44
      $region43: #{forward.5} parent=11 // pred_region
        _
      $region44: #{forward.5} parent=11 // pred_fallthru
        _
      // Predicated region
      $region45: #{forward.5} parent=11 // pred_check
        %p298 = pneg %p233
      $region46: #{forward.5} parent=11 // pred_check_branch
        %300 = sbr.rel (%p298) target = $region48
      $region47: #{forward.5} parent=11 // pred_region
        _
      $region48: #{forward.5} parent=11 // pred_fallthru
        _
    $region12: #{forward.5} parent=5 // pred_fallthru
      _
    %p301 = scmp.lt.s32.totalorder %s18, 2
    // Predicated region
    $region49: #{forward.5} parent=5 // pred_check
      %p302 = pneg %p301
    $region50: #{forward.5} parent=5 // pred_check_branch
      %304 = sbr.rel (%p302) target = $region52
    $region51: #{forward.5} parent=5 // pred_region
      // Predicated region
      $region53: #{forward.5} parent=51 // pred_check
        %p305 = pneg %p38
      $region54: #{forward.5} parent=51 // pred_check_branch
        %307 = sbr.rel (%p305) target = $region56
      $region55: #{forward.5} parent=51 // pred_region
        %p308 = scmp.lt.s32.totalorder %s18, 1
        %s309 = scalar_select %p308, %s18, 1
        %s310 = smul.addr %s309, 2
        %s311 = scalar_lea.vmem %s0, %s310
      $region56: #{forward.5} parent=51 // pred_fallthru
        _
    $region52: #{forward.5} parent=5 // pred_fallthru
      _
    %p312 = scmp.le.s32.totalorder 1, %s18
    %p313 = scmp.lt.s32.totalorder %s18, 3
    %p314 = pnand %p312, %p313
    %p315 = pneg %p314
    // Predicated region
    $region57: #{forward.5} parent=5 // pred_check
      _
    $region58: #{forward.5} parent=5 // pred_check_branch
      %317 = sbr.rel (%p314) target = $region60
    $region59: #{forward.5} parent=5 // pred_region
      %s318 = ssub.s32 %s18, 1
      %p319 = scmp.lt.s32.totalorder %s23, 1
      %s320 = scalar_select %p319, %s23, 1
      %s321 = smul.addr %s320, 2
      %s322 = scalar_lea.vmem %s0, %s321
      %p323 = pneg %p44
      %p324 = pneg %p41
      %p325 = pneg %p65
      %p326 = pneg %p62
      %p327 = pneg %p86
      %p328 = pneg %p83
      %p329 = pneg %p107
      %p330 = pneg %p104
      %p331 = pneg %p128
      %p332 = pneg %p125
      %p333 = pneg %p149
      %p334 = pneg %p146
      %p335 = pneg %p170
      %p336 = pneg %p167
      %p337 = pneg %p191
      %p338 = pneg %p188
      %p339 = pneg %p212
      %p340 = pneg %p209
      %p341 = pneg %p233
      %p342 = pneg %p230
      %p343 = pneg %p259
      %p344 = pneg %p256
      %p345 = scmp.lt.s32.totalorder %s23, 1
      %s346 = scalar_select %p345, %s23, 1
      %s347 = smul.addr %s346, 4
      %s348 = smul.addr %s347, 8
      %s349 = scalar_lea.vmem %s10, %s348
      %p350 = scmp.lt.s32.totalorder %s23, 1
      %s351 = scalar_select %p350, %s23, 1
      %s352 = smul.addr %s351, 2
      %s353 = scalar_lea.vmem %s0, %s352
      %p354 = scmp.lt.s32.totalorder %s23, 1
      %s355 = scalar_select %p354, %s23, 1
      %s356 = smul.addr %s355, 4
      %s357 = smul.addr %s356, 8
      %s358 = scalar_lea.vmem %s10, %s357
      %v359 = vld [vmem:[%s353] sm:$0x3]
      %v360 = vld [vmem:[%s1] sm:$0xff]
      %v361 = vld [vmem:[%s2] sm:$0xff]
      %v362 = vld [vmem:[%s3] sm:$0x1]
      %v363 = vld [vmem:[#allocation2] sm:$0x1]
      %v365 = vlaneseq
      %v366 = vshrl.u32 %v365, 7
      %v367 = vsub.s32 0, %v366
      %v368 = vrot.slane %v363, %v367
      %369 = vset.pattern.permute.xlu0 0
      %370 = vperm.xlu0 %369, %v368
      %v371 = vpop.permute.xlu0 %370
      %v373 = vadd.f32 %v371, 0.0
      %375 = vset.pattern.permute.xlu0 0
      %376 = vperm.xlu0 %375, %v360
      %v377 = vpop.permute.xlu0 %376
      %v379 = vlaneseq
      %v380 = vshrl.u32 %v379, 7
      %v381 = vsub.s32 0, %v380
      %v382 = vrot.slane %v359, %v381
      %v383 = vmul.f32 %v377, %v382
      %v384 = vadd.f32 %v383, 0.0
      %386 = vset.pattern.permute.xlu0 0
      %387 = vperm.xlu0 %386, %v361
      %v388 = vpop.permute.xlu0 %387
      %v390 = vmul.f32 %v388, %v382
      %v391 = vadd.f32 %v390, 0.0
      %392 = vset.pattern.permute.xlu0 1
      %393 = vperm.xlu0 %392, %v360
      %v394 = vpop.permute.xlu0 %393
      %v396 = vmul.f32 %v394, %v382
      %398 = vrot.lane.b32.xlu0 %v396, 127
      %v399 = vpop.permute.xlu0 %398
      %v401 = vadd.f32 %v384, %v399
      %402 = vset.pattern.permute.xlu0 1
      %403 = vperm.xlu0 %402, %v361
      %v404 = vpop.permute.xlu0 %403
      %v406 = vmul.f32 %v404, %v382
      %408 = vrot.lane.b32.xlu0 %v406, 127
      %v409 = vpop.permute.xlu0 %408
      %v411 = vadd.f32 %v391, %v409
      %412 = vset.pattern.permute.xlu0 2
      %413 = vperm.xlu0 %412, %v360
      %v414 = vpop.permute.xlu0 %413
      %v416 = vmul.f32 %v414, %v382
      %418 = vrot.lane.b32.xlu0 %v416, 126
      %v419 = vpop.permute.xlu0 %418
      %v421 = vadd.f32 %v401, %v419
      %422 = vset.pattern.permute.xlu0 2
      %423 = vperm.xlu0 %422, %v361
      %v424 = vpop.permute.xlu0 %423
      %v426 = vmul.f32 %v424, %v382
      %428 = vrot.lane.b32.xlu0 %v426, 126
      %v429 = vpop.permute.xlu0 %428
      %v431 = vadd.f32 %v411, %v429
      %432 = vset.pattern.permute.xlu0 3
      %433 = vperm.xlu0 %432, %v360
      %v434 = vpop.permute.xlu0 %433
      %v436 = vmul.f32 %v434, %v382
      %438 = vrot.lane.b32.xlu0 %v436, 125
      %v439 = vpop.permute.xlu0 %438
      %v441 = vadd.f32 %v421, %v439
      %442 = vset.pattern.permute.xlu0 3
      %443 = vperm.xlu0 %442, %v361
      %v444 = vpop.permute.xlu0 %443
      %v446 = vmul.f32 %v444, %v382
      %448 = vrot.lane.b32.xlu0 %v446, 125
      %v449 = vpop.permute.xlu0 %448
      %v451 = vadd.f32 %v431, %v449
      %452 = vset.pattern.permute.xlu0 4
      %453 = vperm.xlu0 %452, %v360
      %v454 = vpop.permute.xlu0 %453
      %v456 = vmul.f32 %v454, %v382
      %458 = vrot.lane.b32.xlu0 %v456, 124
      %v459 = vpop.permute.xlu0 %458
      %v461 = vadd.f32 %v441, %v459
      %462 = vset.pattern.permute.xlu0 4
      %463 = vperm.xlu0 %462, %v361
      %v464 = vpop.permute.xlu0 %463
      %v466 = vmul.f32 %v464, %v382
      %468 = vrot.lane.b32.xlu0 %v466, 124
      %v469 = vpop.permute.xlu0 %468
      %v471 = vadd.f32 %v451, %v469
      %472 = vset.pattern.permute.xlu0 5
      %473 = vperm.xlu0 %472, %v360
      %v474 = vpop.permute.xlu0 %473
      %v476 = vmul.f32 %v474, %v382
      %478 = vrot.lane.b32.xlu0 %v476, 123
      %v479 = vpop.permute.xlu0 %478
      %v481 = vadd.f32 %v461, %v479
      %482 = vset.pattern.permute.xlu0 5
      %483 = vperm.xlu0 %482, %v361
      %v484 = vpop.permute.xlu0 %483
      %v486 = vmul.f32 %v484, %v382
      %488 = vrot.lane.b32.xlu0 %v486, 123
      %v489 = vpop.permute.xlu0 %488
      %v491 = vadd.f32 %v471, %v489
      %492 = vset.pattern.permute.xlu0 6
      %493 = vperm.xlu0 %492, %v360
      %v494 = vpop.permute.xlu0 %493
      %v496 = vmul.f32 %v494, %v382
      %498 = vrot.lane.b32.xlu0 %v496, 122
      %v499 = vpop.permute.xlu0 %498
      %v501 = vadd.f32 %v481, %v499
      %502 = vset.pattern.permute.xlu0 6
      %503 = vperm.xlu0 %502, %v361
      %v504 = vpop.permute.xlu0 %503
      %v506 = vmul.f32 %v504, %v382
      %508 = vrot.lane.b32.xlu0 %v506, 122
      %v509 = vpop.permute.xlu0 %508
      %v511 = vadd.f32 %v491, %v509
      %512 = vset.pattern.permute.xlu0 7
      %513 = vperm.xlu0 %512, %v360
      %v514 = vpop.permute.xlu0 %513
      %v516 = vmul.f32 %v514, %v382
      %518 = vrot.lane.b32.xlu0 %v516, 121
      %v519 = vpop.permute.xlu0 %518
      %v521 = vadd.f32 %v501, %v519
      %522 = vset.pattern.permute.xlu0 7
      %523 = vperm.xlu0 %522, %v361
      %v524 = vpop.permute.xlu0 %523
      %v526 = vmul.f32 %v524, %v382
      %528 = vrot.lane.b32.xlu0 %v526, 121
      %v529 = vpop.permute.xlu0 %528
      %v531 = vadd.f32 %v511, %v529
      %532 = vset.pattern.permute.xlu0 8
      %533 = vperm.xlu0 %532, %v360
      %v534 = vpop.permute.xlu0 %533
      %v536 = vmul.f32 %v534, %v382
      %538 = vrot.lane.b32.xlu0 %v536, 120
      %v539 = vpop.permute.xlu0 %538
      %v541 = vadd.f32 %v521, %v539
      %542 = vset.pattern.permute.xlu0 8
      %543 = vperm.xlu0 %542, %v361
      %v544 = vpop.permute.xlu0 %543
      %v546 = vmul.f32 %v544, %v382
      %548 = vrot.lane.b32.xlu0 %v546, 120
      %v549 = vpop.permute.xlu0 %548
      %v551 = vadd.f32 %v531, %v549
      %552 = vset.pattern.permute.xlu0 9
      %553 = vperm.xlu0 %552, %v360
      %v554 = vpop.permute.xlu0 %553
      %v556 = vmul.f32 %v554, %v382
      %558 = vrot.lane.b32.xlu0 %v556, 119
      %v559 = vpop.permute.xlu0 %558
      %v561 = vadd.f32 %v541, %v559
      %562 = vset.pattern.permute.xlu0 9
      %563 = vperm.xlu0 %562, %v361
      %v564 = vpop.permute.xlu0 %563
      %v566 = vmul.f32 %v564, %v382
      %568 = vrot.lane.b32.xlu0 %v566, 119
      %v569 = vpop.permute.xlu0 %568
      %v571 = vadd.f32 %v551, %v569
      %572 = vset.pattern.permute.xlu0 10
      %573 = vperm.xlu0 %572, %v360
      %v574 = vpop.permute.xlu0 %573
      %v576 = vmul.f32 %v574, %v382
      %578 = vrot.lane.b32.xlu0 %v576, 118
      %v579 = vpop.permute.xlu0 %578
      %v581 = vadd.f32 %v561, %v579
      %582 = vset.pattern.permute.xlu0 10
      %583 = vperm.xlu0 %582, %v361
      %v584 = vpop.permute.xlu0 %583
      %v586 = vmul.f32 %v584, %v382
      %588 = vrot.lane.b32.xlu0 %v586, 118
      %v589 = vpop.permute.xlu0 %588
      %v591 = vadd.f32 %v571, %v589
      %592 = vset.pattern.permute.xlu0 11
      %593 = vperm.xlu0 %592, %v360
      %v594 = vpop.permute.xlu0 %593
      %v596 = vmul.f32 %v594, %v382
      %598 = vrot.lane.b32.xlu0 %v596, 117
      %v599 = vpop.permute.xlu0 %598
      %v601 = vadd.f32 %v581, %v599
      %602 = vset.pattern.permute.xlu0 11
      %603 = vperm.xlu0 %602, %v361
      %v604 = vpop.permute.xlu0 %603
      %v606 = vmul.f32 %v604, %v382
      %608 = vrot.lane.b32.xlu0 %v606, 117
      %v609 = vpop.permute.xlu0 %608
      %v611 = vadd.f32 %v591, %v609
      %612 = vset.pattern.permute.xlu0 12
      %613 = vperm.xlu0 %612, %v360
      %v614 = vpop.permute.xlu0 %613
      %v616 = vmul.f32 %v614, %v382
      %618 = vrot.lane.b32.xlu0 %v616, 116
      %v619 = vpop.permute.xlu0 %618
      %v621 = vadd.f32 %v601, %v619
      %622 = vset.pattern.permute.xlu0 12
      %623 = vperm.xlu0 %622, %v361
      %v624 = vpop.permute.xlu0 %623
      %v626 = vmul.f32 %v624, %v382
      %628 = vrot.lane.b32.xlu0 %v626, 116
      %v629 = vpop.permute.xlu0 %628
      %v631 = vadd.f32 %v611, %v629
      %632 = vset.pattern.permute.xlu0 13
      %633 = vperm.xlu0 %632, %v360
      %v634 = vpop.permute.xlu0 %633
      %v636 = vmul.f32 %v634, %v382
      %638 = vrot.lane.b32.xlu0 %v636, 115
      %v639 = vpop.permute.xlu0 %638
      %v641 = vadd.f32 %v621, %v639
      %642 = vset.pattern.permute.xlu0 13
      %643 = vperm.xlu0 %642, %v361
      %v644 = vpop.permute.xlu0 %643
      %v646 = vmul.f32 %v644, %v382
      %648 = vrot.lane.b32.xlu0 %v646, 115
      %v649 = vpop.permute.xlu0 %648
      %v651 = vadd.f32 %v631, %v649
      %652 = vset.pattern.permute.xlu0 14
      %653 = vperm.xlu0 %652, %v360
      %v654 = vpop.permute.xlu0 %653
      %v656 = vmul.f32 %v654, %v382
      %658 = vrot.lane.b32.xlu0 %v656, 114
      %v659 = vpop.permute.xlu0 %658
      %v661 = vadd.f32 %v641, %v659
      %662 = vset.pattern.permute.xlu0 14
      %663 = vperm.xlu0 %662, %v361
      %v664 = vpop.permute.xlu0 %663
      %v666 = vmul.f32 %v664, %v382
      %668 = vrot.lane.b32.xlu0 %v666, 114
      %v669 = vpop.permute.xlu0 %668
      %v671 = vadd.f32 %v651, %v669
      %v672 = vmul.f32 %v661, %v661
      %v673 = vmul.f32 %v671, %v671
      %v674 = vadd.f32 %v672, %v673
      %v675 = vmax.f32 %v674, 1e-10
      %v676 = vlog2.pop %v675
      %v677 = vmul.f32 %v676, 0.6931472
      %v678 = vmul.f32 %v677, 4.3429446
      %vm679 = vcmask 130048
      %v680 = vsel %vm679, %v678, -inf
      %681 = vmax.xlane.f32.xlu0 %v680
      %v682 = vpop.xlane.xlu0 %681
      %v683 = vrot.slane %v682, 4
      %v684 = vmax.f32 %v682, %v683
      %v685 = vrot.slane %v684, 2
      %v686 = vmax.f32 %v684, %v685
      %v687 = vrot.slane %v686, 1
      %v688 = vmax.f32 %v686, %v687
      %s689 = vtos %v688
      %s690 = ssub.f32 %s689, 80.0
      %v691 = vstv %s690
      %v692 = vmax.f32 %v678, %v691
      %v693 = vsel %vm679, %v692, inf
      %694 = vmin.xlane.f32.xlu0 %v693
      %v695 = vpop.xlane.xlu0 %694
      %v696 = vrot.slane %v695, 4
      %v697 = vmin.f32 %v695, %v696
      %v698 = vrot.slane %v697, 2
      %v699 = vmin.f32 %v697, %v698
      %v700 = vrot.slane %v699, 1
      %v701 = vmin.f32 %v699, %v700
      %s702 = vtos %v701
      %v703 = vstv %s702
      %v704 = vsub.f32 %v692, %v703
      %s705 = ssub.f32 %s689, %s702
      %s706 = sadd.f32 %s705, 1e-08
      %v707 = vstv %s706
      %v708 = vrcp.pop %v707
      %v709 = vmul.f32 %v704, %v708
      %v711 = vlaneseq
      %v712 = vshrl.u32 %v711, 7
      %v713 = vsub.s32 0, %v712
      %v714 = vrot.slane %v362, %v713
      %715 = vset.pattern.permute.xlu0 0
      %716 = vperm.xlu0 %715, %v714
      %v717 = vpop.permute.xlu0 %716
      %v719 = vmul.f32 %v717, %v709
      %v720 = vadd.f32 %v373, %v719
      %v721 = vlaneseq
      %v722 = vshrl.u32 %v721, 7
      %v723 = vsub.s32 1, %v722
      %v724 = vrot.slane %v359, %v723
      %v725 = vmul.f32 %v377, %v724
      %v726 = vadd.f32 %v725, 0.0
      %v727 = vmul.f32 %v388, %v724
      %v728 = vadd.f32 %v727, 0.0
      %v729 = vmul.f32 %v394, %v724
      %731 = vrot.lane.b32.xlu0 %v729, 127
      %v732 = vpop.permute.xlu0 %731
      %v734 = vadd.f32 %v726, %v732
      %v735 = vmul.f32 %v404, %v724
      %737 = vrot.lane.b32.xlu0 %v735, 127
      %v738 = vpop.permute.xlu0 %737
      %v740 = vadd.f32 %v728, %v738
      %v741 = vmul.f32 %v414, %v724
      %743 = vrot.lane.b32.xlu0 %v741, 126
      %v744 = vpop.permute.xlu0 %743
      %v746 = vadd.f32 %v734, %v744
      %v747 = vmul.f32 %v424, %v724
      %749 = vrot.lane.b32.xlu0 %v747, 126
      %v750 = vpop.permute.xlu0 %749
      %v752 = vadd.f32 %v740, %v750
      %v753 = vmul.f32 %v434, %v724
      %755 = vrot.lane.b32.xlu0 %v753, 125
      %v756 = vpop.permute.xlu0 %755
      %v758 = vadd.f32 %v746, %v756
      %v759 = vmul.f32 %v444, %v724
      %761 = vrot.lane.b32.xlu0 %v759, 125
      %v762 = vpop.permute.xlu0 %761
      %v764 = vadd.f32 %v752, %v762
      %v765 = vmul.f32 %v454, %v724
      %767 = vrot.lane.b32.xlu0 %v765, 124
      %v768 = vpop.permute.xlu0 %767
      %v770 = vadd.f32 %v758, %v768
      %v771 = vmul.f32 %v464, %v724
      %773 = vrot.lane.b32.xlu0 %v771, 124
      %v774 = vpop.permute.xlu0 %773
      %v776 = vadd.f32 %v764, %v774
      %v777 = vmul.f32 %v474, %v724
      %779 = vrot.lane.b32.xlu0 %v777, 123
      %v780 = vpop.permute.xlu0 %779
      %v782 = vadd.f32 %v770, %v780
      %v783 = vmul.f32 %v484, %v724
      %785 = vrot.lane.b32.xlu0 %v783, 123
      %v786 = vpop.permute.xlu0 %785
      %v788 = vadd.f32 %v776, %v786
      %v789 = vmul.f32 %v494, %v724
      %791 = vrot.lane.b32.xlu0 %v789, 122
      %v792 = vpop.permute.xlu0 %791
      %v794 = vadd.f32 %v782, %v792
      %v795 = vmul.f32 %v504, %v724
      %797 = vrot.lane.b32.xlu0 %v795, 122
      %v798 = vpop.permute.xlu0 %797
      %v800 = vadd.f32 %v788, %v798
      %v801 = vmul.f32 %v514, %v724
      %803 = vrot.lane.b32.xlu0 %v801, 121
      %v804 = vpop.permute.xlu0 %803
      %v806 = vadd.f32 %v794, %v804
      %v807 = vmul.f32 %v524, %v724
      %809 = vrot.lane.b32.xlu0 %v807, 121
      %v810 = vpop.permute.xlu0 %809
      %v812 = vadd.f32 %v800, %v810
      %v813 = vmul.f32 %v534, %v724
      %815 = vrot.lane.b32.xlu0 %v813, 120
      %v816 = vpop.permute.xlu0 %815
      %v818 = vadd.f32 %v806, %v816
      %v819 = vmul.f32 %v544, %v724
      %821 = vrot.lane.b32.xlu0 %v819, 120
      %v822 = vpop.permute.xlu0 %821
      %v824 = vadd.f32 %v812, %v822
      %v825 = vmul.f32 %v554, %v724
      %827 = vrot.lane.b32.xlu0 %v825, 119
      %v828 = vpop.permute.xlu0 %827
      %v830 = vadd.f32 %v818, %v828
      %v831 = vmul.f32 %v564, %v724
      %833 = vrot.lane.b32.xlu0 %v831, 119
      %v834 = vpop.permute.xlu0 %833
      %v836 = vadd.f32 %v824, %v834
      %v837 = vmul.f32 %v574, %v724
      %839 = vrot.lane.b32.xlu0 %v837, 118
      %v840 = vpop.permute.xlu0 %839
      %v842 = vadd.f32 %v830, %v840
      %v843 = vmul.f32 %v584, %v724
      %845 = vrot.lane.b32.xlu0 %v843, 118
      %v846 = vpop.permute.xlu0 %845
      %v848 = vadd.f32 %v836, %v846
      %v849 = vmul.f32 %v594, %v724
      %851 = vrot.lane.b32.xlu0 %v849, 117
      %v852 = vpop.permute.xlu0 %851
      %v854 = vadd.f32 %v842, %v852
      %v855 = vmul.f32 %v604, %v724
      %857 = vrot.lane.b32.xlu0 %v855, 117
      %v858 = vpop.permute.xlu0 %857
      %v860 = vadd.f32 %v848, %v858
      %v861 = vmul.f32 %v614, %v724
      %863 = vrot.lane.b32.xlu0 %v861, 116
      %v864 = vpop.permute.xlu0 %863
      %v866 = vadd.f32 %v854, %v864
      %v867 = vmul.f32 %v624, %v724
      %869 = vrot.lane.b32.xlu0 %v867, 116
      %v870 = vpop.permute.xlu0 %869
      %v872 = vadd.f32 %v860, %v870
      %v873 = vmul.f32 %v634, %v724
      %875 = vrot.lane.b32.xlu0 %v873, 115
      %v876 = vpop.permute.xlu0 %875
      %v878 = vadd.f32 %v866, %v876
      %v879 = vmul.f32 %v644, %v724
      %881 = vrot.lane.b32.xlu0 %v879, 115
      %v882 = vpop.permute.xlu0 %881
      %v884 = vadd.f32 %v872, %v882
      %v885 = vmul.f32 %v654, %v724
      %887 = vrot.lane.b32.xlu0 %v885, 114
      %v888 = vpop.permute.xlu0 %887
      %v890 = vadd.f32 %v878, %v888
      %v891 = vmul.f32 %v664, %v724
      %893 = vrot.lane.b32.xlu0 %v891, 114
      %v894 = vpop.permute.xlu0 %893
      %v896 = vadd.f32 %v884, %v894
      %v897 = vmul.f32 %v890, %v890
      %v898 = vmul.f32 %v896, %v896
      %v899 = vadd.f32 %v897, %v898
      %v900 = vmax.f32 %v899, 1e-10
      %v901 = vlog2.pop %v900
      %v902 = vmul.f32 %v901, 0.6931472
      %v903 = vmul.f32 %v902, 4.3429446
      %v904 = vsel %vm679, %v903, -inf
      %905 = vmax.xlane.f32.xlu0 %v904
      %v906 = vpop.xlane.xlu0 %905
      %v907 = vrot.slane %v906, 4
      %v908 = vmax.f32 %v906, %v907
      %v909 = vrot.slane %v908, 2
      %v910 = vmax.f32 %v908, %v909
      %v911 = vrot.slane %v910, 1
      %v912 = vmax.f32 %v910, %v911
      %s913 = vtos %v912
      %s914 = ssub.f32 %s913, 80.0
      %v915 = vstv %s914
      %v916 = vmax.f32 %v903, %v915
      %v917 = vsel %vm679, %v916, inf
      %918 = vmin.xlane.f32.xlu0 %v917
      %v919 = vpop.xlane.xlu0 %918
      %v920 = vrot.slane %v919, 4
      %v921 = vmin.f32 %v919, %v920
      %v922 = vrot.slane %v921, 2
      %v923 = vmin.f32 %v921, %v922
      %v924 = vrot.slane %v923, 1
      %v925 = vmin.f32 %v923, %v924
      %s926 = vtos %v925
      %v927 = vstv %s926
      %v928 = vsub.f32 %v916, %v927
      %s929 = ssub.f32 %s913, %s926
      %s930 = sadd.f32 %s929, 1e-08
      %v931 = vstv %s930
      %v932 = vrcp.pop %v931
      %v933 = vmul.f32 %v928, %v932
      %934 = vset.pattern.permute.xlu0 1
      %935 = vperm.xlu0 %934, %v714
      %v936 = vpop.permute.xlu0 %935
      %v938 = vmul.f32 %v936, %v933
      %v939 = vadd.f32 %v720, %v938
      %v940 = vld [vmem:[%s5] sm:$0xff]
      %v941 = vld [vmem:[%s5 + $0x8] sm:$0xff]
      %v942 = vld [vmem:[%s5 + $0x10] sm:$0xff]
      %v943 = vld [vmem:[%s5 + $0x18] sm:$0xff]
      %v944 = vld [vmem:[%s7] sm:$0xff]
      %v945 = vld [vmem:[%s7 + $0x8] sm:$0xff]
      %v946 = vld [vmem:[%s7 + $0x10] sm:$0xff]
      %v947 = vld [vmem:[%s7 + $0x18] sm:$0xff]
      %949 = vset.pattern.permute.xlu0 0
      %950 = vperm.xlu0 %949, %v944
      %v951 = vpop.permute.xlu0 %950
      %954 = vset.pattern.permute.xlu0 0
      %955 = vperm.xlu0 %954, %v945
      %v956 = vpop.permute.xlu0 %955
      %959 = vset.pattern.permute.xlu0 0
      %960 = vperm.xlu0 %959, %v946
      %v961 = vpop.permute.xlu0 %960
      %964 = vset.pattern.permute.xlu0 0
      %965 = vperm.xlu0 %964, %v947
      %v966 = vpop.permute.xlu0 %965
      %vm968 = vcmask 64512
      %v970 = vsel %vm968, %v940, 0
      %v973 = vsel %vm968, %v941, 0
      %v976 = vsel %vm968, %v942, 0
      %v979 = vsel %vm968, %v943, 0
      %981 = vmatprep.subr.mxu0 0.0
      %982 = vmatpush1.msra.mxu0 %v939
      %983 = vmatprep.subr.mxu0 0.0
      %984 = vmatpush1.msra.mxu0 0.0
      %985 = vmatprep.subr.mxu0 0.0
      %986 = vmatpush1.msra.mxu0 0.0
      %987 = vmatprep.subr.mxu0 0.0
      %988 = vmatpush1.msra.mxu0 0.0
      %989 = vmatprep.subr.mxu0 0.0
      %990 = vmatpush1.msra.mxu0 0.0
      %991 = vmatprep.subr.mxu0 0.0
      %992 = vmatpush1.msra.mxu0 0.0
      %993 = vmatprep.subr.mxu0 0.0
      %994 = vmatpush1.msra.mxu0 0.0
      %995 = vmatprep.subr.mxu0 0.0
      %996 = vmatpush1.msra.mxu0 0.0
      %997 = vmatprep.subr.mxu0 0.0
      %998 = vmatpush1.msra.mxu0 0.0
      %999 = vmatprep.subr.mxu0 0.0
      %1000 = vmatpush1.msra.mxu0 0.0
      %1001 = vmatprep.subr.mxu0 0.0
      %1002 = vmatpush1.msra.mxu0 0.0
      %1003 = vmatprep.subr.mxu0 0.0
      %1004 = vmatpush1.msra.mxu0 0.0
      %1005 = vmatprep.subr.mxu0 0.0
      %1006 = vmatpush1.msra.mxu0 0.0
      %1007 = vmatprep.subr.mxu0 0.0
      %1008 = vmatpush1.msra.mxu0 0.0
      %1009 = vmatprep.subr.mxu0 0.0
      %1010 = vmatpush1.msra.mxu0 0.0
      %1011 = vmatprep.subr.mxu0 0.0
      %1012 = vmatpush1.msra.mxu0 0.0
      %1013 = vmatprep.subr.mxu0 0.0
      %1014 = vmatpush1.msra.mxu0 0.0
      %1015 = vmatprep.subr.mxu0 0.0
      %1016 = vmatpush1.msra.mxu0 0.0
      %1017 = vmatprep.subr.mxu0 0.0
      %1018 = vmatpush1.msra.mxu0 0.0
      %1019 = vmatprep.subr.mxu0 0.0
      %1020 = vmatpush1.msra.mxu0 0.0
      %1021 = vmatprep.subr.mxu0 0.0
      %1022 = vmatpush1.msra.mxu0 0.0
      %1023 = vmatprep.subr.mxu0 0.0
      %1024 = vmatpush1.msra.mxu0 0.0
      %1025 = vmatprep.subr.mxu0 0.0
      %1026 = vmatpush1.msra.mxu0 0.0
      %1027 = vmatprep.subr.mxu0 0.0
      %1028 = vmatpush1.msra.mxu0 0.0
      %1029 = vmatprep.subr.mxu0 0.0
      %1030 = vmatpush1.msra.mxu0 0.0
      %1031 = vmatprep.subr.mxu0 0.0
      %1032 = vmatpush1.msra.mxu0 0.0
      %1033 = vmatprep.subr.mxu0 0.0
      %1034 = vmatpush1.msra.mxu0 0.0
      %1035 = vmatprep.subr.mxu0 0.0
      %1036 = vmatpush1.msra.mxu0 0.0
      %1037 = vmatprep.subr.mxu0 0.0
      %1038 = vmatpush1.msra.mxu0 0.0
      %1039 = vmatprep.subr.mxu0 0.0
      %1040 = vmatpush1.msra.mxu0 0.0
      %1041 = vmatprep.subr.mxu0 0.0
      %1042 = vmatpush1.msra.mxu0 0.0
      %1043 = vmatprep.subr.mxu0 0.0
      %1044 = vmatpush1.msra.mxu0 0.0
      %1045 = vmatprep.mubr.f32.mxu0 0.0
      %1046 = vmatmul.mubr.f32.gmra.mrb[0].mxu0 %v970
      %v1047 = vpop.f32.mrb[0].mxu0
      %v1048 = vadd.f32 %v951, %v1047
      %v1049 = vpop.f32.mrb[0].mxu0
      %1050 = vmatprep.mubr.f32.mxu0 0.0
      %1051 = vmatmul.mubr.f32.gmra.mrb[0].mxu0 %v973
      %v1052 = vpop.f32.mrb[0].mxu0
      %v1053 = vadd.f32 %v956, %v1052
      %v1054 = vpop.f32.mrb[0].mxu0
      %1055 = vmatprep.mubr.f32.mxu0 0.0
      %1056 = vmatmul.mubr.f32.gmra.mrb[0].mxu0 %v976
      %v1057 = vpop.f32.mrb[0].mxu0
      %v1058 = vadd.f32 %v961, %v1057
      %v1059 = vpop.f32.mrb[0].mxu0
      %1060 = vmatprep.mubr.f32.mxu0 0.0
      %1061 = vmatmul.mubr.f32.gmra.mrb[0].mxu0 %v979
      %v1062 = vpop.f32.mrb[0].mxu0
      %v1063 = vadd.f32 %v966, %v1062
      %v1064 = vpop.f32.mrb[0].mxu0
      %1065 = vdwg.mxu0
      %v1066 = vld [vmem:[%s6] sm:$0xff]
      %v1067 = vld [vmem:[%s6 + $0x8] sm:$0xff]
      %v1068 = vld [vmem:[%s6 + $0x10] sm:$0xff]
      %v1069 = vld [vmem:[%s6 + $0x18] sm:$0xff]
      %1071 = vset.pattern.permute.xlu0 0
      %1072 = vperm.xlu0 %1071, %v1066
      %v1073 = vpop.permute.xlu0 %1072
      %1076 = vset.pattern.permute.xlu0 0
      %1077 = vperm.xlu0 %1076, %v1067
      %v1078 = vpop.permute.xlu0 %1077
      %1081 = vset.pattern.permute.xlu0 0
      %1082 = vperm.xlu0 %1081, %v1068
      %v1083 = vpop.permute.xlu0 %1082
      %1086 = vset.pattern.permute.xlu0 0
      %1087 = vperm.xlu0 %1086, %v1069
      %v1088 = vpop.permute.xlu0 %1087
      %v1090 = vmul.f32 %v1073, %v382
      %v1091 = vmul.f32 %v1078, %v382
      %v1092 = vmul.f32 %v1083, %v382
      %v1093 = vmul.f32 %v1088, %v382
      %1098 = vrot.lane.b32.xlu0 %v1090, 121
      %v1099 = vpop.permute.xlu0 %1098
      %1100 = vrot.lane.b32.xlu0 %v1091, 121
      %v1101 = vpop.permute.xlu0 %1100
      %1102 = vrot.lane.b32.xlu0 %v1092, 121
      %v1103 = vpop.permute.xlu0 %1102
      %1104 = vrot.lane.b32.xlu0 %v1093, 121
      %v1105 = vpop.permute.xlu0 %1104
      %v1110 = vadd.f32 %v1048, %v1099
      %v1111 = vadd.f32 %v1053, %v1101
      %v1112 = vadd.f32 %v1058, %v1103
      %v1113 = vadd.f32 %v1063, %v1105
      %1114 = vset.pattern.permute.xlu0 1
      %1115 = vperm.xlu0 %1114, %v1066
      %v1116 = vpop.permute.xlu0 %1115
      %1118 = vset.pattern.permute.xlu0 1
      %1119 = vperm.xlu0 %1118, %v1067
      %v1120 = vpop.permute.xlu0 %1119
      %1122 = vset.pattern.permute.xlu0 1
      %1123 = vperm.xlu0 %1122, %v1068
      %v1124 = vpop.permute.xlu0 %1123
      %1126 = vset.pattern.permute.xlu0 1
      %1127 = vperm.xlu0 %1126, %v1069
      %v1128 = vpop.permute.xlu0 %1127
      %v1130 = vmul.f32 %v1116, %v724
      %v1131 = vmul.f32 %v1120, %v724
      %v1132 = vmul.f32 %v1124, %v724
      %v1133 = vmul.f32 %v1128, %v724
      %1138 = vrot.lane.b32.xlu0 %v1130, 121
      %v1139 = vpop.permute.xlu0 %1138
      %1140 = vrot.lane.b32.xlu0 %v1131, 121
      %v1141 = vpop.permute.xlu0 %1140
      %1142 = vrot.lane.b32.xlu0 %v1132, 121
      %v1143 = vpop.permute.xlu0 %1142
      %1144 = vrot.lane.b32.xlu0 %v1133, 121
      %v1145 = vpop.permute.xlu0 %1144
      %v1150 = vadd.f32 %v1110, %v1139
      %v1151 = vadd.f32 %v1111, %v1141
      %v1152 = vadd.f32 %v1112, %v1143
      %v1153 = vadd.f32 %v1113, %v1145
      %vm1154 = vcmask 261120
      %v1156 = vsel %vm1154, 1.0, 0
      %1158 = vmatprep.subr.mxu0 0.0
      %1159 = vmatpush1.msra.mxu0 %v1150
      %1160 = vmatprep.subr.mxu0 0.0
      %1161 = vmatpush1.msra.mxu0 %v1151
      %1162 = vmatprep.subr.mxu0 0.0
      %1163 = vmatpush1.msra.mxu0 %v1152
      %1164 = vmatprep.subr.mxu0 0.0
      %1165 = vmatpush1.msra.mxu0 %v1153
      %1166 = vmatprep.subr.mxu0 0.0
      %1167 = vmatpush1.msra.mxu0 0.0
      %1168 = vmatprep.subr.mxu0 0.0
      %1169 = vmatpush1.msra.mxu0 0.0
      %1170 = vmatprep.subr.mxu0 0.0
      %1171 = vmatpush1.msra.mxu0 0.0
      %1172 = vmatprep.subr.mxu0 0.0
      %1173 = vmatpush1.msra.mxu0 0.0
      %1174 = vmatprep.subr.mxu0 0.0
      %1175 = vmatpush1.msra.mxu0 0.0
      %1176 = vmatprep.subr.mxu0 0.0
      %1177 = vmatpush1.msra.mxu0 0.0
      %1178 = vmatprep.subr.mxu0 0.0
      %1179 = vmatpush1.msra.mxu0 0.0
      %1180 = vmatprep.subr.mxu0 0.0
      %1181 = vmatpush1.msra.mxu0 0.0
      %1182 = vmatprep.subr.mxu0 0.0
      %1183 = vmatpush1.msra.mxu0 0.0
      %1184 = vmatprep.subr.mxu0 0.0
      %1185 = vmatpush1.msra.mxu0 0.0
      %1186 = vmatprep.subr.mxu0 0.0
      %1187 = vmatpush1.msra.mxu0 0.0
      %1188 = vmatprep.subr.mxu0 0.0
      %1189 = vmatpush1.msra.mxu0 0.0
      %1190 = vmatprep.subr.mxu0 0.0
      %1191 = vmatpush1.msra.mxu0 0.0
      %1192 = vmatprep.subr.mxu0 0.0
      %1193 = vmatpush1.msra.mxu0 0.0
      %1194 = vmatprep.subr.mxu0 0.0
      %1195 = vmatpush1.msra.mxu0 0.0
      %1196 = vmatprep.subr.mxu0 0.0
      %1197 = vmatpush1.msra.mxu0 0.0
      %1198 = vmatprep.subr.mxu0 0.0
      %1199 = vmatpush1.msra.mxu0 0.0
      %1200 = vmatprep.subr.mxu0 0.0
      %1201 = vmatpush1.msra.mxu0 0.0
      %1202 = vmatprep.subr.mxu0 0.0
      %1203 = vmatpush1.msra.mxu0 0.0
      %1204 = vmatprep.subr.mxu0 0.0
      %1205 = vmatpush1.msra.mxu0 0.0
      %1206 = vmatprep.subr.mxu0 0.0
      %1207 = vmatpush1.msra.mxu0 0.0
      %1208 = vmatprep.subr.mxu0 0.0
      %1209 = vmatpush1.msra.mxu0 0.0
      %1210 = vmatprep.subr.mxu0 0.0
      %1211 = vmatpush1.msra.mxu0 0.0
      %1212 = vmatprep.subr.mxu0 0.0
      %1213 = vmatpush1.msra.mxu0 0.0
      %1214 = vmatprep.subr.mxu0 0.0
      %1215 = vmatpush1.msra.mxu0 0.0
      %1216 = vmatprep.subr.mxu0 0.0
      %1217 = vmatpush1.msra.mxu0 0.0
      %1218 = vmatprep.subr.mxu0 0.0
      %1219 = vmatpush1.msra.mxu0 0.0
      %1220 = vmatprep.subr.mxu0 0.0
      %1221 = vmatpush1.msra.mxu0 0.0
      %1222 = vmatprep.mubr.f32.mxu0 0.0
      %1223 = vmatmul.mubr.f32.gmra.mrb[0].mxu0 %v1156
      %v1224 = vpop.f32.mrb[0].mxu0
      %v1225 = vadd.f32 0.0, %v1224
      %v1226 = vpop.f32.mrb[0].mxu0
      %1227 = vdwg.mxu0
      %v1228 = vrcp.pop 32.0
      %v1229 = vmul.f32 %v1225, %v1228
      %v1230 = vlaneseq
      %v1231 = vshrl.u32 %v1230, 7
      %v1232 = vsub.s32 0, %v1231
      %v1233 = vrot.slane %v1229, %v1232
      %v1234 = vsub.f32 %v1150, %v1233
      %v1235 = vsub.f32 %v1151, %v1233
      %v1236 = vsub.f32 %v1152, %v1233
      %v1237 = vsub.f32 %v1153, %v1233
      %v1238 = vmul.f32 %v1234, %v1234
      %v1239 = vmul.f32 %v1235, %v1235
      %v1240 = vmul.f32 %v1236, %v1236
      %v1241 = vmul.f32 %v1237, %v1237
      %1242 = vmatprep.subr.mxu0 0.0
      %1243 = vmatpush1.msra.mxu0 %v1238
      %1244 = vmatprep.subr.mxu0 0.0
      %1245 = vmatpush1.msra.mxu0 %v1239
      %1246 = vmatprep.subr.mxu0 0.0
      %1247 = vmatpush1.msra.mxu0 %v1240
      %1248 = vmatprep.subr.mxu0 0.0
      %1249 = vmatpush1.msra.mxu0 %v1241
      %1250 = vmatprep.subr.mxu0 0.0
      %1251 = vmatpush1.msra.mxu0 0.0
      %1252 = vmatprep.subr.mxu0 0.0
      %1253 = vmatpush1.msra.mxu0 0.0
      %1254 = vmatprep.subr.mxu0 0.0
      %1255 = vmatpush1.msra.mxu0 0.0
      %1256 = vmatprep.subr.mxu0 0.0
      %1257 = vmatpush1.msra.mxu0 0.0
      %1258 = vmatprep.subr.mxu0 0.0
      %1259 = vmatpush1.msra.mxu0 0.0
      %1260 = vmatprep.subr.mxu0 0.0
      %1261 = vmatpush1.msra.mxu0 0.0
      %1262 = vmatprep.subr.mxu0 0.0
      %1263 = vmatpush1.msra.mxu0 0.0
      %1264 = vmatprep.subr.mxu0 0.0
      %1265 = vmatpush1.msra.mxu0 0.0
      %1266 = vmatprep.subr.mxu0 0.0
      %1267 = vmatpush1.msra.mxu0 0.0
      %1268 = vmatprep.subr.mxu0 0.0
      %1269 = vmatpush1.msra.mxu0 0.0
      %1270 = vmatprep.subr.mxu0 0.0
      %1271 = vmatpush1.msra.mxu0 0.0
      %1272 = vmatprep.subr.mxu0 0.0
      %1273 = vmatpush1.msra.mxu0 0.0
      %1274 = vmatprep.subr.mxu0 0.0
      %1275 = vmatpush1.msra.mxu0 0.0
      %1276 = vmatprep.subr.mxu0 0.0
      %1277 = vmatpush1.msra.mxu0 0.0
      %1278 = vmatprep.subr.mxu0 0.0
      %1279 = vmatpush1.msra.mxu0 0.0
      %1280 = vmatprep.subr.mxu0 0.0
      %1281 = vmatpush1.msra.mxu0 0.0
      %1282 = vmatprep.subr.mxu0 0.0
      %1283 = vmatpush1.msra.mxu0 0.0
      %1284 = vmatprep.subr.mxu0 0.0
      %1285 = vmatpush1.msra.mxu0 0.0
      %1286 = vmatprep.subr.mxu0 0.0
      %1287 = vmatpush1.msra.mxu0 0.0
      %1288 = vmatprep.subr.mxu0 0.0
      %1289 = vmatpush1.msra.mxu0 0.0
      %1290 = vmatprep.subr.mxu0 0.0
      %1291 = vmatpush1.msra.mxu0 0.0
      %1292 = vmatprep.subr.mxu0 0.0
      %1293 = vmatpush1.msra.mxu0 0.0
      %1294 = vmatprep.subr.mxu0 0.0
      %1295 = vmatpush1.msra.mxu0 0.0
      %1296 = vmatprep.subr.mxu0 0.0
      %1297 = vmatpush1.msra.mxu0 0.0
      %1298 = vmatprep.subr.mxu0 0.0
      %1299 = vmatpush1.msra.mxu0 0.0
      %1300 = vmatprep.subr.mxu0 0.0
      %1301 = vmatpush1.msra.mxu0 0.0
      %1302 = vmatprep.subr.mxu0 0.0
      %1303 = vmatpush1.msra.mxu0 0.0
      %1304 = vmatprep.subr.mxu0 0.0
      %1305 = vmatpush1.msra.mxu0 0.0
      %1306 = vmatprep.mubr.f32.mxu0 0.0
      %1307 = vmatmul.mubr.f32.gmra.mrb[0].mxu0 %v1156
      %v1308 = vpop.f32.mrb[0].mxu0
      %v1309 = vadd.f32 0.0, %v1308
      %v1310 = vpop.f32.mrb[0].mxu0
      %1311 = vdwg.mxu0
      %v1312 = vmul.f32 %v1309, %v1228
      %v1313 = vadd.f32 %v1312, 1e-05
      %v1314 = vrsqrt.pop %v1313
      %v1315 = vlaneseq
      %v1316 = vshrl.u32 %v1315, 7
      %v1317 = vsub.s32 0, %v1316
      %v1318 = vrot.slane %v1314, %v1317
      %v1319 = vmul.f32 %v1234, %v1318
      %v1320 = vmul.f32 %v1235, %v1318
      %v1321 = vmul.f32 %v1236, %v1318
      %v1322 = vmul.f32 %v1237, %v1318
      %v1323 = vld [vmem:[%s8] sm:$0xff]
      %v1324 = vld [vmem:[%s8 + $0x8] sm:$0xff]
      %v1325 = vld [vmem:[%s8 + $0x10] sm:$0xff]
      %v1326 = vld [vmem:[%s8 + $0x18] sm:$0xff]
      %1328 = vset.pattern.permute.xlu0 0
      %1329 = vperm.xlu0 %1328, %v1323
      %v1330 = vpop.permute.xlu0 %1329
      %1333 = vset.pattern.permute.xlu0 0
      %1334 = vperm.xlu0 %1333, %v1324
      %v1335 = vpop.permute.xlu0 %1334
      %1338 = vset.pattern.permute.xlu0 0
      %1339 = vperm.xlu0 %1338, %v1325
      %v1340 = vpop.permute.xlu0 %1339
      %1343 = vset.pattern.permute.xlu0 0
      %1344 = vperm.xlu0 %1343, %v1326
      %v1345 = vpop.permute.xlu0 %1344
      %v1347 = vmul.f32 %v1319, %v1330
      %v1348 = vmul.f32 %v1320, %v1335
      %v1349 = vmul.f32 %v1321, %v1340
      %v1350 = vmul.f32 %v1322, %v1345
      %v1351 = vld [vmem:[%s9] sm:$0xff]
      %v1352 = vld [vmem:[%s9 + $0x8] sm:$0xff]
      %v1353 = vld [vmem:[%s9 + $0x10] sm:$0xff]
      %v1354 = vld [vmem:[%s9 + $0x18] sm:$0xff]
      %1356 = vset.pattern.permute.xlu0 0
      %1357 = vperm.xlu0 %1356, %v1351
      %v1358 = vpop.permute.xlu0 %1357
      %1361 = vset.pattern.permute.xlu0 0
      %1362 = vperm.xlu0 %1361, %v1352
      %v1363 = vpop.permute.xlu0 %1362
      %1366 = vset.pattern.permute.xlu0 0
      %1367 = vperm.xlu0 %1366, %v1353
      %v1368 = vpop.permute.xlu0 %1367
      %1371 = vset.pattern.permute.xlu0 0
      %1372 = vperm.xlu0 %1371, %v1354
      %v1373 = vpop.permute.xlu0 %1372
      %v1375 = vadd.f32 %v1347, %v1358
      %v1376 = vadd.f32 %v1348, %v1363
      %v1377 = vadd.f32 %v1349, %v1368
      %v1378 = vadd.f32 %v1350, %v1373
      %v1379 = vmax.f32 %v1375, 0.0
      %v1380 = vmax.f32 %v1376, 0.0
      %v1381 = vmax.f32 %v1377, 0.0
      %v1382 = vmax.f32 %v1378, 0.0
      %1383 = vst.msk [vmem:[%s358] sm:$0xff] %vm679, %v1379
      %1384 = vst.msk [vmem:[%s358 + $0x8] sm:$0xff] %vm679, %v1380
      %1385 = vst.msk [vmem:[%s358 + $0x10] sm:$0xff] %vm679, %v1381
      %1386 = vst.msk [vmem:[%s358 + $0x18] sm:$0xff] %vm679, %v1382
      %p1387 = scmp.lt.s32.totalorder %s23, 1
      %s1388 = scalar_select %p1387, %s23, 1
      %s1389 = smul.addr %s1388, 4
      %s1390 = smul.addr %s1389, 8
      %s1391 = scalar_lea.vmem %s10, %s1390
      // Predicated region
      $region61: #{forward.5} parent=59 // pred_check
        %p1392 = pneg %p256
      $region62: #{forward.5} parent=59 // pred_check_branch
        %1394 = sbr.rel (%p1392) target = $region64
      $region63: #{forward.5} parent=59 // pred_region
        _
      $region64: #{forward.5} parent=59 // pred_fallthru
        _
    $region60: #{forward.5} parent=5 // pred_fallthru
      _
    %p1395 = scmp.le.s32.totalorder 2, %s18
    // Predicated region
    $region65: #{forward.5} parent=5 // pred_check
      %p1396 = pneg %p1395
    $region66: #{forward.5} parent=5 // pred_check_branch
      %1398 = sbr.rel (%p1396) target = $region68
    $region67: #{forward.5} parent=5 // pred_region
      %s1399 = ssub.s32 %s18, 2
      // Predicated region
      $region69: #{forward.5} parent=67 // pred_check
        %p1400 = pneg %p262
      $region70: #{forward.5} parent=67 // pred_check_branch
        %1402 = sbr.rel (%p1400) target = $region72
      $region71: #{forward.5} parent=67 // pred_region
        %p1403 = scmp.lt.s32.totalorder %s24, 1
        %s1404 = scalar_select %p1403, %s24, 1
        %s1405 = smul.addr %s1404, 4
        %s1406 = smul.addr %s1405, 8
        %s1407 = scalar_lea.vmem %s10, %s1406
      $region72: #{forward.5} parent=67 // pred_fallthru
        _
    $region68: #{forward.5} parent=5 // pred_fallthru
      _
  $region6: #{forward.5} parent=0 // loop_footer
    %s22 = sadd.s32 1, %s18
  $region7: #{forward.5} parent=0 // loop_footer_branch
    %17 = sbr.rel target = $region3
  $region8: #{forward.5} parent=0 // loop_exit
    _

// kernel: forward.6
$region0: #{forward.6}
  #allocation0 [shape = 'u32[]', space=smem, size = 0x4, offset = 0x4, fixed_abs, tag = 'smem constant byte address 0x4 - core index']
  #allocation1 [shape = 'u32[144,128]{1,0:T(1,128)}', space=vmem, size = 0x12000, scoped, tag = 'internal scratch']
  #allocation2 [shape = 'f32[1,32]{1,0:T(1,128)}', space=vmem, size = 0x200, scoped, tag = 'scratch operand']
  #allocation3 [shape = 'f32[16,96]{1,0:T(8,128)}', space=vmem, size = 0x2000, scoped, tag = 'scratch operand']
  %s0 = inlined_call_operand.vmem [shape: f32[2,16,32], index: 0, kind: input, shape index: {}]
  %s1 = inlined_call_operand.vmem [shape: bf16[2,32,96], index: 1, kind: input, shape index: {}]
  %s2 = inlined_call_operand.vmem [shape: f32[2,1,96], index: 2, kind: input, shape index: {}]
  %s3 = inlined_call_operand.vmem [shape: bf16[2,32,96], index: 3, kind: input, shape index: {}]
  %s4 = inlined_call_operand.vmem [shape: f32[2,1,32], index: 4, kind: input, shape index: {}]
  %s5 = inlined_call_operand.vmem [shape: f32[2,2,16,32], index: 5, kind: output, shape index: {}]
  %s6 = sld [smem:[#allocation0]]
  $region57: #{forward.6} parent=0
    _
  %s8 = ssub.s32 1, %s6
  %s9 = scalar_select 0, %s8, %s6
  loop: start=0, step=1, limit=6
  $region2: #{forward.6} parent=0 // loop_pre_header
    _
  $region3: #{forward.6} parent=0 // loop_header
    %s11 = sphi 0, %s15
    %p12 = scmp.ge.s32.totalorder %s11, 6
    %s18 = sphi 0, %s37
    %s19 = sphi 0, %s33
    %s20 = sphi 0, %s29
    %s21 = sphi 0, %s18
    %s22 = sphi 0, %s19
    %s23 = sphi 0, %s20
    %s24 = sphi 0, %s21
    %s25 = sphi 0, %s22
    %s26 = sphi 0, %s23
    %s50 = sphi 0, %s52
    %s53 = sphi 0, %s50
    %s54 = sphi 0, %s53
    %s70 = sphi 0, %s54
    %s76 = sphi 0, %s78
    %s79 = sphi 0, %s76
    %s80 = sphi 0, %s79
    %s96 = sphi 0, %s80
    %s102 = sphi 0, %s104
    %s105 = sphi 0, %s102
    %s106 = sphi 0, %s105
    %s122 = sphi 0, %s106
    %s128 = sphi 0, %s130
    %s131 = sphi 0, %s128
    %s132 = sphi 0, %s131
    %s148 = sphi 0, %s132
    %s154 = sphi 0, %s156
    %s157 = sphi 0, %s154
    %s158 = sphi 0, %s157
    %s174 = sphi 0, %s158
    %s192 = sphi 0, %s194
    %s195 = sphi 0, %s192
    %s196 = sphi 0, %s195
    %s212 = sphi 0, %s196
  $region4: #{forward.6} parent=0 // loop_header_branch
    %14 = sbr.rel (%p12) target = $region8
  $region5: #{forward.6} parent=0 // loop_body
    %s16 = ssub.s32 %s11, 1
    %s17 = ssub.s32 %s11, 2
    %s27 = sadd.s32 1, %s20
    %p28 = scmp.ge.s32.totalorder %s27, 1
    %s29 = scalar_select %p28, 0, %s27
    %s30 = sadd.s32 1, %s19
    %s31 = scalar_select %p28, %s30, %s19
    %p32 = scmp.ge.s32.totalorder %s31, 2
    %s33 = scalar_select %p32, 0, %s31
    %s34 = sadd.s32 1, %s18
    %s35 = scalar_select %p32, %s34, %s18
    %p36 = scmp.ge.s32.totalorder %s35, 2
    %s37 = scalar_select %p36, 0, %s35
    %s38 = smul.u32 %s20, 2
    %s39 = ssub.s32 0, %s38
    %s40 = smul.u32 %s18, %s39
    %s41 = sadd.s32 %s20, %s40
    %s42 = smul.u32 %s29, 2
    %s43 = ssub.s32 0, %s42
    %s44 = smul.u32 %s37, %s43
    %s45 = sadd.s32 %s29, %s44
    %s46 = ssub.s32 %s19, %s33
    %s47 = ssub.s32 %s41, %s45
    %s48 = sor.u32 %s46, %s47
    %p49 = scmp.eq.s32.totalorder %s48, 0
    %s51 = sadd.s32 %s50, 1
    %s52 = scalar_select %p49, %s50, %s51
    %p55 = pneg %p49
    %p56 = scmp.eq.s32.totalorder %s11, 3
    %p57 = por %p55, %p56
    %p58 = scmp.ne.s32.totalorder %s50, %s53
    %p59 = scmp.eq.s32.totalorder %s11, 0
    %p60 = por %p58, %p59
    %p61 = scmp.ne.s32.totalorder %s50, %s53
    %p62 = scmp.eq.s32.totalorder %s16, 3
    %p63 = por %p61, %p62
    %p64 = scmp.ne.s32.totalorder %s53, %s54
    %p65 = scmp.eq.s32.totalorder %s16, 0
    %p66 = por %p64, %p65
    %p67 = scmp.ne.s32.totalorder %s53, %s54
    %p68 = scmp.eq.s32.totalorder %s17, 3
    %p69 = por %p67, %p68
    %p71 = scmp.ne.s32.totalorder %s54, %s70
    %p72 = scmp.eq.s32.totalorder %s17, 0
    %p73 = por %p71, %p72
    %s74 = ssub.s32 %s18, %s37
    %p75 = scmp.eq.s32.totalorder %s74, 0
    %s77 = sadd.s32 %s76, 1
    %s78 = scalar_select %p75, %s76, %s77
    %p81 = pneg %p75
    %p82 = scmp.eq.s32.totalorder %s11, 3
    %p83 = por %p81, %p82
    %p84 = scmp.ne.s32.totalorder %s76, %s79
    %p85 = scmp.eq.s32.totalorder %s11, 0
    %p86 = por %p84, %p85
    %p87 = scmp.ne.s32.totalorder %s76, %s79
    %p88 = scmp.eq.s32.totalorder %s16, 3
    %p89 = por %p87, %p88
    %p90 = scmp.ne.s32.totalorder %s79, %s80
    %p91 = scmp.eq.s32.totalorder %s16, 0
    %p92 = por %p90, %p91
    %p93 = scmp.ne.s32.totalorder %s79, %s80
    %p94 = scmp.eq.s32.totalorder %s17, 3
    %p95 = por %p93, %p94
    %p97 = scmp.ne.s32.totalorder %s80, %s96
    %p98 = scmp.eq.s32.totalorder %s17, 0
    %p99 = por %p97, %p98
    %s100 = ssub.s32 %s18, %s37
    %p101 = scmp.eq.s32.totalorder %s100, 0
    %s103 = sadd.s32 %s102, 1
    %s104 = scalar_select %p101, %s102, %s103
    %p107 = pneg %p101
    %p108 = scmp.eq.s32.totalorder %s11, 3
    %p109 = por %p107, %p108
    %p110 = scmp.ne.s32.totalorder %s102, %s105
    %p111 = scmp.eq.s32.totalorder %s11, 0
    %p112 = por %p110, %p111
    %p113 = scmp.ne.s32.totalorder %s102, %s105
    %p114 = scmp.eq.s32.totalorder %s16, 3
    %p115 = por %p113, %p114
    %p116 = scmp.ne.s32.totalorder %s105, %s106
    %p117 = scmp.eq.s32.totalorder %s16, 0
    %p118 = por %p116, %p117
    %p119 = scmp.ne.s32.totalorder %s105, %s106
    %p120 = scmp.eq.s32.totalorder %s17, 3
    %p121 = por %p119, %p120
    %p123 = scmp.ne.s32.totalorder %s106, %s122
    %p124 = scmp.eq.s32.totalorder %s17, 0
    %p125 = por %p123, %p124
    %s126 = ssub.s32 %s18, %s37
    %p127 = scmp.eq.s32.totalorder %s126, 0
    %s129 = sadd.s32 %s128, 1
    %s130 = scalar_select %p127, %s128, %s129
    %p133 = pneg %p127
    %p134 = scmp.eq.s32.totalorder %s11, 3
    %p135 = por %p133, %p134
    %p136 = scmp.ne.s32.totalorder %s128, %s131
    %p137 = scmp.eq.s32.totalorder %s11, 0
    %p138 = por %p136, %p137
    %p139 = scmp.ne.s32.totalorder %s128, %s131
    %p140 = scmp.eq.s32.totalorder %s16, 3
    %p141 = por %p139, %p140
    %p142 = scmp.ne.s32.totalorder %s131, %s132
    %p143 = scmp.eq.s32.totalorder %s16, 0
    %p144 = por %p142, %p143
    %p145 = scmp.ne.s32.totalorder %s131, %s132
    %p146 = scmp.eq.s32.totalorder %s17, 3
    %p147 = por %p145, %p146
    %p149 = scmp.ne.s32.totalorder %s132, %s148
    %p150 = scmp.eq.s32.totalorder %s17, 0
    %p151 = por %p149, %p150
    %s152 = ssub.s32 %s18, %s37
    %p153 = scmp.eq.s32.totalorder %s152, 0
    %s155 = sadd.s32 %s154, 1
    %s156 = scalar_select %p153, %s154, %s155
    %p159 = pneg %p153
    %p160 = scmp.eq.s32.totalorder %s11, 3
    %p161 = por %p159, %p160
    %p162 = scmp.ne.s32.totalorder %s154, %s157
    %p163 = scmp.eq.s32.totalorder %s11, 0
    %p164 = por %p162, %p163
    %p165 = scmp.ne.s32.totalorder %s154, %s157
    %p166 = scmp.eq.s32.totalorder %s16, 3
    %p167 = por %p165, %p166
    %p168 = scmp.ne.s32.totalorder %s157, %s158
    %p169 = scmp.eq.s32.totalorder %s16, 0
    %p170 = por %p168, %p169
    %p171 = scmp.ne.s32.totalorder %s157, %s158
    %p172 = scmp.eq.s32.totalorder %s17, 3
    %p173 = por %p171, %p172
    %p175 = scmp.ne.s32.totalorder %s158, %s174
    %p176 = scmp.eq.s32.totalorder %s17, 0
    %p177 = por %p175, %p176
    %s178 = smul.u32 %s20, 2
    %s179 = ssub.s32 0, %s178
    %s180 = smul.u32 %s18, %s179
    %s181 = sadd.s32 %s20, %s180
    %s182 = smul.u32 %s29, 2
    %s183 = ssub.s32 0, %s182
    %s184 = smul.u32 %s37, %s183
    %s185 = sadd.s32 %s29, %s184
    %s186 = ssub.s32 %s18, %s37
    %s187 = ssub.s32 %s19, %s33
    %s188 = sor.u32 %s186, %s187
    %s189 = ssub.s32 %s181, %s185
    %s190 = sor.u32 %s188, %s189
    %p191 = scmp.eq.s32.totalorder %s190, 0
    %s193 = sadd.s32 %s192, 1
    %s194 = scalar_select %p191, %s192, %s193
    %p197 = pneg %p191
    %p198 = scmp.eq.s32.totalorder %s11, 3
    %p199 = por %p197, %p198
    %p200 = scmp.ne.s32.totalorder %s192, %s195
    %p201 = scmp.eq.s32.totalorder %s11, 0
    %p202 = por %p200, %p201
    %p203 = scmp.ne.s32.totalorder %s192, %s195
    %p204 = scmp.eq.s32.totalorder %s16, 3
    %p205 = por %p203, %p204
    %p206 = scmp.ne.s32.totalorder %s195, %s196
    %p207 = scmp.eq.s32.totalorder %s16, 0
    %p208 = por %p206, %p207
    %p209 = scmp.ne.s32.totalorder %s195, %s196
    %p210 = scmp.eq.s32.totalorder %s17, 3
    %p211 = por %p209, %p210
    %p213 = scmp.ne.s32.totalorder %s196, %s212
    %p214 = scmp.eq.s32.totalorder %s17, 0
    %p215 = por %p213, %p214
    %p216 = scmp.le.s32.totalorder 1, %s11
    %p217 = scmp.lt.s32.totalorder %s11, 5
    %p218 = pnand %p216, %p217
    %p219 = pneg %p218
    // Predicated region
    $region9: #{forward.6} parent=5 // pred_check
      _
    $region10: #{forward.6} parent=5 // pred_check_branch
      %221 = sbr.rel (%p218) target = $region12
    $region11: #{forward.6} parent=5 // pred_region
      %s222 = ssub.s32 %s11, 1
    $region12: #{forward.6} parent=5 // pred_fallthru
      _
    %p223 = scmp.lt.s32.totalorder %s11, 4
    // Predicated region
    $region13: #{forward.6} parent=5 // pred_check
      %p224 = pneg %p223
    $region14: #{forward.6} parent=5 // pred_check_branch
      %226 = sbr.rel (%p224) target = $region16
    $region15: #{forward.6} parent=5 // pred_region
      // Predicated region
      $region17: #{forward.6} parent=15 // pred_check
        %p227 = pneg %p60
      $region18: #{forward.6} parent=15 // pred_check_branch
        %229 = sbr.rel (%p227) target = $region20
      $region19: #{forward.6} parent=15 // pred_region
        %s230 = smul.u32 %s20, 2
        %s231 = ssub.s32 0, %s230
        %s232 = smul.u32 %s18, %s231
        %s233 = sadd.s32 %s20, %s232
        %s234 = smul.u32 2, %s233
        %p235 = scmp.lt.s32.totalorder %s19, 1
        %s236 = scalar_select %p235, %s19, 1
        %p237 = scmp.lt.s32.totalorder %s234, 1
        %s238 = scalar_select %p237, %s234, 1
        %s239 = smul.addr %s236, 2
        %s240 = sadd.s32 %s238, %s239
        %s241 = smul.addr %s240, 8
        %s242 = scalar_lea.vmem %s0, %s241
        %s243 = smul.u32 %s20, 2
        %s244 = ssub.s32 0, %s243
        %s245 = smul.u32 %s18, %s244
        %s246 = sadd.s32 %s20, %s245
        %s247 = smul.u32 2, %s246
      $region20: #{forward.6} parent=15 // pred_fallthru
        _
      // Predicated region
      $region21: #{forward.6} parent=15 // pred_check
        %p248 = pneg %p86
      $region22: #{forward.6} parent=15 // pred_check_branch
        %250 = sbr.rel (%p248) target = $region24
      $region23: #{forward.6} parent=15 // pred_region
        %p251 = scmp.lt.s32.totalorder %s18, 1
        %s252 = scalar_select %p251, %s18, 1
        %s253 = smul.addr %s252, 4
        %s254 = smul.addr %s253, 4
        %s255 = scalar_lea.vmem %s1, %s254
      $region24: #{forward.6} parent=15 // pred_fallthru
        _
      // Predicated region
      $region25: #{forward.6} parent=15 // pred_check
        %p256 = pneg %p112
      $region26: #{forward.6} parent=15 // pred_check_branch
        %258 = sbr.rel (%p256) target = $region28
      $region27: #{forward.6} parent=15 // pred_region
        %p259 = scmp.lt.s32.totalorder %s18, 1
        %s260 = scalar_select %p259, %s18, 1
        %s261 = scalar_lea.vmem %s2, %s260
      $region28: #{forward.6} parent=15 // pred_fallthru
        _
      // Predicated region
      $region29: #{forward.6} parent=15 // pred_check
        %p262 = pneg %p138
      $region30: #{forward.6} parent=15 // pred_check_branch
        %264 = sbr.rel (%p262) target = $region32
      $region31: #{forward.6} parent=15 // pred_region
        %p265 = scmp.lt.s32.totalorder %s18, 1
        %s266 = scalar_select %p265, %s18, 1
        %s267 = smul.addr %s266, 4
        %s268 = smul.addr %s267, 4
        %s269 = scalar_lea.vmem %s3, %s268
      $region32: #{forward.6} parent=15 // pred_fallthru
        _
      // Predicated region
      $region33: #{forward.6} parent=15 // pred_check
        %p270 = pneg %p164
      $region34: #{forward.6} parent=15 // pred_check_branch
        %272 = sbr.rel (%p270) target = $region36
      $region35: #{forward.6} parent=15 // pred_region
        %p273 = scmp.lt.s32.totalorder %s18, 1
        %s274 = scalar_select %p273, %s18, 1
        %s275 = scalar_lea.vmem %s4, %s274
      $region36: #{forward.6} parent=15 // pred_fallthru
        _
    $region16: #{forward.6} parent=5 // pred_fallthru
      _
    %p276 = scmp.le.s32.totalorder 1, %s11
    %p277 = scmp.lt.s32.totalorder %s11, 5
    %p278 = pnand %p276, %p277
    %p279 = pneg %p278
    // Predicated region
    $region37: #{forward.6} parent=5 // pred_check
      _
    $region38: #{forward.6} parent=5 // pred_check_branch
      %281 = sbr.rel (%p278) target = $region40
    $region39: #{forward.6} parent=5 // pred_region
      %s282 = ssub.s32 %s11, 1
      %s283 = smul.u32 %s23, 2
      %s284 = ssub.s32 0, %s283
      %s285 = smul.u32 %s21, %s284
      %s286 = sadd.s32 %s23, %s285
      %s287 = smul.u32 2, %s286
      %p288 = scmp.lt.s32.totalorder %s22, 1
      %s289 = scalar_select %p288, %s22, 1
      %p290 = scmp.lt.s32.totalorder %s287, 1
      %s291 = scalar_select %p290, %s287, 1
      %s292 = smul.addr %s289, 2
      %s293 = sadd.s32 %s291, %s292
      %s294 = smul.addr %s293, 8
      %s295 = scalar_lea.vmem %s0, %s294
      %p296 = pneg %p66
      %p297 = pneg %p63
      %p298 = scmp.lt.s32.totalorder %s21, 1
      %s299 = scalar_select %p298, %s21, 1
      %s300 = smul.addr %s299, 4
      %s301 = smul.addr %s300, 4
      %s302 = scalar_lea.vmem %s1, %s301
      %p303 = pneg %p92
      %p304 = pneg %p89
      %p305 = scmp.lt.s32.totalorder %s21, 1
      %s306 = scalar_select %p305, %s21, 1
      %s307 = scalar_lea.vmem %s2, %s306
      %p308 = pneg %p118
      %p309 = pneg %p115
      %p310 = scmp.lt.s32.totalorder %s21, 1
      %s311 = scalar_select %p310, %s21, 1
      %s312 = smul.addr %s311, 4
      %s313 = smul.addr %s312, 4
      %s314 = scalar_lea.vmem %s3, %s313
      %p315 = pneg %p144
      %p316 = pneg %p141
      %p317 = scmp.lt.s32.totalorder %s21, 1
      %s318 = scalar_select %p317, %s21, 1
      %s319 = scalar_lea.vmem %s4, %s318
      %p320 = pneg %p170
      %p321 = pneg %p167
      %p322 = pneg %p208
      %p323 = pneg %p205
      %s324 = smul.u32 %s23, 2
      %s325 = ssub.s32 0, %s324
      %s326 = smul.u32 %s21, %s325
      %s327 = sadd.s32 %s23, %s326
      %s328 = smul.u32 2, %s327
      %p329 = scmp.lt.s32.totalorder %s21, 1
      %s330 = scalar_select %p329, %s21, 1
      %p331 = scmp.lt.s32.totalorder %s22, 1
      %s332 = scalar_select %p331, %s22, 1
      %p333 = scmp.lt.s32.totalorder %s328, 1
      %s334 = scalar_select %p333, %s328, 1
      %s335 = smul.addr %s332, 2
      %s336 = sadd.s32 %s334, %s335
      %s337 = smul.addr %s330, 4
      %s338 = sadd.s32 %s336, %s337
      %s339 = smul.addr %s338, 8
      %s340 = scalar_lea.vmem %s5, %s339
      %s341 = smul.u32 %s23, 2
      %s342 = ssub.s32 0, %s341
      %s343 = smul.u32 %s21, %s342
      %s344 = sadd.s32 %s23, %s343
      %s345 = smul.u32 2, %s344
      %p346 = scmp.lt.s32.totalorder %s22, 1
      %s347 = scalar_select %p346, %s22, 1
      %p348 = scmp.lt.s32.totalorder %s345, 1
      %s349 = scalar_select %p348, %s345, 1
      %s350 = smul.addr %s347, 2
      %s351 = sadd.s32 %s349, %s350
      %s352 = smul.addr %s351, 8
      %s353 = scalar_lea.vmem %s0, %s352
      %s354 = smul.u32 %s23, 2
      %s355 = ssub.s32 0, %s354
      %s356 = smul.u32 %s21, %s355
      %s357 = sadd.s32 %s23, %s356
      %s358 = smul.u32 2, %s357
      %p359 = scmp.lt.s32.totalorder %s21, 1
      %s360 = scalar_select %p359, %s21, 1
      %s361 = smul.addr %s360, 4
      %s362 = smul.addr %s361, 4
      %s363 = scalar_lea.vmem %s1, %s362
      %p364 = scmp.lt.s32.totalorder %s21, 1
      %s365 = scalar_select %p364, %s21, 1
      %s366 = scalar_lea.vmem %s2, %s365
      %p367 = scmp.lt.s32.totalorder %s21, 1
      %s368 = scalar_select %p367, %s21, 1
      %s369 = smul.addr %s368, 4
      %s370 = smul.addr %s369, 4
      %s371 = scalar_lea.vmem %s3, %s370
      %p372 = scmp.lt.s32.totalorder %s21, 1
      %s373 = scalar_select %p372, %s21, 1
      %s374 = scalar_lea.vmem %s4, %s373
      %s375 = smul.u32 %s23, 2
      %s376 = ssub.s32 0, %s375
      %s377 = smul.u32 %s21, %s376
      %s378 = sadd.s32 %s23, %s377
      %s379 = smul.u32 2, %s378
      %p380 = scmp.lt.s32.totalorder %s21, 1
      %s381 = scalar_select %p380, %s21, 1
      %p382 = scmp.lt.s32.totalorder %s22, 1
      %s383 = scalar_select %p382, %s22, 1
      %p384 = scmp.lt.s32.totalorder %s379, 1
      %s385 = scalar_select %p384, %s379, 1
      %s386 = smul.addr %s383, 2
      %s387 = sadd.s32 %s385, %s386
      %s388 = smul.addr %s381, 4
      %s389 = sadd.s32 %s387, %s388
      %s390 = smul.addr %s389, 8
      %s391 = scalar_lea.vmem %s5, %s390
      %s392 = smul.u32 %s23, 2
      %s393 = ssub.s32 0, %s392
      %s394 = smul.u32 %s21, %s393
      %s395 = sadd.s32 %s23, %s394
      %s396 = smul.u32 2, %s395
      %p398 = scmp.eq.s32.totalorder %s23, 0
      // Predicated region
      $region41: #{forward.6} parent=39 // pred_check
        %p399 = pneg %p398
      $region42: #{forward.6} parent=39 // pred_check_branch
        %401 = sbr.rel (%p399) target = $region44
      $region43: #{forward.6} parent=39 // pred_region
        %vm402 = vcmask 253952
        %403 = vst.msk [vmem:[#allocation2] sm:$0x1] %vm402, 0.0
      $region44: #{forward.6} parent=39 // pred_fallthru
        _
      %v404 = vld [vmem:[%s353] sm:$0xff]
      %v405 = vld [vmem:[%s353 + $0x8] sm:$0xff]
      %v406 = vpack.c.bf16 %v405, %v404
      %v407 = vld [vmem:[%s363] sm:$0xf]
      %v408 = vld [vmem:[%s363 + $0x4] sm:$0xf]
      %v409 = vld [vmem:[%s363 + $0x8] sm:$0xf]
      %v410 = vld [vmem:[%s363 + $0xc] sm:$0xf]
      %v411 = vld [vmem:[%s366] sm:$0x1]
      %v413 = vlaneseq
      %v414 = vshrl.u32 %v413, 7
      %v415 = vsub.s32 0, %v414
      %v416 = vrot.slane %v411, %v415
      %v422 = vunpack.c.l.b16 %v407
      %v423 = vunpack.c.l.b16 %v408
      %v424 = vunpack.c.l.b16 %v409
      %v425 = vunpack.c.l.b16 %v410
      %v426 = vpack.c.b16 %v423, %v422
      %v427 = vpack.c.b16 %v425, %v424
      %vm430 = vcmask 261120
      %v432 = vsel %vm430, %v406, 0
      %434 = vmatprep.subr.bf16.mxu0 0
      %435 = vmatpush1.bf16.msra.mxu0 %v426
      %436 = vmatprep.subr.bf16.mxu0 0
      %437 = vmatpush1.bf16.msra.mxu0 %v427
      %438 = vmatprep.subr.bf16.mxu0 0
      %439 = vmatpush1.bf16.msra.mxu0 0
      %440 = vmatprep.subr.bf16.mxu0 0
      %441 = vmatpush1.bf16.msra.mxu0 0
      %442 = vmatprep.subr.bf16.mxu0 0
      %443 = vmatpush1.bf16.msra.mxu0 0
      %444 = vmatprep.subr.bf16.mxu0 0
      %445 = vmatpush1.bf16.msra.mxu0 0
      %446 = vmatprep.subr.bf16.mxu0 0
      %447 = vmatpush1.bf16.msra.mxu0 0
      %448 = vmatprep.subr.bf16.mxu0 0
      %449 = vmatpush1.bf16.msra.mxu0 0
      %450 = vmatprep.subr.bf16.mxu0 0
      %451 = vmatpush1.bf16.msra.mxu0 0
      %452 = vmatprep.subr.bf16.mxu0 0
      %453 = vmatpush1.bf16.msra.mxu0 0
      %454 = vmatprep.subr.bf16.mxu0 0
      %455 = vmatpush1.bf16.msra.mxu0 0
      %456 = vmatprep.subr.bf16.mxu0 0
      %457 = vmatpush1.bf16.msra.mxu0 0
      %458 = vmatprep.subr.bf16.mxu0 0
      %459 = vmatpush1.bf16.msra.mxu0 0
      %460 = vmatprep.subr.bf16.mxu0 0
      %461 = vmatpush1.bf16.msra.mxu0 0
      %462 = vmatprep.subr.bf16.mxu0 0
      %463 = vmatpush1.bf16.msra.mxu0 0
      %464 = vmatprep.subr.bf16.mxu0 0
      %465 = vmatpush1.bf16.msra.mxu0 0
      %466 = vmatprep.mubr.bf16.mxu0 0
      %467 = vmatmul.mubr.bf16.gmra.mrb[0].mxu0 %v432
      %v468 = vpop.f32.mrb[0].mxu0
      %v469 = vadd.f32 %v416, %v468
      %v470 = vpop.f32.mrb[0].mxu0
      %v471 = vpop.f32.mrb[0].mxu0
      %v472 = vadd.f32 %v416, %v471
      %v473 = vpop.f32.mrb[0].mxu0
      %474 = vdwg.mxu0
      %vm475 = vcmask 785408
      %476 = vst.msk [vmem:[#allocation3] sm:$0xff] %vm475, %v469
      %477 = vst.msk [vmem:[#allocation3 + $0x8] sm:$0xff] %vm475, %v472
      %v478 = vld [vmem:[%s371] sm:$0xf]
      %v479 = vld [vmem:[%s371 + $0x4] sm:$0xf]
      %v480 = vld [vmem:[%s371 + $0x8] sm:$0xf]
      %v481 = vld [vmem:[%s371 + $0xc] sm:$0xf]
      %v482 = vld [vmem:[%s374] sm:$0x1]
      %v483 = vld [vmem:[#allocation2] sm:$0x1]
      %s484 = smul.u32 %s21, 15
      %s485 = scalar_lea.vmem [#allocation3], %s484
      %v486 = vld [vmem:[%s485] sm:$0x1]
      %v487 = vpack.c.bf16 %v483, %v483
      %v492 = vunpack.c.l.b16 %v478
      %v493 = vunpack.c.l.b16 %v479
      %v494 = vunpack.c.l.b16 %v480
      %v495 = vunpack.c.l.b16 %v481
      %v496 = vpack.c.b16 %v493, %v492
      %v497 = vpack.c.b16 %v495, %v494
      %v501 = vsel %vm430, %v487, 0
      %503 = vmatprep.subr.bf16.mxu0 0
      %504 = vmatpush1.bf16.msra.mxu0 %v496
      %505 = vmatprep.subr.bf16.mxu0 0
      %506 = vmatpush1.bf16.msra.mxu0 %v497
      %507 = vmatprep.subr.bf16.mxu0 0
      %508 = vmatpush1.bf16.msra.mxu0 0
      %509 = vmatprep.subr.bf16.mxu0 0
      %510 = vmatpush1.bf16.msra.mxu0 0
      %511 = vmatprep.subr.bf16.mxu0 0
      %512 = vmatpush1.bf16.msra.mxu0 0
      %513 = vmatprep.subr.bf16.mxu0 0
      %514 = vmatpush1.bf16.msra.mxu0 0
      %515 = vmatprep.subr.bf16.mxu0 0
      %516 = vmatpush1.bf16.msra.mxu0 0
      %517 = vmatprep.subr.bf16.mxu0 0
      %518 = vmatpush1.bf16.msra.mxu0 0
      %519 = vmatprep.subr.bf16.mxu0 0
      %520 = vmatpush1.bf16.msra.mxu0 0
      %521 = vmatprep.subr.bf16.mxu0 0
      %522 = vmatpush1.bf16.msra.mxu0 0
      %523 = vmatprep.subr.bf16.mxu0 0
      %524 = vmatpush1.bf16.msra.mxu0 0
      %525 = vmatprep.subr.bf16.mxu0 0
      %526 = vmatpush1.bf16.msra.mxu0 0
      %527 = vmatprep.subr.bf16.mxu0 0
      %528 = vmatpush1.bf16.msra.mxu0 0
      %529 = vmatprep.subr.bf16.mxu0 0
      %530 = vmatpush1.bf16.msra.mxu0 0
      %531 = vmatprep.subr.bf16.mxu0 0
      %532 = vmatpush1.bf16.msra.mxu0 0
      %533 = vmatprep.subr.bf16.mxu0 0
      %534 = vmatpush1.bf16.msra.mxu0 0
      %535 = vmatprep.mubr.bf16.mxu0 0
      %536 = vmatmul.mubr.bf16.gmra.mrb[0].mxu0 %v501
      %v537 = vpop.f32.mrb[0].mxu0
      %v538 = vadd.f32 0.0, %v537
      %v539 = vpop.f32.mrb[0].mxu0
      %v540 = vpop.f32.mrb[0].mxu0
      %v541 = vpop.f32.mrb[0].mxu0
      %542 = vdwg.mxu0
      %v543 = vadd.f32 %v486, %v538
      %v544 = vxor.u32 %v543, 2147483648
      %v545 = vmul.f32 %v544, 1.442695
      %v546 = vpow.pop %v545
      %v547 = vadd.f32 %v546, 1.0
      %v548 = vrcp.pop %v547
      %v549 = vmul.f32 1.0, %v548
      %v551 = vlaneseq
      %v552 = vshrl.u32 %v551, 7
      %v553 = vsub.s32 0, %v552
      %v554 = vrot.slane %v482, %v553
      %555 = vrot.lane.b32.xlu0 %v554, 64
      %v556 = vpop.permute.xlu0 %555
      %v558 = vadd.f32 %v538, %v556
      %560 = vrot.lane.b32.xlu0 %v558, 64
      %v561 = vpop.permute.xlu0 %560
      %v563 = vmul.f32 %v549, %v561
      %565 = vrot.lane.b32.xlu0 %v563, 64
      %v566 = vpop.permute.xlu0 %565
      %v568 = vadd.f32 %v486, %v566
      %v569 = vtanh.pop %v568
      %v570 = vsub.f32 1.0, %v549
      %572 = vrot.lane.b32.xlu0 %v569, 96
      %v573 = vpop.permute.xlu0 %572
      %v575 = vmul.f32 %v570, %v573
      %v577 = vlaneseq
      %v578 = vshrl.u32 %v577, 7
      %v579 = vsub.s32 0, %v578
      %v580 = vrot.slane %v483, %v579
      %581 = vrot.lane.b32.xlu0 %v580, 32
      %v582 = vpop.permute.xlu0 %581
      %v584 = vmul.f32 %v549, %v582
      %v585 = vadd.f32 %v575, %v584
      %587 = vrot.lane.b32.xlu0 %v585, 96
      %v588 = vpop.permute.xlu0 %587
      %s590 = scalar_lea.vmem %s391, %s484
      %vm591 = vcmask 253952
      %592 = vst.msk [vmem:[%s590] sm:$0x1] %vm591, %v588
      %s593 = ssub.s32 1, %s21
      %s594 = smul.u32 %s21, 14
      %s595 = sadd.s32 %s593, %s594
      %s596 = scalar_lea.vmem [#allocation3], %s595
      %v597 = vld [vmem:[%s596] sm:$0x1]
      %v598 = vpack.c.bf16 %v585, %v585
      %600 = vrot.lane.b32.xlu0 %v598, 96
      %v601 = vpop.permute.xlu0 %600
      %v603 = vsel %vm430, %v601, 0
      %605 = vmatprep.subr.bf16.mxu0 0
      %606 = vmatpush1.bf16.msra.mxu0 %v496
      %607 = vmatprep.subr.bf16.mxu0 0
      %608 = vmatpush1.bf16.msra.mxu0 %v497
      %609 = vmatprep.subr.bf16.mxu0 0
      %610 = vmatpush1.bf16.msra.mxu0 0
      %611 = vmatprep.subr.bf16.mxu0 0
      %612 = vmatpush1.bf16.msra.mxu0 0
      %613 = vmatprep.subr.bf16.mxu0 0
      %614 = vmatpush1.bf16.msra.mxu0 0
      %615 = vmatprep.subr.bf16.mxu0 0
      %616 = vmatpush1.bf16.msra.mxu0 0
      %617 = vmatprep.subr.bf16.mxu0 0
      %618 = vmatpush1.bf16.msra.mxu0 0
      %619 = vmatprep.subr.bf16.mxu0 0
      %620 = vmatpush1.bf16.msra.mxu0 0
      %621 = vmatprep.subr.bf16.mxu0 0
      %622 = vmatpush1.bf16.msra.mxu0 0
      %623 = vmatprep.subr.bf16.mxu0 0
      %624 = vmatpush1.bf16.msra.mxu0 0
      %625 = vmatprep.subr.bf16.mxu0 0
      %626 = vmatpush1.bf16.msra.mxu0 0
      %627 = vmatprep.subr.bf16.mxu0 0
      %628 = vmatpush1.bf16.msra.mxu0 0
      %629 = vmatprep.subr.bf16.mxu0 0
      %630 = vmatpush1.bf16.msra.mxu0 0
      %631 = vmatprep.subr.bf16.mxu0 0
      %632 = vmatpush1.bf16.msra.mxu0 0
      %633 = vmatprep.subr.bf16.mxu0 0
      %634 = vmatpush1.bf16.msra.mxu0 0
      %635 = vmatprep.subr.bf16.mxu0 0
      %636 = vmatpush1.bf16.msra.mxu0 0
      %637 = vmatprep.mubr.bf16.mxu0 0
      %638 = vmatmul.mubr.bf16.gmra.mrb[0].mxu0 %v603
      %v639 = vpop.f32.mrb[0].mxu0
      %v640 = vadd.f32 0.0, %v639
      %v641 = vpop.f32.mrb[0].mxu0
      %v642 = vpop.f32.mrb[0].mxu0
      %v643 = vpop.f32.mrb[0].mxu0
      %644 = vdwg.mxu0
      %v645 = vadd.f32 %v597, %v640
      %v646 = vxor.u32 %v645, 2147483648
      %v647 = vmul.f32 %v646, 1.442695
      %v648 = vpow.pop %v647
      %v649 = vadd.f32 %v648, 1.0
      %v650 = vrcp.pop %v649
      %v651 = vmul.f32 1.0, %v650
      %v652 = vadd.f32 %v640, %v556
      %654 = vrot.lane.b32.xlu0 %v652, 64
      %v655 = vpop.permute.xlu0 %654
      %v657 = vmul.f32 %v651, %v655
      %659 = vrot.lane.b32.xlu0 %v657, 64
      %v660 = vpop.permute.xlu0 %659
      %v662 = vadd.f32 %v597, %v660
      %v663 = vtanh.pop %v662
      %v664 = vsub.f32 1.0, %v651
      %666 = vrot.lane.b32.xlu0 %v663, 96
      %v667 = vpop.permute.xlu0 %666
      %v669 = vmul.f32 %v664, %v667
      %v670 = vmul.f32 %v651, %v585
      %v671 = vadd.f32 %v669, %v670
      %673 = vrot.lane.b32.xlu0 %v671, 96
      %v674 = vpop.permute.xlu0 %673
      %s676 = scalar_lea.vmem %s391, %s595
      %677 = vst.msk [vmem:[%s676] sm:$0x1] %vm591, %v674
      %s678 = smul.u32 %s593, 2
      %s679 = smul.u32 %s21, 13
      %s680 = sadd.s32 %s678, %s679
      %s681 = scalar_lea.vmem [#allocation3], %s680
      %v682 = vld [vmem:[%s681] sm:$0x1]
      %v683 = vpack.c.bf16 %v671, %v671
      %685 = vrot.lane.b32.xlu0 %v683, 96
      %v686 = vpop.permute.xlu0 %685
      %v688 = vsel %vm430, %v686, 0
      %690 = vmatprep.subr.bf16.mxu0 0
      %691 = vmatpush1.bf16.msra.mxu0 %v496
      %692 = vmatprep.subr.bf16.mxu0 0
      %693 = vmatpush1.bf16.msra.mxu0 %v497
      %694 = vmatprep.subr.bf16.mxu0 0
      %695 = vmatpush1.bf16.msra.mxu0 0
      %696 = vmatprep.subr.bf16.mxu0 0
      %697 = vmatpush1.bf16.msra.mxu0 0
      %698 = vmatprep.subr.bf16.mxu0 0
      %699 = vmatpush1.bf16.msra.mxu0 0
      %700 = vmatprep.subr.bf16.mxu0 0
      %701 = vmatpush1.bf16.msra.mxu0 0
      %702 = vmatprep.subr.bf16.mxu0 0
      %703 = vmatpush1.bf16.msra.mxu0 0
      %704 = vmatprep.subr.bf16.mxu0 0
      %705 = vmatpush1.bf16.msra.mxu0 0
      %706 = vmatprep.subr.bf16.mxu0 0
      %707 = vmatpush1.bf16.msra.mxu0 0
      %708 = vmatprep.subr.bf16.mxu0 0
      %709 = vmatpush1.bf16.msra.mxu0 0
      %710 = vmatprep.subr.bf16.mxu0 0
      %711 = vmatpush1.bf16.msra.mxu0 0
      %712 = vmatprep.subr.bf16.mxu0 0
      %713 = vmatpush1.bf16.msra.mxu0 0
      %714 = vmatprep.subr.bf16.mxu0 0
      %715 = vmatpush1.bf16.msra.mxu0 0
      %716 = vmatprep.subr.bf16.mxu0 0
      %717 = vmatpush1.bf16.msra.mxu0 0
      %718 = vmatprep.subr.bf16.mxu0 0
      %719 = vmatpush1.bf16.msra.mxu0 0
      %720 = vmatprep.subr.bf16.mxu0 0
      %721 = vmatpush1.bf16.msra.mxu0 0
      %722 = vmatprep.mubr.bf16.mxu0 0
      %723 = vmatmul.mubr.bf16.gmra.mrb[0].mxu0 %v688
      %v724 = vpop.f32.mrb[0].mxu0
      %v725 = vadd.f32 0.0, %v724
      %v726 = vpop.f32.mrb[0].mxu0
      %v727 = vpop.f32.mrb[0].mxu0
      %v728 = vpop.f32.mrb[0].mxu0
      %729 = vdwg.mxu0
      %v730 = vadd.f32 %v682, %v725
      %v731 = vxor.u32 %v730, 2147483648
      %v732 = vmul.f32 %v731, 1.442695
      %v733 = vpow.pop %v732
      %v734 = vadd.f32 %v733, 1.0
      %v735 = vrcp.pop %v734
      %v736 = vmul.f32 1.0, %v735
      %v737 = vadd.f32 %v725, %v556
      %739 = vrot.lane.b32.xlu0 %v737, 64
      %v740 = vpop.permute.xlu0 %739
      %v742 = vmul.f32 %v736, %v740
      %744 = vrot.lane.b32.xlu0 %v742, 64
      %v745 = vpop.permute.xlu0 %744
      %v747 = vadd.f32 %v682, %v745
      %v748 = vtanh.pop %v747
      %v749 = vsub.f32 1.0, %v736
      %751 = vrot.lane.b32.xlu0 %v748, 96
      %v752 = vpop.permute.xlu0 %751
      %v754 = vmul.f32 %v749, %v752
      %v755 = vmul.f32 %v736, %v671
      %v756 = vadd.f32 %v754, %v755
      %758 = vrot.lane.b32.xlu0 %v756, 96
      %v759 = vpop.permute.xlu0 %758
      %s761 = scalar_lea.vmem %s391, %s680
      %762 = vst.msk [vmem:[%s761] sm:$0x1] %vm591, %v759
      %s763 = smul.u32 %s593, 3
      %s764 = smul.u32 %s21, 12
      %s765 = sadd.s32 %s763, %s764
      %s766 = scalar_lea.vmem [#allocation3], %s765
      %v767 = vld [vmem:[%s766] sm:$0x1]
      %v768 = vpack.c.bf16 %v756, %v756
      %770 = vrot.lane.b32.xlu0 %v768, 96
      %v771 = vpop.permute.xlu0 %770
      %v773 = vsel %vm430, %v771, 0
      %775 = vmatprep.subr.bf16.mxu0 0
      %776 = vmatpush1.bf16.msra.mxu0 %v496
      %777 = vmatprep.subr.bf16.mxu0 0
      %778 = vmatpush1.bf16.msra.mxu0 %v497
      %779 = vmatprep.subr.bf16.mxu0 0
      %780 = vmatpush1.bf16.msra.mxu0 0
      %781 = vmatprep.subr.bf16.mxu0 0
      %782 = vmatpush1.bf16.msra.mxu0 0
      %783 = vmatprep.subr.bf16.mxu0 0
      %784 = vmatpush1.bf16.msra.mxu0 0
      %785 = vmatprep.subr.bf16.mxu0 0
      %786 = vmatpush1.bf16.msra.mxu0 0
      %787 = vmatprep.subr.bf16.mxu0 0
      %788 = vmatpush1.bf16.msra.mxu0 0
      %789 = vmatprep.subr.bf16.mxu0 0
      %790 = vmatpush1.bf16.msra.mxu0 0
      %791 = vmatprep.subr.bf16.mxu0 0
      %792 = vmatpush1.bf16.msra.mxu0 0
      %793 = vmatprep.subr.bf16.mxu0 0
      %794 = vmatpush1.bf16.msra.mxu0 0
      %795 = vmatprep.subr.bf16.mxu0 0
      %796 = vmatpush1.bf16.msra.mxu0 0
      %797 = vmatprep.subr.bf16.mxu0 0
      %798 = vmatpush1.bf16.msra.mxu0 0
      %799 = vmatprep.subr.bf16.mxu0 0
      %800 = vmatpush1.bf16.msra.mxu0 0
      %801 = vmatprep.subr.bf16.mxu0 0
      %802 = vmatpush1.bf16.msra.mxu0 0
      %803 = vmatprep.subr.bf16.mxu0 0
      %804 = vmatpush1.bf16.msra.mxu0 0
      %805 = vmatprep.subr.bf16.mxu0 0
      %806 = vmatpush1.bf16.msra.mxu0 0
      %807 = vmatprep.mubr.bf16.mxu0 0
      %808 = vmatmul.mubr.bf16.gmra.mrb[0].mxu0 %v773
      %v809 = vpop.f32.mrb[0].mxu0
      %v810 = vadd.f32 0.0, %v809
      %v811 = vpop.f32.mrb[0].mxu0
      %v812 = vpop.f32.mrb[0].mxu0
      %v813 = vpop.f32.mrb[0].mxu0
      %814 = vdwg.mxu0
      %v815 = vadd.f32 %v767, %v810
      %v816 = vxor.u32 %v815, 2147483648
      %v817 = vmul.f32 %v816, 1.442695
      %v818 = vpow.pop %v817
      %v819 = vadd.f32 %v818, 1.0
      %v820 = vrcp.pop %v819
      %v821 = vmul.f32 1.0, %v820
      %v822 = vadd.f32 %v810, %v556
      %824 = vrot.lane.b32.xlu0 %v822, 64
      %v825 = vpop.permute.xlu0 %824
      %v827 = vmul.f32 %v821, %v825
      %829 = vrot.lane.b32.xlu0 %v827, 64
      %v830 = vpop.permute.xlu0 %829
      %v832 = vadd.f32 %v767, %v830
      %v833 = vtanh.pop %v832
      %v834 = vsub.f32 1.0, %v821
      %836 = vrot.lane.b32.xlu0 %v833, 96
      %v837 = vpop.permute.xlu0 %836
      %v839 = vmul.f32 %v834, %v837
      %v840 = vmul.f32 %v821, %v756
      %v841 = vadd.f32 %v839, %v840
      %843 = vrot.lane.b32.xlu0 %v841, 96
      %v844 = vpop.permute.xlu0 %843
      %s846 = scalar_lea.vmem %s391, %s765
      %847 = vst.msk [vmem:[%s846] sm:$0x1] %vm591, %v844
      %s848 = smul.u32 %s593, 4
      %s849 = smul.u32 %s21, 11
      %s850 = sadd.s32 %s848, %s849
      %s851 = scalar_lea.vmem [#allocation3], %s850
      %v852 = vld [vmem:[%s851] sm:$0x1]
      %v853 = vpack.c.bf16 %v841, %v841
      %855 = vrot.lane.b32.xlu0 %v853, 96
      %v856 = vpop.permute.xlu0 %855
      %v858 = vsel %vm430, %v856, 0
      %860 = vmatprep.subr.bf16.mxu0 0
      %861 = vmatpush1.bf16.msra.mxu0 %v496
      %862 = vmatprep.subr.bf16.mxu0 0
      %863 = vmatpush1.bf16.msra.mxu0 %v497
      %864 = vmatprep.subr.bf16.mxu0 0
      %865 = vmatpush1.bf16.msra.mxu0 0
      %866 = vmatprep.subr.bf16.mxu0 0
      %867 = vmatpush1.bf16.msra.mxu0 0
      %868 = vmatprep.subr.bf16.mxu0 0
      %869 = vmatpush1.bf16.msra.mxu0 0
      %870 = vmatprep.subr.bf16.mxu0 0
      %871 = vmatpush1.bf16.msra.mxu0 0
      %872 = vmatprep.subr.bf16.mxu0 0
      %873 = vmatpush1.bf16.msra.mxu0 0
      %874 = vmatprep.subr.bf16.mxu0 0
      %875 = vmatpush1.bf16.msra.mxu0 0
      %876 = vmatprep.subr.bf16.mxu0 0
      %877 = vmatpush1.bf16.msra.mxu0 0
      %878 = vmatprep.subr.bf16.mxu0 0
      %879 = vmatpush1.bf16.msra.mxu0 0
      %880 = vmatprep.subr.bf16.mxu0 0
      %881 = vmatpush1.bf16.msra.mxu0 0
      %882 = vmatprep.subr.bf16.mxu0 0
      %883 = vmatpush1.bf16.msra.mxu0 0
      %884 = vmatprep.subr.bf16.mxu0 0
      %885 = vmatpush1.bf16.msra.mxu0 0
      %886 = vmatprep.subr.bf16.mxu0 0
      %887 = vmatpush1.bf16.msra.mxu0 0
      %888 = vmatprep.subr.bf16.mxu0 0
      %889 = vmatpush1.bf16.msra.mxu0 0
      %890 = vmatprep.subr.bf16.mxu0 0
      %891 = vmatpush1.bf16.msra.mxu0 0
      %892 = vmatprep.mubr.bf16.mxu0 0
      %893 = vmatmul.mubr.bf16.gmra.mrb[0].mxu0 %v858
      %v894 = vpop.f32.mrb[0].mxu0
      %v895 = vadd.f32 0.0, %v894
      %v896 = vpop.f32.mrb[0].mxu0
      %v897 = vpop.f32.mrb[0].mxu0
      %v898 = vpop.f32.mrb[0].mxu0
      %899 = vdwg.mxu0
      %v900 = vadd.f32 %v852, %v895
      %v901 = vxor.u32 %v900, 2147483648
      %v902 = vmul.f32 %v901, 1.442695
      %v903 = vpow.pop %v902
      %v904 = vadd.f32 %v903, 1.0
      %v905 = vrcp.pop %v904
      %v906 = vmul.f32 1.0, %v905
      %v907 = vadd.f32 %v895, %v556
      %909 = vrot.lane.b32.xlu0 %v907, 64
      %v910 = vpop.permute.xlu0 %909
      %v912 = vmul.f32 %v906, %v910
      %914 = vrot.lane.b32.xlu0 %v912, 64
      %v915 = vpop.permute.xlu0 %914
      %v917 = vadd.f32 %v852, %v915
      %v918 = vtanh.pop %v917
      %v919 = vsub.f32 1.0, %v906
      %921 = vrot.lane.b32.xlu0 %v918, 96
      %v922 = vpop.permute.xlu0 %921
      %v924 = vmul.f32 %v919, %v922
      %v925 = vmul.f32 %v906, %v841
      %v926 = vadd.f32 %v924, %v925
      %928 = vrot.lane.b32.xlu0 %v926, 96
      %v929 = vpop.permute.xlu0 %928
      %s931 = scalar_lea.vmem %s391, %s850
      %932 = vst.msk [vmem:[%s931] sm:$0x1] %vm591, %v929
      %s933 = smul.u32 %s593, 5
      %s934 = smul.u32 %s21, 10
      %s935 = sadd.s32 %s933, %s934
      %s936 = scalar_lea.vmem [#allocation3], %s935
      %v937 = vld [vmem:[%s936] sm:$0x1]
      %v938 = vpack.c.bf16 %v926, %v926
      %940 = vrot.lane.b32.xlu0 %v938, 96
      %v941 = vpop.permute.xlu0 %940
      %v943 = vsel %vm430, %v941, 0
      %945 = vmatprep.subr.bf16.mxu0 0
      %946 = vmatpush1.bf16.msra.mxu0 %v496
      %947 = vmatprep.subr.bf16.mxu0 0
      %948 = vmatpush1.bf16.msra.mxu0 %v497
      %949 = vmatprep.subr.bf16.mxu0 0
      %950 = vmatpush1.bf16.msra.mxu0 0
      %951 = vmatprep.subr.bf16.mxu0 0
      %952 = vmatpush1.bf16.msra.mxu0 0
      %953 = vmatprep.subr.bf16.mxu0 0
      %954 = vmatpush1.bf16.msra.mxu0 0
      %955 = vmatprep.subr.bf16.mxu0 0
      %956 = vmatpush1.bf16.msra.mxu0 0
      %957 = vmatprep.subr.bf16.mxu0 0
      %958 = vmatpush1.bf16.msra.mxu0 0
      %959 = vmatprep.subr.bf16.mxu0 0
      %960 = vmatpush1.bf16.msra.mxu0 0
      %961 = vmatprep.subr.bf16.mxu0 0
      %962 = vmatpush1.bf16.msra.mxu0 0
      %963 = vmatprep.subr.bf16.mxu0 0
      %964 = vmatpush1.bf16.msra.mxu0 0
      %965 = vmatprep.subr.bf16.mxu0 0
      %966 = vmatpush1.bf16.msra.mxu0 0
      %967 = vmatprep.subr.bf16.mxu0 0
      %968 = vmatpush1.bf16.msra.mxu0 0
      %969 = vmatprep.subr.bf16.mxu0 0
      %970 = vmatpush1.bf16.msra.mxu0 0
      %971 = vmatprep.subr.bf16.mxu0 0
      %972 = vmatpush1.bf16.msra.mxu0 0
      %973 = vmatprep.subr.bf16.mxu0 0
      %974 = vmatpush1.bf16.msra.mxu0 0
      %975 = vmatprep.subr.bf16.mxu0 0
      %976 = vmatpush1.bf16.msra.mxu0 0
      %977 = vmatprep.mubr.bf16.mxu0 0
      %978 = vmatmul.mubr.bf16.gmra.mrb[0].mxu0 %v943
      %v979 = vpop.f32.mrb[0].mxu0
      %v980 = vadd.f32 0.0, %v979
      %v981 = vpop.f32.mrb[0].mxu0
      %v982 = vpop.f32.mrb[0].mxu0
      %v983 = vpop.f32.mrb[0].mxu0
      %984 = vdwg.mxu0
      %v985 = vadd.f32 %v937, %v980
      %v986 = vxor.u32 %v985, 2147483648
      %v987 = vmul.f32 %v986, 1.442695
      %v988 = vpow.pop %v987
      %v989 = vadd.f32 %v988, 1.0
      %v990 = vrcp.pop %v989
      %v991 = vmul.f32 1.0, %v990
      %v992 = vadd.f32 %v980, %v556
      %994 = vrot.lane.b32.xlu0 %v992, 64
      %v995 = vpop.permute.xlu0 %994
      %v997 = vmul.f32 %v991, %v995
      %999 = vrot.lane.b32.xlu0 %v997, 64
      %v1000 = vpop.permute.xlu0 %999
      %v1002 = vadd.f32 %v937, %v1000
      %v1003 = vtanh.pop %v1002
      %v1004 = vsub.f32 1.0, %v991
      %1006 = vrot.lane.b32.xlu0 %v1003, 96
      %v1007 = vpop.permute.xlu0 %1006
      %v1009 = vmul.f32 %v1004, %v1007
      %v1010 = vmul.f32 %v991, %v926
      %v1011 = vadd.f32 %v1009, %v1010
      %1013 = vrot.lane.b32.xlu0 %v1011, 96
      %v1014 = vpop.permute.xlu0 %1013
      %s1016 = scalar_lea.vmem %s391, %s935
      %1017 = vst.msk [vmem:[%s1016] sm:$0x1] %vm591, %v1014
      %s1018 = smul.u32 %s593, 6
      %s1019 = smul.u32 %s21, 9
      %s1020 = sadd.s32 %s1018, %s1019
      %s1021 = scalar_lea.vmem [#allocation3], %s1020
      %v1022 = vld [vmem:[%s1021] sm:$0x1]
      %v1023 = vpack.c.bf16 %v1011, %v1011
      %1025 = vrot.lane.b32.xlu0 %v1023, 96
      %v1026 = vpop.permute.xlu0 %1025
      %v1028 = vsel %vm430, %v1026, 0
      %1030 = vmatprep.subr.bf16.mxu0 0
      %1031 = vmatpush1.bf16.msra.mxu0 %v496
      %1032 = vmatprep.subr.bf16.mxu0 0
      %1033 = vmatpush1.bf16.msra.mxu0 %v497
      %1034 = vmatprep.subr.bf16.mxu0 0
      %1035 = vmatpush1.bf16.msra.mxu0 0
      %1036 = vmatprep.subr.bf16.mxu0 0
      %1037 = vmatpush1.bf16.msra.mxu0 0
      %1038 = vmatprep.subr.bf16.mxu0 0
      %1039 = vmatpush1.bf16.msra.mxu0 0
      %1040 = vmatprep.subr.bf16.mxu0 0
      %1041 = vmatpush1.bf16.msra.mxu0 0
      %1042 = vmatprep.subr.bf16.mxu0 0
      %1043 = vmatpush1.bf16.msra.mxu0 0
      %1044 = vmatprep.subr.bf16.mxu0 0
      %1045 = vmatpush1.bf16.msra.mxu0 0
      %1046 = vmatprep.subr.bf16.mxu0 0
      %1047 = vmatpush1.bf16.msra.mxu0 0
      %1048 = vmatprep.subr.bf16.mxu0 0
      %1049 = vmatpush1.bf16.msra.mxu0 0
      %1050 = vmatprep.subr.bf16.mxu0 0
      %1051 = vmatpush1.bf16.msra.mxu0 0
      %1052 = vmatprep.subr.bf16.mxu0 0
      %1053 = vmatpush1.bf16.msra.mxu0 0
      %1054 = vmatprep.subr.bf16.mxu0 0
      %1055 = vmatpush1.bf16.msra.mxu0 0
      %1056 = vmatprep.subr.bf16.mxu0 0
      %1057 = vmatpush1.bf16.msra.mxu0 0
      %1058 = vmatprep.subr.bf16.mxu0 0
      %1059 = vmatpush1.bf16.msra.mxu0 0
      %1060 = vmatprep.subr.bf16.mxu0 0
      %1061 = vmatpush1.bf16.msra.mxu0 0
      %1062 = vmatprep.mubr.bf16.mxu0 0
      %1063 = vmatmul.mubr.bf16.gmra.mrb[0].mxu0 %v1028
      %v1064 = vpop.f32.mrb[0].mxu0
      %v1065 = vadd.f32 0.0, %v1064
      %v1066 = vpop.f32.mrb[0].mxu0
      %v1067 = vpop.f32.mrb[0].mxu0
      %v1068 = vpop.f32.mrb[0].mxu0
      %1069 = vdwg.mxu0
      %v1070 = vadd.f32 %v1022, %v1065
      %v1071 = vxor.u32 %v1070, 2147483648
      %v1072 = vmul.f32 %v1071, 1.442695
      %v1073 = vpow.pop %v1072
      %v1074 = vadd.f32 %v1073, 1.0
      %v1075 = vrcp.pop %v1074
      %v1076 = vmul.f32 1.0, %v1075
      %v1077 = vadd.f32 %v1065, %v556
      %1079 = vrot.lane.b32.xlu0 %v1077, 64
      %v1080 = vpop.permute.xlu0 %1079
      %v1082 = vmul.f32 %v1076, %v1080
      %1084 = vrot.lane.b32.xlu0 %v1082, 64
      %v1085 = vpop.permute.xlu0 %1084
      %v1087 = vadd.f32 %v1022, %v1085
      %v1088 = vtanh.pop %v1087
      %v1089 = vsub.f32 1.0, %v1076
      %1091 = vrot.lane.b32.xlu0 %v1088, 96
      %v1092 = vpop.permute.xlu0 %1091
      %v1094 = vmul.f32 %v1089, %v1092
      %v1095 = vmul.f32 %v1076, %v1011
      %v1096 = vadd.f32 %v1094, %v1095
      %1098 = vrot.lane.b32.xlu0 %v1096, 96
      %v1099 = vpop.permute.xlu0 %1098
      %s1101 = scalar_lea.vmem %s391, %s1020
      %1102 = vst.msk [vmem:[%s1101] sm:$0x1] %vm591, %v1099
      %s1103 = smul.u32 %s593, 7
      %s1104 = smul.u32 %s21, 8
      %s1105 = sadd.s32 %s1103, %s1104
      %s1106 = scalar_lea.vmem [#allocation3], %s1105
      %v1107 = vld [vmem:[%s1106] sm:$0x1]
      %v1108 = vpack.c.bf16 %v1096, %v1096
      %1110 = vrot.lane.b32.xlu0 %v1108, 96
      %v1111 = vpop.permute.xlu0 %1110
      %v1113 = vsel %vm430, %v1111, 0
      %1115 = vmatprep.subr.bf16.mxu0 0
      %1116 = vmatpush1.bf16.msra.mxu0 %v496
      %1117 = vmatprep.subr.bf16.mxu0 0
      %1118 = vmatpush1.bf16.msra.mxu0 %v497
      %1119 = vmatprep.subr.bf16.mxu0 0
      %1120 = vmatpush1.bf16.msra.mxu0 0
      %1121 = vmatprep.subr.bf16.mxu0 0
      %1122 = vmatpush1.bf16.msra.mxu0 0
      %1123 = vmatprep.subr.bf16.mxu0 0
      %1124 = vmatpush1.bf16.msra.mxu0 0
      %1125 = vmatprep.subr.bf16.mxu0 0
      %1126 = vmatpush1.bf16.msra.mxu0 0
      %1127 = vmatprep.subr.bf16.mxu0 0
      %1128 = vmatpush1.bf16.msra.mxu0 0
      %1129 = vmatprep.subr.bf16.mxu0 0
      %1130 = vmatpush1.bf16.msra.mxu0 0
      %1131 = vmatprep.subr.bf16.mxu0 0
      %1132 = vmatpush1.bf16.msra.mxu0 0
      %1133 = vmatprep.subr.bf16.mxu0 0
      %1134 = vmatpush1.bf16.msra.mxu0 0
      %1135 = vmatprep.subr.bf16.mxu0 0
      %1136 = vmatpush1.bf16.msra.mxu0 0
      %1137 = vmatprep.subr.bf16.mxu0 0
      %1138 = vmatpush1.bf16.msra.mxu0 0
      %1139 = vmatprep.subr.bf16.mxu0 0
      %1140 = vmatpush1.bf16.msra.mxu0 0
      %1141 = vmatprep.subr.bf16.mxu0 0
      %1142 = vmatpush1.bf16.msra.mxu0 0
      %1143 = vmatprep.subr.bf16.mxu0 0
      %1144 = vmatpush1.bf16.msra.mxu0 0
      %1145 = vmatprep.subr.bf16.mxu0 0
      %1146 = vmatpush1.bf16.msra.mxu0 0
      %1147 = vmatprep.mubr.bf16.mxu0 0
      %1148 = vmatmul.mubr.bf16.gmra.mrb[0].mxu0 %v1113
      %v1149 = vpop.f32.mrb[0].mxu0
      %v1150 = vadd.f32 0.0, %v1149
      %v1151 = vpop.f32.mrb[0].mxu0
      %v1152 = vpop.f32.mrb[0].mxu0
      %v1153 = vpop.f32.mrb[0].mxu0
      %1154 = vdwg.mxu0
      %v1155 = vadd.f32 %v1107, %v1150
      %v1156 = vxor.u32 %v1155, 2147483648
      %v1157 = vmul.f32 %v1156, 1.442695
      %v1158 = vpow.pop %v1157
      %v1159 = vadd.f32 %v1158, 1.0
      %v1160 = vrcp.pop %v1159
      %v1161 = vmul.f32 1.0, %v1160
      %v1162 = vadd.f32 %v1150, %v556
      %1164 = vrot.lane.b32.xlu0 %v1162, 64
      %v1165 = vpop.permute.xlu0 %1164
      %v1167 = vmul.f32 %v1161, %v1165
      %1169 = vrot.lane.b32.xlu0 %v1167, 64
      %v1170 = vpop.permute.xlu0 %1169
      %v1172 = vadd.f32 %v1107, %v1170
      %v1173 = vtanh.pop %v1172
      %v1174 = vsub.f32 1.0, %v1161
      %1176 = vrot.lane.b32.xlu0 %v1173, 96
      %v1177 = vpop.permute.xlu0 %1176
      %v1179 = vmul.f32 %v1174, %v1177
      %v1180 = vmul.f32 %v1161, %v1096
      %v1181 = vadd.f32 %v1179, %v1180
      %1183 = vrot.lane.b32.xlu0 %v1181, 96
      %v1184 = vpop.permute.xlu0 %1183
      %s1186 = scalar_lea.vmem %s391, %s1105
      %1187 = vst.msk [vmem:[%s1186] sm:$0x1] %vm591, %v1184
      %s1188 = smul.u32 %s593, 8
      %s1189 = smul.u32 %s21, 7
      %s1190 = sadd.s32 %s1188, %s1189
      %s1191 = scalar_lea.vmem [#allocation3], %s1190
      %v1192 = vld [vmem:[%s1191] sm:$0x1]
      %v1193 = vpack.c.bf16 %v1181, %v1181
      %1195 = vrot.lane.b32.xlu0 %v1193, 96
      %v1196 = vpop.permute.xlu0 %1195
      %v1198 = vsel %vm430, %v1196, 0
      %1200 = vmatprep.subr.bf16.mxu0 0
      %1201 = vmatpush1.bf16.msra.mxu0 %v496
      %1202 = vmatprep.subr.bf16.mxu0 0
      %1203 = vmatpush1.bf16.msra.mxu0 %v497
      %1204 = vmatprep.subr.bf16.mxu0 0
      %1205 = vmatpush1.bf16.msra.mxu0 0
      %1206 = vmatprep.subr.bf16.mxu0 0
      %1207 = vmatpush1.bf16.msra.mxu0 0
      %1208 = vmatprep.subr.bf16.mxu0 0
      %1209 = vmatpush1.bf16.msra.mxu0 0
      %1210 = vmatprep.subr.bf16.mxu0 0
      %1211 = vmatpush1.bf16.msra.mxu0 0
      %1212 = vmatprep.subr.bf16.mxu0 0
      %1213 = vmatpush1.bf16.msra.mxu0 0
      %1214 = vmatprep.subr.bf16.mxu0 0
      %1215 = vmatpush1.bf16.msra.mxu0 0
      %1216 = vmatprep.subr.bf16.mxu0 0
      %1217 = vmatpush1.bf16.msra.mxu0 0
      %1218 = vmatprep.subr.bf16.mxu0 0
      %1219 = vmatpush1.bf16.msra.mxu0 0
      %1220 = vmatprep.subr.bf16.mxu0 0
      %1221 = vmatpush1.bf16.msra.mxu0 0
      %1222 = vmatprep.subr.bf16.mxu0 0
      %1223 = vmatpush1.bf16.msra.mxu0 0
      %1224 = vmatprep.subr.bf16.mxu0 0
      %1225 = vmatpush1.bf16.msra.mxu0 0
      %1226 = vmatprep.subr.bf16.mxu0 0
      %1227 = vmatpush1.bf16.msra.mxu0 0
      %1228 = vmatprep.subr.bf16.mxu0 0
      %1229 = vmatpush1.bf16.msra.mxu0 0
      %1230 = vmatprep.subr.bf16.mxu0 0
      %1231 = vmatpush1.bf16.msra.mxu0 0
      %1232 = vmatprep.mubr.bf16.mxu0 0
      %1233 = vmatmul.mubr.bf16.gmra.mrb[0].mxu0 %v1198
      %v1234 = vpop.f32.mrb[0].mxu0
      %v1235 = vadd.f32 0.0, %v1234
      %v1236 = vpop.f32.mrb[0].mxu0
      %v1237 = vpop.f32.mrb[0].mxu0
      %v1238 = vpop.f32.mrb[0].mxu0
      %1239 = vdwg.mxu0
      %v1240 = vadd.f32 %v1192, %v1235
      %v1241 = vxor.u32 %v1240, 2147483648
      %v1242 = vmul.f32 %v1241, 1.442695
      %v1243 = vpow.pop %v1242
      %v1244 = vadd.f32 %v1243, 1.0
      %v1245 = vrcp.pop %v1244
      %v1246 = vmul.f32 1.0, %v1245
      %v1247 = vadd.f32 %v1235, %v556
      %1249 = vrot.lane.b32.xlu0 %v1247, 64
      %v1250 = vpop.permute.xlu0 %1249
      %v1252 = vmul.f32 %v1246, %v1250
      %1254 = vrot.lane.b32.xlu0 %v1252, 64
      %v1255 = vpop.permute.xlu0 %1254
      %v1257 = vadd.f32 %v1192, %v1255
      %v1258 = vtanh.pop %v1257
      %v1259 = vsub.f32 1.0, %v1246
      %1261 = vrot.lane.b32.xlu0 %v1258, 96
      %v1262 = vpop.permute.xlu0 %1261
      %v1264 = vmul.f32 %v1259, %v1262
      %v1265 = vmul.f32 %v1246, %v1181
      %v1266 = vadd.f32 %v1264, %v1265
      %1268 = vrot.lane.b32.xlu0 %v1266, 96
      %v1269 = vpop.permute.xlu0 %1268
      %s1271 = scalar_lea.vmem %s391, %s1190
      %1272 = vst.msk [vmem:[%s1271] sm:$0x1] %vm591, %v1269
      %s1273 = smul.u32 %s593, 9
      %s1274 = smul.u32 %s21, 6
      %s1275 = sadd.s32 %s1273, %s1274
      %s1276 = scalar_lea.vmem [#allocation3], %s1275
      %v1277 = vld [vmem:[%s1276] sm:$0x1]
      %v1278 = vpack.c.bf16 %v1266, %v1266
      %1280 = vrot.lane.b32.xlu0 %v1278, 96
      %v1281 = vpop.permute.xlu0 %1280
      %v1283 = vsel %vm430, %v1281, 0
      %1285 = vmatprep.subr.bf16.mxu0 0
      %1286 = vmatpush1.bf16.msra.mxu0 %v496
      %1287 = vmatprep.subr.bf16.mxu0 0
      %1288 = vmatpush1.bf16.msra.mxu0 %v497
      %1289 = vmatprep.subr.bf16.mxu0 0
      %1290 = vmatpush1.bf16.msra.mxu0 0
      %1291 = vmatprep.subr.bf16.mxu0 0
      %1292 = vmatpush1.bf16.msra.mxu0 0
      %1293 = vmatprep.subr.bf16.mxu0 0
      %1294 = vmatpush1.bf16.msra.mxu0 0
      %1295 = vmatprep.subr.bf16.mxu0 0
      %1296 = vmatpush1.bf16.msra.mxu0 0
      %1297 = vmatprep.subr.bf16.mxu0 0
      %1298 = vmatpush1.bf16.msra.mxu0 0
      %1299 = vmatprep.subr.bf16.mxu0 0
      %1300 = vmatpush1.bf16.msra.mxu0 0
      %1301 = vmatprep.subr.bf16.mxu0 0
      %1302 = vmatpush1.bf16.msra.mxu0 0
      %1303 = vmatprep.subr.bf16.mxu0 0
      %1304 = vmatpush1.bf16.msra.mxu0 0
      %1305 = vmatprep.subr.bf16.mxu0 0
      %1306 = vmatpush1.bf16.msra.mxu0 0
      %1307 = vmatprep.subr.bf16.mxu0 0
      %1308 = vmatpush1.bf16.msra.mxu0 0
      %1309 = vmatprep.subr.bf16.mxu0 0
      %1310 = vmatpush1.bf16.msra.mxu0 0
      %1311 = vmatprep.subr.bf16.mxu0 0
      %1312 = vmatpush1.bf16.msra.mxu0 0
      %1313 = vmatprep.subr.bf16.mxu0 0
      %1314 = vmatpush1.bf16.msra.mxu0 0
      %1315 = vmatprep.subr.bf16.mxu0 0
      %1316 = vmatpush1.bf16.msra.mxu0 0
      %1317 = vmatprep.mubr.bf16.mxu0 0
      %1318 = vmatmul.mubr.bf16.gmra.mrb[0].mxu0 %v1283
      %v1319 = vpop.f32.mrb[0].mxu0
      %v1320 = vadd.f32 0.0, %v1319
      %v1321 = vpop.f32.mrb[0].mxu0
      %v1322 = vpop.f32.mrb[0].mxu0
      %v1323 = vpop.f32.mrb[0].mxu0
      %1324 = vdwg.mxu0
      %v1325 = vadd.f32 %v1277, %v1320
      %v1326 = vxor.u32 %v1325, 2147483648
      %v1327 = vmul.f32 %v1326, 1.442695
      %v1328 = vpow.pop %v1327
      %v1329 = vadd.f32 %v1328, 1.0
      %v1330 = vrcp.pop %v1329
      %v1331 = vmul.f32 1.0, %v1330
      %v1332 = vadd.f32 %v1320, %v556
      %1334 = vrot.lane.b32.xlu0 %v1332, 64
      %v1335 = vpop.permute.xlu0 %1334
      %v1337 = vmul.f32 %v1331, %v1335
      %1339 = vrot.lane.b32.xlu0 %v1337, 64
      %v1340 = vpop.permute.xlu0 %1339
      %v1342 = vadd.f32 %v1277, %v1340
      %v1343 = vtanh.pop %v1342
      %v1344 = vsub.f32 1.0, %v1331
      %1346 = vrot.lane.b32.xlu0 %v1343, 96
      %v1347 = vpop.permute.xlu0 %1346
      %v1349 = vmul.f32 %v1344, %v1347
      %v1350 = vmul.f32 %v1331, %v1266
      %v1351 = vadd.f32 %v1349, %v1350
      %1353 = vrot.lane.b32.xlu0 %v1351, 96
      %v1354 = vpop.permute.xlu0 %1353
      %s1356 = scalar_lea.vmem %s391, %s1275
      %1357 = vst.msk [vmem:[%s1356] sm:$0x1] %vm591, %v1354
      %s1358 = smul.u32 %s593, 10
      %s1359 = smul.u32 %s21, 5
      %s1360 = sadd.s32 %s1358, %s1359
      %s1361 = scalar_lea.vmem [#allocation3], %s1360
      %v1362 = vld [vmem:[%s1361] sm:$0x1]
      %v1363 = vpack.c.bf16 %v1351, %v1351
      %1365 = vrot.lane.b32.xlu0 %v1363, 96
      %v1366 = vpop.permute.xlu0 %1365
      %v1368 = vsel %vm430, %v1366, 0
      %1370 = vmatprep.subr.bf16.mxu0 0
      %1371 = vmatpush1.bf16.msra.mxu0 %v496
      %1372 = vmatprep.subr.bf16.mxu0 0
      %1373 = vmatpush1.bf16.msra.mxu0 %v497
      %1374 = vmatprep.subr.bf16.mxu0 0
      %1375 = vmatpush1.bf16.msra.mxu0 0
      %1376 = vmatprep.subr.bf16.mxu0 0
      %1377 = vmatpush1.bf16.msra.mxu0 0
      %1378 = vmatprep.subr.bf16.mxu0 0
      %1379 = vmatpush1.bf16.msra.mxu0 0
      %1380 = vmatprep.subr.bf16.mxu0 0
      %1381 = vmatpush1.bf16.msra.mxu0 0
      %1382 = vmatprep.subr.bf16.mxu0 0
      %1383 = vmatpush1.bf16.msra.mxu0 0
      %1384 = vmatprep.subr.bf16.mxu0 0
      %1385 = vmatpush1.bf16.msra.mxu0 0
      %1386 = vmatprep.subr.bf16.mxu0 0
      %1387 = vmatpush1.bf16.msra.mxu0 0
      %1388 = vmatprep.subr.bf16.mxu0 0
      %1389 = vmatpush1.bf16.msra.mxu0 0
      %1390 = vmatprep.subr.bf16.mxu0 0
      %1391 = vmatpush1.bf16.msra.mxu0 0
      %1392 = vmatprep.subr.bf16.mxu0 0
      %1393 = vmatpush1.bf16.msra.mxu0 0
      %1394 = vmatprep.subr.bf16.mxu0 0
      %1395 = vmatpush1.bf16.msra.mxu0 0
      %1396 = vmatprep.subr.bf16.mxu0 0
      %1397 = vmatpush1.bf16.msra.mxu0 0
      %1398 = vmatprep.subr.bf16.mxu0 0
      %1399 = vmatpush1.bf16.msra.mxu0 0
      %1400 = vmatprep.subr.bf16.mxu0 0
      %1401 = vmatpush1.bf16.msra.mxu0 0
      %1402 = vmatprep.mubr.bf16.mxu0 0
      %1403 = vmatmul.mubr.bf16.gmra.mrb[0].mxu0 %v1368
      %v1404 = vpop.f32.mrb[0].mxu0
      %v1405 = vadd.f32 0.0, %v1404
      %v1406 = vpop.f32.mrb[0].mxu0
      %v1407 = vpop.f32.mrb[0].mxu0
      %v1408 = vpop.f32.mrb[0].mxu0
      %1409 = vdwg.mxu0
      %v1410 = vadd.f32 %v1362, %v1405
      %v1411 = vxor.u32 %v1410, 2147483648
      %v1412 = vmul.f32 %v1411, 1.442695
      %v1413 = vpow.pop %v1412
      %v1414 = vadd.f32 %v1413, 1.0
      %v1415 = vrcp.pop %v1414
      %v1416 = vmul.f32 1.0, %v1415
      %v1417 = vadd.f32 %v1405, %v556
      %1419 = vrot.lane.b32.xlu0 %v1417, 64
      %v1420 = vpop.permute.xlu0 %1419
      %v1422 = vmul.f32 %v1416, %v1420
      %1424 = vrot.lane.b32.xlu0 %v1422, 64
      %v1425 = vpop.permute.xlu0 %1424
      %v1427 = vadd.f32 %v1362, %v1425
      %v1428 = vtanh.pop %v1427
      %v1429 = vsub.f32 1.0, %v1416
      %1431 = vrot.lane.b32.xlu0 %v1428, 96
      %v1432 = vpop.permute.xlu0 %1431
      %v1434 = vmul.f32 %v1429, %v1432
      %v1435 = vmul.f32 %v1416, %v1351
      %v1436 = vadd.f32 %v1434, %v1435
      %1438 = vrot.lane.b32.xlu0 %v1436, 96
      %v1439 = vpop.permute.xlu0 %1438
      %s1441 = scalar_lea.vmem %s391, %s1360
      %1442 = vst.msk [vmem:[%s1441] sm:$0x1] %vm591, %v1439
      %s1443 = smul.u32 %s593, 11
      %s1444 = smul.u32 %s21, 4
      %s1445 = sadd.s32 %s1443, %s1444
      %s1446 = scalar_lea.vmem [#allocation3], %s1445
      %v1447 = vld [vmem:[%s1446] sm:$0x1]
      %v1448 = vpack.c.bf16 %v1436, %v1436
      %1450 = vrot.lane.b32.xlu0 %v1448, 96
      %v1451 = vpop.permute.xlu0 %1450
      %v1453 = vsel %vm430, %v1451, 0
      %1455 = vmatprep.subr.bf16.mxu0 0
      %1456 = vmatpush1.bf16.msra.mxu0 %v496
      %1457 = vmatprep.subr.bf16.mxu0 0
      %1458 = vmatpush1.bf16.msra.mxu0 %v497
      %1459 = vmatprep.subr.bf16.mxu0 0
      %1460 = vmatpush1.bf16.msra.mxu0 0
      %1461 = vmatprep.subr.bf16.mxu0 0
      %1462 = vmatpush1.bf16.msra.mxu0 0
      %1463 = vmatprep.subr.bf16.mxu0 0
      %1464 = vmatpush1.bf16.msra.mxu0 0
      %1465 = vmatprep.subr.bf16.mxu0 0
      %1466 = vmatpush1.bf16.msra.mxu0 0
      %1467 = vmatprep.subr.bf16.mxu0 0
      %1468 = vmatpush1.bf16.msra.mxu0 0
      %1469 = vmatprep.subr.bf16.mxu0 0
      %1470 = vmatpush1.bf16.msra.mxu0 0
      %1471 = vmatprep.subr.bf16.mxu0 0
      %1472 = vmatpush1.bf16.msra.mxu0 0
      %1473 = vmatprep.subr.bf16.mxu0 0
      %1474 = vmatpush1.bf16.msra.mxu0 0
      %1475 = vmatprep.subr.bf16.mxu0 0
      %1476 = vmatpush1.bf16.msra.mxu0 0
      %1477 = vmatprep.subr.bf16.mxu0 0
      %1478 = vmatpush1.bf16.msra.mxu0 0
      %1479 = vmatprep.subr.bf16.mxu0 0
      %1480 = vmatpush1.bf16.msra.mxu0 0
      %1481 = vmatprep.subr.bf16.mxu0 0
      %1482 = vmatpush1.bf16.msra.mxu0 0
      %1483 = vmatprep.subr.bf16.mxu0 0
      %1484 = vmatpush1.bf16.msra.mxu0 0
      %1485 = vmatprep.subr.bf16.mxu0 0
      %1486 = vmatpush1.bf16.msra.mxu0 0
      %1487 = vmatprep.mubr.bf16.mxu0 0
      %1488 = vmatmul.mubr.bf16.gmra.mrb[0].mxu0 %v1453
      %v1489 = vpop.f32.mrb[0].mxu0
      %v1490 = vadd.f32 0.0, %v1489
      %v1491 = vpop.f32.mrb[0].mxu0
      %v1492 = vpop.f32.mrb[0].mxu0
      %v1493 = vpop.f32.mrb[0].mxu0
      %1494 = vdwg.mxu0
      %v1495 = vadd.f32 %v1447, %v1490
      %v1496 = vxor.u32 %v1495, 2147483648
      %v1497 = vmul.f32 %v1496, 1.442695
      %v1498 = vpow.pop %v1497
      %v1499 = vadd.f32 %v1498, 1.0
      %v1500 = vrcp.pop %v1499
      %v1501 = vmul.f32 1.0, %v1500
      %v1502 = vadd.f32 %v1490, %v556
      %1504 = vrot.lane.b32.xlu0 %v1502, 64
      %v1505 = vpop.permute.xlu0 %1504
      %v1507 = vmul.f32 %v1501, %v1505
      %1509 = vrot.lane.b32.xlu0 %v1507, 64
      %v1510 = vpop.permute.xlu0 %1509
      %v1512 = vadd.f32 %v1447, %v1510
      %v1513 = vtanh.pop %v1512
      %v1514 = vsub.f32 1.0, %v1501
      %1516 = vrot.lane.b32.xlu0 %v1513, 96
      %v1517 = vpop.permute.xlu0 %1516
      %v1519 = vmul.f32 %v1514, %v1517
      %v1520 = vmul.f32 %v1501, %v1436
      %v1521 = vadd.f32 %v1519, %v1520
      %1523 = vrot.lane.b32.xlu0 %v1521, 96
      %v1524 = vpop.permute.xlu0 %1523
      %s1526 = scalar_lea.vmem %s391, %s1445
      %1527 = vst.msk [vmem:[%s1526] sm:$0x1] %vm591, %v1524
      %s1528 = smul.u32 %s593, 12
      %s1529 = smul.u32 %s21, 3
      %s1530 = sadd.s32 %s1528, %s1529
      %s1531 = scalar_lea.vmem [#allocation3], %s1530
      %v1532 = vld [vmem:[%s1531] sm:$0x1]
      %v1533 = vpack.c.bf16 %v1521, %v1521
      %1535 = vrot.lane.b32.xlu0 %v1533, 96
      %v1536 = vpop.permute.xlu0 %1535
      %v1538 = vsel %vm430, %v1536, 0
      %1540 = vmatprep.subr.bf16.mxu0 0
      %1541 = vmatpush1.bf16.msra.mxu0 %v496
      %1542 = vmatprep.subr.bf16.mxu0 0
      %1543 = vmatpush1.bf16.msra.mxu0 %v497
      %1544 = vmatprep.subr.bf16.mxu0 0
      %1545 = vmatpush1.bf16.msra.mxu0 0
      %1546 = vmatprep.subr.bf16.mxu0 0
      %1547 = vmatpush1.bf16.msra.mxu0 0
      %1548 = vmatprep.subr.bf16.mxu0 0
      %1549 = vmatpush1.bf16.msra.mxu0 0
      %1550 = vmatprep.subr.bf16.mxu0 0
      %1551 = vmatpush1.bf16.msra.mxu0 0
      %1552 = vmatprep.subr.bf16.mxu0 0
      %1553 = vmatpush1.bf16.msra.mxu0 0
      %1554 = vmatprep.subr.bf16.mxu0 0
      %1555 = vmatpush1.bf16.msra.mxu0 0
      %1556 = vmatprep.subr.bf16.mxu0 0
      %1557 = vmatpush1.bf16.msra.mxu0 0
      %1558 = vmatprep.subr.bf16.mxu0 0
      %1559 = vmatpush1.bf16.msra.mxu0 0
      %1560 = vmatprep.subr.bf16.mxu0 0
      %1561 = vmatpush1.bf16.msra.mxu0 0
      %1562 = vmatprep.subr.bf16.mxu0 0
      %1563 = vmatpush1.bf16.msra.mxu0 0
      %1564 = vmatprep.subr.bf16.mxu0 0
      %1565 = vmatpush1.bf16.msra.mxu0 0
      %1566 = vmatprep.subr.bf16.mxu0 0
      %1567 = vmatpush1.bf16.msra.mxu0 0
      %1568 = vmatprep.subr.bf16.mxu0 0
      %1569 = vmatpush1.bf16.msra.mxu0 0
      %1570 = vmatprep.subr.bf16.mxu0 0
      %1571 = vmatpush1.bf16.msra.mxu0 0
      %1572 = vmatprep.mubr.bf16.mxu0 0
      %1573 = vmatmul.mubr.bf16.gmra.mrb[0].mxu0 %v1538
      %v1574 = vpop.f32.mrb[0].mxu0
      %v1575 = vadd.f32 0.0, %v1574
      %v1576 = vpop.f32.mrb[0].mxu0
      %v1577 = vpop.f32.mrb[0].mxu0
      %v1578 = vpop.f32.mrb[0].mxu0
      %1579 = vdwg.mxu0
      %v1580 = vadd.f32 %v1532, %v1575
      %v1581 = vxor.u32 %v1580, 2147483648
      %v1582 = vmul.f32 %v1581, 1.442695
      %v1583 = vpow.pop %v1582
      %v1584 = vadd.f32 %v1583, 1.0
      %v1585 = vrcp.pop %v1584
      %v1586 = vmul.f32 1.0, %v1585
      %v1587 = vadd.f32 %v1575, %v556
      %1589 = vrot.lane.b32.xlu0 %v1587, 64
      %v1590 = vpop.permute.xlu0 %1589
      %v1592 = vmul.f32 %v1586, %v1590
      %1594 = vrot.lane.b32.xlu0 %v1592, 64
      %v1595 = vpop.permute.xlu0 %1594
      %v1597 = vadd.f32 %v1532, %v1595
      %v1598 = vtanh.pop %v1597
      %v1599 = vsub.f32 1.0, %v1586
      %1601 = vrot.lane.b32.xlu0 %v1598, 96
      %v1602 = vpop.permute.xlu0 %1601
      %v1604 = vmul.f32 %v1599, %v1602
      %v1605 = vmul.f32 %v1586, %v1521
      %v1606 = vadd.f32 %v1604, %v1605
      %1608 = vrot.lane.b32.xlu0 %v1606, 96
      %v1609 = vpop.permute.xlu0 %1608
      %s1611 = scalar_lea.vmem %s391, %s1530
      %1612 = vst.msk [vmem:[%s1611] sm:$0x1] %vm591, %v1609
      %s1613 = smul.u32 %s593, 13
      %s1614 = smul.u32 %s21, 2
      %s1615 = sadd.s32 %s1613, %s1614
      %s1616 = scalar_lea.vmem [#allocation3], %s1615
      %v1617 = vld [vmem:[%s1616] sm:$0x1]
      %v1618 = vpack.c.bf16 %v1606, %v1606
      %1620 = vrot.lane.b32.xlu0 %v1618, 96
      %v1621 = vpop.permute.xlu0 %1620
      %v1623 = vsel %vm430, %v1621, 0
      %1625 = vmatprep.subr.bf16.mxu0 0
      %1626 = vmatpush1.bf16.msra.mxu0 %v496
      %1627 = vmatprep.subr.bf16.mxu0 0
      %1628 = vmatpush1.bf16.msra.mxu0 %v497
      %1629 = vmatprep.subr.bf16.mxu0 0
      %1630 = vmatpush1.bf16.msra.mxu0 0
      %1631 = vmatprep.subr.bf16.mxu0 0
      %1632 = vmatpush1.bf16.msra.mxu0 0
      %1633 = vmatprep.subr.bf16.mxu0 0
      %1634 = vmatpush1.bf16.msra.mxu0 0
      %1635 = vmatprep.subr.bf16.mxu0 0
      %1636 = vmatpush1.bf16.msra.mxu0 0
      %1637 = vmatprep.subr.bf16.mxu0 0
      %1638 = vmatpush1.bf16.msra.mxu0 0
      %1639 = vmatprep.subr.bf16.mxu0 0
      %1640 = vmatpush1.bf16.msra.mxu0 0
      %1641 = vmatprep.subr.bf16.mxu0 0
      %1642 = vmatpush1.bf16.msra.mxu0 0
      %1643 = vmatprep.subr.bf16.mxu0 0
      %1644 = vmatpush1.bf16.msra.mxu0 0
      %1645 = vmatprep.subr.bf16.mxu0 0
      %1646 = vmatpush1.bf16.msra.mxu0 0
      %1647 = vmatprep.subr.bf16.mxu0 0
      %1648 = vmatpush1.bf16.msra.mxu0 0
      %1649 = vmatprep.subr.bf16.mxu0 0
      %1650 = vmatpush1.bf16.msra.mxu0 0
      %1651 = vmatprep.subr.bf16.mxu0 0
      %1652 = vmatpush1.bf16.msra.mxu0 0
      %1653 = vmatprep.subr.bf16.mxu0 0
      %1654 = vmatpush1.bf16.msra.mxu0 0
      %1655 = vmatprep.subr.bf16.mxu0 0
      %1656 = vmatpush1.bf16.msra.mxu0 0
      %1657 = vmatprep.mubr.bf16.mxu0 0
      %1658 = vmatmul.mubr.bf16.gmra.mrb[0].mxu0 %v1623
      %v1659 = vpop.f32.mrb[0].mxu0
      %v1660 = vadd.f32 0.0, %v1659
      %v1661 = vpop.f32.mrb[0].mxu0
      %v1662 = vpop.f32.mrb[0].mxu0
      %v1663 = vpop.f32.mrb[0].mxu0
      %1664 = vdwg.mxu0
      %v1665 = vadd.f32 %v1617, %v1660
      %v1666 = vxor.u32 %v1665, 2147483648
      %v1667 = vmul.f32 %v1666, 1.442695
      %v1668 = vpow.pop %v1667
      %v1669 = vadd.f32 %v1668, 1.0
      %v1670 = vrcp.pop %v1669
      %v1671 = vmul.f32 1.0, %v1670
      %v1672 = vadd.f32 %v1660, %v556
      %1674 = vrot.lane.b32.xlu0 %v1672, 64
      %v1675 = vpop.permute.xlu0 %1674
      %v1677 = vmul.f32 %v1671, %v1675
      %1679 = vrot.lane.b32.xlu0 %v1677, 64
      %v1680 = vpop.permute.xlu0 %1679
      %v1682 = vadd.f32 %v1617, %v1680
      %v1683 = vtanh.pop %v1682
      %v1684 = vsub.f32 1.0, %v1671
      %1686 = vrot.lane.b32.xlu0 %v1683, 96
      %v1687 = vpop.permute.xlu0 %1686
      %v1689 = vmul.f32 %v1684, %v1687
      %v1690 = vmul.f32 %v1671, %v1606
      %v1691 = vadd.f32 %v1689, %v1690
      %1693 = vrot.lane.b32.xlu0 %v1691, 96
      %v1694 = vpop.permute.xlu0 %1693
      %s1696 = scalar_lea.vmem %s391, %s1615
      %1697 = vst.msk [vmem:[%s1696] sm:$0x1] %vm591, %v1694
      %s1698 = smul.u32 %s593, 14
      %s1699 = sadd.s32 %s1698, %s21
      %s1700 = scalar_lea.vmem [#allocation3], %s1699
      %v1701 = vld [vmem:[%s1700] sm:$0x1]
      %v1702 = vpack.c.bf16 %v1691, %v1691
      %1704 = vrot.lane.b32.xlu0 %v1702, 96
      %v1705 = vpop.permute.xlu0 %1704
      %v1707 = vsel %vm430, %v1705, 0
      %1709 = vmatprep.subr.bf16.mxu0 0
      %1710 = vmatpush1.bf16.msra.mxu0 %v496
      %1711 = vmatprep.subr.bf16.mxu0 0
      %1712 = vmatpush1.bf16.msra.mxu0 %v497
      %1713 = vmatprep.subr.bf16.mxu0 0
      %1714 = vmatpush1.bf16.msra.mxu0 0
      %1715 = vmatprep.subr.bf16.mxu0 0
      %1716 = vmatpush1.bf16.msra.mxu0 0
      %1717 = vmatprep.subr.bf16.mxu0 0
      %1718 = vmatpush1.bf16.msra.mxu0 0
      %1719 = vmatprep.subr.bf16.mxu0 0
      %1720 = vmatpush1.bf16.msra.mxu0 0
      %1721 = vmatprep.subr.bf16.mxu0 0
      %1722 = vmatpush1.bf16.msra.mxu0 0
      %1723 = vmatprep.subr.bf16.mxu0 0
      %1724 = vmatpush1.bf16.msra.mxu0 0
      %1725 = vmatprep.subr.bf16.mxu0 0
      %1726 = vmatpush1.bf16.msra.mxu0 0
      %1727 = vmatprep.subr.bf16.mxu0 0
      %1728 = vmatpush1.bf16.msra.mxu0 0
      %1729 = vmatprep.subr.bf16.mxu0 0
      %1730 = vmatpush1.bf16.msra.mxu0 0
      %1731 = vmatprep.subr.bf16.mxu0 0
      %1732 = vmatpush1.bf16.msra.mxu0 0
      %1733 = vmatprep.subr.bf16.mxu0 0
      %1734 = vmatpush1.bf16.msra.mxu0 0
      %1735 = vmatprep.subr.bf16.mxu0 0
      %1736 = vmatpush1.bf16.msra.mxu0 0
      %1737 = vmatprep.subr.bf16.mxu0 0
      %1738 = vmatpush1.bf16.msra.mxu0 0
      %1739 = vmatprep.subr.bf16.mxu0 0
      %1740 = vmatpush1.bf16.msra.mxu0 0
      %1741 = vmatprep.mubr.bf16.mxu0 0
      %1742 = vmatmul.mubr.bf16.gmra.mrb[0].mxu0 %v1707
      %v1743 = vpop.f32.mrb[0].mxu0
      %v1744 = vadd.f32 0.0, %v1743
      %v1745 = vpop.f32.mrb[0].mxu0
      %v1746 = vpop.f32.mrb[0].mxu0
      %v1747 = vpop.f32.mrb[0].mxu0
      %1748 = vdwg.mxu0
      %v1749 = vadd.f32 %v1701, %v1744
      %v1750 = vxor.u32 %v1749, 2147483648
      %v1751 = vmul.f32 %v1750, 1.442695
      %v1752 = vpow.pop %v1751
      %v1753 = vadd.f32 %v1752, 1.0
      %v1754 = vrcp.pop %v1753
      %v1755 = vmul.f32 1.0, %v1754
      %v1756 = vadd.f32 %v1744, %v556
      %1758 = vrot.lane.b32.xlu0 %v1756, 64
      %v1759 = vpop.permute.xlu0 %1758
      %v1761 = vmul.f32 %v1755, %v1759
      %1763 = vrot.lane.b32.xlu0 %v1761, 64
      %v1764 = vpop.permute.xlu0 %1763
      %v1766 = vadd.f32 %v1701, %v1764
      %v1767 = vtanh.pop %v1766
      %v1768 = vsub.f32 1.0, %v1755
      %1770 = vrot.lane.b32.xlu0 %v1767, 96
      %v1771 = vpop.permute.xlu0 %1770
      %v1773 = vmul.f32 %v1768, %v1771
      %v1774 = vmul.f32 %v1755, %v1691
      %v1775 = vadd.f32 %v1773, %v1774
      %1777 = vrot.lane.b32.xlu0 %v1775, 96
      %v1778 = vpop.permute.xlu0 %1777
      %s1780 = scalar_lea.vmem %s391, %s1699
      %1781 = vst.msk [vmem:[%s1780] sm:$0x1] %vm591, %v1778
      %s1782 = smul.u32 %s593, 15
      %s1783 = scalar_lea.vmem [#allocation3], %s1782
      %v1784 = vld [vmem:[%s1783] sm:$0x1]
      %v1785 = vpack.c.bf16 %v1775, %v1775
      %1787 = vrot.lane.b32.xlu0 %v1785, 96
      %v1788 = vpop.permute.xlu0 %1787
      %v1790 = vsel %vm430, %v1788, 0
      %1792 = vmatprep.subr.bf16.mxu0 0
      %1793 = vmatpush1.bf16.msra.mxu0 %v496
      %1794 = vmatprep.subr.bf16.mxu0 0
      %1795 = vmatpush1.bf16.msra.mxu0 %v497
      %1796 = vmatprep.subr.bf16.mxu0 0
      %1797 = vmatpush1.bf16.msra.mxu0 0
      %1798 = vmatprep.subr.bf16.mxu0 0
      %1799 = vmatpush1.bf16.msra.mxu0 0
      %1800 = vmatprep.subr.bf16.mxu0 0
      %1801 = vmatpush1.bf16.msra.mxu0 0
      %1802 = vmatprep.subr.bf16.mxu0 0
      %1803 = vmatpush1.bf16.msra.mxu0 0
      %1804 = vmatprep.subr.bf16.mxu0 0
      %1805 = vmatpush1.bf16.msra.mxu0 0
      %1806 = vmatprep.subr.bf16.mxu0 0
      %1807 = vmatpush1.bf16.msra.mxu0 0
      %1808 = vmatprep.subr.bf16.mxu0 0
      %1809 = vmatpush1.bf16.msra.mxu0 0
      %1810 = vmatprep.subr.bf16.mxu0 0
      %1811 = vmatpush1.bf16.msra.mxu0 0
      %1812 = vmatprep.subr.bf16.mxu0 0
      %1813 = vmatpush1.bf16.msra.mxu0 0
      %1814 = vmatprep.subr.bf16.mxu0 0
      %1815 = vmatpush1.bf16.msra.mxu0 0
      %1816 = vmatprep.subr.bf16.mxu0 0
      %1817 = vmatpush1.bf16.msra.mxu0 0
      %1818 = vmatprep.subr.bf16.mxu0 0
      %1819 = vmatpush1.bf16.msra.mxu0 0
      %1820 = vmatprep.subr.bf16.mxu0 0
      %1821 = vmatpush1.bf16.msra.mxu0 0
      %1822 = vmatprep.subr.bf16.mxu0 0
      %1823 = vmatpush1.bf16.msra.mxu0 0
      %1824 = vmatprep.mubr.bf16.mxu0 0
      %1825 = vmatmul.mubr.bf16.gmra.mrb[0].mxu0 %v1790
      %v1826 = vpop.f32.mrb[0].mxu0
      %v1827 = vadd.f32 0.0, %v1826
      %v1828 = vpop.f32.mrb[0].mxu0
      %v1829 = vpop.f32.mrb[0].mxu0
      %v1830 = vpop.f32.mrb[0].mxu0
      %1831 = vdwg.mxu0
      %v1832 = vadd.f32 %v1784, %v1827
      %v1833 = vxor.u32 %v1832, 2147483648
      %v1834 = vmul.f32 %v1833, 1.442695
      %v1835 = vpow.pop %v1834
      %v1836 = vadd.f32 %v1835, 1.0
      %v1837 = vrcp.pop %v1836
      %v1838 = vmul.f32 1.0, %v1837
      %v1839 = vadd.f32 %v1827, %v556
      %1841 = vrot.lane.b32.xlu0 %v1839, 64
      %v1842 = vpop.permute.xlu0 %1841
      %v1844 = vmul.f32 %v1838, %v1842
      %1846 = vrot.lane.b32.xlu0 %v1844, 64
      %v1847 = vpop.permute.xlu0 %1846
      %v1849 = vadd.f32 %v1784, %v1847
      %v1850 = vtanh.pop %v1849
      %v1851 = vsub.f32 1.0, %v1838
      %1853 = vrot.lane.b32.xlu0 %v1850, 96
      %v1854 = vpop.permute.xlu0 %1853
      %v1856 = vmul.f32 %v1851, %v1854
      %v1857 = vmul.f32 %v1838, %v1775
      %v1858 = vadd.f32 %v1856, %v1857
      %1860 = vrot.lane.b32.xlu0 %v1858, 96
      %v1861 = vpop.permute.xlu0 %1860
      %s1863 = scalar_lea.vmem %s391, %s1782
      %1864 = vst.msk [vmem:[%s1863] sm:$0x1] %vm591, %v1861
      %1865 = vst.msk [vmem:[#allocation2] sm:$0x1] %vm591, %v1861
      %s1866 = smul.u32 %s23, 2
      %s1867 = ssub.s32 0, %s1866
      %s1868 = smul.u32 %s21, %s1867
      %s1869 = sadd.s32 %s23, %s1868
      %s1870 = smul.u32 2, %s1869
      %p1871 = scmp.lt.s32.totalorder %s21, 1
      %s1872 = scalar_select %p1871, %s21, 1
      %p1873 = scmp.lt.s32.totalorder %s22, 1
      %s1874 = scalar_select %p1873, %s22, 1
      %p1875 = scmp.lt.s32.totalorder %s1870, 1
      %s1876 = scalar_select %p1875, %s1870, 1
      %s1877 = smul.addr %s1874, 2
      %s1878 = sadd.s32 %s1876, %s1877
      %s1879 = smul.addr %s1872, 4
      %s1880 = sadd.s32 %s1878, %s1879
      %s1881 = smul.addr %s1880, 8
      %s1882 = scalar_lea.vmem %s5, %s1881
      // Predicated region
      $region45: #{forward.6} parent=39 // pred_check
        %p1883 = pneg %p205
      $region46: #{forward.6} parent=39 // pred_check_branch
        %1885 = sbr.rel (%p1883) target = $region48
      $region47: #{forward.6} parent=39 // pred_region
        %s1886 = smul.u32 %s23, 2
        %s1887 = ssub.s32 0, %s1886
        %s1888 = smul.u32 %s21, %s1887
        %s1889 = sadd.s32 %s23, %s1888
        %s1890 = smul.u32 2, %s1889
      $region48: #{forward.6} parent=39 // pred_fallthru
        _
    $region40: #{forward.6} parent=5 // pred_fallthru
      _
    %p1891 = scmp.le.s32.totalorder 2, %s11
    // Predicated region
    $region49: #{forward.6} parent=5 // pred_check
      %p1892 = pneg %p1891
    $region50: #{forward.6} parent=5 // pred_check_branch
      %1894 = sbr.rel (%p1892) target = $region52
    $region51: #{forward.6} parent=5 // pred_region
      %s1895 = ssub.s32 %s11, 2
      // Predicated region
      $region53: #{forward.6} parent=51 // pred_check
        %p1896 = pneg %p211
      $region54: #{forward.6} parent=51 // pred_check_branch
        %1898 = sbr.rel (%p1896) target = $region56
      $region55: #{forward.6} parent=51 // pred_region
        %s1899 = smul.u32 %s26, 2
        %s1900 = ssub.s32 0, %s1899
        %s1901 = smul.u32 %s24, %s1900
        %s1902 = sadd.s32 %s26, %s1901
        %s1903 = smul.u32 2, %s1902
        %p1904 = scmp.lt.s32.totalorder %s24, 1
        %s1905 = scalar_select %p1904, %s24, 1
        %p1906 = scmp.lt.s32.totalorder %s25, 1
        %s1907 = scalar_select %p1906, %s25, 1
        %p1908 = scmp.lt.s32.totalorder %s1903, 1
        %s1909 = scalar_select %p1908, %s1903, 1
        %s1910 = smul.addr %s1907, 2
        %s1911 = sadd.s32 %s1909, %s1910
        %s1912 = smul.addr %s1905, 4
        %s1913 = sadd.s32 %s1911, %s1912
        %s1914 = smul.addr %s1913, 8
        %s1915 = scalar_lea.vmem %s5, %s1914
      $region56: #{forward.6} parent=51 // pred_fallthru
        _
    $region52: #{forward.6} parent=5 // pred_fallthru
      _
  $region6: #{forward.6} parent=0 // loop_footer
    %s15 = sadd.s32 1, %s11
  $region7: #{forward.6} parent=0 // loop_footer_branch
    %10 = sbr.rel target = $region3
  $region8: #{forward.6} parent=0 // loop_exit
    _

</llo_original>
